<compile_context>
chip_gen: v7x
topology: tpu7x:2x2x1
jax: 0.10.0
libtpu: 0.0.40
codegen_flags: <defaults>
</compile_context>

<pallas_src>
import math
from functools import partial

import jax
import jax.numpy as jnp
from jax.experimental import pallas as pl
from jax.experimental.pallas import tpu as pltpu

# ---------------- configuration (small, synthetic) ----------------
N_TOKEN    = 16            # len(e2w); includes Pad_None / Mask_None
EMB_SIZE   = 256           # hard-coded in MidiFormer.__init__
HIDDEN     = 32            # formerConfig.hidden_size == d_model
N_HEADS    = 4
HEAD_DIM   = HIDDEN // N_HEADS
N_LAYERS   = 2
INTER      = 64
MAX_POS    = 32
EMA_GROUPS = 8
CG         = HIDDEN // EMA_GROUPS   # channels per EMA group
LN_EPS     = 1e-12
GN_EPS     = 1e-5


# ---------------- fused encoder kernel (single pallas_call) ----------------
def _encoder_kernel(tok_ref, sel_ref, posadd_ref, mask_ref,
                    in_w_ref, in_b_ref, special_ref, eg_ref, eb_ref,
                    wqkv_ref, bqkv_ref, wo_ref, bo_ref,
                    ln1g_ref, ln1b_ref, w1_ref, b1_ref, w2_ref, b2_ref,
                    ln2g_ref, ln2b_ref,
                    o_ref, qkv_scr, ctx_scr,
                    *, bs, seq, n_layers, n_heads, hidden):
    dh = hidden // n_heads
    scale = 1.0 / math.sqrt(dh)

    def layer_norm(x, g, b):
        mu = jnp.mean(x, axis=-1, keepdims=True)
        var = jnp.mean((x - mu) ** 2, axis=-1, keepdims=True)
        return (x - mu) * jax.lax.rsqrt(var + LN_EPS) * g + b

    # ---- embeddings: input projection + special-token row + pos/type emb + LN (all fused) ----
    proj = jnp.dot(tok_ref[...], in_w_ref[...],
                   preferred_element_type=jnp.float32) + in_b_ref[...]          # (bs*S, H)
    sel = sel_ref[...]                                                          # 1.0 on special rows
    h = proj * (1.0 - sel) + special_ref[...] * sel + posadd_ref[...]
    h = layer_norm(h, eg_ref[...], eb_ref[...])

    # ---- transformer layers, fully VMEM resident (static unroll) ----
    for l in range(n_layers):
        # fused QKV projection: one (bs*S, H) @ (H, 3H) matmul (lane width 3H)
        qkv_scr[...] = jnp.dot(h, wqkv_ref[l],
                               preferred_element_type=jnp.float32) + bqkv_ref[l]

        # multi-head attention, one (batch, head) tile at a time -> plain 2-D MXU matmuls
        for b in range(bs):
            r0, r1 = b * seq, (b + 1) * seq
            bias = mask_ref[b:b + 1, :]                                         # (1, S) additive mask
            for hd in range(n_heads):
                c0 = hd * dh
                q = qkv_scr[r0:r1, c0:c0 + dh]                                  # (S, dh)
                k = qkv_scr[r0:r1, hidden + c0:hidden + c0 + dh]
                v = qkv_scr[r0:r1, 2 * hidden + c0:2 * hidden + c0 + dh]
                s = jax.lax.dot_general(q, k, (((1,), (1,)), ((), ())),
                                        preferred_element_type=jnp.float32) * scale + bias
                s = s - jnp.max(s, axis=-1, keepdims=True)
                e = jnp.exp(s)
                p = e * pl.reciprocal(jnp.sum(e, axis=-1, keepdims=True), approx=True)
                ctx_scr[r0:r1, c0:c0 + dh] = jnp.dot(p, v,
                                                     preferred_element_type=jnp.float32)

        attn_out = jnp.dot(ctx_scr[...], wo_ref[l],
                           preferred_element_type=jnp.float32) + bo_ref[l]
        h = layer_norm(h + attn_out, ln1g_ref[l], ln1b_ref[l])

        ffn = jnp.dot(h, w1_ref[l], preferred_element_type=jnp.float32) + b1_ref[l]
        ffn = jax.nn.gelu(ffn)          # tanh-approx GELU (see TODO above)
        ffn = jnp.dot(ffn, w2_ref[l], preferred_element_type=jnp.float32) + b2_ref[l]
        h = layer_norm(h + ffn, ln2g_ref[l], ln2b_ref[l])

    o_ref[...] = h


def pallas_encoder(p, tok_pad, sel, posadd, mask_bias, bs, S, mark):
    layers = p["layers"]
    # concatenate Wq/Wk/Wv into one (H, 3H) weight per layer; stack layers along a leading axis
    wqkv = jnp.stack([jnp.concatenate([lp["wq"], lp["wk"], lp["wv"]], axis=1) for lp in layers])
    bqkv = jnp.stack([jnp.concatenate([lp["bq"], lp["bk"], lp["bv"]], axis=0)[None, :]
                      for lp in layers])
    wo   = jnp.stack([lp["wo"] for lp in layers])
    bo   = jnp.stack([lp["bo"][None, :] for lp in layers])
    ln1g = jnp.stack([lp["ln1_g"][None, :] for lp in layers])
    ln1b = jnp.stack([lp["ln1_b"][None, :] for lp in layers])
    w1   = jnp.stack([lp["w1"] for lp in layers])
    b1   = jnp.stack([lp["b1"][None, :] for lp in layers])
    w2   = jnp.stack([lp["w2"] for lp in layers])
    b2   = jnp.stack([lp["b2"][None, :] for lp in layers])
    ln2g = jnp.stack([lp["ln2_g"][None, :] for lp in layers])
    ln2b = jnp.stack([lp["ln2_b"][None, :] for lp in layers])

    kernel = partial(_encoder_kernel, bs=bs, seq=S, n_layers=len(layers),
                     n_heads=N_HEADS, hidden=HIDDEN)
    return pl.pallas_call(
        kernel,
        out_shape=jax.ShapeDtypeStruct((bs * S, HIDDEN), jnp.float32),
        scratch_shapes=[pltpu.VMEM((bs * S, 3 * HIDDEN), jnp.float32),   # fused QKV activations
                        pltpu.VMEM((bs * S, HIDDEN), jnp.float32)],      # attention context
    )(tok_pad, sel, posadd, mask_bias,
      p["in_w"], p["in_b"][None, :],
      p["former_word_emb"][mark][None, :],
      p["emb_ln_g"][None, :], p["emb_ln_b"][None, :],
      wqkv, bqkv, wo, bo, ln1g, ln1b, w1, b1, w2, b2, ln2g, ln2b)


# ---------------- EMA kernel (single pallas_call, grid over batch) ----------------
def _ema_kernel(gx_ref, w1_ref, b1_ref, w3_ref, b3_ref, gng_ref, gnb_ref,
                o_ref, pad_scr, *, seq, gn_eps):
    n_groups, cg, _ = gx_ref.shape
    w1 = w1_ref[...]
    b1 = b1_ref[...]
    b3 = b3_ref[...]
    gng = gng_ref[...]
    gnb = gnb_ref[...]
    w3_top, w3_mid, w3_bot = w3_ref[0], w3_ref[1], w3_ref[2]

    # zero the 1-column padding border once per program (interior rewritten every group)
    pad_scr[...] = jnp.zeros(pad_scr.shape, jnp.float32)

    def softmax_channels(a):                    # softmax over the channel axis of (cg, 1)
        a = a - jnp.max(a, axis=0, keepdims=True)
        e = jnp.exp(a)
        return e * pl.reciprocal(jnp.sum(e, axis=0, keepdims=True), approx=True)

    for g in range(n_groups):
        gx = gx_ref[g]                                                          # (cg, S)

        # conv1x1 on cat([pool_h, pool_w]) == conv1x1 on each pooled branch (conv is linear)
        xh = jnp.dot(w1, gx, preferred_element_type=jnp.float32) + b1           # (cg, S)
        xw = jnp.mean(xh, axis=1, keepdims=True)                                # == w1 @ mean(gx) + b1
        mod = gx * jax.nn.sigmoid(xh) * jax.nn.sigmoid(xw)

        # GroupNorm(cg, cg): per-channel normalization over the spatial axis + affine
        mu = jnp.mean(mod, axis=1, keepdims=True)
        var = jnp.mean((mod - mu) ** 2, axis=1, keepdims=True)
        x1 = (mod - mu) * jax.lax.rsqrt(var + gn_eps) * gng + gnb

        # conv3x3 (padding=1): with W == 1 only the centre kernel column sees data,
        # so it reduces to three taps along the sequence axis (6 of 9 taps pruned).
        pad_scr[:, 1:seq + 1] = gx
        x2 = (jnp.dot(w3_top, pad_scr[:, 0:seq], preferred_element_type=jnp.float32)
              + jnp.dot(w3_mid, pad_scr[:, 1:seq + 1], preferred_element_type=jnp.float32)
              + jnp.dot(w3_bot, pad_scr[:, 2:seq + 2], preferred_element_type=jnp.float32)
              + b3)

        # cross-branch channel attention
        x11 = softmax_channels(jnp.mean(x1, axis=1, keepdims=True))             # agp(x1) softmax
        x21 = softmax_channels(jnp.mean(x2, axis=1, keepdims=True))             # agp(x2) softmax
        w_attn = (jnp.sum(x11 * x2, axis=0, keepdims=True)                      # x11 @ x12
                  + jnp.sum(x21 * x1, axis=0, keepdims=True))                   # x21 @ x22 -> (1, S)
        o_ref[g] = gx * jax.nn.sigmoid(w_attn)


def pallas_ema(group_x, ep):
    BG, cg, S = group_x.shape
    bs = BG // EMA_GROUPS
    G = EMA_GROUPS
    kernel = partial(_ema_kernel, seq=S, gn_eps=GN_EPS)
    return pl.pallas_call(
        kernel,
        out_shape=jax.ShapeDtypeStruct((BG, cg, S), jnp.float32),
        grid=(bs,),
        in_specs=[
            pl.BlockSpec((G, cg, S), lambda b: (b, 0, 0)),
            pl.BlockSpec((cg, cg),   lambda b: (0, 0)),
            pl.BlockSpec((cg, 1),    lambda b: (0, 0)),
            pl.BlockSpec((3, cg, cg), lambda b: (0, 0, 0)),
            pl.BlockSpec((cg, 1),    lambda b: (0, 0)),
            pl.BlockSpec((cg, 1),    lambda b: (0, 0)),
            pl.BlockSpec((cg, 1),    lambda b: (0, 0)),
        ],
        out_specs=pl.BlockSpec((G, cg, S), lambda b: (b, 0, 0)),
        scratch_shapes=[pltpu.VMEM((cg, S + 2), jnp.float32)],   # zero-padded row for conv taps
        compiler_params=pltpu.CompilerParams(dimension_semantics=("parallel",)),
    )(group_x, ep["w1"], ep["b1"], ep["w3_taps"], ep["b3"], ep["gn_g"], ep["gn_b"])


# ---------------- model glue (plain JAX) ----------------
def midi_former_forward(p, input_id, attn_mask, mode="mlm"):
    bs, slen = input_id.shape
    S = slen + 1
    mark = 0 if mode == "mlm" else 1

    # embedding lookup (gather stays in XLA) + special-token prefix at the 256-dim level
    emb = jnp.take(p["word_emb"], input_id, axis=0) * math.sqrt(EMB_SIZE)        # (bs, slen, 256)
    tok_pad = jnp.concatenate([jnp.zeros((bs, 1, EMB_SIZE), jnp.float32), emb],
                              axis=1).reshape(bs * S, EMB_SIZE)                  # (bs*S, 256)
    sel = (jnp.arange(bs * S) % S == 0).astype(jnp.float32)[:, None]             # (bs*S, 1)
    posadd = jnp.tile(p["pos_emb"][:S], (bs, 1)) + p["tok_type_emb"][0][None, :] # (bs*S, H)

    full_mask = jnp.concatenate(
        [jnp.ones((bs, 1), jnp.float32), attn_mask.astype(jnp.float32)], axis=1)  # (bs, S)
    mask_bias = (1.0 - full_mask) * -10000.0                                      # additive bias

    y2d = pallas_encoder(p, tok_pad, sel, posadd, mask_bias, bs, S, mark)         # (bs*S, H)
    y = y2d.reshape(bs, S, HIDDEN)

    # layout: view (bs, S, hidden) as NCHW (bs, hidden, S, 1) for the EMA block
    group_x = jnp.transpose(y, (0, 2, 1)).reshape(bs * EMA_GROUPS, CG, S)         # (BG, cg, S)
    ep = {
        "w1": p["ema"]["w1"], "b1": p["ema"]["b1"],
        # only the kw == 1 column of the 3x3 kernel touches real data when W == 1
        "w3_taps": jnp.transpose(p["ema"]["w3_raw"][:, :, :, 1], (2, 0, 1)),      # (3, out, in)
        "b3": p["ema"]["b3"], "gn_g": p["ema"]["gn_g"], "gn_b": p["ema"]["gn_b"],
    }
    out = pallas_ema(group_x, ep)                                                 # (BG, cg, S)
    return out.reshape(bs, HIDDEN, S, 1)


# ---------------- deterministic parameter init ----------------
def init_params(key):
    keys = iter(jax.random.split(key, 64))

    def nrm(shape):
        return jax.random.normal(next(keys), shape, jnp.float32) * 0.02

    zeros = lambda *s: jnp.zeros(s, jnp.float32)
    ones = lambda *s: jnp.ones(s, jnp.float32)

    p = {
        "word_emb": nrm((N_TOKEN, EMB_SIZE)),
        "in_w": nrm((EMB_SIZE, HIDDEN)), "in_b": zeros(HIDDEN),
        "former_word_emb": nrm((2, HIDDEN)),
        "pos_emb": nrm((MAX_POS, HIDDEN)),
        "tok_type_emb": nrm((2, HIDDEN)),
        "emb_ln_g": ones(HIDDEN), "emb_ln_b": zeros(HIDDEN),
        "layers": [],
    }
    for _ in range(N_LAYERS):
        p["layers"].append({
            "wq": nrm((HIDDEN, HIDDEN)), "bq": zeros(HIDDEN),
            "wk": nrm((HIDDEN, HIDDEN)), "bk": zeros(HIDDEN),
            "wv": nrm((HIDDEN, HIDDEN)), "bv": zeros(HIDDEN),
            "wo": nrm((HIDDEN, HIDDEN)), "bo": zeros(HIDDEN),
            "ln1_g": ones(HIDDEN), "ln1_b": zeros(HIDDEN),
            "w1": nrm((HIDDEN, INTER)), "b1": zeros(INTER),
            "w2": nrm((INTER, HIDDEN)), "b2": zeros(HIDDEN),
            "ln2_g": ones(HIDDEN), "ln2_b": zeros(HIDDEN),
        })
    p["ema"] = {
        "w1": nrm((CG, CG)),                     # conv1x1 weight (out, in)
        "b1": zeros(CG, 1),
        "w3_raw": nrm((CG, CG, 3, 3)),           # torch Conv2d weight layout (out, in, kh, kw)
        "b3": zeros(CG, 1),
        "gn_g": ones(CG, 1),
        "gn_b": zeros(CG, 1),
    }
    return p


if __name__ == "__main__":
    key = jax.random.PRNGKey(0)
    kp, ki = jax.random.split(key)
    params = init_params(kp)

    bs, slen = 2, 8
    input_id = jax.random.randint(ki, (bs, slen), 0, N_TOKEN, dtype=jnp.int32)
    attn_mask = jnp.ones((bs, slen), jnp.float32)

    fwd = jax.jit(partial(midi_former_forward, mode="mlm"))
    out = fwd(params, input_id, attn_mask)
    jax.block_until_ready(out)
    assert out.shape == (bs, HIDDEN, slen + 1, 1)
    print("KERNEL_OK")
</pallas_src>

<mosaic_0001>
module attributes {stable_mosaic.version = 11 : i64} {
  func.func @_encoder_kernel(%arg0: memref<18x256xf32, #tpu.memory_space<vmem>>, %arg1: memref<18x1xf32, #tpu.memory_space<vmem>>, %arg2: memref<18x32xf32, #tpu.memory_space<vmem>>, %arg3: memref<2x9xf32, #tpu.memory_space<vmem>>, %arg4: memref<256x32xf32, #tpu.memory_space<vmem>>, %arg5: memref<1x32xf32, #tpu.memory_space<vmem>>, %arg6: memref<1x32xf32, #tpu.memory_space<vmem>>, %arg7: memref<1x32xf32, #tpu.memory_space<vmem>>, %arg8: memref<1x32xf32, #tpu.memory_space<vmem>>, %arg9: memref<2x32x96xf32, #tpu.memory_space<vmem>>, %arg10: memref<2x1x96xf32, #tpu.memory_space<vmem>>, %arg11: memref<2x32x32xf32, #tpu.memory_space<vmem>>, %arg12: memref<2x1x32xf32, #tpu.memory_space<vmem>>, %arg13: memref<2x1x32xf32, #tpu.memory_space<vmem>>, %arg14: memref<2x1x32xf32, #tpu.memory_space<vmem>>, %arg15: memref<2x32x64xf32, #tpu.memory_space<vmem>>, %arg16: memref<2x1x64xf32, #tpu.memory_space<vmem>>, %arg17: memref<2x64x32xf32, #tpu.memory_space<vmem>>, %arg18: memref<2x1x32xf32, #tpu.memory_space<vmem>>, %arg19: memref<2x1x32xf32, #tpu.memory_space<vmem>>, %arg20: memref<2x1x32xf32, #tpu.memory_space<vmem>>, %arg21: memref<18x32xf32, #tpu.memory_space<vmem>>, %arg22: memref<18x96xf32, #tpu.memory_space<vmem>>, %arg23: memref<18x32xf32, #tpu.memory_space<vmem>>) attributes {dimension_semantics = [], scalar_prefetch = 0 : i64, scratch_operands = 2 : i64, tpu.core_type = #tpu.core_type<tc>} {
    %c0 = arith.constant 0 : index
    %c0_0 = arith.constant 0 : index
    %0 = vector.load %arg0[%c0, %c0_0] : memref<18x256xf32, #tpu.memory_space<vmem>>, vector<18x256xf32>
    %c0_1 = arith.constant 0 : index
    %c0_2 = arith.constant 0 : index
    %1 = vector.load %arg4[%c0_1, %c0_2] : memref<256x32xf32, #tpu.memory_space<vmem>>, vector<256x32xf32>
    %cst = arith.constant dense<0.000000e+00> : vector<18x32xf32>
    %2 = tpu.matmul %0, %1, %cst {dimension_numbers = #tpu.dot_dimension_numbers<[1], [0], [0], [1], [0, 0, 1, 1], [], []>} : vector<18x256xf32>, vector<256x32xf32>, vector<18x32xf32> -> vector<18x32xf32>
    %c0_3 = arith.constant 0 : index
    %c0_4 = arith.constant 0 : index
    %3 = vector.load %arg5[%c0_3, %c0_4] : memref<1x32xf32, #tpu.memory_space<vmem>>, vector<1x32xf32>
    %4 = vector.broadcast %3 : vector<1x32xf32> to vector<18x32xf32>
    %5 = arith.addf %2, %4 : vector<18x32xf32>
    %c0_5 = arith.constant 0 : index
    %c0_6 = arith.constant 0 : index
    %6 = vector.load %arg1[%c0_5, %c0_6] : memref<18x1xf32, #tpu.memory_space<vmem>>, vector<18x1xf32>
    %cst_7 = arith.constant 1.000000e+00 : f32
    %7 = vector.broadcast %cst_7 : f32 to vector<18x1xf32>
    %8 = arith.subf %7, %6 : vector<18x1xf32>
    %9 = vector.broadcast %8 : vector<18x1xf32> to vector<18x32xf32>
    %10 = arith.mulf %5, %9 : vector<18x32xf32>
    %c0_8 = arith.constant 0 : index
    %c0_9 = arith.constant 0 : index
    %11 = vector.load %arg6[%c0_8, %c0_9] : memref<1x32xf32, #tpu.memory_space<vmem>>, vector<1x32xf32>
    %12 = vector.broadcast %11 : vector<1x32xf32> to vector<18x32xf32>
    %13 = vector.broadcast %6 : vector<18x1xf32> to vector<18x32xf32>
    %14 = arith.mulf %12, %13 : vector<18x32xf32>
    %15 = arith.addf %10, %14 : vector<18x32xf32>
    %c0_10 = arith.constant 0 : index
    %c0_11 = arith.constant 0 : index
    %16 = vector.load %arg2[%c0_10, %c0_11] : memref<18x32xf32, #tpu.memory_space<vmem>>, vector<18x32xf32>
    %17 = arith.addf %15, %16 : vector<18x32xf32>
    %c0_12 = arith.constant 0 : index
    %c0_13 = arith.constant 0 : index
    %18 = vector.load %arg7[%c0_12, %c0_13] : memref<1x32xf32, #tpu.memory_space<vmem>>, vector<1x32xf32>
    %c0_14 = arith.constant 0 : index
    %c0_15 = arith.constant 0 : index
    %19 = vector.load %arg8[%c0_14, %c0_15] : memref<1x32xf32, #tpu.memory_space<vmem>>, vector<1x32xf32>
    %cst_16 = arith.constant dense<0.000000e+00> : vector<18xf32>
    %20 = vector.multi_reduction <add>, %17, %cst_16 [1] : vector<18x32xf32> to vector<18xf32>
    %21 = vector.shape_cast %20 : vector<18xf32> to vector<18x1xf32>
    %cst_17 = arith.constant 3.200000e+01 : f32
    %22 = vector.broadcast %cst_17 : f32 to vector<18x1xf32>
    %23 = arith.divf %21, %22 : vector<18x1xf32>
    %24 = vector.broadcast %23 : vector<18x1xf32> to vector<18x32xf32>
    %25 = arith.subf %17, %24 : vector<18x32xf32>
    %26 = arith.mulf %25, %25 : vector<18x32xf32>
    %cst_18 = arith.constant dense<0.000000e+00> : vector<18xf32>
    %27 = vector.multi_reduction <add>, %26, %cst_18 [1] : vector<18x32xf32> to vector<18xf32>
    %28 = vector.shape_cast %27 : vector<18xf32> to vector<18x1xf32>
    %cst_19 = arith.constant 3.200000e+01 : f32
    %29 = vector.broadcast %cst_19 : f32 to vector<18x1xf32>
    %30 = arith.divf %28, %29 : vector<18x1xf32>
    %31 = vector.broadcast %23 : vector<18x1xf32> to vector<18x32xf32>
    %32 = arith.subf %17, %31 : vector<18x32xf32>
    %cst_20 = arith.constant 9.99999996E-13 : f32
    %33 = vector.broadcast %cst_20 : f32 to vector<18x1xf32>
    %34 = arith.addf %30, %33 : vector<18x1xf32>
    %35 = math.rsqrt %34 : vector<18x1xf32>
    %36 = vector.broadcast %35 : vector<18x1xf32> to vector<18x32xf32>
    %37 = arith.mulf %32, %36 : vector<18x32xf32>
    %38 = vector.broadcast %18 : vector<1x32xf32> to vector<18x32xf32>
    %39 = arith.mulf %37, %38 : vector<18x32xf32>
    %40 = vector.broadcast %19 : vector<1x32xf32> to vector<18x32xf32>
    %41 = arith.addf %39, %40 : vector<18x32xf32>
    %c0_21 = arith.constant 0 : index
    %c0_22 = arith.constant 0 : index
    %c0_23 = arith.constant 0 : index
    %42 = vector.load %arg9[%c0_21, %c0_22, %c0_23] : memref<2x32x96xf32, #tpu.memory_space<vmem>>, vector<1x32x96xf32>
    %43 = vector.shape_cast %42 : vector<1x32x96xf32> to vector<32x96xf32>
    %cst_24 = arith.constant dense<0.000000e+00> : vector<18x96xf32>
    %44 = tpu.matmul %41, %43, %cst_24 {dimension_numbers = #tpu.dot_dimension_numbers<[1], [0], [0], [1], [0, 0, 1, 1], [], []>} : vector<18x32xf32>, vector<32x96xf32>, vector<18x96xf32> -> vector<18x96xf32>
    %c0_25 = arith.constant 0 : index
    %c0_26 = arith.constant 0 : index
    %c0_27 = arith.constant 0 : index
    %45 = vector.load %arg10[%c0_25, %c0_26, %c0_27] : memref<2x1x96xf32, #tpu.memory_space<vmem>>, vector<1x1x96xf32>
    %46 = vector.shape_cast %45 : vector<1x1x96xf32> to vector<1x96xf32>
    %47 = vector.broadcast %46 : vector<1x96xf32> to vector<18x96xf32>
    %48 = arith.addf %44, %47 : vector<18x96xf32>
    %c0_28 = arith.constant 0 : index
    %c0_29 = arith.constant 0 : index
    %49 = vector.load %arg22[%c0_28, %c0_29] : memref<18x96xf32, #tpu.memory_space<vmem>>, vector<18x96xf32>
    tpu.vector_store %arg22[%c0_28, %c0_29], %48 {strides = array<i32>} : memref<18x96xf32, #tpu.memory_space<vmem>>, vector<18x96xf32>,
    %c0_30 = arith.constant 0 : index
    %c0_31 = arith.constant 0 : index
    %50 = vector.load %arg3[%c0_30, %c0_31] : memref<2x9xf32, #tpu.memory_space<vmem>>, vector<1x9xf32>
    %c0_32 = arith.constant 0 : index
    %c0_33 = arith.constant 0 : index
    %51 = vector.load %arg22[%c0_32, %c0_33] : memref<18x96xf32, #tpu.memory_space<vmem>>, vector<9x8xf32>
    %c0_34 = arith.constant 0 : index
    %c32 = arith.constant 32 : index
    %52 = vector.load %arg22[%c0_34, %c32] : memref<18x96xf32, #tpu.memory_space<vmem>>, vector<9x8xf32>
    %c0_35 = arith.constant 0 : index
    %c64 = arith.constant 64 : index
    %53 = vector.load %arg22[%c0_35, %c64] : memref<18x96xf32, #tpu.memory_space<vmem>>, vector<9x8xf32>
    %cst_36 = arith.constant dense<0.000000e+00> : vector<9x9xf32>
    %54 = tpu.matmul %51, %52, %cst_36 {dimension_numbers = #tpu.dot_dimension_numbers<[1], [1], [0], [0], [0, 0, 1, 0], [], []>} : vector<9x8xf32>, vector<9x8xf32>, vector<9x9xf32> -> vector<9x9xf32>
    %cst_37 = arith.constant 0.353553385 : f32
    %55 = vector.broadcast %cst_37 : f32 to vector<9x9xf32>
    %56 = arith.mulf %54, %55 : vector<9x9xf32>
    %57 = vector.broadcast %50 : vector<1x9xf32> to vector<9x9xf32>
    %58 = arith.addf %56, %57 : vector<9x9xf32>
    %cst_38 = arith.constant dense<0xFF800000> : vector<9xf32>
    %59 = vector.multi_reduction <maximumf>, %58, %cst_38 [1] : vector<9x9xf32> to vector<9xf32>
    %60 = vector.shape_cast %59 : vector<9xf32> to vector<9x1xf32>
    %61 = vector.broadcast %60 : vector<9x1xf32> to vector<9x9xf32>
    %62 = arith.subf %58, %61 : vector<9x9xf32>
    %63 = math.exp %62 : vector<9x9xf32>
    %cst_39 = arith.constant dense<0.000000e+00> : vector<9xf32>
    %64 = vector.multi_reduction <add>, %63, %cst_39 [1] : vector<9x9xf32> to vector<9xf32>
    %65 = vector.shape_cast %64 : vector<9xf32> to vector<9x1xf32>
    %66 = tpu.reciprocal %65 {approx = true} : vector<9x1xf32> -> vector<9x1xf32>
    %67 = vector.broadcast %66 : vector<9x1xf32> to vector<9x9xf32>
    %68 = arith.mulf %63, %67 : vector<9x9xf32>
    %cst_40 = arith.constant dense<0.000000e+00> : vector<9x8xf32>
    %69 = tpu.matmul %68, %53, %cst_40 {dimension_numbers = #tpu.dot_dimension_numbers<[1], [0], [0], [1], [0, 0, 1, 1], [], []>} : vector<9x9xf32>, vector<9x8xf32>, vector<9x8xf32> -> vector<9x8xf32>
    %c0_41 = arith.constant 0 : index
    %c0_42 = arith.constant 0 : index
    %70 = vector.load %arg23[%c0_41, %c0_42] : memref<18x32xf32, #tpu.memory_space<vmem>>, vector<9x8xf32>
    tpu.vector_store %arg23[%c0_41, %c0_42], %69 {strides = array<i32>} : memref<18x32xf32, #tpu.memory_space<vmem>>, vector<9x8xf32>,
    %c0_43 = arith.constant 0 : index
    %c8 = arith.constant 8 : index
    %71 = vector.load %arg22[%c0_43, %c8] : memref<18x96xf32, #tpu.memory_space<vmem>>, vector<9x8xf32>
    %c0_44 = arith.constant 0 : index
    %c40 = arith.constant 40 : index
    %72 = vector.load %arg22[%c0_44, %c40] : memref<18x96xf32, #tpu.memory_space<vmem>>, vector<9x8xf32>
    %c0_45 = arith.constant 0 : index
    %c72 = arith.constant 72 : index
    %73 = vector.load %arg22[%c0_45, %c72] : memref<18x96xf32, #tpu.memory_space<vmem>>, vector<9x8xf32>
    %cst_46 = arith.constant dense<0.000000e+00> : vector<9x9xf32>
    %74 = tpu.matmul %71, %72, %cst_46 {dimension_numbers = #tpu.dot_dimension_numbers<[1], [1], [0], [0], [0, 0, 1, 0], [], []>} : vector<9x8xf32>, vector<9x8xf32>, vector<9x9xf32> -> vector<9x9xf32>
    %cst_47 = arith.constant 0.353553385 : f32
    %75 = vector.broadcast %cst_47 : f32 to vector<9x9xf32>
    %76 = arith.mulf %74, %75 : vector<9x9xf32>
    %77 = vector.broadcast %50 : vector<1x9xf32> to vector<9x9xf32>
    %78 = arith.addf %76, %77 : vector<9x9xf32>
    %cst_48 = arith.constant dense<0xFF800000> : vector<9xf32>
    %79 = vector.multi_reduction <maximumf>, %78, %cst_48 [1] : vector<9x9xf32> to vector<9xf32>
    %80 = vector.shape_cast %79 : vector<9xf32> to vector<9x1xf32>
    %81 = vector.broadcast %80 : vector<9x1xf32> to vector<9x9xf32>
    %82 = arith.subf %78, %81 : vector<9x9xf32>
    %83 = math.exp %82 : vector<9x9xf32>
    %cst_49 = arith.constant dense<0.000000e+00> : vector<9xf32>
    %84 = vector.multi_reduction <add>, %83, %cst_49 [1] : vector<9x9xf32> to vector<9xf32>
    %85 = vector.shape_cast %84 : vector<9xf32> to vector<9x1xf32>
    %86 = tpu.reciprocal %85 {approx = true} : vector<9x1xf32> -> vector<9x1xf32>
    %87 = vector.broadcast %86 : vector<9x1xf32> to vector<9x9xf32>
    %88 = arith.mulf %83, %87 : vector<9x9xf32>
    %cst_50 = arith.constant dense<0.000000e+00> : vector<9x8xf32>
    %89 = tpu.matmul %88, %73, %cst_50 {dimension_numbers = #tpu.dot_dimension_numbers<[1], [0], [0], [1], [0, 0, 1, 1], [], []>} : vector<9x9xf32>, vector<9x8xf32>, vector<9x8xf32> -> vector<9x8xf32>
    %c0_51 = arith.constant 0 : index
    %c8_52 = arith.constant 8 : index
    %90 = vector.load %arg23[%c0_51, %c8_52] : memref<18x32xf32, #tpu.memory_space<vmem>>, vector<9x8xf32>
    tpu.vector_store %arg23[%c0_51, %c8_52], %89 {strides = array<i32>} : memref<18x32xf32, #tpu.memory_space<vmem>>, vector<9x8xf32>,
    %c0_53 = arith.constant 0 : index
    %c16 = arith.constant 16 : index
    %91 = vector.load %arg22[%c0_53, %c16] : memref<18x96xf32, #tpu.memory_space<vmem>>, vector<9x8xf32>
    %c0_54 = arith.constant 0 : index
    %c48 = arith.constant 48 : index
    %92 = vector.load %arg22[%c0_54, %c48] : memref<18x96xf32, #tpu.memory_space<vmem>>, vector<9x8xf32>
    %c0_55 = arith.constant 0 : index
    %c80 = arith.constant 80 : index
    %93 = vector.load %arg22[%c0_55, %c80] : memref<18x96xf32, #tpu.memory_space<vmem>>, vector<9x8xf32>
    %cst_56 = arith.constant dense<0.000000e+00> : vector<9x9xf32>
    %94 = tpu.matmul %91, %92, %cst_56 {dimension_numbers = #tpu.dot_dimension_numbers<[1], [1], [0], [0], [0, 0, 1, 0], [], []>} : vector<9x8xf32>, vector<9x8xf32>, vector<9x9xf32> -> vector<9x9xf32>
    %cst_57 = arith.constant 0.353553385 : f32
    %95 = vector.broadcast %cst_57 : f32 to vector<9x9xf32>
    %96 = arith.mulf %94, %95 : vector<9x9xf32>
    %97 = vector.broadcast %50 : vector<1x9xf32> to vector<9x9xf32>
    %98 = arith.addf %96, %97 : vector<9x9xf32>
    %cst_58 = arith.constant dense<0xFF800000> : vector<9xf32>
    %99 = vector.multi_reduction <maximumf>, %98, %cst_58 [1] : vector<9x9xf32> to vector<9xf32>
    %100 = vector.shape_cast %99 : vector<9xf32> to vector<9x1xf32>
    %101 = vector.broadcast %100 : vector<9x1xf32> to vector<9x9xf32>
    %102 = arith.subf %98, %101 : vector<9x9xf32>
    %103 = math.exp %102 : vector<9x9xf32>
    %cst_59 = arith.constant dense<0.000000e+00> : vector<9xf32>
    %104 = vector.multi_reduction <add>, %103, %cst_59 [1] : vector<9x9xf32> to vector<9xf32>
    %105 = vector.shape_cast %104 : vector<9xf32> to vector<9x1xf32>
    %106 = tpu.reciprocal %105 {approx = true} : vector<9x1xf32> -> vector<9x1xf32>
    %107 = vector.broadcast %106 : vector<9x1xf32> to vector<9x9xf32>
    %108 = arith.mulf %103, %107 : vector<9x9xf32>
    %cst_60 = arith.constant dense<0.000000e+00> : vector<9x8xf32>
    %109 = tpu.matmul %108, %93, %cst_60 {dimension_numbers = #tpu.dot_dimension_numbers<[1], [0], [0], [1], [0, 0, 1, 1], [], []>} : vector<9x9xf32>, vector<9x8xf32>, vector<9x8xf32> -> vector<9x8xf32>
    %c0_61 = arith.constant 0 : index
    %c16_62 = arith.constant 16 : index
    %110 = vector.load %arg23[%c0_61, %c16_62] : memref<18x32xf32, #tpu.memory_space<vmem>>, vector<9x8xf32>
    tpu.vector_store %arg23[%c0_61, %c16_62], %109 {strides = array<i32>} : memref<18x32xf32, #tpu.memory_space<vmem>>, vector<9x8xf32>,
    %c0_63 = arith.constant 0 : index
    %c24 = arith.constant 24 : index
    %111 = vector.load %arg22[%c0_63, %c24] : memref<18x96xf32, #tpu.memory_space<vmem>>, vector<9x8xf32>
    %c0_64 = arith.constant 0 : index
    %c56 = arith.constant 56 : index
    %112 = vector.load %arg22[%c0_64, %c56] : memref<18x96xf32, #tpu.memory_space<vmem>>, vector<9x8xf32>
    %c0_65 = arith.constant 0 : index
    %c88 = arith.constant 88 : index
    %113 = vector.load %arg22[%c0_65, %c88] : memref<18x96xf32, #tpu.memory_space<vmem>>, vector<9x8xf32>
    %cst_66 = arith.constant dense<0.000000e+00> : vector<9x9xf32>
    %114 = tpu.matmul %111, %112, %cst_66 {dimension_numbers = #tpu.dot_dimension_numbers<[1], [1], [0], [0], [0, 0, 1, 0], [], []>} : vector<9x8xf32>, vector<9x8xf32>, vector<9x9xf32> -> vector<9x9xf32>
    %cst_67 = arith.constant 0.353553385 : f32
    %115 = vector.broadcast %cst_67 : f32 to vector<9x9xf32>
    %116 = arith.mulf %114, %115 : vector<9x9xf32>
    %117 = vector.broadcast %50 : vector<1x9xf32> to vector<9x9xf32>
    %118 = arith.addf %116, %117 : vector<9x9xf32>
    %cst_68 = arith.constant dense<0xFF800000> : vector<9xf32>
    %119 = vector.multi_reduction <maximumf>, %118, %cst_68 [1] : vector<9x9xf32> to vector<9xf32>
    %120 = vector.shape_cast %119 : vector<9xf32> to vector<9x1xf32>
    %121 = vector.broadcast %120 : vector<9x1xf32> to vector<9x9xf32>
    %122 = arith.subf %118, %121 : vector<9x9xf32>
    %123 = math.exp %122 : vector<9x9xf32>
    %cst_69 = arith.constant dense<0.000000e+00> : vector<9xf32>
    %124 = vector.multi_reduction <add>, %123, %cst_69 [1] : vector<9x9xf32> to vector<9xf32>
    %125 = vector.shape_cast %124 : vector<9xf32> to vector<9x1xf32>
    %126 = tpu.reciprocal %125 {approx = true} : vector<9x1xf32> -> vector<9x1xf32>
    %127 = vector.broadcast %126 : vector<9x1xf32> to vector<9x9xf32>
    %128 = arith.mulf %123, %127 : vector<9x9xf32>
    %cst_70 = arith.constant dense<0.000000e+00> : vector<9x8xf32>
    %129 = tpu.matmul %128, %113, %cst_70 {dimension_numbers = #tpu.dot_dimension_numbers<[1], [0], [0], [1], [0, 0, 1, 1], [], []>} : vector<9x9xf32>, vector<9x8xf32>, vector<9x8xf32> -> vector<9x8xf32>
    %c0_71 = arith.constant 0 : index
    %c24_72 = arith.constant 24 : index
    %130 = vector.load %arg23[%c0_71, %c24_72] : memref<18x32xf32, #tpu.memory_space<vmem>>, vector<9x8xf32>
    tpu.vector_store %arg23[%c0_71, %c24_72], %129 {strides = array<i32>} : memref<18x32xf32, #tpu.memory_space<vmem>>, vector<9x8xf32>,
    %c1 = arith.constant 1 : index
    %c0_73 = arith.constant 0 : index
    %131 = vector.load %arg3[%c1, %c0_73] : memref<2x9xf32, #tpu.memory_space<vmem>>, vector<1x9xf32>
    %c9 = arith.constant 9 : index
    %c0_74 = arith.constant 0 : index
    %132 = vector.load %arg22[%c9, %c0_74] : memref<18x96xf32, #tpu.memory_space<vmem>>, vector<9x8xf32>
    %c9_75 = arith.constant 9 : index
    %c32_76 = arith.constant 32 : index
    %133 = vector.load %arg22[%c9_75, %c32_76] : memref<18x96xf32, #tpu.memory_space<vmem>>, vector<9x8xf32>
    %c9_77 = arith.constant 9 : index
    %c64_78 = arith.constant 64 : index
    %134 = vector.load %arg22[%c9_77, %c64_78] : memref<18x96xf32, #tpu.memory_space<vmem>>, vector<9x8xf32>
    %cst_79 = arith.constant dense<0.000000e+00> : vector<9x9xf32>
    %135 = tpu.matmul %132, %133, %cst_79 {dimension_numbers = #tpu.dot_dimension_numbers<[1], [1], [0], [0], [0, 0, 1, 0], [], []>} : vector<9x8xf32>, vector<9x8xf32>, vector<9x9xf32> -> vector<9x9xf32>
    %cst_80 = arith.constant 0.353553385 : f32
    %136 = vector.broadcast %cst_80 : f32 to vector<9x9xf32>
    %137 = arith.mulf %135, %136 : vector<9x9xf32>
    %138 = vector.broadcast %131 : vector<1x9xf32> to vector<9x9xf32>
    %139 = arith.addf %137, %138 : vector<9x9xf32>
    %cst_81 = arith.constant dense<0xFF800000> : vector<9xf32>
    %140 = vector.multi_reduction <maximumf>, %139, %cst_81 [1] : vector<9x9xf32> to vector<9xf32>
    %141 = vector.shape_cast %140 : vector<9xf32> to vector<9x1xf32>
    %142 = vector.broadcast %141 : vector<9x1xf32> to vector<9x9xf32>
    %143 = arith.subf %139, %142 : vector<9x9xf32>
    %144 = math.exp %143 : vector<9x9xf32>
    %cst_82 = arith.constant dense<0.000000e+00> : vector<9xf32>
    %145 = vector.multi_reduction <add>, %144, %cst_82 [1] : vector<9x9xf32> to vector<9xf32>
    %146 = vector.shape_cast %145 : vector<9xf32> to vector<9x1xf32>
    %147 = tpu.reciprocal %146 {approx = true} : vector<9x1xf32> -> vector<9x1xf32>
    %148 = vector.broadcast %147 : vector<9x1xf32> to vector<9x9xf32>
    %149 = arith.mulf %144, %148 : vector<9x9xf32>
    %cst_83 = arith.constant dense<0.000000e+00> : vector<9x8xf32>
    %150 = tpu.matmul %149, %134, %cst_83 {dimension_numbers = #tpu.dot_dimension_numbers<[1], [0], [0], [1], [0, 0, 1, 1], [], []>} : vector<9x9xf32>, vector<9x8xf32>, vector<9x8xf32> -> vector<9x8xf32>
    %c9_84 = arith.constant 9 : index
    %c0_85 = arith.constant 0 : index
    %151 = vector.load %arg23[%c9_84, %c0_85] : memref<18x32xf32, #tpu.memory_space<vmem>>, vector<9x8xf32>
    tpu.vector_store %arg23[%c9_84, %c0_85], %150 {strides = array<i32>} : memref<18x32xf32, #tpu.memory_space<vmem>>, vector<9x8xf32>,
    %c9_86 = arith.constant 9 : index
    %c8_87 = arith.constant 8 : index
    %152 = vector.load %arg22[%c9_86, %c8_87] : memref<18x96xf32, #tpu.memory_space<vmem>>, vector<9x8xf32>
    %c9_88 = arith.constant 9 : index
    %c40_89 = arith.constant 40 : index
    %153 = vector.load %arg22[%c9_88, %c40_89] : memref<18x96xf32, #tpu.memory_space<vmem>>, vector<9x8xf32>
    %c9_90 = arith.constant 9 : index
    %c72_91 = arith.constant 72 : index
    %154 = vector.load %arg22[%c9_90, %c72_91] : memref<18x96xf32, #tpu.memory_space<vmem>>, vector<9x8xf32>
    %cst_92 = arith.constant dense<0.000000e+00> : vector<9x9xf32>
    %155 = tpu.matmul %152, %153, %cst_92 {dimension_numbers = #tpu.dot_dimension_numbers<[1], [1], [0], [0], [0, 0, 1, 0], [], []>} : vector<9x8xf32>, vector<9x8xf32>, vector<9x9xf32> -> vector<9x9xf32>
    %cst_93 = arith.constant 0.353553385 : f32
    %156 = vector.broadcast %cst_93 : f32 to vector<9x9xf32>
    %157 = arith.mulf %155, %156 : vector<9x9xf32>
    %158 = vector.broadcast %131 : vector<1x9xf32> to vector<9x9xf32>
    %159 = arith.addf %157, %158 : vector<9x9xf32>
    %cst_94 = arith.constant dense<0xFF800000> : vector<9xf32>
    %160 = vector.multi_reduction <maximumf>, %159, %cst_94 [1] : vector<9x9xf32> to vector<9xf32>
    %161 = vector.shape_cast %160 : vector<9xf32> to vector<9x1xf32>
    %162 = vector.broadcast %161 : vector<9x1xf32> to vector<9x9xf32>
    %163 = arith.subf %159, %162 : vector<9x9xf32>
    %164 = math.exp %163 : vector<9x9xf32>
    %cst_95 = arith.constant dense<0.000000e+00> : vector<9xf32>
    %165 = vector.multi_reduction <add>, %164, %cst_95 [1] : vector<9x9xf32> to vector<9xf32>
    %166 = vector.shape_cast %165 : vector<9xf32> to vector<9x1xf32>
    %167 = tpu.reciprocal %166 {approx = true} : vector<9x1xf32> -> vector<9x1xf32>
    %168 = vector.broadcast %167 : vector<9x1xf32> to vector<9x9xf32>
    %169 = arith.mulf %164, %168 : vector<9x9xf32>
    %cst_96 = arith.constant dense<0.000000e+00> : vector<9x8xf32>
    %170 = tpu.matmul %169, %154, %cst_96 {dimension_numbers = #tpu.dot_dimension_numbers<[1], [0], [0], [1], [0, 0, 1, 1], [], []>} : vector<9x9xf32>, vector<9x8xf32>, vector<9x8xf32> -> vector<9x8xf32>
    %c9_97 = arith.constant 9 : index
    %c8_98 = arith.constant 8 : index
    %171 = vector.load %arg23[%c9_97, %c8_98] : memref<18x32xf32, #tpu.memory_space<vmem>>, vector<9x8xf32>
    tpu.vector_store %arg23[%c9_97, %c8_98], %170 {strides = array<i32>} : memref<18x32xf32, #tpu.memory_space<vmem>>, vector<9x8xf32>,
    %c9_99 = arith.constant 9 : index
    %c16_100 = arith.constant 16 : index
    %172 = vector.load %arg22[%c9_99, %c16_100] : memref<18x96xf32, #tpu.memory_space<vmem>>, vector<9x8xf32>
    %c9_101 = arith.constant 9 : index
    %c48_102 = arith.constant 48 : index
    %173 = vector.load %arg22[%c9_101, %c48_102] : memref<18x96xf32, #tpu.memory_space<vmem>>, vector<9x8xf32>
    %c9_103 = arith.constant 9 : index
    %c80_104 = arith.constant 80 : index
    %174 = vector.load %arg22[%c9_103, %c80_104] : memref<18x96xf32, #tpu.memory_space<vmem>>, vector<9x8xf32>
    %cst_105 = arith.constant dense<0.000000e+00> : vector<9x9xf32>
    %175 = tpu.matmul %172, %173, %cst_105 {dimension_numbers = #tpu.dot_dimension_numbers<[1], [1], [0], [0], [0, 0, 1, 0], [], []>} : vector<9x8xf32>, vector<9x8xf32>, vector<9x9xf32> -> vector<9x9xf32>
    %cst_106 = arith.constant 0.353553385 : f32
    %176 = vector.broadcast %cst_106 : f32 to vector<9x9xf32>
    %177 = arith.mulf %175, %176 : vector<9x9xf32>
    %178 = vector.broadcast %131 : vector<1x9xf32> to vector<9x9xf32>
    %179 = arith.addf %177, %178 : vector<9x9xf32>
    %cst_107 = arith.constant dense<0xFF800000> : vector<9xf32>
    %180 = vector.multi_reduction <maximumf>, %179, %cst_107 [1] : vector<9x9xf32> to vector<9xf32>
    %181 = vector.shape_cast %180 : vector<9xf32> to vector<9x1xf32>
    %182 = vector.broadcast %181 : vector<9x1xf32> to vector<9x9xf32>
    %183 = arith.subf %179, %182 : vector<9x9xf32>
    %184 = math.exp %183 : vector<9x9xf32>
    %cst_108 = arith.constant dense<0.000000e+00> : vector<9xf32>
    %185 = vector.multi_reduction <add>, %184, %cst_108 [1] : vector<9x9xf32> to vector<9xf32>
    %186 = vector.shape_cast %185 : vector<9xf32> to vector<9x1xf32>
    %187 = tpu.reciprocal %186 {approx = true} : vector<9x1xf32> -> vector<9x1xf32>
    %188 = vector.broadcast %187 : vector<9x1xf32> to vector<9x9xf32>
    %189 = arith.mulf %184, %188 : vector<9x9xf32>
    %cst_109 = arith.constant dense<0.000000e+00> : vector<9x8xf32>
    %190 = tpu.matmul %189, %174, %cst_109 {dimension_numbers = #tpu.dot_dimension_numbers<[1], [0], [0], [1], [0, 0, 1, 1], [], []>} : vector<9x9xf32>, vector<9x8xf32>, vector<9x8xf32> -> vector<9x8xf32>
    %c9_110 = arith.constant 9 : index
    %c16_111 = arith.constant 16 : index
    %191 = vector.load %arg23[%c9_110, %c16_111] : memref<18x32xf32, #tpu.memory_space<vmem>>, vector<9x8xf32>
    tpu.vector_store %arg23[%c9_110, %c16_111], %190 {strides = array<i32>} : memref<18x32xf32, #tpu.memory_space<vmem>>, vector<9x8xf32>,
    %c9_112 = arith.constant 9 : index
    %c24_113 = arith.constant 24 : index
    %192 = vector.load %arg22[%c9_112, %c24_113] : memref<18x96xf32, #tpu.memory_space<vmem>>, vector<9x8xf32>
    %c9_114 = arith.constant 9 : index
    %c56_115 = arith.constant 56 : index
    %193 = vector.load %arg22[%c9_114, %c56_115] : memref<18x96xf32, #tpu.memory_space<vmem>>, vector<9x8xf32>
    %c9_116 = arith.constant 9 : index
    %c88_117 = arith.constant 88 : index
    %194 = vector.load %arg22[%c9_116, %c88_117] : memref<18x96xf32, #tpu.memory_space<vmem>>, vector<9x8xf32>
    %cst_118 = arith.constant dense<0.000000e+00> : vector<9x9xf32>
    %195 = tpu.matmul %192, %193, %cst_118 {dimension_numbers = #tpu.dot_dimension_numbers<[1], [1], [0], [0], [0, 0, 1, 0], [], []>} : vector<9x8xf32>, vector<9x8xf32>, vector<9x9xf32> -> vector<9x9xf32>
    %cst_119 = arith.constant 0.353553385 : f32
    %196 = vector.broadcast %cst_119 : f32 to vector<9x9xf32>
    %197 = arith.mulf %195, %196 : vector<9x9xf32>
    %198 = vector.broadcast %131 : vector<1x9xf32> to vector<9x9xf32>
    %199 = arith.addf %197, %198 : vector<9x9xf32>
    %cst_120 = arith.constant dense<0xFF800000> : vector<9xf32>
    %200 = vector.multi_reduction <maximumf>, %199, %cst_120 [1] : vector<9x9xf32> to vector<9xf32>
    %201 = vector.shape_cast %200 : vector<9xf32> to vector<9x1xf32>
    %202 = vector.broadcast %201 : vector<9x1xf32> to vector<9x9xf32>
    %203 = arith.subf %199, %202 : vector<9x9xf32>
    %204 = math.exp %203 : vector<9x9xf32>
    %cst_121 = arith.constant dense<0.000000e+00> : vector<9xf32>
    %205 = vector.multi_reduction <add>, %204, %cst_121 [1] : vector<9x9xf32> to vector<9xf32>
    %206 = vector.shape_cast %205 : vector<9xf32> to vector<9x1xf32>
    %207 = tpu.reciprocal %206 {approx = true} : vector<9x1xf32> -> vector<9x1xf32>
    %208 = vector.broadcast %207 : vector<9x1xf32> to vector<9x9xf32>
    %209 = arith.mulf %204, %208 : vector<9x9xf32>
    %cst_122 = arith.constant dense<0.000000e+00> : vector<9x8xf32>
    %210 = tpu.matmul %209, %194, %cst_122 {dimension_numbers = #tpu.dot_dimension_numbers<[1], [0], [0], [1], [0, 0, 1, 1], [], []>} : vector<9x9xf32>, vector<9x8xf32>, vector<9x8xf32> -> vector<9x8xf32>
    %c9_123 = arith.constant 9 : index
    %c24_124 = arith.constant 24 : index
    %211 = vector.load %arg23[%c9_123, %c24_124] : memref<18x32xf32, #tpu.memory_space<vmem>>, vector<9x8xf32>
    tpu.vector_store %arg23[%c9_123, %c24_124], %210 {strides = array<i32>} : memref<18x32xf32, #tpu.memory_space<vmem>>, vector<9x8xf32>,
    %c0_125 = arith.constant 0 : index
    %c0_126 = arith.constant 0 : index
    %212 = vector.load %arg23[%c0_125, %c0_126] : memref<18x32xf32, #tpu.memory_space<vmem>>, vector<18x32xf32>
    %c0_127 = arith.constant 0 : index
    %c0_128 = arith.constant 0 : index
    %c0_129 = arith.constant 0 : index
    %213 = vector.load %arg11[%c0_127, %c0_128, %c0_129] : memref<2x32x32xf32, #tpu.memory_space<vmem>>, vector<1x32x32xf32>
    %214 = vector.shape_cast %213 : vector<1x32x32xf32> to vector<32x32xf32>
    %cst_130 = arith.constant dense<0.000000e+00> : vector<18x32xf32>
    %215 = tpu.matmul %212, %214, %cst_130 {dimension_numbers = #tpu.dot_dimension_numbers<[1], [0], [0], [1], [0, 0, 1, 1], [], []>} : vector<18x32xf32>, vector<32x32xf32>, vector<18x32xf32> -> vector<18x32xf32>
    %c0_131 = arith.constant 0 : index
    %c0_132 = arith.constant 0 : index
    %c0_133 = arith.constant 0 : index
    %216 = vector.load %arg12[%c0_131, %c0_132, %c0_133] : memref<2x1x32xf32, #tpu.memory_space<vmem>>, vector<1x1x32xf32>
    %217 = vector.shape_cast %216 : vector<1x1x32xf32> to vector<1x32xf32>
    %218 = vector.broadcast %217 : vector<1x32xf32> to vector<18x32xf32>
    %219 = arith.addf %215, %218 : vector<18x32xf32>
    %220 = arith.addf %41, %219 : vector<18x32xf32>
    %c0_134 = arith.constant 0 : index
    %c0_135 = arith.constant 0 : index
    %c0_136 = arith.constant 0 : index
    %221 = vector.load %arg13[%c0_134, %c0_135, %c0_136] : memref<2x1x32xf32, #tpu.memory_space<vmem>>, vector<1x1x32xf32>
    %222 = vector.shape_cast %221 : vector<1x1x32xf32> to vector<1x32xf32>
    %c0_137 = arith.constant 0 : index
    %c0_138 = arith.constant 0 : index
    %c0_139 = arith.constant 0 : index
    %223 = vector.load %arg14[%c0_137, %c0_138, %c0_139] : memref<2x1x32xf32, #tpu.memory_space<vmem>>, vector<1x1x32xf32>
    %224 = vector.shape_cast %223 : vector<1x1x32xf32> to vector<1x32xf32>
    %cst_140 = arith.constant dense<0.000000e+00> : vector<18xf32>
    %225 = vector.multi_reduction <add>, %220, %cst_140 [1] : vector<18x32xf32> to vector<18xf32>
    %226 = vector.shape_cast %225 : vector<18xf32> to vector<18x1xf32>
    %cst_141 = arith.constant 3.200000e+01 : f32
    %227 = vector.broadcast %cst_141 : f32 to vector<18x1xf32>
    %228 = arith.divf %226, %227 : vector<18x1xf32>
    %229 = vector.broadcast %228 : vector<18x1xf32> to vector<18x32xf32>
    %230 = arith.subf %220, %229 : vector<18x32xf32>
    %231 = arith.mulf %230, %230 : vector<18x32xf32>
    %cst_142 = arith.constant dense<0.000000e+00> : vector<18xf32>
    %232 = vector.multi_reduction <add>, %231, %cst_142 [1] : vector<18x32xf32> to vector<18xf32>
    %233 = vector.shape_cast %232 : vector<18xf32> to vector<18x1xf32>
    %cst_143 = arith.constant 3.200000e+01 : f32
    %234 = vector.broadcast %cst_143 : f32 to vector<18x1xf32>
    %235 = arith.divf %233, %234 : vector<18x1xf32>
    %236 = vector.broadcast %228 : vector<18x1xf32> to vector<18x32xf32>
    %237 = arith.subf %220, %236 : vector<18x32xf32>
    %cst_144 = arith.constant 9.99999996E-13 : f32
    %238 = vector.broadcast %cst_144 : f32 to vector<18x1xf32>
    %239 = arith.addf %235, %238 : vector<18x1xf32>
    %240 = math.rsqrt %239 : vector<18x1xf32>
    %241 = vector.broadcast %240 : vector<18x1xf32> to vector<18x32xf32>
    %242 = arith.mulf %237, %241 : vector<18x32xf32>
    %243 = vector.broadcast %222 : vector<1x32xf32> to vector<18x32xf32>
    %244 = arith.mulf %242, %243 : vector<18x32xf32>
    %245 = vector.broadcast %224 : vector<1x32xf32> to vector<18x32xf32>
    %246 = arith.addf %244, %245 : vector<18x32xf32>
    %c0_145 = arith.constant 0 : index
    %c0_146 = arith.constant 0 : index
    %c0_147 = arith.constant 0 : index
    %247 = vector.load %arg15[%c0_145, %c0_146, %c0_147] : memref<2x32x64xf32, #tpu.memory_space<vmem>>, vector<1x32x64xf32>
    %248 = vector.shape_cast %247 : vector<1x32x64xf32> to vector<32x64xf32>
    %cst_148 = arith.constant dense<0.000000e+00> : vector<18x64xf32>
    %249 = tpu.matmul %246, %248, %cst_148 {dimension_numbers = #tpu.dot_dimension_numbers<[1], [0], [0], [1], [0, 0, 1, 1], [], []>} : vector<18x32xf32>, vector<32x64xf32>, vector<18x64xf32> -> vector<18x64xf32>
    %c0_149 = arith.constant 0 : index
    %c0_150 = arith.constant 0 : index
    %c0_151 = arith.constant 0 : index
    %250 = vector.load %arg16[%c0_149, %c0_150, %c0_151] : memref<2x1x64xf32, #tpu.memory_space<vmem>>, vector<1x1x64xf32>
    %251 = vector.shape_cast %250 : vector<1x1x64xf32> to vector<1x64xf32>
    %252 = vector.broadcast %251 : vector<1x64xf32> to vector<18x64xf32>
    %253 = arith.addf %249, %252 : vector<18x64xf32>
    %254 = arith.mulf %253, %253 : vector<18x64xf32>
    %255 = arith.mulf %253, %254 : vector<18x64xf32>
    %cst_152 = arith.constant 4.471500e-02 : f32
    %256 = vector.broadcast %cst_152 : f32 to vector<18x64xf32>
    %257 = arith.mulf %256, %255 : vector<18x64xf32>
    %258 = arith.addf %253, %257 : vector<18x64xf32>
    %cst_153 = arith.constant 0.797884583 : f32
    %259 = vector.broadcast %cst_153 : f32 to vector<18x64xf32>
    %260 = arith.mulf %259, %258 : vector<18x64xf32>
    %261 = math.tanh %260 : vector<18x64xf32>
    %cst_154 = arith.constant 1.000000e+00 : f32
    %262 = vector.broadcast %cst_154 : f32 to vector<18x64xf32>
    %263 = arith.addf %262, %261 : vector<18x64xf32>
    %cst_155 = arith.constant 5.000000e-01 : f32
    %264 = vector.broadcast %cst_155 : f32 to vector<18x64xf32>
    %265 = arith.mulf %264, %263 : vector<18x64xf32>
    %266 = arith.mulf %253, %265 : vector<18x64xf32>
    %c0_156 = arith.constant 0 : index
    %c0_157 = arith.constant 0 : index
    %c0_158 = arith.constant 0 : index
    %267 = vector.load %arg17[%c0_156, %c0_157, %c0_158] : memref<2x64x32xf32, #tpu.memory_space<vmem>>, vector<1x64x32xf32>
    %268 = vector.shape_cast %267 : vector<1x64x32xf32> to vector<64x32xf32>
    %cst_159 = arith.constant dense<0.000000e+00> : vector<18x32xf32>
    %269 = tpu.matmul %266, %268, %cst_159 {dimension_numbers = #tpu.dot_dimension_numbers<[1], [0], [0], [1], [0, 0, 1, 1], [], []>} : vector<18x64xf32>, vector<64x32xf32>, vector<18x32xf32> -> vector<18x32xf32>
    %c0_160 = arith.constant 0 : index
    %c0_161 = arith.constant 0 : index
    %c0_162 = arith.constant 0 : index
    %270 = vector.load %arg18[%c0_160, %c0_161, %c0_162] : memref<2x1x32xf32, #tpu.memory_space<vmem>>, vector<1x1x32xf32>
    %271 = vector.shape_cast %270 : vector<1x1x32xf32> to vector<1x32xf32>
    %272 = vector.broadcast %271 : vector<1x32xf32> to vector<18x32xf32>
    %273 = arith.addf %269, %272 : vector<18x32xf32>
    %274 = arith.addf %246, %273 : vector<18x32xf32>
    %c0_163 = arith.constant 0 : index
    %c0_164 = arith.constant 0 : index
    %c0_165 = arith.constant 0 : index
    %275 = vector.load %arg19[%c0_163, %c0_164, %c0_165] : memref<2x1x32xf32, #tpu.memory_space<vmem>>, vector<1x1x32xf32>
    %276 = vector.shape_cast %275 : vector<1x1x32xf32> to vector<1x32xf32>
    %c0_166 = arith.constant 0 : index
    %c0_167 = arith.constant 0 : index
    %c0_168 = arith.constant 0 : index
    %277 = vector.load %arg20[%c0_166, %c0_167, %c0_168] : memref<2x1x32xf32, #tpu.memory_space<vmem>>, vector<1x1x32xf32>
    %278 = vector.shape_cast %277 : vector<1x1x32xf32> to vector<1x32xf32>
    %cst_169 = arith.constant dense<0.000000e+00> : vector<18xf32>
    %279 = vector.multi_reduction <add>, %274, %cst_169 [1] : vector<18x32xf32> to vector<18xf32>
    %280 = vector.shape_cast %279 : vector<18xf32> to vector<18x1xf32>
    %cst_170 = arith.constant 3.200000e+01 : f32
    %281 = vector.broadcast %cst_170 : f32 to vector<18x1xf32>
    %282 = arith.divf %280, %281 : vector<18x1xf32>
    %283 = vector.broadcast %282 : vector<18x1xf32> to vector<18x32xf32>
    %284 = arith.subf %274, %283 : vector<18x32xf32>
    %285 = arith.mulf %284, %284 : vector<18x32xf32>
    %cst_171 = arith.constant dense<0.000000e+00> : vector<18xf32>
    %286 = vector.multi_reduction <add>, %285, %cst_171 [1] : vector<18x32xf32> to vector<18xf32>
    %287 = vector.shape_cast %286 : vector<18xf32> to vector<18x1xf32>
    %cst_172 = arith.constant 3.200000e+01 : f32
    %288 = vector.broadcast %cst_172 : f32 to vector<18x1xf32>
    %289 = arith.divf %287, %288 : vector<18x1xf32>
    %290 = vector.broadcast %282 : vector<18x1xf32> to vector<18x32xf32>
    %291 = arith.subf %274, %290 : vector<18x32xf32>
    %cst_173 = arith.constant 9.99999996E-13 : f32
    %292 = vector.broadcast %cst_173 : f32 to vector<18x1xf32>
    %293 = arith.addf %289, %292 : vector<18x1xf32>
    %294 = math.rsqrt %293 : vector<18x1xf32>
    %295 = vector.broadcast %294 : vector<18x1xf32> to vector<18x32xf32>
    %296 = arith.mulf %291, %295 : vector<18x32xf32>
    %297 = vector.broadcast %276 : vector<1x32xf32> to vector<18x32xf32>
    %298 = arith.mulf %296, %297 : vector<18x32xf32>
    %299 = vector.broadcast %278 : vector<1x32xf32> to vector<18x32xf32>
    %300 = arith.addf %298, %299 : vector<18x32xf32>
    %c1_174 = arith.constant 1 : index
    %c0_175 = arith.constant 0 : index
    %c0_176 = arith.constant 0 : index
    %301 = vector.load %arg9[%c1_174, %c0_175, %c0_176] : memref<2x32x96xf32, #tpu.memory_space<vmem>>, vector<1x32x96xf32>
    %302 = vector.shape_cast %301 : vector<1x32x96xf32> to vector<32x96xf32>
    %cst_177 = arith.constant dense<0.000000e+00> : vector<18x96xf32>
    %303 = tpu.matmul %300, %302, %cst_177 {dimension_numbers = #tpu.dot_dimension_numbers<[1], [0], [0], [1], [0, 0, 1, 1], [], []>} : vector<18x32xf32>, vector<32x96xf32>, vector<18x96xf32> -> vector<18x96xf32>
    %c1_178 = arith.constant 1 : index
    %c0_179 = arith.constant 0 : index
    %c0_180 = arith.constant 0 : index
    %304 = vector.load %arg10[%c1_178, %c0_179, %c0_180] : memref<2x1x96xf32, #tpu.memory_space<vmem>>, vector<1x1x96xf32>
    %305 = vector.shape_cast %304 : vector<1x1x96xf32> to vector<1x96xf32>
    %306 = vector.broadcast %305 : vector<1x96xf32> to vector<18x96xf32>
    %307 = arith.addf %303, %306 : vector<18x96xf32>
    %c0_181 = arith.constant 0 : index
    %c0_182 = arith.constant 0 : index
    %308 = vector.load %arg22[%c0_181, %c0_182] : memref<18x96xf32, #tpu.memory_space<vmem>>, vector<18x96xf32>
    tpu.vector_store %arg22[%c0_181, %c0_182], %307 {strides = array<i32>} : memref<18x96xf32, #tpu.memory_space<vmem>>, vector<18x96xf32>,
    %c0_183 = arith.constant 0 : index
    %c0_184 = arith.constant 0 : index
    %309 = vector.load %arg3[%c0_183, %c0_184] : memref<2x9xf32, #tpu.memory_space<vmem>>, vector<1x9xf32>
    %c0_185 = arith.constant 0 : index
    %c0_186 = arith.constant 0 : index
    %310 = vector.load %arg22[%c0_185, %c0_186] : memref<18x96xf32, #tpu.memory_space<vmem>>, vector<9x8xf32>
    %c0_187 = arith.constant 0 : index
    %c32_188 = arith.constant 32 : index
    %311 = vector.load %arg22[%c0_187, %c32_188] : memref<18x96xf32, #tpu.memory_space<vmem>>, vector<9x8xf32>
    %c0_189 = arith.constant 0 : index
    %c64_190 = arith.constant 64 : index
    %312 = vector.load %arg22[%c0_189, %c64_190] : memref<18x96xf32, #tpu.memory_space<vmem>>, vector<9x8xf32>
    %cst_191 = arith.constant dense<0.000000e+00> : vector<9x9xf32>
    %313 = tpu.matmul %310, %311, %cst_191 {dimension_numbers = #tpu.dot_dimension_numbers<[1], [1], [0], [0], [0, 0, 1, 0], [], []>} : vector<9x8xf32>, vector<9x8xf32>, vector<9x9xf32> -> vector<9x9xf32>
    %cst_192 = arith.constant 0.353553385 : f32
    %314 = vector.broadcast %cst_192 : f32 to vector<9x9xf32>
    %315 = arith.mulf %313, %314 : vector<9x9xf32>
    %316 = vector.broadcast %309 : vector<1x9xf32> to vector<9x9xf32>
    %317 = arith.addf %315, %316 : vector<9x9xf32>
    %cst_193 = arith.constant dense<0xFF800000> : vector<9xf32>
    %318 = vector.multi_reduction <maximumf>, %317, %cst_193 [1] : vector<9x9xf32> to vector<9xf32>
    %319 = vector.shape_cast %318 : vector<9xf32> to vector<9x1xf32>
    %320 = vector.broadcast %319 : vector<9x1xf32> to vector<9x9xf32>
    %321 = arith.subf %317, %320 : vector<9x9xf32>
    %322 = math.exp %321 : vector<9x9xf32>
    %cst_194 = arith.constant dense<0.000000e+00> : vector<9xf32>
    %323 = vector.multi_reduction <add>, %322, %cst_194 [1] : vector<9x9xf32> to vector<9xf32>
    %324 = vector.shape_cast %323 : vector<9xf32> to vector<9x1xf32>
    %325 = tpu.reciprocal %324 {approx = true} : vector<9x1xf32> -> vector<9x1xf32>
    %326 = vector.broadcast %325 : vector<9x1xf32> to vector<9x9xf32>
    %327 = arith.mulf %322, %326 : vector<9x9xf32>
    %cst_195 = arith.constant dense<0.000000e+00> : vector<9x8xf32>
    %328 = tpu.matmul %327, %312, %cst_195 {dimension_numbers = #tpu.dot_dimension_numbers<[1], [0], [0], [1], [0, 0, 1, 1], [], []>} : vector<9x9xf32>, vector<9x8xf32>, vector<9x8xf32> -> vector<9x8xf32>
    %c0_196 = arith.constant 0 : index
    %c0_197 = arith.constant 0 : index
    %329 = vector.load %arg23[%c0_196, %c0_197] : memref<18x32xf32, #tpu.memory_space<vmem>>, vector<9x8xf32>
    tpu.vector_store %arg23[%c0_196, %c0_197], %328 {strides = array<i32>} : memref<18x32xf32, #tpu.memory_space<vmem>>, vector<9x8xf32>,
    %c0_198 = arith.constant 0 : index
    %c8_199 = arith.constant 8 : index
    %330 = vector.load %arg22[%c0_198, %c8_199] : memref<18x96xf32, #tpu.memory_space<vmem>>, vector<9x8xf32>
    %c0_200 = arith.constant 0 : index
    %c40_201 = arith.constant 40 : index
    %331 = vector.load %arg22[%c0_200, %c40_201] : memref<18x96xf32, #tpu.memory_space<vmem>>, vector<9x8xf32>
    %c0_202 = arith.constant 0 : index
    %c72_203 = arith.constant 72 : index
    %332 = vector.load %arg22[%c0_202, %c72_203] : memref<18x96xf32, #tpu.memory_space<vmem>>, vector<9x8xf32>
    %cst_204 = arith.constant dense<0.000000e+00> : vector<9x9xf32>
    %333 = tpu.matmul %330, %331, %cst_204 {dimension_numbers = #tpu.dot_dimension_numbers<[1], [1], [0], [0], [0, 0, 1, 0], [], []>} : vector<9x8xf32>, vector<9x8xf32>, vector<9x9xf32> -> vector<9x9xf32>
    %cst_205 = arith.constant 0.353553385 : f32
    %334 = vector.broadcast %cst_205 : f32 to vector<9x9xf32>
    %335 = arith.mulf %333, %334 : vector<9x9xf32>
    %336 = vector.broadcast %309 : vector<1x9xf32> to vector<9x9xf32>
    %337 = arith.addf %335, %336 : vector<9x9xf32>
    %cst_206 = arith.constant dense<0xFF800000> : vector<9xf32>
    %338 = vector.multi_reduction <maximumf>, %337, %cst_206 [1] : vector<9x9xf32> to vector<9xf32>
    %339 = vector.shape_cast %338 : vector<9xf32> to vector<9x1xf32>
    %340 = vector.broadcast %339 : vector<9x1xf32> to vector<9x9xf32>
    %341 = arith.subf %337, %340 : vector<9x9xf32>
    %342 = math.exp %341 : vector<9x9xf32>
    %cst_207 = arith.constant dense<0.000000e+00> : vector<9xf32>
    %343 = vector.multi_reduction <add>, %342, %cst_207 [1] : vector<9x9xf32> to vector<9xf32>
    %344 = vector.shape_cast %343 : vector<9xf32> to vector<9x1xf32>
    %345 = tpu.reciprocal %344 {approx = true} : vector<9x1xf32> -> vector<9x1xf32>
    %346 = vector.broadcast %345 : vector<9x1xf32> to vector<9x9xf32>
    %347 = arith.mulf %342, %346 : vector<9x9xf32>
    %cst_208 = arith.constant dense<0.000000e+00> : vector<9x8xf32>
    %348 = tpu.matmul %347, %332, %cst_208 {dimension_numbers = #tpu.dot_dimension_numbers<[1], [0], [0], [1], [0, 0, 1, 1], [], []>} : vector<9x9xf32>, vector<9x8xf32>, vector<9x8xf32> -> vector<9x8xf32>
    %c0_209 = arith.constant 0 : index
    %c8_210 = arith.constant 8 : index
    %349 = vector.load %arg23[%c0_209, %c8_210] : memref<18x32xf32, #tpu.memory_space<vmem>>, vector<9x8xf32>
    tpu.vector_store %arg23[%c0_209, %c8_210], %348 {strides = array<i32>} : memref<18x32xf32, #tpu.memory_space<vmem>>, vector<9x8xf32>,
    %c0_211 = arith.constant 0 : index
    %c16_212 = arith.constant 16 : index
    %350 = vector.load %arg22[%c0_211, %c16_212] : memref<18x96xf32, #tpu.memory_space<vmem>>, vector<9x8xf32>
    %c0_213 = arith.constant 0 : index
    %c48_214 = arith.constant 48 : index
    %351 = vector.load %arg22[%c0_213, %c48_214] : memref<18x96xf32, #tpu.memory_space<vmem>>, vector<9x8xf32>
    %c0_215 = arith.constant 0 : index
    %c80_216 = arith.constant 80 : index
    %352 = vector.load %arg22[%c0_215, %c80_216] : memref<18x96xf32, #tpu.memory_space<vmem>>, vector<9x8xf32>
    %cst_217 = arith.constant dense<0.000000e+00> : vector<9x9xf32>
    %353 = tpu.matmul %350, %351, %cst_217 {dimension_numbers = #tpu.dot_dimension_numbers<[1], [1], [0], [0], [0, 0, 1, 0], [], []>} : vector<9x8xf32>, vector<9x8xf32>, vector<9x9xf32> -> vector<9x9xf32>
    %cst_218 = arith.constant 0.353553385 : f32
    %354 = vector.broadcast %cst_218 : f32 to vector<9x9xf32>
    %355 = arith.mulf %353, %354 : vector<9x9xf32>
    %356 = vector.broadcast %309 : vector<1x9xf32> to vector<9x9xf32>
    %357 = arith.addf %355, %356 : vector<9x9xf32>
    %cst_219 = arith.constant dense<0xFF800000> : vector<9xf32>
    %358 = vector.multi_reduction <maximumf>, %357, %cst_219 [1] : vector<9x9xf32> to vector<9xf32>
    %359 = vector.shape_cast %358 : vector<9xf32> to vector<9x1xf32>
    %360 = vector.broadcast %359 : vector<9x1xf32> to vector<9x9xf32>
    %361 = arith.subf %357, %360 : vector<9x9xf32>
    %362 = math.exp %361 : vector<9x9xf32>
    %cst_220 = arith.constant dense<0.000000e+00> : vector<9xf32>
    %363 = vector.multi_reduction <add>, %362, %cst_220 [1] : vector<9x9xf32> to vector<9xf32>
    %364 = vector.shape_cast %363 : vector<9xf32> to vector<9x1xf32>
    %365 = tpu.reciprocal %364 {approx = true} : vector<9x1xf32> -> vector<9x1xf32>
    %366 = vector.broadcast %365 : vector<9x1xf32> to vector<9x9xf32>
    %367 = arith.mulf %362, %366 : vector<9x9xf32>
    %cst_221 = arith.constant dense<0.000000e+00> : vector<9x8xf32>
    %368 = tpu.matmul %367, %352, %cst_221 {dimension_numbers = #tpu.dot_dimension_numbers<[1], [0], [0], [1], [0, 0, 1, 1], [], []>} : vector<9x9xf32>, vector<9x8xf32>, vector<9x8xf32> -> vector<9x8xf32>
    %c0_222 = arith.constant 0 : index
    %c16_223 = arith.constant 16 : index
    %369 = vector.load %arg23[%c0_222, %c16_223] : memref<18x32xf32, #tpu.memory_space<vmem>>, vector<9x8xf32>
    tpu.vector_store %arg23[%c0_222, %c16_223], %368 {strides = array<i32>} : memref<18x32xf32, #tpu.memory_space<vmem>>, vector<9x8xf32>,
    %c0_224 = arith.constant 0 : index
    %c24_225 = arith.constant 24 : index
    %370 = vector.load %arg22[%c0_224, %c24_225] : memref<18x96xf32, #tpu.memory_space<vmem>>, vector<9x8xf32>
    %c0_226 = arith.constant 0 : index
    %c56_227 = arith.constant 56 : index
    %371 = vector.load %arg22[%c0_226, %c56_227] : memref<18x96xf32, #tpu.memory_space<vmem>>, vector<9x8xf32>
    %c0_228 = arith.constant 0 : index
    %c88_229 = arith.constant 88 : index
    %372 = vector.load %arg22[%c0_228, %c88_229] : memref<18x96xf32, #tpu.memory_space<vmem>>, vector<9x8xf32>
    %cst_230 = arith.constant dense<0.000000e+00> : vector<9x9xf32>
    %373 = tpu.matmul %370, %371, %cst_230 {dimension_numbers = #tpu.dot_dimension_numbers<[1], [1], [0], [0], [0, 0, 1, 0], [], []>} : vector<9x8xf32>, vector<9x8xf32>, vector<9x9xf32> -> vector<9x9xf32>
    %cst_231 = arith.constant 0.353553385 : f32
    %374 = vector.broadcast %cst_231 : f32 to vector<9x9xf32>
    %375 = arith.mulf %373, %374 : vector<9x9xf32>
    %376 = vector.broadcast %309 : vector<1x9xf32> to vector<9x9xf32>
    %377 = arith.addf %375, %376 : vector<9x9xf32>
    %cst_232 = arith.constant dense<0xFF800000> : vector<9xf32>
    %378 = vector.multi_reduction <maximumf>, %377, %cst_232 [1] : vector<9x9xf32> to vector<9xf32>
    %379 = vector.shape_cast %378 : vector<9xf32> to vector<9x1xf32>
    %380 = vector.broadcast %379 : vector<9x1xf32> to vector<9x9xf32>
    %381 = arith.subf %377, %380 : vector<9x9xf32>
    %382 = math.exp %381 : vector<9x9xf32>
    %cst_233 = arith.constant dense<0.000000e+00> : vector<9xf32>
    %383 = vector.multi_reduction <add>, %382, %cst_233 [1] : vector<9x9xf32> to vector<9xf32>
    %384 = vector.shape_cast %383 : vector<9xf32> to vector<9x1xf32>
    %385 = tpu.reciprocal %384 {approx = true} : vector<9x1xf32> -> vector<9x1xf32>
    %386 = vector.broadcast %385 : vector<9x1xf32> to vector<9x9xf32>
    %387 = arith.mulf %382, %386 : vector<9x9xf32>
    %cst_234 = arith.constant dense<0.000000e+00> : vector<9x8xf32>
    %388 = tpu.matmul %387, %372, %cst_234 {dimension_numbers = #tpu.dot_dimension_numbers<[1], [0], [0], [1], [0, 0, 1, 1], [], []>} : vector<9x9xf32>, vector<9x8xf32>, vector<9x8xf32> -> vector<9x8xf32>
    %c0_235 = arith.constant 0 : index
    %c24_236 = arith.constant 24 : index
    %389 = vector.load %arg23[%c0_235, %c24_236] : memref<18x32xf32, #tpu.memory_space<vmem>>, vector<9x8xf32>
    tpu.vector_store %arg23[%c0_235, %c24_236], %388 {strides = array<i32>} : memref<18x32xf32, #tpu.memory_space<vmem>>, vector<9x8xf32>,
    %c1_237 = arith.constant 1 : index
    %c0_238 = arith.constant 0 : index
    %390 = vector.load %arg3[%c1_237, %c0_238] : memref<2x9xf32, #tpu.memory_space<vmem>>, vector<1x9xf32>
    %c9_239 = arith.constant 9 : index
    %c0_240 = arith.constant 0 : index
    %391 = vector.load %arg22[%c9_239, %c0_240] : memref<18x96xf32, #tpu.memory_space<vmem>>, vector<9x8xf32>
    %c9_241 = arith.constant 9 : index
    %c32_242 = arith.constant 32 : index
    %392 = vector.load %arg22[%c9_241, %c32_242] : memref<18x96xf32, #tpu.memory_space<vmem>>, vector<9x8xf32>
    %c9_243 = arith.constant 9 : index
    %c64_244 = arith.constant 64 : index
    %393 = vector.load %arg22[%c9_243, %c64_244] : memref<18x96xf32, #tpu.memory_space<vmem>>, vector<9x8xf32>
    %cst_245 = arith.constant dense<0.000000e+00> : vector<9x9xf32>
    %394 = tpu.matmul %391, %392, %cst_245 {dimension_numbers = #tpu.dot_dimension_numbers<[1], [1], [0], [0], [0, 0, 1, 0], [], []>} : vector<9x8xf32>, vector<9x8xf32>, vector<9x9xf32> -> vector<9x9xf32>
    %cst_246 = arith.constant 0.353553385 : f32
    %395 = vector.broadcast %cst_246 : f32 to vector<9x9xf32>
    %396 = arith.mulf %394, %395 : vector<9x9xf32>
    %397 = vector.broadcast %390 : vector<1x9xf32> to vector<9x9xf32>
    %398 = arith.addf %396, %397 : vector<9x9xf32>
    %cst_247 = arith.constant dense<0xFF800000> : vector<9xf32>
    %399 = vector.multi_reduction <maximumf>, %398, %cst_247 [1] : vector<9x9xf32> to vector<9xf32>
    %400 = vector.shape_cast %399 : vector<9xf32> to vector<9x1xf32>
    %401 = vector.broadcast %400 : vector<9x1xf32> to vector<9x9xf32>
    %402 = arith.subf %398, %401 : vector<9x9xf32>
    %403 = math.exp %402 : vector<9x9xf32>
    %cst_248 = arith.constant dense<0.000000e+00> : vector<9xf32>
    %404 = vector.multi_reduction <add>, %403, %cst_248 [1] : vector<9x9xf32> to vector<9xf32>
    %405 = vector.shape_cast %404 : vector<9xf32> to vector<9x1xf32>
    %406 = tpu.reciprocal %405 {approx = true} : vector<9x1xf32> -> vector<9x1xf32>
    %407 = vector.broadcast %406 : vector<9x1xf32> to vector<9x9xf32>
    %408 = arith.mulf %403, %407 : vector<9x9xf32>
    %cst_249 = arith.constant dense<0.000000e+00> : vector<9x8xf32>
    %409 = tpu.matmul %408, %393, %cst_249 {dimension_numbers = #tpu.dot_dimension_numbers<[1], [0], [0], [1], [0, 0, 1, 1], [], []>} : vector<9x9xf32>, vector<9x8xf32>, vector<9x8xf32> -> vector<9x8xf32>
    %c9_250 = arith.constant 9 : index
    %c0_251 = arith.constant 0 : index
    %410 = vector.load %arg23[%c9_250, %c0_251] : memref<18x32xf32, #tpu.memory_space<vmem>>, vector<9x8xf32>
    tpu.vector_store %arg23[%c9_250, %c0_251], %409 {strides = array<i32>} : memref<18x32xf32, #tpu.memory_space<vmem>>, vector<9x8xf32>,
    %c9_252 = arith.constant 9 : index
    %c8_253 = arith.constant 8 : index
    %411 = vector.load %arg22[%c9_252, %c8_253] : memref<18x96xf32, #tpu.memory_space<vmem>>, vector<9x8xf32>
    %c9_254 = arith.constant 9 : index
    %c40_255 = arith.constant 40 : index
    %412 = vector.load %arg22[%c9_254, %c40_255] : memref<18x96xf32, #tpu.memory_space<vmem>>, vector<9x8xf32>
    %c9_256 = arith.constant 9 : index
    %c72_257 = arith.constant 72 : index
    %413 = vector.load %arg22[%c9_256, %c72_257] : memref<18x96xf32, #tpu.memory_space<vmem>>, vector<9x8xf32>
    %cst_258 = arith.constant dense<0.000000e+00> : vector<9x9xf32>
    %414 = tpu.matmul %411, %412, %cst_258 {dimension_numbers = #tpu.dot_dimension_numbers<[1], [1], [0], [0], [0, 0, 1, 0], [], []>} : vector<9x8xf32>, vector<9x8xf32>, vector<9x9xf32> -> vector<9x9xf32>
    %cst_259 = arith.constant 0.353553385 : f32
    %415 = vector.broadcast %cst_259 : f32 to vector<9x9xf32>
    %416 = arith.mulf %414, %415 : vector<9x9xf32>
    %417 = vector.broadcast %390 : vector<1x9xf32> to vector<9x9xf32>
    %418 = arith.addf %416, %417 : vector<9x9xf32>
    %cst_260 = arith.constant dense<0xFF800000> : vector<9xf32>
    %419 = vector.multi_reduction <maximumf>, %418, %cst_260 [1] : vector<9x9xf32> to vector<9xf32>
    %420 = vector.shape_cast %419 : vector<9xf32> to vector<9x1xf32>
    %421 = vector.broadcast %420 : vector<9x1xf32> to vector<9x9xf32>
    %422 = arith.subf %418, %421 : vector<9x9xf32>
    %423 = math.exp %422 : vector<9x9xf32>
    %cst_261 = arith.constant dense<0.000000e+00> : vector<9xf32>
    %424 = vector.multi_reduction <add>, %423, %cst_261 [1] : vector<9x9xf32> to vector<9xf32>
    %425 = vector.shape_cast %424 : vector<9xf32> to vector<9x1xf32>
    %426 = tpu.reciprocal %425 {approx = true} : vector<9x1xf32> -> vector<9x1xf32>
    %427 = vector.broadcast %426 : vector<9x1xf32> to vector<9x9xf32>
    %428 = arith.mulf %423, %427 : vector<9x9xf32>
    %cst_262 = arith.constant dense<0.000000e+00> : vector<9x8xf32>
    %429 = tpu.matmul %428, %413, %cst_262 {dimension_numbers = #tpu.dot_dimension_numbers<[1], [0], [0], [1], [0, 0, 1, 1], [], []>} : vector<9x9xf32>, vector<9x8xf32>, vector<9x8xf32> -> vector<9x8xf32>
    %c9_263 = arith.constant 9 : index
    %c8_264 = arith.constant 8 : index
    %430 = vector.load %arg23[%c9_263, %c8_264] : memref<18x32xf32, #tpu.memory_space<vmem>>, vector<9x8xf32>
    tpu.vector_store %arg23[%c9_263, %c8_264], %429 {strides = array<i32>} : memref<18x32xf32, #tpu.memory_space<vmem>>, vector<9x8xf32>,
    %c9_265 = arith.constant 9 : index
    %c16_266 = arith.constant 16 : index
    %431 = vector.load %arg22[%c9_265, %c16_266] : memref<18x96xf32, #tpu.memory_space<vmem>>, vector<9x8xf32>
    %c9_267 = arith.constant 9 : index
    %c48_268 = arith.constant 48 : index
    %432 = vector.load %arg22[%c9_267, %c48_268] : memref<18x96xf32, #tpu.memory_space<vmem>>, vector<9x8xf32>
    %c9_269 = arith.constant 9 : index
    %c80_270 = arith.constant 80 : index
    %433 = vector.load %arg22[%c9_269, %c80_270] : memref<18x96xf32, #tpu.memory_space<vmem>>, vector<9x8xf32>
    %cst_271 = arith.constant dense<0.000000e+00> : vector<9x9xf32>
    %434 = tpu.matmul %431, %432, %cst_271 {dimension_numbers = #tpu.dot_dimension_numbers<[1], [1], [0], [0], [0, 0, 1, 0], [], []>} : vector<9x8xf32>, vector<9x8xf32>, vector<9x9xf32> -> vector<9x9xf32>
    %cst_272 = arith.constant 0.353553385 : f32
    %435 = vector.broadcast %cst_272 : f32 to vector<9x9xf32>
    %436 = arith.mulf %434, %435 : vector<9x9xf32>
    %437 = vector.broadcast %390 : vector<1x9xf32> to vector<9x9xf32>
    %438 = arith.addf %436, %437 : vector<9x9xf32>
    %cst_273 = arith.constant dense<0xFF800000> : vector<9xf32>
    %439 = vector.multi_reduction <maximumf>, %438, %cst_273 [1] : vector<9x9xf32> to vector<9xf32>
    %440 = vector.shape_cast %439 : vector<9xf32> to vector<9x1xf32>
    %441 = vector.broadcast %440 : vector<9x1xf32> to vector<9x9xf32>
    %442 = arith.subf %438, %441 : vector<9x9xf32>
    %443 = math.exp %442 : vector<9x9xf32>
    %cst_274 = arith.constant dense<0.000000e+00> : vector<9xf32>
    %444 = vector.multi_reduction <add>, %443, %cst_274 [1] : vector<9x9xf32> to vector<9xf32>
    %445 = vector.shape_cast %444 : vector<9xf32> to vector<9x1xf32>
    %446 = tpu.reciprocal %445 {approx = true} : vector<9x1xf32> -> vector<9x1xf32>
    %447 = vector.broadcast %446 : vector<9x1xf32> to vector<9x9xf32>
    %448 = arith.mulf %443, %447 : vector<9x9xf32>
    %cst_275 = arith.constant dense<0.000000e+00> : vector<9x8xf32>
    %449 = tpu.matmul %448, %433, %cst_275 {dimension_numbers = #tpu.dot_dimension_numbers<[1], [0], [0], [1], [0, 0, 1, 1], [], []>} : vector<9x9xf32>, vector<9x8xf32>, vector<9x8xf32> -> vector<9x8xf32>
    %c9_276 = arith.constant 9 : index
    %c16_277 = arith.constant 16 : index
    %450 = vector.load %arg23[%c9_276, %c16_277] : memref<18x32xf32, #tpu.memory_space<vmem>>, vector<9x8xf32>
    tpu.vector_store %arg23[%c9_276, %c16_277], %449 {strides = array<i32>} : memref<18x32xf32, #tpu.memory_space<vmem>>, vector<9x8xf32>,
    %c9_278 = arith.constant 9 : index
    %c24_279 = arith.constant 24 : index
    %451 = vector.load %arg22[%c9_278, %c24_279] : memref<18x96xf32, #tpu.memory_space<vmem>>, vector<9x8xf32>
    %c9_280 = arith.constant 9 : index
    %c56_281 = arith.constant 56 : index
    %452 = vector.load %arg22[%c9_280, %c56_281] : memref<18x96xf32, #tpu.memory_space<vmem>>, vector<9x8xf32>
    %c9_282 = arith.constant 9 : index
    %c88_283 = arith.constant 88 : index
    %453 = vector.load %arg22[%c9_282, %c88_283] : memref<18x96xf32, #tpu.memory_space<vmem>>, vector<9x8xf32>
    %cst_284 = arith.constant dense<0.000000e+00> : vector<9x9xf32>
    %454 = tpu.matmul %451, %452, %cst_284 {dimension_numbers = #tpu.dot_dimension_numbers<[1], [1], [0], [0], [0, 0, 1, 0], [], []>} : vector<9x8xf32>, vector<9x8xf32>, vector<9x9xf32> -> vector<9x9xf32>
    %cst_285 = arith.constant 0.353553385 : f32
    %455 = vector.broadcast %cst_285 : f32 to vector<9x9xf32>
    %456 = arith.mulf %454, %455 : vector<9x9xf32>
    %457 = vector.broadcast %390 : vector<1x9xf32> to vector<9x9xf32>
    %458 = arith.addf %456, %457 : vector<9x9xf32>
    %cst_286 = arith.constant dense<0xFF800000> : vector<9xf32>
    %459 = vector.multi_reduction <maximumf>, %458, %cst_286 [1] : vector<9x9xf32> to vector<9xf32>
    %460 = vector.shape_cast %459 : vector<9xf32> to vector<9x1xf32>
    %461 = vector.broadcast %460 : vector<9x1xf32> to vector<9x9xf32>
    %462 = arith.subf %458, %461 : vector<9x9xf32>
    %463 = math.exp %462 : vector<9x9xf32>
    %cst_287 = arith.constant dense<0.000000e+00> : vector<9xf32>
    %464 = vector.multi_reduction <add>, %463, %cst_287 [1] : vector<9x9xf32> to vector<9xf32>
    %465 = vector.shape_cast %464 : vector<9xf32> to vector<9x1xf32>
    %466 = tpu.reciprocal %465 {approx = true} : vector<9x1xf32> -> vector<9x1xf32>
    %467 = vector.broadcast %466 : vector<9x1xf32> to vector<9x9xf32>
    %468 = arith.mulf %463, %467 : vector<9x9xf32>
    %cst_288 = arith.constant dense<0.000000e+00> : vector<9x8xf32>
    %469 = tpu.matmul %468, %453, %cst_288 {dimension_numbers = #tpu.dot_dimension_numbers<[1], [0], [0], [1], [0, 0, 1, 1], [], []>} : vector<9x9xf32>, vector<9x8xf32>, vector<9x8xf32> -> vector<9x8xf32>
    %c9_289 = arith.constant 9 : index
    %c24_290 = arith.constant 24 : index
    %470 = vector.load %arg23[%c9_289, %c24_290] : memref<18x32xf32, #tpu.memory_space<vmem>>, vector<9x8xf32>
    tpu.vector_store %arg23[%c9_289, %c24_290], %469 {strides = array<i32>} : memref<18x32xf32, #tpu.memory_space<vmem>>, vector<9x8xf32>,
    %c0_291 = arith.constant 0 : index
    %c0_292 = arith.constant 0 : index
    %471 = vector.load %arg23[%c0_291, %c0_292] : memref<18x32xf32, #tpu.memory_space<vmem>>, vector<18x32xf32>
    %c1_293 = arith.constant 1 : index
    %c0_294 = arith.constant 0 : index
    %c0_295 = arith.constant 0 : index
    %472 = vector.load %arg11[%c1_293, %c0_294, %c0_295] : memref<2x32x32xf32, #tpu.memory_space<vmem>>, vector<1x32x32xf32>
    %473 = vector.shape_cast %472 : vector<1x32x32xf32> to vector<32x32xf32>
    %cst_296 = arith.constant dense<0.000000e+00> : vector<18x32xf32>
    %474 = tpu.matmul %471, %473, %cst_296 {dimension_numbers = #tpu.dot_dimension_numbers<[1], [0], [0], [1], [0, 0, 1, 1], [], []>} : vector<18x32xf32>, vector<32x32xf32>, vector<18x32xf32> -> vector<18x32xf32>
    %c1_297 = arith.constant 1 : index
    %c0_298 = arith.constant 0 : index
    %c0_299 = arith.constant 0 : index
    %475 = vector.load %arg12[%c1_297, %c0_298, %c0_299] : memref<2x1x32xf32, #tpu.memory_space<vmem>>, vector<1x1x32xf32>
    %476 = vector.shape_cast %475 : vector<1x1x32xf32> to vector<1x32xf32>
    %477 = vector.broadcast %476 : vector<1x32xf32> to vector<18x32xf32>
    %478 = arith.addf %474, %477 : vector<18x32xf32>
    %479 = arith.addf %300, %478 : vector<18x32xf32>
    %c1_300 = arith.constant 1 : index
    %c0_301 = arith.constant 0 : index
    %c0_302 = arith.constant 0 : index
    %480 = vector.load %arg13[%c1_300, %c0_301, %c0_302] : memref<2x1x32xf32, #tpu.memory_space<vmem>>, vector<1x1x32xf32>
    %481 = vector.shape_cast %480 : vector<1x1x32xf32> to vector<1x32xf32>
    %c1_303 = arith.constant 1 : index
    %c0_304 = arith.constant 0 : index
    %c0_305 = arith.constant 0 : index
    %482 = vector.load %arg14[%c1_303, %c0_304, %c0_305] : memref<2x1x32xf32, #tpu.memory_space<vmem>>, vector<1x1x32xf32>
    %483 = vector.shape_cast %482 : vector<1x1x32xf32> to vector<1x32xf32>
    %cst_306 = arith.constant dense<0.000000e+00> : vector<18xf32>
    %484 = vector.multi_reduction <add>, %479, %cst_306 [1] : vector<18x32xf32> to vector<18xf32>
    %485 = vector.shape_cast %484 : vector<18xf32> to vector<18x1xf32>
    %cst_307 = arith.constant 3.200000e+01 : f32
    %486 = vector.broadcast %cst_307 : f32 to vector<18x1xf32>
    %487 = arith.divf %485, %486 : vector<18x1xf32>
    %488 = vector.broadcast %487 : vector<18x1xf32> to vector<18x32xf32>
    %489 = arith.subf %479, %488 : vector<18x32xf32>
    %490 = arith.mulf %489, %489 : vector<18x32xf32>
    %cst_308 = arith.constant dense<0.000000e+00> : vector<18xf32>
    %491 = vector.multi_reduction <add>, %490, %cst_308 [1] : vector<18x32xf32> to vector<18xf32>
    %492 = vector.shape_cast %491 : vector<18xf32> to vector<18x1xf32>
    %cst_309 = arith.constant 3.200000e+01 : f32
    %493 = vector.broadcast %cst_309 : f32 to vector<18x1xf32>
    %494 = arith.divf %492, %493 : vector<18x1xf32>
    %495 = vector.broadcast %487 : vector<18x1xf32> to vector<18x32xf32>
    %496 = arith.subf %479, %495 : vector<18x32xf32>
    %cst_310 = arith.constant 9.99999996E-13 : f32
    %497 = vector.broadcast %cst_310 : f32 to vector<18x1xf32>
    %498 = arith.addf %494, %497 : vector<18x1xf32>
    %499 = math.rsqrt %498 : vector<18x1xf32>
    %500 = vector.broadcast %499 : vector<18x1xf32> to vector<18x32xf32>
    %501 = arith.mulf %496, %500 : vector<18x32xf32>
    %502 = vector.broadcast %481 : vector<1x32xf32> to vector<18x32xf32>
    %503 = arith.mulf %501, %502 : vector<18x32xf32>
    %504 = vector.broadcast %483 : vector<1x32xf32> to vector<18x32xf32>
    %505 = arith.addf %503, %504 : vector<18x32xf32>
    %c1_311 = arith.constant 1 : index
    %c0_312 = arith.constant 0 : index
    %c0_313 = arith.constant 0 : index
    %506 = vector.load %arg15[%c1_311, %c0_312, %c0_313] : memref<2x32x64xf32, #tpu.memory_space<vmem>>, vector<1x32x64xf32>
    %507 = vector.shape_cast %506 : vector<1x32x64xf32> to vector<32x64xf32>
    %cst_314 = arith.constant dense<0.000000e+00> : vector<18x64xf32>
    %508 = tpu.matmul %505, %507, %cst_314 {dimension_numbers = #tpu.dot_dimension_numbers<[1], [0], [0], [1], [0, 0, 1, 1], [], []>} : vector<18x32xf32>, vector<32x64xf32>, vector<18x64xf32> -> vector<18x64xf32>
    %c1_315 = arith.constant 1 : index
    %c0_316 = arith.constant 0 : index
    %c0_317 = arith.constant 0 : index
    %509 = vector.load %arg16[%c1_315, %c0_316, %c0_317] : memref<2x1x64xf32, #tpu.memory_space<vmem>>, vector<1x1x64xf32>
    %510 = vector.shape_cast %509 : vector<1x1x64xf32> to vector<1x64xf32>
    %511 = vector.broadcast %510 : vector<1x64xf32> to vector<18x64xf32>
    %512 = arith.addf %508, %511 : vector<18x64xf32>
    %513 = arith.mulf %512, %512 : vector<18x64xf32>
    %514 = arith.mulf %512, %513 : vector<18x64xf32>
    %cst_318 = arith.constant 4.471500e-02 : f32
    %515 = vector.broadcast %cst_318 : f32 to vector<18x64xf32>
    %516 = arith.mulf %515, %514 : vector<18x64xf32>
    %517 = arith.addf %512, %516 : vector<18x64xf32>
    %cst_319 = arith.constant 0.797884583 : f32
    %518 = vector.broadcast %cst_319 : f32 to vector<18x64xf32>
    %519 = arith.mulf %518, %517 : vector<18x64xf32>
    %520 = math.tanh %519 : vector<18x64xf32>
    %cst_320 = arith.constant 1.000000e+00 : f32
    %521 = vector.broadcast %cst_320 : f32 to vector<18x64xf32>
    %522 = arith.addf %521, %520 : vector<18x64xf32>
    %cst_321 = arith.constant 5.000000e-01 : f32
    %523 = vector.broadcast %cst_321 : f32 to vector<18x64xf32>
    %524 = arith.mulf %523, %522 : vector<18x64xf32>
    %525 = arith.mulf %512, %524 : vector<18x64xf32>
    %c1_322 = arith.constant 1 : index
    %c0_323 = arith.constant 0 : index
    %c0_324 = arith.constant 0 : index
    %526 = vector.load %arg17[%c1_322, %c0_323, %c0_324] : memref<2x64x32xf32, #tpu.memory_space<vmem>>, vector<1x64x32xf32>
    %527 = vector.shape_cast %526 : vector<1x64x32xf32> to vector<64x32xf32>
    %cst_325 = arith.constant dense<0.000000e+00> : vector<18x32xf32>
    %528 = tpu.matmul %525, %527, %cst_325 {dimension_numbers = #tpu.dot_dimension_numbers<[1], [0], [0], [1], [0, 0, 1, 1], [], []>} : vector<18x64xf32>, vector<64x32xf32>, vector<18x32xf32> -> vector<18x32xf32>
    %c1_326 = arith.constant 1 : index
    %c0_327 = arith.constant 0 : index
    %c0_328 = arith.constant 0 : index
    %529 = vector.load %arg18[%c1_326, %c0_327, %c0_328] : memref<2x1x32xf32, #tpu.memory_space<vmem>>, vector<1x1x32xf32>
    %530 = vector.shape_cast %529 : vector<1x1x32xf32> to vector<1x32xf32>
    %531 = vector.broadcast %530 : vector<1x32xf32> to vector<18x32xf32>
    %532 = arith.addf %528, %531 : vector<18x32xf32>
    %533 = arith.addf %505, %532 : vector<18x32xf32>
    %c1_329 = arith.constant 1 : index
    %c0_330 = arith.constant 0 : index
    %c0_331 = arith.constant 0 : index
    %534 = vector.load %arg19[%c1_329, %c0_330, %c0_331] : memref<2x1x32xf32, #tpu.memory_space<vmem>>, vector<1x1x32xf32>
    %535 = vector.shape_cast %534 : vector<1x1x32xf32> to vector<1x32xf32>
    %c1_332 = arith.constant 1 : index
    %c0_333 = arith.constant 0 : index
    %c0_334 = arith.constant 0 : index
    %536 = vector.load %arg20[%c1_332, %c0_333, %c0_334] : memref<2x1x32xf32, #tpu.memory_space<vmem>>, vector<1x1x32xf32>
    %537 = vector.shape_cast %536 : vector<1x1x32xf32> to vector<1x32xf32>
    %cst_335 = arith.constant dense<0.000000e+00> : vector<18xf32>
    %538 = vector.multi_reduction <add>, %533, %cst_335 [1] : vector<18x32xf32> to vector<18xf32>
    %539 = vector.shape_cast %538 : vector<18xf32> to vector<18x1xf32>
    %cst_336 = arith.constant 3.200000e+01 : f32
    %540 = vector.broadcast %cst_336 : f32 to vector<18x1xf32>
    %541 = arith.divf %539, %540 : vector<18x1xf32>
    %542 = vector.broadcast %541 : vector<18x1xf32> to vector<18x32xf32>
    %543 = arith.subf %533, %542 : vector<18x32xf32>
    %544 = arith.mulf %543, %543 : vector<18x32xf32>
    %cst_337 = arith.constant dense<0.000000e+00> : vector<18xf32>
    %545 = vector.multi_reduction <add>, %544, %cst_337 [1] : vector<18x32xf32> to vector<18xf32>
    %546 = vector.shape_cast %545 : vector<18xf32> to vector<18x1xf32>
    %cst_338 = arith.constant 3.200000e+01 : f32
    %547 = vector.broadcast %cst_338 : f32 to vector<18x1xf32>
    %548 = arith.divf %546, %547 : vector<18x1xf32>
    %549 = vector.broadcast %541 : vector<18x1xf32> to vector<18x32xf32>
    %550 = arith.subf %533, %549 : vector<18x32xf32>
    %cst_339 = arith.constant 9.99999996E-13 : f32
    %551 = vector.broadcast %cst_339 : f32 to vector<18x1xf32>
    %552 = arith.addf %548, %551 : vector<18x1xf32>
    %553 = math.rsqrt %552 : vector<18x1xf32>
    %554 = vector.broadcast %553 : vector<18x1xf32> to vector<18x32xf32>
    %555 = arith.mulf %550, %554 : vector<18x32xf32>
    %556 = vector.broadcast %535 : vector<1x32xf32> to vector<18x32xf32>
    %557 = arith.mulf %555, %556 : vector<18x32xf32>
    %558 = vector.broadcast %537 : vector<1x32xf32> to vector<18x32xf32>
    %559 = arith.addf %557, %558 : vector<18x32xf32>
    %c0_340 = arith.constant 0 : index
    %c0_341 = arith.constant 0 : index
    %560 = vector.load %arg21[%c0_340, %c0_341] : memref<18x32xf32, #tpu.memory_space<vmem>>, vector<18x32xf32>
    tpu.vector_store %arg21[%c0_340, %c0_341], %559 {strides = array<i32>} : memref<18x32xf32, #tpu.memory_space<vmem>>, vector<18x32xf32>,
    return
  }
}

module attributes {stable_mosaic.version = 11 : i64} {
  func.func @_ema_kernel(%arg0: i32, %arg1: memref<8x4x9xf32, #tpu.memory_space<vmem>>, %arg2: memref<4x4xf32, #tpu.memory_space<vmem>>, %arg3: memref<4x1xf32, #tpu.memory_space<vmem>>, %arg4: memref<3x4x4xf32, #tpu.memory_space<vmem>>, %arg5: memref<4x1xf32, #tpu.memory_space<vmem>>, %arg6: memref<4x1xf32, #tpu.memory_space<vmem>>, %arg7: memref<4x1xf32, #tpu.memory_space<vmem>>, %arg8: memref<8x4x9xf32, #tpu.memory_space<vmem>>, %arg9: memref<4x11xf32, #tpu.memory_space<vmem>>) attributes {dimension_semantics = [#tpu.dimension_semantics<parallel>], iteration_bounds = array<i64: 2>, scalar_prefetch = 0 : i64, scratch_operands = 1 : i64, tpu.core_type = #tpu.core_type<tc>, window_params = [{transform_indices = @transform_0, window_bounds = array<i64: 8, 4, 9>}, {pipeline_mode = #tpu.pipeline_mode<synchronous>, transform_indices = @transform_1, window_bounds = array<i64: 4, 4>}, {pipeline_mode = #tpu.pipeline_mode<synchronous>, transform_indices = @transform_2, window_bounds = array<i64: 4, 1>}, {pipeline_mode = #tpu.pipeline_mode<synchronous>, transform_indices = @transform_3, window_bounds = array<i64: 3, 4, 4>}, {pipeline_mode = #tpu.pipeline_mode<synchronous>, transform_indices = @transform_4, window_bounds = array<i64: 4, 1>}, {pipeline_mode = #tpu.pipeline_mode<synchronous>, transform_indices = @transform_5, window_bounds = array<i64: 4, 1>}, {pipeline_mode = #tpu.pipeline_mode<synchronous>, transform_indices = @transform_6, window_bounds = array<i64: 4, 1>}, {transform_indices = @transform_7, window_bounds = array<i64: 8, 4, 9>}]} {
    %c0 = arith.constant 0 : index
    %c0_0 = arith.constant 0 : index
    %0 = vector.load %arg2[%c0, %c0_0] : memref<4x4xf32, #tpu.memory_space<vmem>>, vector<4x4xf32>
    %c0_1 = arith.constant 0 : index
    %c0_2 = arith.constant 0 : index
    %1 = vector.load %arg3[%c0_1, %c0_2] : memref<4x1xf32, #tpu.memory_space<vmem>>, vector<4x1xf32>
    %c0_3 = arith.constant 0 : index
    %c0_4 = arith.constant 0 : index
    %2 = vector.load %arg5[%c0_3, %c0_4] : memref<4x1xf32, #tpu.memory_space<vmem>>, vector<4x1xf32>
    %c0_5 = arith.constant 0 : index
    %c0_6 = arith.constant 0 : index
    %3 = vector.load %arg6[%c0_5, %c0_6] : memref<4x1xf32, #tpu.memory_space<vmem>>, vector<4x1xf32>
    %c0_7 = arith.constant 0 : index
    %c0_8 = arith.constant 0 : index
    %4 = vector.load %arg7[%c0_7, %c0_8] : memref<4x1xf32, #tpu.memory_space<vmem>>, vector<4x1xf32>
    %c0_9 = arith.constant 0 : index
    %c0_10 = arith.constant 0 : index
    %c0_11 = arith.constant 0 : index
    %5 = vector.load %arg4[%c0_9, %c0_10, %c0_11] : memref<3x4x4xf32, #tpu.memory_space<vmem>>, vector<1x4x4xf32>
    %6 = vector.shape_cast %5 : vector<1x4x4xf32> to vector<4x4xf32>
    %c1 = arith.constant 1 : index
    %c0_12 = arith.constant 0 : index
    %c0_13 = arith.constant 0 : index
    %7 = vector.load %arg4[%c1, %c0_12, %c0_13] : memref<3x4x4xf32, #tpu.memory_space<vmem>>, vector<1x4x4xf32>
    %8 = vector.shape_cast %7 : vector<1x4x4xf32> to vector<4x4xf32>
    %c2 = arith.constant 2 : index
    %c0_14 = arith.constant 0 : index
    %c0_15 = arith.constant 0 : index
    %9 = vector.load %arg4[%c2, %c0_14, %c0_15] : memref<3x4x4xf32, #tpu.memory_space<vmem>>, vector<1x4x4xf32>
    %10 = vector.shape_cast %9 : vector<1x4x4xf32> to vector<4x4xf32>
    %cst = arith.constant 0.000000e+00 : f32
    %11 = vector.broadcast %cst : f32 to vector<4x11xf32>
    %c0_16 = arith.constant 0 : index
    %c0_17 = arith.constant 0 : index
    %12 = vector.load %arg9[%c0_16, %c0_17] : memref<4x11xf32, #tpu.memory_space<vmem>>, vector<4x11xf32>
    tpu.vector_store %arg9[%c0_16, %c0_17], %11 {strides = array<i32>} : memref<4x11xf32, #tpu.memory_space<vmem>>, vector<4x11xf32>,
    %c0_18 = arith.constant 0 : index
    %c0_19 = arith.constant 0 : index
    %c0_20 = arith.constant 0 : index
    %13 = vector.load %arg1[%c0_18, %c0_19, %c0_20] : memref<8x4x9xf32, #tpu.memory_space<vmem>>, vector<1x4x9xf32>
    %14 = vector.shape_cast %13 : vector<1x4x9xf32> to vector<4x9xf32>
    %cst_21 = arith.constant dense<0.000000e+00> : vector<4x9xf32>
    %15 = tpu.matmul %0, %14, %cst_21 {dimension_numbers = #tpu.dot_dimension_numbers<[1], [0], [0], [1], [0, 0, 1, 1], [], []>} : vector<4x4xf32>, vector<4x9xf32>, vector<4x9xf32> -> vector<4x9xf32>
    %16 = vector.broadcast %1 : vector<4x1xf32> to vector<4x9xf32>
    %17 = arith.addf %15, %16 : vector<4x9xf32>
    %cst_22 = arith.constant dense<0.000000e+00> : vector<4xf32>
    %18 = vector.multi_reduction <add>, %17, %cst_22 [1] : vector<4x9xf32> to vector<4xf32>
    %19 = vector.shape_cast %18 : vector<4xf32> to vector<4x1xf32>
    %cst_23 = arith.constant 9.000000e+00 : f32
    %20 = vector.broadcast %cst_23 : f32 to vector<4x1xf32>
    %21 = arith.divf %19, %20 : vector<4x1xf32>
    %22 = arith.negf %17 : vector<4x9xf32>
    %23 = math.exp %22 : vector<4x9xf32>
    %cst_24 = arith.constant 1.000000e+00 : f32
    %24 = vector.broadcast %cst_24 : f32 to vector<4x9xf32>
    %25 = arith.addf %24, %23 : vector<4x9xf32>
    %26 = arith.divf %24, %25 : vector<4x9xf32>
    %27 = arith.mulf %14, %26 : vector<4x9xf32>
    %28 = arith.negf %21 : vector<4x1xf32>
    %29 = math.exp %28 : vector<4x1xf32>
    %cst_25 = arith.constant 1.000000e+00 : f32
    %30 = vector.broadcast %cst_25 : f32 to vector<4x1xf32>
    %31 = arith.addf %30, %29 : vector<4x1xf32>
    %32 = arith.divf %30, %31 : vector<4x1xf32>
    %33 = vector.broadcast %32 : vector<4x1xf32> to vector<4x9xf32>
    %34 = arith.mulf %27, %33 : vector<4x9xf32>
    %cst_26 = arith.constant dense<0.000000e+00> : vector<4xf32>
    %35 = vector.multi_reduction <add>, %34, %cst_26 [1] : vector<4x9xf32> to vector<4xf32>
    %36 = vector.shape_cast %35 : vector<4xf32> to vector<4x1xf32>
    %cst_27 = arith.constant 9.000000e+00 : f32
    %37 = vector.broadcast %cst_27 : f32 to vector<4x1xf32>
    %38 = arith.divf %36, %37 : vector<4x1xf32>
    %39 = vector.broadcast %38 : vector<4x1xf32> to vector<4x9xf32>
    %40 = arith.subf %34, %39 : vector<4x9xf32>
    %41 = arith.mulf %40, %40 : vector<4x9xf32>
    %cst_28 = arith.constant dense<0.000000e+00> : vector<4xf32>
    %42 = vector.multi_reduction <add>, %41, %cst_28 [1] : vector<4x9xf32> to vector<4xf32>
    %43 = vector.shape_cast %42 : vector<4xf32> to vector<4x1xf32>
    %cst_29 = arith.constant 9.000000e+00 : f32
    %44 = vector.broadcast %cst_29 : f32 to vector<4x1xf32>
    %45 = arith.divf %43, %44 : vector<4x1xf32>
    %46 = vector.broadcast %38 : vector<4x1xf32> to vector<4x9xf32>
    %47 = arith.subf %34, %46 : vector<4x9xf32>
    %cst_30 = arith.constant 9.99999974E-6 : f32
    %48 = vector.broadcast %cst_30 : f32 to vector<4x1xf32>
    %49 = arith.addf %45, %48 : vector<4x1xf32>
    %50 = math.rsqrt %49 : vector<4x1xf32>
    %51 = vector.broadcast %50 : vector<4x1xf32> to vector<4x9xf32>
    %52 = arith.mulf %47, %51 : vector<4x9xf32>
    %53 = vector.broadcast %3 : vector<4x1xf32> to vector<4x9xf32>
    %54 = arith.mulf %52, %53 : vector<4x9xf32>
    %55 = vector.broadcast %4 : vector<4x1xf32> to vector<4x9xf32>
    %56 = arith.addf %54, %55 : vector<4x9xf32>
    %c0_31 = arith.constant 0 : index
    %c1_32 = arith.constant 1 : index
    %57 = vector.load %arg9[%c0_31, %c1_32] : memref<4x11xf32, #tpu.memory_space<vmem>>, vector<4x9xf32>
    tpu.vector_store %arg9[%c0_31, %c1_32], %14 {strides = array<i32>} : memref<4x11xf32, #tpu.memory_space<vmem>>, vector<4x9xf32>,
    %c0_33 = arith.constant 0 : index
    %c0_34 = arith.constant 0 : index
    %58 = vector.load %arg9[%c0_33, %c0_34] : memref<4x11xf32, #tpu.memory_space<vmem>>, vector<4x9xf32>
    %cst_35 = arith.constant dense<0.000000e+00> : vector<4x9xf32>
    %59 = tpu.matmul %6, %58, %cst_35 {dimension_numbers = #tpu.dot_dimension_numbers<[1], [0], [0], [1], [0, 0, 1, 1], [], []>} : vector<4x4xf32>, vector<4x9xf32>, vector<4x9xf32> -> vector<4x9xf32>
    %c0_36 = arith.constant 0 : index
    %c1_37 = arith.constant 1 : index
    %60 = vector.load %arg9[%c0_36, %c1_37] : memref<4x11xf32, #tpu.memory_space<vmem>>, vector<4x9xf32>
    %cst_38 = arith.constant dense<0.000000e+00> : vector<4x9xf32>
    %61 = tpu.matmul %8, %60, %cst_38 {dimension_numbers = #tpu.dot_dimension_numbers<[1], [0], [0], [1], [0, 0, 1, 1], [], []>} : vector<4x4xf32>, vector<4x9xf32>, vector<4x9xf32> -> vector<4x9xf32>
    %62 = arith.addf %59, %61 : vector<4x9xf32>
    %c0_39 = arith.constant 0 : index
    %c2_40 = arith.constant 2 : index
    %63 = vector.load %arg9[%c0_39, %c2_40] : memref<4x11xf32, #tpu.memory_space<vmem>>, vector<4x9xf32>
    %cst_41 = arith.constant dense<0.000000e+00> : vector<4x9xf32>
    %64 = tpu.matmul %10, %63, %cst_41 {dimension_numbers = #tpu.dot_dimension_numbers<[1], [0], [0], [1], [0, 0, 1, 1], [], []>} : vector<4x4xf32>, vector<4x9xf32>, vector<4x9xf32> -> vector<4x9xf32>
    %65 = arith.addf %62, %64 : vector<4x9xf32>
    %66 = vector.broadcast %2 : vector<4x1xf32> to vector<4x9xf32>
    %67 = arith.addf %65, %66 : vector<4x9xf32>
    %cst_42 = arith.constant dense<0.000000e+00> : vector<4xf32>
    %68 = vector.multi_reduction <add>, %56, %cst_42 [1] : vector<4x9xf32> to vector<4xf32>
    %69 = vector.shape_cast %68 : vector<4xf32> to vector<4x1xf32>
    %cst_43 = arith.constant 9.000000e+00 : f32
    %70 = vector.broadcast %cst_43 : f32 to vector<4x1xf32>
    %71 = arith.divf %69, %70 : vector<4x1xf32>
    %cst_44 = arith.constant dense<0xFF800000> : vector<1xf32>
    %72 = vector.multi_reduction <maximumf>, %71, %cst_44 [0] : vector<4x1xf32> to vector<1xf32>
    %73 = vector.shape_cast %72 : vector<1xf32> to vector<1x1xf32>
    %74 = vector.broadcast %73 : vector<1x1xf32> to vector<4x1xf32>
    %75 = arith.subf %71, %74 : vector<4x1xf32>
    %76 = math.exp %75 : vector<4x1xf32>
    %cst_45 = arith.constant dense<0.000000e+00> : vector<1xf32>
    %77 = vector.multi_reduction <add>, %76, %cst_45 [0] : vector<4x1xf32> to vector<1xf32>
    %78 = vector.shape_cast %77 : vector<1xf32> to vector<1x1xf32>
    %79 = tpu.reciprocal %78 {approx = true} : vector<1x1xf32> -> vector<1x1xf32>
    %80 = vector.broadcast %79 : vector<1x1xf32> to vector<4x1xf32>
    %81 = arith.mulf %76, %80 : vector<4x1xf32>
    %cst_46 = arith.constant dense<0.000000e+00> : vector<4xf32>
    %82 = vector.multi_reduction <add>, %67, %cst_46 [1] : vector<4x9xf32> to vector<4xf32>
    %83 = vector.shape_cast %82 : vector<4xf32> to vector<4x1xf32>
    %cst_47 = arith.constant 9.000000e+00 : f32
    %84 = vector.broadcast %cst_47 : f32 to vector<4x1xf32>
    %85 = arith.divf %83, %84 : vector<4x1xf32>
    %cst_48 = arith.constant dense<0xFF800000> : vector<1xf32>
    %86 = vector.multi_reduction <maximumf>, %85, %cst_48 [0] : vector<4x1xf32> to vector<1xf32>
    %87 = vector.shape_cast %86 : vector<1xf32> to vector<1x1xf32>
    %88 = vector.broadcast %87 : vector<1x1xf32> to vector<4x1xf32>
    %89 = arith.subf %85, %88 : vector<4x1xf32>
    %90 = math.exp %89 : vector<4x1xf32>
    %cst_49 = arith.constant dense<0.000000e+00> : vector<1xf32>
    %91 = vector.multi_reduction <add>, %90, %cst_49 [0] : vector<4x1xf32> to vector<1xf32>
    %92 = vector.shape_cast %91 : vector<1xf32> to vector<1x1xf32>
    %93 = tpu.reciprocal %92 {approx = true} : vector<1x1xf32> -> vector<1x1xf32>
    %94 = vector.broadcast %93 : vector<1x1xf32> to vector<4x1xf32>
    %95 = arith.mulf %90, %94 : vector<4x1xf32>
    %96 = vector.broadcast %81 : vector<4x1xf32> to vector<4x9xf32>
    %97 = arith.mulf %96, %67 : vector<4x9xf32>
    %cst_50 = arith.constant dense<0.000000e+00> : vector<9xf32>
    %98 = vector.multi_reduction <add>, %97, %cst_50 [0] : vector<4x9xf32> to vector<9xf32>
    %99 = vector.shape_cast %98 : vector<9xf32> to vector<1x9xf32>
    %100 = vector.broadcast %95 : vector<4x1xf32> to vector<4x9xf32>
    %101 = arith.mulf %100, %56 : vector<4x9xf32>
    %cst_51 = arith.constant dense<0.000000e+00> : vector<9xf32>
    %102 = vector.multi_reduction <add>, %101, %cst_51 [0] : vector<4x9xf32> to vector<9xf32>
    %103 = vector.shape_cast %102 : vector<9xf32> to vector<1x9xf32>
    %104 = arith.addf %99, %103 : vector<1x9xf32>
    %105 = arith.negf %104 : vector<1x9xf32>
    %106 = math.exp %105 : vector<1x9xf32>
    %cst_52 = arith.constant 1.000000e+00 : f32
    %107 = vector.broadcast %cst_52 : f32 to vector<1x9xf32>
    %108 = arith.addf %107, %106 : vector<1x9xf32>
    %109 = arith.divf %107, %108 : vector<1x9xf32>
    %110 = vector.broadcast %109 : vector<1x9xf32> to vector<4x9xf32>
    %111 = arith.mulf %14, %110 : vector<4x9xf32>
    %c0_53 = arith.constant 0 : index
    %c0_54 = arith.constant 0 : index
    %c0_55 = arith.constant 0 : index
    %112 = vector.load %arg8[%c0_53, %c0_54, %c0_55] : memref<8x4x9xf32, #tpu.memory_space<vmem>>, vector<1x4x9xf32>
    %113 = vector.shape_cast %112 : vector<1x4x9xf32> to vector<4x9xf32>
    %114 = vector.shape_cast %111 : vector<4x9xf32> to vector<1x4x9xf32>
    tpu.vector_store %arg8[%c0_53, %c0_54, %c0_55], %114 {strides = array<i32>} : memref<8x4x9xf32, #tpu.memory_space<vmem>>, vector<1x4x9xf32>,
    %c1_56 = arith.constant 1 : index
    %c0_57 = arith.constant 0 : index
    %c0_58 = arith.constant 0 : index
    %115 = vector.load %arg1[%c1_56, %c0_57, %c0_58] : memref<8x4x9xf32, #tpu.memory_space<vmem>>, vector<1x4x9xf32>
    %116 = vector.shape_cast %115 : vector<1x4x9xf32> to vector<4x9xf32>
    %cst_59 = arith.constant dense<0.000000e+00> : vector<4x9xf32>
    %117 = tpu.matmul %0, %116, %cst_59 {dimension_numbers = #tpu.dot_dimension_numbers<[1], [0], [0], [1], [0, 0, 1, 1], [], []>} : vector<4x4xf32>, vector<4x9xf32>, vector<4x9xf32> -> vector<4x9xf32>
    %118 = vector.broadcast %1 : vector<4x1xf32> to vector<4x9xf32>
    %119 = arith.addf %117, %118 : vector<4x9xf32>
    %cst_60 = arith.constant dense<0.000000e+00> : vector<4xf32>
    %120 = vector.multi_reduction <add>, %119, %cst_60 [1] : vector<4x9xf32> to vector<4xf32>
    %121 = vector.shape_cast %120 : vector<4xf32> to vector<4x1xf32>
    %cst_61 = arith.constant 9.000000e+00 : f32
    %122 = vector.broadcast %cst_61 : f32 to vector<4x1xf32>
    %123 = arith.divf %121, %122 : vector<4x1xf32>
    %124 = arith.negf %119 : vector<4x9xf32>
    %125 = math.exp %124 : vector<4x9xf32>
    %cst_62 = arith.constant 1.000000e+00 : f32
    %126 = vector.broadcast %cst_62 : f32 to vector<4x9xf32>
    %127 = arith.addf %126, %125 : vector<4x9xf32>
    %128 = arith.divf %126, %127 : vector<4x9xf32>
    %129 = arith.mulf %116, %128 : vector<4x9xf32>
    %130 = arith.negf %123 : vector<4x1xf32>
    %131 = math.exp %130 : vector<4x1xf32>
    %cst_63 = arith.constant 1.000000e+00 : f32
    %132 = vector.broadcast %cst_63 : f32 to vector<4x1xf32>
    %133 = arith.addf %132, %131 : vector<4x1xf32>
    %134 = arith.divf %132, %133 : vector<4x1xf32>
    %135 = vector.broadcast %134 : vector<4x1xf32> to vector<4x9xf32>
    %136 = arith.mulf %129, %135 : vector<4x9xf32>
    %cst_64 = arith.constant dense<0.000000e+00> : vector<4xf32>
    %137 = vector.multi_reduction <add>, %136, %cst_64 [1] : vector<4x9xf32> to vector<4xf32>
    %138 = vector.shape_cast %137 : vector<4xf32> to vector<4x1xf32>
    %cst_65 = arith.constant 9.000000e+00 : f32
    %139 = vector.broadcast %cst_65 : f32 to vector<4x1xf32>
    %140 = arith.divf %138, %139 : vector<4x1xf32>
    %141 = vector.broadcast %140 : vector<4x1xf32> to vector<4x9xf32>
    %142 = arith.subf %136, %141 : vector<4x9xf32>
    %143 = arith.mulf %142, %142 : vector<4x9xf32>
    %cst_66 = arith.constant dense<0.000000e+00> : vector<4xf32>
    %144 = vector.multi_reduction <add>, %143, %cst_66 [1] : vector<4x9xf32> to vector<4xf32>
    %145 = vector.shape_cast %144 : vector<4xf32> to vector<4x1xf32>
    %cst_67 = arith.constant 9.000000e+00 : f32
    %146 = vector.broadcast %cst_67 : f32 to vector<4x1xf32>
    %147 = arith.divf %145, %146 : vector<4x1xf32>
    %148 = vector.broadcast %140 : vector<4x1xf32> to vector<4x9xf32>
    %149 = arith.subf %136, %148 : vector<4x9xf32>
    %cst_68 = arith.constant 9.99999974E-6 : f32
    %150 = vector.broadcast %cst_68 : f32 to vector<4x1xf32>
    %151 = arith.addf %147, %150 : vector<4x1xf32>
    %152 = math.rsqrt %151 : vector<4x1xf32>
    %153 = vector.broadcast %152 : vector<4x1xf32> to vector<4x9xf32>
    %154 = arith.mulf %149, %153 : vector<4x9xf32>
    %155 = vector.broadcast %3 : vector<4x1xf32> to vector<4x9xf32>
    %156 = arith.mulf %154, %155 : vector<4x9xf32>
    %157 = vector.broadcast %4 : vector<4x1xf32> to vector<4x9xf32>
    %158 = arith.addf %156, %157 : vector<4x9xf32>
    %c0_69 = arith.constant 0 : index
    %c1_70 = arith.constant 1 : index
    %159 = vector.load %arg9[%c0_69, %c1_70] : memref<4x11xf32, #tpu.memory_space<vmem>>, vector<4x9xf32>
    tpu.vector_store %arg9[%c0_69, %c1_70], %116 {strides = array<i32>} : memref<4x11xf32, #tpu.memory_space<vmem>>, vector<4x9xf32>,
    %c0_71 = arith.constant 0 : index
    %c0_72 = arith.constant 0 : index
    %160 = vector.load %arg9[%c0_71, %c0_72] : memref<4x11xf32, #tpu.memory_space<vmem>>, vector<4x9xf32>
    %cst_73 = arith.constant dense<0.000000e+00> : vector<4x9xf32>
    %161 = tpu.matmul %6, %160, %cst_73 {dimension_numbers = #tpu.dot_dimension_numbers<[1], [0], [0], [1], [0, 0, 1, 1], [], []>} : vector<4x4xf32>, vector<4x9xf32>, vector<4x9xf32> -> vector<4x9xf32>
    %c0_74 = arith.constant 0 : index
    %c1_75 = arith.constant 1 : index
    %162 = vector.load %arg9[%c0_74, %c1_75] : memref<4x11xf32, #tpu.memory_space<vmem>>, vector<4x9xf32>
    %cst_76 = arith.constant dense<0.000000e+00> : vector<4x9xf32>
    %163 = tpu.matmul %8, %162, %cst_76 {dimension_numbers = #tpu.dot_dimension_numbers<[1], [0], [0], [1], [0, 0, 1, 1], [], []>} : vector<4x4xf32>, vector<4x9xf32>, vector<4x9xf32> -> vector<4x9xf32>
    %164 = arith.addf %161, %163 : vector<4x9xf32>
    %c0_77 = arith.constant 0 : index
    %c2_78 = arith.constant 2 : index
    %165 = vector.load %arg9[%c0_77, %c2_78] : memref<4x11xf32, #tpu.memory_space<vmem>>, vector<4x9xf32>
    %cst_79 = arith.constant dense<0.000000e+00> : vector<4x9xf32>
    %166 = tpu.matmul %10, %165, %cst_79 {dimension_numbers = #tpu.dot_dimension_numbers<[1], [0], [0], [1], [0, 0, 1, 1], [], []>} : vector<4x4xf32>, vector<4x9xf32>, vector<4x9xf32> -> vector<4x9xf32>
    %167 = arith.addf %164, %166 : vector<4x9xf32>
    %168 = vector.broadcast %2 : vector<4x1xf32> to vector<4x9xf32>
    %169 = arith.addf %167, %168 : vector<4x9xf32>
    %cst_80 = arith.constant dense<0.000000e+00> : vector<4xf32>
    %170 = vector.multi_reduction <add>, %158, %cst_80 [1] : vector<4x9xf32> to vector<4xf32>
    %171 = vector.shape_cast %170 : vector<4xf32> to vector<4x1xf32>
    %cst_81 = arith.constant 9.000000e+00 : f32
    %172 = vector.broadcast %cst_81 : f32 to vector<4x1xf32>
    %173 = arith.divf %171, %172 : vector<4x1xf32>
    %cst_82 = arith.constant dense<0xFF800000> : vector<1xf32>
    %174 = vector.multi_reduction <maximumf>, %173, %cst_82 [0] : vector<4x1xf32> to vector<1xf32>
    %175 = vector.shape_cast %174 : vector<1xf32> to vector<1x1xf32>
    %176 = vector.broadcast %175 : vector<1x1xf32> to vector<4x1xf32>
    %177 = arith.subf %173, %176 : vector<4x1xf32>
    %178 = math.exp %177 : vector<4x1xf32>
    %cst_83 = arith.constant dense<0.000000e+00> : vector<1xf32>
    %179 = vector.multi_reduction <add>, %178, %cst_83 [0] : vector<4x1xf32> to vector<1xf32>
    %180 = vector.shape_cast %179 : vector<1xf32> to vector<1x1xf32>
    %181 = tpu.reciprocal %180 {approx = true} : vector<1x1xf32> -> vector<1x1xf32>
    %182 = vector.broadcast %181 : vector<1x1xf32> to vector<4x1xf32>
    %183 = arith.mulf %178, %182 : vector<4x1xf32>
    %cst_84 = arith.constant dense<0.000000e+00> : vector<4xf32>
    %184 = vector.multi_reduction <add>, %169, %cst_84 [1] : vector<4x9xf32> to vector<4xf32>
    %185 = vector.shape_cast %184 : vector<4xf32> to vector<4x1xf32>
    %cst_85 = arith.constant 9.000000e+00 : f32
    %186 = vector.broadcast %cst_85 : f32 to vector<4x1xf32>
    %187 = arith.divf %185, %186 : vector<4x1xf32>
    %cst_86 = arith.constant dense<0xFF800000> : vector<1xf32>
    %188 = vector.multi_reduction <maximumf>, %187, %cst_86 [0] : vector<4x1xf32> to vector<1xf32>
    %189 = vector.shape_cast %188 : vector<1xf32> to vector<1x1xf32>
    %190 = vector.broadcast %189 : vector<1x1xf32> to vector<4x1xf32>
    %191 = arith.subf %187, %190 : vector<4x1xf32>
    %192 = math.exp %191 : vector<4x1xf32>
    %cst_87 = arith.constant dense<0.000000e+00> : vector<1xf32>
    %193 = vector.multi_reduction <add>, %192, %cst_87 [0] : vector<4x1xf32> to vector<1xf32>
    %194 = vector.shape_cast %193 : vector<1xf32> to vector<1x1xf32>
    %195 = tpu.reciprocal %194 {approx = true} : vector<1x1xf32> -> vector<1x1xf32>
    %196 = vector.broadcast %195 : vector<1x1xf32> to vector<4x1xf32>
    %197 = arith.mulf %192, %196 : vector<4x1xf32>
    %198 = vector.broadcast %183 : vector<4x1xf32> to vector<4x9xf32>
    %199 = arith.mulf %198, %169 : vector<4x9xf32>
    %cst_88 = arith.constant dense<0.000000e+00> : vector<9xf32>
    %200 = vector.multi_reduction <add>, %199, %cst_88 [0] : vector<4x9xf32> to vector<9xf32>
    %201 = vector.shape_cast %200 : vector<9xf32> to vector<1x9xf32>
    %202 = vector.broadcast %197 : vector<4x1xf32> to vector<4x9xf32>
    %203 = arith.mulf %202, %158 : vector<4x9xf32>
    %cst_89 = arith.constant dense<0.000000e+00> : vector<9xf32>
    %204 = vector.multi_reduction <add>, %203, %cst_89 [0] : vector<4x9xf32> to vector<9xf32>
    %205 = vector.shape_cast %204 : vector<9xf32> to vector<1x9xf32>
    %206 = arith.addf %201, %205 : vector<1x9xf32>
    %207 = arith.negf %206 : vector<1x9xf32>
    %208 = math.exp %207 : vector<1x9xf32>
    %cst_90 = arith.constant 1.000000e+00 : f32
    %209 = vector.broadcast %cst_90 : f32 to vector<1x9xf32>
    %210 = arith.addf %209, %208 : vector<1x9xf32>
    %211 = arith.divf %209, %210 : vector<1x9xf32>
    %212 = vector.broadcast %211 : vector<1x9xf32> to vector<4x9xf32>
    %213 = arith.mulf %116, %212 : vector<4x9xf32>
    %c1_91 = arith.constant 1 : index
    %c0_92 = arith.constant 0 : index
    %c0_93 = arith.constant 0 : index
    %214 = vector.load %arg8[%c1_91, %c0_92, %c0_93] : memref<8x4x9xf32, #tpu.memory_space<vmem>>, vector<1x4x9xf32>
    %215 = vector.shape_cast %214 : vector<1x4x9xf32> to vector<4x9xf32>
    %216 = vector.shape_cast %213 : vector<4x9xf32> to vector<1x4x9xf32>
    tpu.vector_store %arg8[%c1_91, %c0_92, %c0_93], %216 {strides = array<i32>} : memref<8x4x9xf32, #tpu.memory_space<vmem>>, vector<1x4x9xf32>,
    %c2_94 = arith.constant 2 : index
    %c0_95 = arith.constant 0 : index
    %c0_96 = arith.constant 0 : index
    %217 = vector.load %arg1[%c2_94, %c0_95, %c0_96] : memref<8x4x9xf32, #tpu.memory_space<vmem>>, vector<1x4x9xf32>
    %218 = vector.shape_cast %217 : vector<1x4x9xf32> to vector<4x9xf32>
    %cst_97 = arith.constant dense<0.000000e+00> : vector<4x9xf32>
    %219 = tpu.matmul %0, %218, %cst_97 {dimension_numbers = #tpu.dot_dimension_numbers<[1], [0], [0], [1], [0, 0, 1, 1], [], []>} : vector<4x4xf32>, vector<4x9xf32>, vector<4x9xf32> -> vector<4x9xf32>
    %220 = vector.broadcast %1 : vector<4x1xf32> to vector<4x9xf32>
    %221 = arith.addf %219, %220 : vector<4x9xf32>
    %cst_98 = arith.constant dense<0.000000e+00> : vector<4xf32>
    %222 = vector.multi_reduction <add>, %221, %cst_98 [1] : vector<4x9xf32> to vector<4xf32>
    %223 = vector.shape_cast %222 : vector<4xf32> to vector<4x1xf32>
    %cst_99 = arith.constant 9.000000e+00 : f32
    %224 = vector.broadcast %cst_99 : f32 to vector<4x1xf32>
    %225 = arith.divf %223, %224 : vector<4x1xf32>
    %226 = arith.negf %221 : vector<4x9xf32>
    %227 = math.exp %226 : vector<4x9xf32>
    %cst_100 = arith.constant 1.000000e+00 : f32
    %228 = vector.broadcast %cst_100 : f32 to vector<4x9xf32>
    %229 = arith.addf %228, %227 : vector<4x9xf32>
    %230 = arith.divf %228, %229 : vector<4x9xf32>
    %231 = arith.mulf %218, %230 : vector<4x9xf32>
    %232 = arith.negf %225 : vector<4x1xf32>
    %233 = math.exp %232 : vector<4x1xf32>
    %cst_101 = arith.constant 1.000000e+00 : f32
    %234 = vector.broadcast %cst_101 : f32 to vector<4x1xf32>
    %235 = arith.addf %234, %233 : vector<4x1xf32>
    %236 = arith.divf %234, %235 : vector<4x1xf32>
    %237 = vector.broadcast %236 : vector<4x1xf32> to vector<4x9xf32>
    %238 = arith.mulf %231, %237 : vector<4x9xf32>
    %cst_102 = arith.constant dense<0.000000e+00> : vector<4xf32>
    %239 = vector.multi_reduction <add>, %238, %cst_102 [1] : vector<4x9xf32> to vector<4xf32>
    %240 = vector.shape_cast %239 : vector<4xf32> to vector<4x1xf32>
    %cst_103 = arith.constant 9.000000e+00 : f32
    %241 = vector.broadcast %cst_103 : f32 to vector<4x1xf32>
    %242 = arith.divf %240, %241 : vector<4x1xf32>
    %243 = vector.broadcast %242 : vector<4x1xf32> to vector<4x9xf32>
    %244 = arith.subf %238, %243 : vector<4x9xf32>
    %245 = arith.mulf %244, %244 : vector<4x9xf32>
    %cst_104 = arith.constant dense<0.000000e+00> : vector<4xf32>
    %246 = vector.multi_reduction <add>, %245, %cst_104 [1] : vector<4x9xf32> to vector<4xf32>
    %247 = vector.shape_cast %246 : vector<4xf32> to vector<4x1xf32>
    %cst_105 = arith.constant 9.000000e+00 : f32
    %248 = vector.broadcast %cst_105 : f32 to vector<4x1xf32>
    %249 = arith.divf %247, %248 : vector<4x1xf32>
    %250 = vector.broadcast %242 : vector<4x1xf32> to vector<4x9xf32>
    %251 = arith.subf %238, %250 : vector<4x9xf32>
    %cst_106 = arith.constant 9.99999974E-6 : f32
    %252 = vector.broadcast %cst_106 : f32 to vector<4x1xf32>
    %253 = arith.addf %249, %252 : vector<4x1xf32>
    %254 = math.rsqrt %253 : vector<4x1xf32>
    %255 = vector.broadcast %254 : vector<4x1xf32> to vector<4x9xf32>
    %256 = arith.mulf %251, %255 : vector<4x9xf32>
    %257 = vector.broadcast %3 : vector<4x1xf32> to vector<4x9xf32>
    %258 = arith.mulf %256, %257 : vector<4x9xf32>
    %259 = vector.broadcast %4 : vector<4x1xf32> to vector<4x9xf32>
    %260 = arith.addf %258, %259 : vector<4x9xf32>
    %c0_107 = arith.constant 0 : index
    %c1_108 = arith.constant 1 : index
    %261 = vector.load %arg9[%c0_107, %c1_108] : memref<4x11xf32, #tpu.memory_space<vmem>>, vector<4x9xf32>
    tpu.vector_store %arg9[%c0_107, %c1_108], %218 {strides = array<i32>} : memref<4x11xf32, #tpu.memory_space<vmem>>, vector<4x9xf32>,
    %c0_109 = arith.constant 0 : index
    %c0_110 = arith.constant 0 : index
    %262 = vector.load %arg9[%c0_109, %c0_110] : memref<4x11xf32, #tpu.memory_space<vmem>>, vector<4x9xf32>
    %cst_111 = arith.constant dense<0.000000e+00> : vector<4x9xf32>
    %263 = tpu.matmul %6, %262, %cst_111 {dimension_numbers = #tpu.dot_dimension_numbers<[1], [0], [0], [1], [0, 0, 1, 1], [], []>} : vector<4x4xf32>, vector<4x9xf32>, vector<4x9xf32> -> vector<4x9xf32>
    %c0_112 = arith.constant 0 : index
    %c1_113 = arith.constant 1 : index
    %264 = vector.load %arg9[%c0_112, %c1_113] : memref<4x11xf32, #tpu.memory_space<vmem>>, vector<4x9xf32>
    %cst_114 = arith.constant dense<0.000000e+00> : vector<4x9xf32>
    %265 = tpu.matmul %8, %264, %cst_114 {dimension_numbers = #tpu.dot_dimension_numbers<[1], [0], [0], [1], [0, 0, 1, 1], [], []>} : vector<4x4xf32>, vector<4x9xf32>, vector<4x9xf32> -> vector<4x9xf32>
    %266 = arith.addf %263, %265 : vector<4x9xf32>
    %c0_115 = arith.constant 0 : index
    %c2_116 = arith.constant 2 : index
    %267 = vector.load %arg9[%c0_115, %c2_116] : memref<4x11xf32, #tpu.memory_space<vmem>>, vector<4x9xf32>
    %cst_117 = arith.constant dense<0.000000e+00> : vector<4x9xf32>
    %268 = tpu.matmul %10, %267, %cst_117 {dimension_numbers = #tpu.dot_dimension_numbers<[1], [0], [0], [1], [0, 0, 1, 1], [], []>} : vector<4x4xf32>, vector<4x9xf32>, vector<4x9xf32> -> vector<4x9xf32>
    %269 = arith.addf %266, %268 : vector<4x9xf32>
    %270 = vector.broadcast %2 : vector<4x1xf32> to vector<4x9xf32>
    %271 = arith.addf %269, %270 : vector<4x9xf32>
    %cst_118 = arith.constant dense<0.000000e+00> : vector<4xf32>
    %272 = vector.multi_reduction <add>, %260, %cst_118 [1] : vector<4x9xf32> to vector<4xf32>
    %273 = vector.shape_cast %272 : vector<4xf32> to vector<4x1xf32>
    %cst_119 = arith.constant 9.000000e+00 : f32
    %274 = vector.broadcast %cst_119 : f32 to vector<4x1xf32>
    %275 = arith.divf %273, %274 : vector<4x1xf32>
    %cst_120 = arith.constant dense<0xFF800000> : vector<1xf32>
    %276 = vector.multi_reduction <maximumf>, %275, %cst_120 [0] : vector<4x1xf32> to vector<1xf32>
    %277 = vector.shape_cast %276 : vector<1xf32> to vector<1x1xf32>
    %278 = vector.broadcast %277 : vector<1x1xf32> to vector<4x1xf32>
    %279 = arith.subf %275, %278 : vector<4x1xf32>
    %280 = math.exp %279 : vector<4x1xf32>
    %cst_121 = arith.constant dense<0.000000e+00> : vector<1xf32>
    %281 = vector.multi_reduction <add>, %280, %cst_121 [0] : vector<4x1xf32> to vector<1xf32>
    %282 = vector.shape_cast %281 : vector<1xf32> to vector<1x1xf32>
    %283 = tpu.reciprocal %282 {approx = true} : vector<1x1xf32> -> vector<1x1xf32>
    %284 = vector.broadcast %283 : vector<1x1xf32> to vector<4x1xf32>
    %285 = arith.mulf %280, %284 : vector<4x1xf32>
    %cst_122 = arith.constant dense<0.000000e+00> : vector<4xf32>
    %286 = vector.multi_reduction <add>, %271, %cst_122 [1] : vector<4x9xf32> to vector<4xf32>
    %287 = vector.shape_cast %286 : vector<4xf32> to vector<4x1xf32>
    %cst_123 = arith.constant 9.000000e+00 : f32
    %288 = vector.broadcast %cst_123 : f32 to vector<4x1xf32>
    %289 = arith.divf %287, %288 : vector<4x1xf32>
    %cst_124 = arith.constant dense<0xFF800000> : vector<1xf32>
    %290 = vector.multi_reduction <maximumf>, %289, %cst_124 [0] : vector<4x1xf32> to vector<1xf32>
    %291 = vector.shape_cast %290 : vector<1xf32> to vector<1x1xf32>
    %292 = vector.broadcast %291 : vector<1x1xf32> to vector<4x1xf32>
    %293 = arith.subf %289, %292 : vector<4x1xf32>
    %294 = math.exp %293 : vector<4x1xf32>
    %cst_125 = arith.constant dense<0.000000e+00> : vector<1xf32>
    %295 = vector.multi_reduction <add>, %294, %cst_125 [0] : vector<4x1xf32> to vector<1xf32>
    %296 = vector.shape_cast %295 : vector<1xf32> to vector<1x1xf32>
    %297 = tpu.reciprocal %296 {approx = true} : vector<1x1xf32> -> vector<1x1xf32>
    %298 = vector.broadcast %297 : vector<1x1xf32> to vector<4x1xf32>
    %299 = arith.mulf %294, %298 : vector<4x1xf32>
    %300 = vector.broadcast %285 : vector<4x1xf32> to vector<4x9xf32>
    %301 = arith.mulf %300, %271 : vector<4x9xf32>
    %cst_126 = arith.constant dense<0.000000e+00> : vector<9xf32>
    %302 = vector.multi_reduction <add>, %301, %cst_126 [0] : vector<4x9xf32> to vector<9xf32>
    %303 = vector.shape_cast %302 : vector<9xf32> to vector<1x9xf32>
    %304 = vector.broadcast %299 : vector<4x1xf32> to vector<4x9xf32>
    %305 = arith.mulf %304, %260 : vector<4x9xf32>
    %cst_127 = arith.constant dense<0.000000e+00> : vector<9xf32>
    %306 = vector.multi_reduction <add>, %305, %cst_127 [0] : vector<4x9xf32> to vector<9xf32>
    %307 = vector.shape_cast %306 : vector<9xf32> to vector<1x9xf32>
    %308 = arith.addf %303, %307 : vector<1x9xf32>
    %309 = arith.negf %308 : vector<1x9xf32>
    %310 = math.exp %309 : vector<1x9xf32>
    %cst_128 = arith.constant 1.000000e+00 : f32
    %311 = vector.broadcast %cst_128 : f32 to vector<1x9xf32>
    %312 = arith.addf %311, %310 : vector<1x9xf32>
    %313 = arith.divf %311, %312 : vector<1x9xf32>
    %314 = vector.broadcast %313 : vector<1x9xf32> to vector<4x9xf32>
    %315 = arith.mulf %218, %314 : vector<4x9xf32>
    %c2_129 = arith.constant 2 : index
    %c0_130 = arith.constant 0 : index
    %c0_131 = arith.constant 0 : index
    %316 = vector.load %arg8[%c2_129, %c0_130, %c0_131] : memref<8x4x9xf32, #tpu.memory_space<vmem>>, vector<1x4x9xf32>
    %317 = vector.shape_cast %316 : vector<1x4x9xf32> to vector<4x9xf32>
    %318 = vector.shape_cast %315 : vector<4x9xf32> to vector<1x4x9xf32>
    tpu.vector_store %arg8[%c2_129, %c0_130, %c0_131], %318 {strides = array<i32>} : memref<8x4x9xf32, #tpu.memory_space<vmem>>, vector<1x4x9xf32>,
    %c3 = arith.constant 3 : index
    %c0_132 = arith.constant 0 : index
    %c0_133 = arith.constant 0 : index
    %319 = vector.load %arg1[%c3, %c0_132, %c0_133] : memref<8x4x9xf32, #tpu.memory_space<vmem>>, vector<1x4x9xf32>
    %320 = vector.shape_cast %319 : vector<1x4x9xf32> to vector<4x9xf32>
    %cst_134 = arith.constant dense<0.000000e+00> : vector<4x9xf32>
    %321 = tpu.matmul %0, %320, %cst_134 {dimension_numbers = #tpu.dot_dimension_numbers<[1], [0], [0], [1], [0, 0, 1, 1], [], []>} : vector<4x4xf32>, vector<4x9xf32>, vector<4x9xf32> -> vector<4x9xf32>
    %322 = vector.broadcast %1 : vector<4x1xf32> to vector<4x9xf32>
    %323 = arith.addf %321, %322 : vector<4x9xf32>
    %cst_135 = arith.constant dense<0.000000e+00> : vector<4xf32>
    %324 = vector.multi_reduction <add>, %323, %cst_135 [1] : vector<4x9xf32> to vector<4xf32>
    %325 = vector.shape_cast %324 : vector<4xf32> to vector<4x1xf32>
    %cst_136 = arith.constant 9.000000e+00 : f32
    %326 = vector.broadcast %cst_136 : f32 to vector<4x1xf32>
    %327 = arith.divf %325, %326 : vector<4x1xf32>
    %328 = arith.negf %323 : vector<4x9xf32>
    %329 = math.exp %328 : vector<4x9xf32>
    %cst_137 = arith.constant 1.000000e+00 : f32
    %330 = vector.broadcast %cst_137 : f32 to vector<4x9xf32>
    %331 = arith.addf %330, %329 : vector<4x9xf32>
    %332 = arith.divf %330, %331 : vector<4x9xf32>
    %333 = arith.mulf %320, %332 : vector<4x9xf32>
    %334 = arith.negf %327 : vector<4x1xf32>
    %335 = math.exp %334 : vector<4x1xf32>
    %cst_138 = arith.constant 1.000000e+00 : f32
    %336 = vector.broadcast %cst_138 : f32 to vector<4x1xf32>
    %337 = arith.addf %336, %335 : vector<4x1xf32>
    %338 = arith.divf %336, %337 : vector<4x1xf32>
    %339 = vector.broadcast %338 : vector<4x1xf32> to vector<4x9xf32>
    %340 = arith.mulf %333, %339 : vector<4x9xf32>
    %cst_139 = arith.constant dense<0.000000e+00> : vector<4xf32>
    %341 = vector.multi_reduction <add>, %340, %cst_139 [1] : vector<4x9xf32> to vector<4xf32>
    %342 = vector.shape_cast %341 : vector<4xf32> to vector<4x1xf32>
    %cst_140 = arith.constant 9.000000e+00 : f32
    %343 = vector.broadcast %cst_140 : f32 to vector<4x1xf32>
    %344 = arith.divf %342, %343 : vector<4x1xf32>
    %345 = vector.broadcast %344 : vector<4x1xf32> to vector<4x9xf32>
    %346 = arith.subf %340, %345 : vector<4x9xf32>
    %347 = arith.mulf %346, %346 : vector<4x9xf32>
    %cst_141 = arith.constant dense<0.000000e+00> : vector<4xf32>
    %348 = vector.multi_reduction <add>, %347, %cst_141 [1] : vector<4x9xf32> to vector<4xf32>
    %349 = vector.shape_cast %348 : vector<4xf32> to vector<4x1xf32>
    %cst_142 = arith.constant 9.000000e+00 : f32
    %350 = vector.broadcast %cst_142 : f32 to vector<4x1xf32>
    %351 = arith.divf %349, %350 : vector<4x1xf32>
    %352 = vector.broadcast %344 : vector<4x1xf32> to vector<4x9xf32>
    %353 = arith.subf %340, %352 : vector<4x9xf32>
    %cst_143 = arith.constant 9.99999974E-6 : f32
    %354 = vector.broadcast %cst_143 : f32 to vector<4x1xf32>
    %355 = arith.addf %351, %354 : vector<4x1xf32>
    %356 = math.rsqrt %355 : vector<4x1xf32>
    %357 = vector.broadcast %356 : vector<4x1xf32> to vector<4x9xf32>
    %358 = arith.mulf %353, %357 : vector<4x9xf32>
    %359 = vector.broadcast %3 : vector<4x1xf32> to vector<4x9xf32>
    %360 = arith.mulf %358, %359 : vector<4x9xf32>
    %361 = vector.broadcast %4 : vector<4x1xf32> to vector<4x9xf32>
    %362 = arith.addf %360, %361 : vector<4x9xf32>
    %c0_144 = arith.constant 0 : index
    %c1_145 = arith.constant 1 : index
    %363 = vector.load %arg9[%c0_144, %c1_145] : memref<4x11xf32, #tpu.memory_space<vmem>>, vector<4x9xf32>
    tpu.vector_store %arg9[%c0_144, %c1_145], %320 {strides = array<i32>} : memref<4x11xf32, #tpu.memory_space<vmem>>, vector<4x9xf32>,
    %c0_146 = arith.constant 0 : index
    %c0_147 = arith.constant 0 : index
    %364 = vector.load %arg9[%c0_146, %c0_147] : memref<4x11xf32, #tpu.memory_space<vmem>>, vector<4x9xf32>
    %cst_148 = arith.constant dense<0.000000e+00> : vector<4x9xf32>
    %365 = tpu.matmul %6, %364, %cst_148 {dimension_numbers = #tpu.dot_dimension_numbers<[1], [0], [0], [1], [0, 0, 1, 1], [], []>} : vector<4x4xf32>, vector<4x9xf32>, vector<4x9xf32> -> vector<4x9xf32>
    %c0_149 = arith.constant 0 : index
    %c1_150 = arith.constant 1 : index
    %366 = vector.load %arg9[%c0_149, %c1_150] : memref<4x11xf32, #tpu.memory_space<vmem>>, vector<4x9xf32>
    %cst_151 = arith.constant dense<0.000000e+00> : vector<4x9xf32>
    %367 = tpu.matmul %8, %366, %cst_151 {dimension_numbers = #tpu.dot_dimension_numbers<[1], [0], [0], [1], [0, 0, 1, 1], [], []>} : vector<4x4xf32>, vector<4x9xf32>, vector<4x9xf32> -> vector<4x9xf32>
    %368 = arith.addf %365, %367 : vector<4x9xf32>
    %c0_152 = arith.constant 0 : index
    %c2_153 = arith.constant 2 : index
    %369 = vector.load %arg9[%c0_152, %c2_153] : memref<4x11xf32, #tpu.memory_space<vmem>>, vector<4x9xf32>
    %cst_154 = arith.constant dense<0.000000e+00> : vector<4x9xf32>
    %370 = tpu.matmul %10, %369, %cst_154 {dimension_numbers = #tpu.dot_dimension_numbers<[1], [0], [0], [1], [0, 0, 1, 1], [], []>} : vector<4x4xf32>, vector<4x9xf32>, vector<4x9xf32> -> vector<4x9xf32>
    %371 = arith.addf %368, %370 : vector<4x9xf32>
    %372 = vector.broadcast %2 : vector<4x1xf32> to vector<4x9xf32>
    %373 = arith.addf %371, %372 : vector<4x9xf32>
    %cst_155 = arith.constant dense<0.000000e+00> : vector<4xf32>
    %374 = vector.multi_reduction <add>, %362, %cst_155 [1] : vector<4x9xf32> to vector<4xf32>
    %375 = vector.shape_cast %374 : vector<4xf32> to vector<4x1xf32>
    %cst_156 = arith.constant 9.000000e+00 : f32
    %376 = vector.broadcast %cst_156 : f32 to vector<4x1xf32>
    %377 = arith.divf %375, %376 : vector<4x1xf32>
    %cst_157 = arith.constant dense<0xFF800000> : vector<1xf32>
    %378 = vector.multi_reduction <maximumf>, %377, %cst_157 [0] : vector<4x1xf32> to vector<1xf32>
    %379 = vector.shape_cast %378 : vector<1xf32> to vector<1x1xf32>
    %380 = vector.broadcast %379 : vector<1x1xf32> to vector<4x1xf32>
    %381 = arith.subf %377, %380 : vector<4x1xf32>
    %382 = math.exp %381 : vector<4x1xf32>
    %cst_158 = arith.constant dense<0.000000e+00> : vector<1xf32>
    %383 = vector.multi_reduction <add>, %382, %cst_158 [0] : vector<4x1xf32> to vector<1xf32>
    %384 = vector.shape_cast %383 : vector<1xf32> to vector<1x1xf32>
    %385 = tpu.reciprocal %384 {approx = true} : vector<1x1xf32> -> vector<1x1xf32>
    %386 = vector.broadcast %385 : vector<1x1xf32> to vector<4x1xf32>
    %387 = arith.mulf %382, %386 : vector<4x1xf32>
    %cst_159 = arith.constant dense<0.000000e+00> : vector<4xf32>
    %388 = vector.multi_reduction <add>, %373, %cst_159 [1] : vector<4x9xf32> to vector<4xf32>
    %389 = vector.shape_cast %388 : vector<4xf32> to vector<4x1xf32>
    %cst_160 = arith.constant 9.000000e+00 : f32
    %390 = vector.broadcast %cst_160 : f32 to vector<4x1xf32>
    %391 = arith.divf %389, %390 : vector<4x1xf32>
    %cst_161 = arith.constant dense<0xFF800000> : vector<1xf32>
    %392 = vector.multi_reduction <maximumf>, %391, %cst_161 [0] : vector<4x1xf32> to vector<1xf32>
    %393 = vector.shape_cast %392 : vector<1xf32> to vector<1x1xf32>
    %394 = vector.broadcast %393 : vector<1x1xf32> to vector<4x1xf32>
    %395 = arith.subf %391, %394 : vector<4x1xf32>
    %396 = math.exp %395 : vector<4x1xf32>
    %cst_162 = arith.constant dense<0.000000e+00> : vector<1xf32>
    %397 = vector.multi_reduction <add>, %396, %cst_162 [0] : vector<4x1xf32> to vector<1xf32>
    %398 = vector.shape_cast %397 : vector<1xf32> to vector<1x1xf32>
    %399 = tpu.reciprocal %398 {approx = true} : vector<1x1xf32> -> vector<1x1xf32>
    %400 = vector.broadcast %399 : vector<1x1xf32> to vector<4x1xf32>
    %401 = arith.mulf %396, %400 : vector<4x1xf32>
    %402 = vector.broadcast %387 : vector<4x1xf32> to vector<4x9xf32>
    %403 = arith.mulf %402, %373 : vector<4x9xf32>
    %cst_163 = arith.constant dense<0.000000e+00> : vector<9xf32>
    %404 = vector.multi_reduction <add>, %403, %cst_163 [0] : vector<4x9xf32> to vector<9xf32>
    %405 = vector.shape_cast %404 : vector<9xf32> to vector<1x9xf32>
    %406 = vector.broadcast %401 : vector<4x1xf32> to vector<4x9xf32>
    %407 = arith.mulf %406, %362 : vector<4x9xf32>
    %cst_164 = arith.constant dense<0.000000e+00> : vector<9xf32>
    %408 = vector.multi_reduction <add>, %407, %cst_164 [0] : vector<4x9xf32> to vector<9xf32>
    %409 = vector.shape_cast %408 : vector<9xf32> to vector<1x9xf32>
    %410 = arith.addf %405, %409 : vector<1x9xf32>
    %411 = arith.negf %410 : vector<1x9xf32>
    %412 = math.exp %411 : vector<1x9xf32>
    %cst_165 = arith.constant 1.000000e+00 : f32
    %413 = vector.broadcast %cst_165 : f32 to vector<1x9xf32>
    %414 = arith.addf %413, %412 : vector<1x9xf32>
    %415 = arith.divf %413, %414 : vector<1x9xf32>
    %416 = vector.broadcast %415 : vector<1x9xf32> to vector<4x9xf32>
    %417 = arith.mulf %320, %416 : vector<4x9xf32>
    %c3_166 = arith.constant 3 : index
    %c0_167 = arith.constant 0 : index
    %c0_168 = arith.constant 0 : index
    %418 = vector.load %arg8[%c3_166, %c0_167, %c0_168] : memref<8x4x9xf32, #tpu.memory_space<vmem>>, vector<1x4x9xf32>
    %419 = vector.shape_cast %418 : vector<1x4x9xf32> to vector<4x9xf32>
    %420 = vector.shape_cast %417 : vector<4x9xf32> to vector<1x4x9xf32>
    tpu.vector_store %arg8[%c3_166, %c0_167, %c0_168], %420 {strides = array<i32>} : memref<8x4x9xf32, #tpu.memory_space<vmem>>, vector<1x4x9xf32>,
    %c4 = arith.constant 4 : index
    %c0_169 = arith.constant 0 : index
    %c0_170 = arith.constant 0 : index
    %421 = vector.load %arg1[%c4, %c0_169, %c0_170] : memref<8x4x9xf32, #tpu.memory_space<vmem>>, vector<1x4x9xf32>
    %422 = vector.shape_cast %421 : vector<1x4x9xf32> to vector<4x9xf32>
    %cst_171 = arith.constant dense<0.000000e+00> : vector<4x9xf32>
    %423 = tpu.matmul %0, %422, %cst_171 {dimension_numbers = #tpu.dot_dimension_numbers<[1], [0], [0], [1], [0, 0, 1, 1], [], []>} : vector<4x4xf32>, vector<4x9xf32>, vector<4x9xf32> -> vector<4x9xf32>
    %424 = vector.broadcast %1 : vector<4x1xf32> to vector<4x9xf32>
    %425 = arith.addf %423, %424 : vector<4x9xf32>
    %cst_172 = arith.constant dense<0.000000e+00> : vector<4xf32>
    %426 = vector.multi_reduction <add>, %425, %cst_172 [1] : vector<4x9xf32> to vector<4xf32>
    %427 = vector.shape_cast %426 : vector<4xf32> to vector<4x1xf32>
    %cst_173 = arith.constant 9.000000e+00 : f32
    %428 = vector.broadcast %cst_173 : f32 to vector<4x1xf32>
    %429 = arith.divf %427, %428 : vector<4x1xf32>
    %430 = arith.negf %425 : vector<4x9xf32>
    %431 = math.exp %430 : vector<4x9xf32>
    %cst_174 = arith.constant 1.000000e+00 : f32
    %432 = vector.broadcast %cst_174 : f32 to vector<4x9xf32>
    %433 = arith.addf %432, %431 : vector<4x9xf32>
    %434 = arith.divf %432, %433 : vector<4x9xf32>
    %435 = arith.mulf %422, %434 : vector<4x9xf32>
    %436 = arith.negf %429 : vector<4x1xf32>
    %437 = math.exp %436 : vector<4x1xf32>
    %cst_175 = arith.constant 1.000000e+00 : f32
    %438 = vector.broadcast %cst_175 : f32 to vector<4x1xf32>
    %439 = arith.addf %438, %437 : vector<4x1xf32>
    %440 = arith.divf %438, %439 : vector<4x1xf32>
    %441 = vector.broadcast %440 : vector<4x1xf32> to vector<4x9xf32>
    %442 = arith.mulf %435, %441 : vector<4x9xf32>
    %cst_176 = arith.constant dense<0.000000e+00> : vector<4xf32>
    %443 = vector.multi_reduction <add>, %442, %cst_176 [1] : vector<4x9xf32> to vector<4xf32>
    %444 = vector.shape_cast %443 : vector<4xf32> to vector<4x1xf32>
    %cst_177 = arith.constant 9.000000e+00 : f32
    %445 = vector.broadcast %cst_177 : f32 to vector<4x1xf32>
    %446 = arith.divf %444, %445 : vector<4x1xf32>
    %447 = vector.broadcast %446 : vector<4x1xf32> to vector<4x9xf32>
    %448 = arith.subf %442, %447 : vector<4x9xf32>
    %449 = arith.mulf %448, %448 : vector<4x9xf32>
    %cst_178 = arith.constant dense<0.000000e+00> : vector<4xf32>
    %450 = vector.multi_reduction <add>, %449, %cst_178 [1] : vector<4x9xf32> to vector<4xf32>
    %451 = vector.shape_cast %450 : vector<4xf32> to vector<4x1xf32>
    %cst_179 = arith.constant 9.000000e+00 : f32
    %452 = vector.broadcast %cst_179 : f32 to vector<4x1xf32>
    %453 = arith.divf %451, %452 : vector<4x1xf32>
    %454 = vector.broadcast %446 : vector<4x1xf32> to vector<4x9xf32>
    %455 = arith.subf %442, %454 : vector<4x9xf32>
    %cst_180 = arith.constant 9.99999974E-6 : f32
    %456 = vector.broadcast %cst_180 : f32 to vector<4x1xf32>
    %457 = arith.addf %453, %456 : vector<4x1xf32>
    %458 = math.rsqrt %457 : vector<4x1xf32>
    %459 = vector.broadcast %458 : vector<4x1xf32> to vector<4x9xf32>
    %460 = arith.mulf %455, %459 : vector<4x9xf32>
    %461 = vector.broadcast %3 : vector<4x1xf32> to vector<4x9xf32>
    %462 = arith.mulf %460, %461 : vector<4x9xf32>
    %463 = vector.broadcast %4 : vector<4x1xf32> to vector<4x9xf32>
    %464 = arith.addf %462, %463 : vector<4x9xf32>
    %c0_181 = arith.constant 0 : index
    %c1_182 = arith.constant 1 : index
    %465 = vector.load %arg9[%c0_181, %c1_182] : memref<4x11xf32, #tpu.memory_space<vmem>>, vector<4x9xf32>
    tpu.vector_store %arg9[%c0_181, %c1_182], %422 {strides = array<i32>} : memref<4x11xf32, #tpu.memory_space<vmem>>, vector<4x9xf32>,
    %c0_183 = arith.constant 0 : index
    %c0_184 = arith.constant 0 : index
    %466 = vector.load %arg9[%c0_183, %c0_184] : memref<4x11xf32, #tpu.memory_space<vmem>>, vector<4x9xf32>
    %cst_185 = arith.constant dense<0.000000e+00> : vector<4x9xf32>
    %467 = tpu.matmul %6, %466, %cst_185 {dimension_numbers = #tpu.dot_dimension_numbers<[1], [0], [0], [1], [0, 0, 1, 1], [], []>} : vector<4x4xf32>, vector<4x9xf32>, vector<4x9xf32> -> vector<4x9xf32>
    %c0_186 = arith.constant 0 : index
    %c1_187 = arith.constant 1 : index
    %468 = vector.load %arg9[%c0_186, %c1_187] : memref<4x11xf32, #tpu.memory_space<vmem>>, vector<4x9xf32>
    %cst_188 = arith.constant dense<0.000000e+00> : vector<4x9xf32>
    %469 = tpu.matmul %8, %468, %cst_188 {dimension_numbers = #tpu.dot_dimension_numbers<[1], [0], [0], [1], [0, 0, 1, 1], [], []>} : vector<4x4xf32>, vector<4x9xf32>, vector<4x9xf32> -> vector<4x9xf32>
    %470 = arith.addf %467, %469 : vector<4x9xf32>
    %c0_189 = arith.constant 0 : index
    %c2_190 = arith.constant 2 : index
    %471 = vector.load %arg9[%c0_189, %c2_190] : memref<4x11xf32, #tpu.memory_space<vmem>>, vector<4x9xf32>
    %cst_191 = arith.constant dense<0.000000e+00> : vector<4x9xf32>
    %472 = tpu.matmul %10, %471, %cst_191 {dimension_numbers = #tpu.dot_dimension_numbers<[1], [0], [0], [1], [0, 0, 1, 1], [], []>} : vector<4x4xf32>, vector<4x9xf32>, vector<4x9xf32> -> vector<4x9xf32>
    %473 = arith.addf %470, %472 : vector<4x9xf32>
    %474 = vector.broadcast %2 : vector<4x1xf32> to vector<4x9xf32>
    %475 = arith.addf %473, %474 : vector<4x9xf32>
    %cst_192 = arith.constant dense<0.000000e+00> : vector<4xf32>
    %476 = vector.multi_reduction <add>, %464, %cst_192 [1] : vector<4x9xf32> to vector<4xf32>
    %477 = vector.shape_cast %476 : vector<4xf32> to vector<4x1xf32>
    %cst_193 = arith.constant 9.000000e+00 : f32
    %478 = vector.broadcast %cst_193 : f32 to vector<4x1xf32>
    %479 = arith.divf %477, %478 : vector<4x1xf32>
    %cst_194 = arith.constant dense<0xFF800000> : vector<1xf32>
    %480 = vector.multi_reduction <maximumf>, %479, %cst_194 [0] : vector<4x1xf32> to vector<1xf32>
    %481 = vector.shape_cast %480 : vector<1xf32> to vector<1x1xf32>
    %482 = vector.broadcast %481 : vector<1x1xf32> to vector<4x1xf32>
    %483 = arith.subf %479, %482 : vector<4x1xf32>
    %484 = math.exp %483 : vector<4x1xf32>
    %cst_195 = arith.constant dense<0.000000e+00> : vector<1xf32>
    %485 = vector.multi_reduction <add>, %484, %cst_195 [0] : vector<4x1xf32> to vector<1xf32>
    %486 = vector.shape_cast %485 : vector<1xf32> to vector<1x1xf32>
    %487 = tpu.reciprocal %486 {approx = true} : vector<1x1xf32> -> vector<1x1xf32>
    %488 = vector.broadcast %487 : vector<1x1xf32> to vector<4x1xf32>
    %489 = arith.mulf %484, %488 : vector<4x1xf32>
    %cst_196 = arith.constant dense<0.000000e+00> : vector<4xf32>
    %490 = vector.multi_reduction <add>, %475, %cst_196 [1] : vector<4x9xf32> to vector<4xf32>
    %491 = vector.shape_cast %490 : vector<4xf32> to vector<4x1xf32>
    %cst_197 = arith.constant 9.000000e+00 : f32
    %492 = vector.broadcast %cst_197 : f32 to vector<4x1xf32>
    %493 = arith.divf %491, %492 : vector<4x1xf32>
    %cst_198 = arith.constant dense<0xFF800000> : vector<1xf32>
    %494 = vector.multi_reduction <maximumf>, %493, %cst_198 [0] : vector<4x1xf32> to vector<1xf32>
    %495 = vector.shape_cast %494 : vector<1xf32> to vector<1x1xf32>
    %496 = vector.broadcast %495 : vector<1x1xf32> to vector<4x1xf32>
    %497 = arith.subf %493, %496 : vector<4x1xf32>
    %498 = math.exp %497 : vector<4x1xf32>
    %cst_199 = arith.constant dense<0.000000e+00> : vector<1xf32>
    %499 = vector.multi_reduction <add>, %498, %cst_199 [0] : vector<4x1xf32> to vector<1xf32>
    %500 = vector.shape_cast %499 : vector<1xf32> to vector<1x1xf32>
    %501 = tpu.reciprocal %500 {approx = true} : vector<1x1xf32> -> vector<1x1xf32>
    %502 = vector.broadcast %501 : vector<1x1xf32> to vector<4x1xf32>
    %503 = arith.mulf %498, %502 : vector<4x1xf32>
    %504 = vector.broadcast %489 : vector<4x1xf32> to vector<4x9xf32>
    %505 = arith.mulf %504, %475 : vector<4x9xf32>
    %cst_200 = arith.constant dense<0.000000e+00> : vector<9xf32>
    %506 = vector.multi_reduction <add>, %505, %cst_200 [0] : vector<4x9xf32> to vector<9xf32>
    %507 = vector.shape_cast %506 : vector<9xf32> to vector<1x9xf32>
    %508 = vector.broadcast %503 : vector<4x1xf32> to vector<4x9xf32>
    %509 = arith.mulf %508, %464 : vector<4x9xf32>
    %cst_201 = arith.constant dense<0.000000e+00> : vector<9xf32>
    %510 = vector.multi_reduction <add>, %509, %cst_201 [0] : vector<4x9xf32> to vector<9xf32>
    %511 = vector.shape_cast %510 : vector<9xf32> to vector<1x9xf32>
    %512 = arith.addf %507, %511 : vector<1x9xf32>
    %513 = arith.negf %512 : vector<1x9xf32>
    %514 = math.exp %513 : vector<1x9xf32>
    %cst_202 = arith.constant 1.000000e+00 : f32
    %515 = vector.broadcast %cst_202 : f32 to vector<1x9xf32>
    %516 = arith.addf %515, %514 : vector<1x9xf32>
    %517 = arith.divf %515, %516 : vector<1x9xf32>
    %518 = vector.broadcast %517 : vector<1x9xf32> to vector<4x9xf32>
    %519 = arith.mulf %422, %518 : vector<4x9xf32>
    %c4_203 = arith.constant 4 : index
    %c0_204 = arith.constant 0 : index
    %c0_205 = arith.constant 0 : index
    %520 = vector.load %arg8[%c4_203, %c0_204, %c0_205] : memref<8x4x9xf32, #tpu.memory_space<vmem>>, vector<1x4x9xf32>
    %521 = vector.shape_cast %520 : vector<1x4x9xf32> to vector<4x9xf32>
    %522 = vector.shape_cast %519 : vector<4x9xf32> to vector<1x4x9xf32>
    tpu.vector_store %arg8[%c4_203, %c0_204, %c0_205], %522 {strides = array<i32>} : memref<8x4x9xf32, #tpu.memory_space<vmem>>, vector<1x4x9xf32>,
    %c5 = arith.constant 5 : index
    %c0_206 = arith.constant 0 : index
    %c0_207 = arith.constant 0 : index
    %523 = vector.load %arg1[%c5, %c0_206, %c0_207] : memref<8x4x9xf32, #tpu.memory_space<vmem>>, vector<1x4x9xf32>
    %524 = vector.shape_cast %523 : vector<1x4x9xf32> to vector<4x9xf32>
    %cst_208 = arith.constant dense<0.000000e+00> : vector<4x9xf32>
    %525 = tpu.matmul %0, %524, %cst_208 {dimension_numbers = #tpu.dot_dimension_numbers<[1], [0], [0], [1], [0, 0, 1, 1], [], []>} : vector<4x4xf32>, vector<4x9xf32>, vector<4x9xf32> -> vector<4x9xf32>
    %526 = vector.broadcast %1 : vector<4x1xf32> to vector<4x9xf32>
    %527 = arith.addf %525, %526 : vector<4x9xf32>
    %cst_209 = arith.constant dense<0.000000e+00> : vector<4xf32>
    %528 = vector.multi_reduction <add>, %527, %cst_209 [1] : vector<4x9xf32> to vector<4xf32>
    %529 = vector.shape_cast %528 : vector<4xf32> to vector<4x1xf32>
    %cst_210 = arith.constant 9.000000e+00 : f32
    %530 = vector.broadcast %cst_210 : f32 to vector<4x1xf32>
    %531 = arith.divf %529, %530 : vector<4x1xf32>
    %532 = arith.negf %527 : vector<4x9xf32>
    %533 = math.exp %532 : vector<4x9xf32>
    %cst_211 = arith.constant 1.000000e+00 : f32
    %534 = vector.broadcast %cst_211 : f32 to vector<4x9xf32>
    %535 = arith.addf %534, %533 : vector<4x9xf32>
    %536 = arith.divf %534, %535 : vector<4x9xf32>
    %537 = arith.mulf %524, %536 : vector<4x9xf32>
    %538 = arith.negf %531 : vector<4x1xf32>
    %539 = math.exp %538 : vector<4x1xf32>
    %cst_212 = arith.constant 1.000000e+00 : f32
    %540 = vector.broadcast %cst_212 : f32 to vector<4x1xf32>
    %541 = arith.addf %540, %539 : vector<4x1xf32>
    %542 = arith.divf %540, %541 : vector<4x1xf32>
    %543 = vector.broadcast %542 : vector<4x1xf32> to vector<4x9xf32>
    %544 = arith.mulf %537, %543 : vector<4x9xf32>
    %cst_213 = arith.constant dense<0.000000e+00> : vector<4xf32>
    %545 = vector.multi_reduction <add>, %544, %cst_213 [1] : vector<4x9xf32> to vector<4xf32>
    %546 = vector.shape_cast %545 : vector<4xf32> to vector<4x1xf32>
    %cst_214 = arith.constant 9.000000e+00 : f32
    %547 = vector.broadcast %cst_214 : f32 to vector<4x1xf32>
    %548 = arith.divf %546, %547 : vector<4x1xf32>
    %549 = vector.broadcast %548 : vector<4x1xf32> to vector<4x9xf32>
    %550 = arith.subf %544, %549 : vector<4x9xf32>
    %551 = arith.mulf %550, %550 : vector<4x9xf32>
    %cst_215 = arith.constant dense<0.000000e+00> : vector<4xf32>
    %552 = vector.multi_reduction <add>, %551, %cst_215 [1] : vector<4x9xf32> to vector<4xf32>
    %553 = vector.shape_cast %552 : vector<4xf32> to vector<4x1xf32>
    %cst_216 = arith.constant 9.000000e+00 : f32
    %554 = vector.broadcast %cst_216 : f32 to vector<4x1xf32>
    %555 = arith.divf %553, %554 : vector<4x1xf32>
    %556 = vector.broadcast %548 : vector<4x1xf32> to vector<4x9xf32>
    %557 = arith.subf %544, %556 : vector<4x9xf32>
    %cst_217 = arith.constant 9.99999974E-6 : f32
    %558 = vector.broadcast %cst_217 : f32 to vector<4x1xf32>
    %559 = arith.addf %555, %558 : vector<4x1xf32>
    %560 = math.rsqrt %559 : vector<4x1xf32>
    %561 = vector.broadcast %560 : vector<4x1xf32> to vector<4x9xf32>
    %562 = arith.mulf %557, %561 : vector<4x9xf32>
    %563 = vector.broadcast %3 : vector<4x1xf32> to vector<4x9xf32>
    %564 = arith.mulf %562, %563 : vector<4x9xf32>
    %565 = vector.broadcast %4 : vector<4x1xf32> to vector<4x9xf32>
    %566 = arith.addf %564, %565 : vector<4x9xf32>
    %c0_218 = arith.constant 0 : index
    %c1_219 = arith.constant 1 : index
    %567 = vector.load %arg9[%c0_218, %c1_219] : memref<4x11xf32, #tpu.memory_space<vmem>>, vector<4x9xf32>
    tpu.vector_store %arg9[%c0_218, %c1_219], %524 {strides = array<i32>} : memref<4x11xf32, #tpu.memory_space<vmem>>, vector<4x9xf32>,
    %c0_220 = arith.constant 0 : index
    %c0_221 = arith.constant 0 : index
    %568 = vector.load %arg9[%c0_220, %c0_221] : memref<4x11xf32, #tpu.memory_space<vmem>>, vector<4x9xf32>
    %cst_222 = arith.constant dense<0.000000e+00> : vector<4x9xf32>
    %569 = tpu.matmul %6, %568, %cst_222 {dimension_numbers = #tpu.dot_dimension_numbers<[1], [0], [0], [1], [0, 0, 1, 1], [], []>} : vector<4x4xf32>, vector<4x9xf32>, vector<4x9xf32> -> vector<4x9xf32>
    %c0_223 = arith.constant 0 : index
    %c1_224 = arith.constant 1 : index
    %570 = vector.load %arg9[%c0_223, %c1_224] : memref<4x11xf32, #tpu.memory_space<vmem>>, vector<4x9xf32>
    %cst_225 = arith.constant dense<0.000000e+00> : vector<4x9xf32>
    %571 = tpu.matmul %8, %570, %cst_225 {dimension_numbers = #tpu.dot_dimension_numbers<[1], [0], [0], [1], [0, 0, 1, 1], [], []>} : vector<4x4xf32>, vector<4x9xf32>, vector<4x9xf32> -> vector<4x9xf32>
    %572 = arith.addf %569, %571 : vector<4x9xf32>
    %c0_226 = arith.constant 0 : index
    %c2_227 = arith.constant 2 : index
    %573 = vector.load %arg9[%c0_226, %c2_227] : memref<4x11xf32, #tpu.memory_space<vmem>>, vector<4x9xf32>
    %cst_228 = arith.constant dense<0.000000e+00> : vector<4x9xf32>
    %574 = tpu.matmul %10, %573, %cst_228 {dimension_numbers = #tpu.dot_dimension_numbers<[1], [0], [0], [1], [0, 0, 1, 1], [], []>} : vector<4x4xf32>, vector<4x9xf32>, vector<4x9xf32> -> vector<4x9xf32>
    %575 = arith.addf %572, %574 : vector<4x9xf32>
    %576 = vector.broadcast %2 : vector<4x1xf32> to vector<4x9xf32>
    %577 = arith.addf %575, %576 : vector<4x9xf32>
    %cst_229 = arith.constant dense<0.000000e+00> : vector<4xf32>
    %578 = vector.multi_reduction <add>, %566, %cst_229 [1] : vector<4x9xf32> to vector<4xf32>
    %579 = vector.shape_cast %578 : vector<4xf32> to vector<4x1xf32>
    %cst_230 = arith.constant 9.000000e+00 : f32
    %580 = vector.broadcast %cst_230 : f32 to vector<4x1xf32>
    %581 = arith.divf %579, %580 : vector<4x1xf32>
    %cst_231 = arith.constant dense<0xFF800000> : vector<1xf32>
    %582 = vector.multi_reduction <maximumf>, %581, %cst_231 [0] : vector<4x1xf32> to vector<1xf32>
    %583 = vector.shape_cast %582 : vector<1xf32> to vector<1x1xf32>
    %584 = vector.broadcast %583 : vector<1x1xf32> to vector<4x1xf32>
    %585 = arith.subf %581, %584 : vector<4x1xf32>
    %586 = math.exp %585 : vector<4x1xf32>
    %cst_232 = arith.constant dense<0.000000e+00> : vector<1xf32>
    %587 = vector.multi_reduction <add>, %586, %cst_232 [0] : vector<4x1xf32> to vector<1xf32>
    %588 = vector.shape_cast %587 : vector<1xf32> to vector<1x1xf32>
    %589 = tpu.reciprocal %588 {approx = true} : vector<1x1xf32> -> vector<1x1xf32>
    %590 = vector.broadcast %589 : vector<1x1xf32> to vector<4x1xf32>
    %591 = arith.mulf %586, %590 : vector<4x1xf32>
    %cst_233 = arith.constant dense<0.000000e+00> : vector<4xf32>
    %592 = vector.multi_reduction <add>, %577, %cst_233 [1] : vector<4x9xf32> to vector<4xf32>
    %593 = vector.shape_cast %592 : vector<4xf32> to vector<4x1xf32>
    %cst_234 = arith.constant 9.000000e+00 : f32
    %594 = vector.broadcast %cst_234 : f32 to vector<4x1xf32>
    %595 = arith.divf %593, %594 : vector<4x1xf32>
    %cst_235 = arith.constant dense<0xFF800000> : vector<1xf32>
    %596 = vector.multi_reduction <maximumf>, %595, %cst_235 [0] : vector<4x1xf32> to vector<1xf32>
    %597 = vector.shape_cast %596 : vector<1xf32> to vector<1x1xf32>
    %598 = vector.broadcast %597 : vector<1x1xf32> to vector<4x1xf32>
    %599 = arith.subf %595, %598 : vector<4x1xf32>
    %600 = math.exp %599 : vector<4x1xf32>
    %cst_236 = arith.constant dense<0.000000e+00> : vector<1xf32>
    %601 = vector.multi_reduction <add>, %600, %cst_236 [0] : vector<4x1xf32> to vector<1xf32>
    %602 = vector.shape_cast %601 : vector<1xf32> to vector<1x1xf32>
    %603 = tpu.reciprocal %602 {approx = true} : vector<1x1xf32> -> vector<1x1xf32>
    %604 = vector.broadcast %603 : vector<1x1xf32> to vector<4x1xf32>
    %605 = arith.mulf %600, %604 : vector<4x1xf32>
    %606 = vector.broadcast %591 : vector<4x1xf32> to vector<4x9xf32>
    %607 = arith.mulf %606, %577 : vector<4x9xf32>
    %cst_237 = arith.constant dense<0.000000e+00> : vector<9xf32>
    %608 = vector.multi_reduction <add>, %607, %cst_237 [0] : vector<4x9xf32> to vector<9xf32>
    %609 = vector.shape_cast %608 : vector<9xf32> to vector<1x9xf32>
    %610 = vector.broadcast %605 : vector<4x1xf32> to vector<4x9xf32>
    %611 = arith.mulf %610, %566 : vector<4x9xf32>
    %cst_238 = arith.constant dense<0.000000e+00> : vector<9xf32>
    %612 = vector.multi_reduction <add>, %611, %cst_238 [0] : vector<4x9xf32> to vector<9xf32>
    %613 = vector.shape_cast %612 : vector<9xf32> to vector<1x9xf32>
    %614 = arith.addf %609, %613 : vector<1x9xf32>
    %615 = arith.negf %614 : vector<1x9xf32>
    %616 = math.exp %615 : vector<1x9xf32>
    %cst_239 = arith.constant 1.000000e+00 : f32
    %617 = vector.broadcast %cst_239 : f32 to vector<1x9xf32>
    %618 = arith.addf %617, %616 : vector<1x9xf32>
    %619 = arith.divf %617, %618 : vector<1x9xf32>
    %620 = vector.broadcast %619 : vector<1x9xf32> to vector<4x9xf32>
    %621 = arith.mulf %524, %620 : vector<4x9xf32>
    %c5_240 = arith.constant 5 : index
    %c0_241 = arith.constant 0 : index
    %c0_242 = arith.constant 0 : index
    %622 = vector.load %arg8[%c5_240, %c0_241, %c0_242] : memref<8x4x9xf32, #tpu.memory_space<vmem>>, vector<1x4x9xf32>
    %623 = vector.shape_cast %622 : vector<1x4x9xf32> to vector<4x9xf32>
    %624 = vector.shape_cast %621 : vector<4x9xf32> to vector<1x4x9xf32>
    tpu.vector_store %arg8[%c5_240, %c0_241, %c0_242], %624 {strides = array<i32>} : memref<8x4x9xf32, #tpu.memory_space<vmem>>, vector<1x4x9xf32>,
    %c6 = arith.constant 6 : index
    %c0_243 = arith.constant 0 : index
    %c0_244 = arith.constant 0 : index
    %625 = vector.load %arg1[%c6, %c0_243, %c0_244] : memref<8x4x9xf32, #tpu.memory_space<vmem>>, vector<1x4x9xf32>
    %626 = vector.shape_cast %625 : vector<1x4x9xf32> to vector<4x9xf32>
    %cst_245 = arith.constant dense<0.000000e+00> : vector<4x9xf32>
    %627 = tpu.matmul %0, %626, %cst_245 {dimension_numbers = #tpu.dot_dimension_numbers<[1], [0], [0], [1], [0, 0, 1, 1], [], []>} : vector<4x4xf32>, vector<4x9xf32>, vector<4x9xf32> -> vector<4x9xf32>
    %628 = vector.broadcast %1 : vector<4x1xf32> to vector<4x9xf32>
    %629 = arith.addf %627, %628 : vector<4x9xf32>
    %cst_246 = arith.constant dense<0.000000e+00> : vector<4xf32>
    %630 = vector.multi_reduction <add>, %629, %cst_246 [1] : vector<4x9xf32> to vector<4xf32>
    %631 = vector.shape_cast %630 : vector<4xf32> to vector<4x1xf32>
    %cst_247 = arith.constant 9.000000e+00 : f32
    %632 = vector.broadcast %cst_247 : f32 to vector<4x1xf32>
    %633 = arith.divf %631, %632 : vector<4x1xf32>
    %634 = arith.negf %629 : vector<4x9xf32>
    %635 = math.exp %634 : vector<4x9xf32>
    %cst_248 = arith.constant 1.000000e+00 : f32
    %636 = vector.broadcast %cst_248 : f32 to vector<4x9xf32>
    %637 = arith.addf %636, %635 : vector<4x9xf32>
    %638 = arith.divf %636, %637 : vector<4x9xf32>
    %639 = arith.mulf %626, %638 : vector<4x9xf32>
    %640 = arith.negf %633 : vector<4x1xf32>
    %641 = math.exp %640 : vector<4x1xf32>
    %cst_249 = arith.constant 1.000000e+00 : f32
    %642 = vector.broadcast %cst_249 : f32 to vector<4x1xf32>
    %643 = arith.addf %642, %641 : vector<4x1xf32>
    %644 = arith.divf %642, %643 : vector<4x1xf32>
    %645 = vector.broadcast %644 : vector<4x1xf32> to vector<4x9xf32>
    %646 = arith.mulf %639, %645 : vector<4x9xf32>
    %cst_250 = arith.constant dense<0.000000e+00> : vector<4xf32>
    %647 = vector.multi_reduction <add>, %646, %cst_250 [1] : vector<4x9xf32> to vector<4xf32>
    %648 = vector.shape_cast %647 : vector<4xf32> to vector<4x1xf32>
    %cst_251 = arith.constant 9.000000e+00 : f32
    %649 = vector.broadcast %cst_251 : f32 to vector<4x1xf32>
    %650 = arith.divf %648, %649 : vector<4x1xf32>
    %651 = vector.broadcast %650 : vector<4x1xf32> to vector<4x9xf32>
    %652 = arith.subf %646, %651 : vector<4x9xf32>
    %653 = arith.mulf %652, %652 : vector<4x9xf32>
    %cst_252 = arith.constant dense<0.000000e+00> : vector<4xf32>
    %654 = vector.multi_reduction <add>, %653, %cst_252 [1] : vector<4x9xf32> to vector<4xf32>
    %655 = vector.shape_cast %654 : vector<4xf32> to vector<4x1xf32>
    %cst_253 = arith.constant 9.000000e+00 : f32
    %656 = vector.broadcast %cst_253 : f32 to vector<4x1xf32>
    %657 = arith.divf %655, %656 : vector<4x1xf32>
    %658 = vector.broadcast %650 : vector<4x1xf32> to vector<4x9xf32>
    %659 = arith.subf %646, %658 : vector<4x9xf32>
    %cst_254 = arith.constant 9.99999974E-6 : f32
    %660 = vector.broadcast %cst_254 : f32 to vector<4x1xf32>
    %661 = arith.addf %657, %660 : vector<4x1xf32>
    %662 = math.rsqrt %661 : vector<4x1xf32>
    %663 = vector.broadcast %662 : vector<4x1xf32> to vector<4x9xf32>
    %664 = arith.mulf %659, %663 : vector<4x9xf32>
    %665 = vector.broadcast %3 : vector<4x1xf32> to vector<4x9xf32>
    %666 = arith.mulf %664, %665 : vector<4x9xf32>
    %667 = vector.broadcast %4 : vector<4x1xf32> to vector<4x9xf32>
    %668 = arith.addf %666, %667 : vector<4x9xf32>
    %c0_255 = arith.constant 0 : index
    %c1_256 = arith.constant 1 : index
    %669 = vector.load %arg9[%c0_255, %c1_256] : memref<4x11xf32, #tpu.memory_space<vmem>>, vector<4x9xf32>
    tpu.vector_store %arg9[%c0_255, %c1_256], %626 {strides = array<i32>} : memref<4x11xf32, #tpu.memory_space<vmem>>, vector<4x9xf32>,
    %c0_257 = arith.constant 0 : index
    %c0_258 = arith.constant 0 : index
    %670 = vector.load %arg9[%c0_257, %c0_258] : memref<4x11xf32, #tpu.memory_space<vmem>>, vector<4x9xf32>
    %cst_259 = arith.constant dense<0.000000e+00> : vector<4x9xf32>
    %671 = tpu.matmul %6, %670, %cst_259 {dimension_numbers = #tpu.dot_dimension_numbers<[1], [0], [0], [1], [0, 0, 1, 1], [], []>} : vector<4x4xf32>, vector<4x9xf32>, vector<4x9xf32> -> vector<4x9xf32>
    %c0_260 = arith.constant 0 : index
    %c1_261 = arith.constant 1 : index
    %672 = vector.load %arg9[%c0_260, %c1_261] : memref<4x11xf32, #tpu.memory_space<vmem>>, vector<4x9xf32>
    %cst_262 = arith.constant dense<0.000000e+00> : vector<4x9xf32>
    %673 = tpu.matmul %8, %672, %cst_262 {dimension_numbers = #tpu.dot_dimension_numbers<[1], [0], [0], [1], [0, 0, 1, 1], [], []>} : vector<4x4xf32>, vector<4x9xf32>, vector<4x9xf32> -> vector<4x9xf32>
    %674 = arith.addf %671, %673 : vector<4x9xf32>
    %c0_263 = arith.constant 0 : index
    %c2_264 = arith.constant 2 : index
    %675 = vector.load %arg9[%c0_263, %c2_264] : memref<4x11xf32, #tpu.memory_space<vmem>>, vector<4x9xf32>
    %cst_265 = arith.constant dense<0.000000e+00> : vector<4x9xf32>
    %676 = tpu.matmul %10, %675, %cst_265 {dimension_numbers = #tpu.dot_dimension_numbers<[1], [0], [0], [1], [0, 0, 1, 1], [], []>} : vector<4x4xf32>, vector<4x9xf32>, vector<4x9xf32> -> vector<4x9xf32>
    %677 = arith.addf %674, %676 : vector<4x9xf32>
    %678 = vector.broadcast %2 : vector<4x1xf32> to vector<4x9xf32>
    %679 = arith.addf %677, %678 : vector<4x9xf32>
    %cst_266 = arith.constant dense<0.000000e+00> : vector<4xf32>
    %680 = vector.multi_reduction <add>, %668, %cst_266 [1] : vector<4x9xf32> to vector<4xf32>
    %681 = vector.shape_cast %680 : vector<4xf32> to vector<4x1xf32>
    %cst_267 = arith.constant 9.000000e+00 : f32
    %682 = vector.broadcast %cst_267 : f32 to vector<4x1xf32>
    %683 = arith.divf %681, %682 : vector<4x1xf32>
    %cst_268 = arith.constant dense<0xFF800000> : vector<1xf32>
    %684 = vector.multi_reduction <maximumf>, %683, %cst_268 [0] : vector<4x1xf32> to vector<1xf32>
    %685 = vector.shape_cast %684 : vector<1xf32> to vector<1x1xf32>
    %686 = vector.broadcast %685 : vector<1x1xf32> to vector<4x1xf32>
    %687 = arith.subf %683, %686 : vector<4x1xf32>
    %688 = math.exp %687 : vector<4x1xf32>
    %cst_269 = arith.constant dense<0.000000e+00> : vector<1xf32>
    %689 = vector.multi_reduction <add>, %688, %cst_269 [0] : vector<4x1xf32> to vector<1xf32>
    %690 = vector.shape_cast %689 : vector<1xf32> to vector<1x1xf32>
    %691 = tpu.reciprocal %690 {approx = true} : vector<1x1xf32> -> vector<1x1xf32>
    %692 = vector.broadcast %691 : vector<1x1xf32> to vector<4x1xf32>
    %693 = arith.mulf %688, %692 : vector<4x1xf32>
    %cst_270 = arith.constant dense<0.000000e+00> : vector<4xf32>
    %694 = vector.multi_reduction <add>, %679, %cst_270 [1] : vector<4x9xf32> to vector<4xf32>
    %695 = vector.shape_cast %694 : vector<4xf32> to vector<4x1xf32>
    %cst_271 = arith.constant 9.000000e+00 : f32
    %696 = vector.broadcast %cst_271 : f32 to vector<4x1xf32>
    %697 = arith.divf %695, %696 : vector<4x1xf32>
    %cst_272 = arith.constant dense<0xFF800000> : vector<1xf32>
    %698 = vector.multi_reduction <maximumf>, %697, %cst_272 [0] : vector<4x1xf32> to vector<1xf32>
    %699 = vector.shape_cast %698 : vector<1xf32> to vector<1x1xf32>
    %700 = vector.broadcast %699 : vector<1x1xf32> to vector<4x1xf32>
    %701 = arith.subf %697, %700 : vector<4x1xf32>
    %702 = math.exp %701 : vector<4x1xf32>
    %cst_273 = arith.constant dense<0.000000e+00> : vector<1xf32>
    %703 = vector.multi_reduction <add>, %702, %cst_273 [0] : vector<4x1xf32> to vector<1xf32>
    %704 = vector.shape_cast %703 : vector<1xf32> to vector<1x1xf32>
    %705 = tpu.reciprocal %704 {approx = true} : vector<1x1xf32> -> vector<1x1xf32>
    %706 = vector.broadcast %705 : vector<1x1xf32> to vector<4x1xf32>
    %707 = arith.mulf %702, %706 : vector<4x1xf32>
    %708 = vector.broadcast %693 : vector<4x1xf32> to vector<4x9xf32>
    %709 = arith.mulf %708, %679 : vector<4x9xf32>
    %cst_274 = arith.constant dense<0.000000e+00> : vector<9xf32>
    %710 = vector.multi_reduction <add>, %709, %cst_274 [0] : vector<4x9xf32> to vector<9xf32>
    %711 = vector.shape_cast %710 : vector<9xf32> to vector<1x9xf32>
    %712 = vector.broadcast %707 : vector<4x1xf32> to vector<4x9xf32>
    %713 = arith.mulf %712, %668 : vector<4x9xf32>
    %cst_275 = arith.constant dense<0.000000e+00> : vector<9xf32>
    %714 = vector.multi_reduction <add>, %713, %cst_275 [0] : vector<4x9xf32> to vector<9xf32>
    %715 = vector.shape_cast %714 : vector<9xf32> to vector<1x9xf32>
    %716 = arith.addf %711, %715 : vector<1x9xf32>
    %717 = arith.negf %716 : vector<1x9xf32>
    %718 = math.exp %717 : vector<1x9xf32>
    %cst_276 = arith.constant 1.000000e+00 : f32
    %719 = vector.broadcast %cst_276 : f32 to vector<1x9xf32>
    %720 = arith.addf %719, %718 : vector<1x9xf32>
    %721 = arith.divf %719, %720 : vector<1x9xf32>
    %722 = vector.broadcast %721 : vector<1x9xf32> to vector<4x9xf32>
    %723 = arith.mulf %626, %722 : vector<4x9xf32>
    %c6_277 = arith.constant 6 : index
    %c0_278 = arith.constant 0 : index
    %c0_279 = arith.constant 0 : index
    %724 = vector.load %arg8[%c6_277, %c0_278, %c0_279] : memref<8x4x9xf32, #tpu.memory_space<vmem>>, vector<1x4x9xf32>
    %725 = vector.shape_cast %724 : vector<1x4x9xf32> to vector<4x9xf32>
    %726 = vector.shape_cast %723 : vector<4x9xf32> to vector<1x4x9xf32>
    tpu.vector_store %arg8[%c6_277, %c0_278, %c0_279], %726 {strides = array<i32>} : memref<8x4x9xf32, #tpu.memory_space<vmem>>, vector<1x4x9xf32>,
    %c7 = arith.constant 7 : index
    %c0_280 = arith.constant 0 : index
    %c0_281 = arith.constant 0 : index
    %727 = vector.load %arg1[%c7, %c0_280, %c0_281] : memref<8x4x9xf32, #tpu.memory_space<vmem>>, vector<1x4x9xf32>
    %728 = vector.shape_cast %727 : vector<1x4x9xf32> to vector<4x9xf32>
    %cst_282 = arith.constant dense<0.000000e+00> : vector<4x9xf32>
    %729 = tpu.matmul %0, %728, %cst_282 {dimension_numbers = #tpu.dot_dimension_numbers<[1], [0], [0], [1], [0, 0, 1, 1], [], []>} : vector<4x4xf32>, vector<4x9xf32>, vector<4x9xf32> -> vector<4x9xf32>
    %730 = vector.broadcast %1 : vector<4x1xf32> to vector<4x9xf32>
    %731 = arith.addf %729, %730 : vector<4x9xf32>
    %cst_283 = arith.constant dense<0.000000e+00> : vector<4xf32>
    %732 = vector.multi_reduction <add>, %731, %cst_283 [1] : vector<4x9xf32> to vector<4xf32>
    %733 = vector.shape_cast %732 : vector<4xf32> to vector<4x1xf32>
    %cst_284 = arith.constant 9.000000e+00 : f32
    %734 = vector.broadcast %cst_284 : f32 to vector<4x1xf32>
    %735 = arith.divf %733, %734 : vector<4x1xf32>
    %736 = arith.negf %731 : vector<4x9xf32>
    %737 = math.exp %736 : vector<4x9xf32>
    %cst_285 = arith.constant 1.000000e+00 : f32
    %738 = vector.broadcast %cst_285 : f32 to vector<4x9xf32>
    %739 = arith.addf %738, %737 : vector<4x9xf32>
    %740 = arith.divf %738, %739 : vector<4x9xf32>
    %741 = arith.mulf %728, %740 : vector<4x9xf32>
    %742 = arith.negf %735 : vector<4x1xf32>
    %743 = math.exp %742 : vector<4x1xf32>
    %cst_286 = arith.constant 1.000000e+00 : f32
    %744 = vector.broadcast %cst_286 : f32 to vector<4x1xf32>
    %745 = arith.addf %744, %743 : vector<4x1xf32>
    %746 = arith.divf %744, %745 : vector<4x1xf32>
    %747 = vector.broadcast %746 : vector<4x1xf32> to vector<4x9xf32>
    %748 = arith.mulf %741, %747 : vector<4x9xf32>
    %cst_287 = arith.constant dense<0.000000e+00> : vector<4xf32>
    %749 = vector.multi_reduction <add>, %748, %cst_287 [1] : vector<4x9xf32> to vector<4xf32>
    %750 = vector.shape_cast %749 : vector<4xf32> to vector<4x1xf32>
    %cst_288 = arith.constant 9.000000e+00 : f32
    %751 = vector.broadcast %cst_288 : f32 to vector<4x1xf32>
    %752 = arith.divf %750, %751 : vector<4x1xf32>
    %753 = vector.broadcast %752 : vector<4x1xf32> to vector<4x9xf32>
    %754 = arith.subf %748, %753 : vector<4x9xf32>
    %755 = arith.mulf %754, %754 : vector<4x9xf32>
    %cst_289 = arith.constant dense<0.000000e+00> : vector<4xf32>
    %756 = vector.multi_reduction <add>, %755, %cst_289 [1] : vector<4x9xf32> to vector<4xf32>
    %757 = vector.shape_cast %756 : vector<4xf32> to vector<4x1xf32>
    %cst_290 = arith.constant 9.000000e+00 : f32
    %758 = vector.broadcast %cst_290 : f32 to vector<4x1xf32>
    %759 = arith.divf %757, %758 : vector<4x1xf32>
    %760 = vector.broadcast %752 : vector<4x1xf32> to vector<4x9xf32>
    %761 = arith.subf %748, %760 : vector<4x9xf32>
    %cst_291 = arith.constant 9.99999974E-6 : f32
    %762 = vector.broadcast %cst_291 : f32 to vector<4x1xf32>
    %763 = arith.addf %759, %762 : vector<4x1xf32>
    %764 = math.rsqrt %763 : vector<4x1xf32>
    %765 = vector.broadcast %764 : vector<4x1xf32> to vector<4x9xf32>
    %766 = arith.mulf %761, %765 : vector<4x9xf32>
    %767 = vector.broadcast %3 : vector<4x1xf32> to vector<4x9xf32>
    %768 = arith.mulf %766, %767 : vector<4x9xf32>
    %769 = vector.broadcast %4 : vector<4x1xf32> to vector<4x9xf32>
    %770 = arith.addf %768, %769 : vector<4x9xf32>
    %c0_292 = arith.constant 0 : index
    %c1_293 = arith.constant 1 : index
    %771 = vector.load %arg9[%c0_292, %c1_293] : memref<4x11xf32, #tpu.memory_space<vmem>>, vector<4x9xf32>
    tpu.vector_store %arg9[%c0_292, %c1_293], %728 {strides = array<i32>} : memref<4x11xf32, #tpu.memory_space<vmem>>, vector<4x9xf32>,
    %c0_294 = arith.constant 0 : index
    %c0_295 = arith.constant 0 : index
    %772 = vector.load %arg9[%c0_294, %c0_295] : memref<4x11xf32, #tpu.memory_space<vmem>>, vector<4x9xf32>
    %cst_296 = arith.constant dense<0.000000e+00> : vector<4x9xf32>
    %773 = tpu.matmul %6, %772, %cst_296 {dimension_numbers = #tpu.dot_dimension_numbers<[1], [0], [0], [1], [0, 0, 1, 1], [], []>} : vector<4x4xf32>, vector<4x9xf32>, vector<4x9xf32> -> vector<4x9xf32>
    %c0_297 = arith.constant 0 : index
    %c1_298 = arith.constant 1 : index
    %774 = vector.load %arg9[%c0_297, %c1_298] : memref<4x11xf32, #tpu.memory_space<vmem>>, vector<4x9xf32>
    %cst_299 = arith.constant dense<0.000000e+00> : vector<4x9xf32>
    %775 = tpu.matmul %8, %774, %cst_299 {dimension_numbers = #tpu.dot_dimension_numbers<[1], [0], [0], [1], [0, 0, 1, 1], [], []>} : vector<4x4xf32>, vector<4x9xf32>, vector<4x9xf32> -> vector<4x9xf32>
    %776 = arith.addf %773, %775 : vector<4x9xf32>
    %c0_300 = arith.constant 0 : index
    %c2_301 = arith.constant 2 : index
    %777 = vector.load %arg9[%c0_300, %c2_301] : memref<4x11xf32, #tpu.memory_space<vmem>>, vector<4x9xf32>
    %cst_302 = arith.constant dense<0.000000e+00> : vector<4x9xf32>
    %778 = tpu.matmul %10, %777, %cst_302 {dimension_numbers = #tpu.dot_dimension_numbers<[1], [0], [0], [1], [0, 0, 1, 1], [], []>} : vector<4x4xf32>, vector<4x9xf32>, vector<4x9xf32> -> vector<4x9xf32>
    %779 = arith.addf %776, %778 : vector<4x9xf32>
    %780 = vector.broadcast %2 : vector<4x1xf32> to vector<4x9xf32>
    %781 = arith.addf %779, %780 : vector<4x9xf32>
    %cst_303 = arith.constant dense<0.000000e+00> : vector<4xf32>
    %782 = vector.multi_reduction <add>, %770, %cst_303 [1] : vector<4x9xf32> to vector<4xf32>
    %783 = vector.shape_cast %782 : vector<4xf32> to vector<4x1xf32>
    %cst_304 = arith.constant 9.000000e+00 : f32
    %784 = vector.broadcast %cst_304 : f32 to vector<4x1xf32>
    %785 = arith.divf %783, %784 : vector<4x1xf32>
    %cst_305 = arith.constant dense<0xFF800000> : vector<1xf32>
    %786 = vector.multi_reduction <maximumf>, %785, %cst_305 [0] : vector<4x1xf32> to vector<1xf32>
    %787 = vector.shape_cast %786 : vector<1xf32> to vector<1x1xf32>
    %788 = vector.broadcast %787 : vector<1x1xf32> to vector<4x1xf32>
    %789 = arith.subf %785, %788 : vector<4x1xf32>
    %790 = math.exp %789 : vector<4x1xf32>
    %cst_306 = arith.constant dense<0.000000e+00> : vector<1xf32>
    %791 = vector.multi_reduction <add>, %790, %cst_306 [0] : vector<4x1xf32> to vector<1xf32>
    %792 = vector.shape_cast %791 : vector<1xf32> to vector<1x1xf32>
    %793 = tpu.reciprocal %792 {approx = true} : vector<1x1xf32> -> vector<1x1xf32>
    %794 = vector.broadcast %793 : vector<1x1xf32> to vector<4x1xf32>
    %795 = arith.mulf %790, %794 : vector<4x1xf32>
    %cst_307 = arith.constant dense<0.000000e+00> : vector<4xf32>
    %796 = vector.multi_reduction <add>, %781, %cst_307 [1] : vector<4x9xf32> to vector<4xf32>
    %797 = vector.shape_cast %796 : vector<4xf32> to vector<4x1xf32>
    %cst_308 = arith.constant 9.000000e+00 : f32
    %798 = vector.broadcast %cst_308 : f32 to vector<4x1xf32>
    %799 = arith.divf %797, %798 : vector<4x1xf32>
    %cst_309 = arith.constant dense<0xFF800000> : vector<1xf32>
    %800 = vector.multi_reduction <maximumf>, %799, %cst_309 [0] : vector<4x1xf32> to vector<1xf32>
    %801 = vector.shape_cast %800 : vector<1xf32> to vector<1x1xf32>
    %802 = vector.broadcast %801 : vector<1x1xf32> to vector<4x1xf32>
    %803 = arith.subf %799, %802 : vector<4x1xf32>
    %804 = math.exp %803 : vector<4x1xf32>
    %cst_310 = arith.constant dense<0.000000e+00> : vector<1xf32>
    %805 = vector.multi_reduction <add>, %804, %cst_310 [0] : vector<4x1xf32> to vector<1xf32>
    %806 = vector.shape_cast %805 : vector<1xf32> to vector<1x1xf32>
    %807 = tpu.reciprocal %806 {approx = true} : vector<1x1xf32> -> vector<1x1xf32>
    %808 = vector.broadcast %807 : vector<1x1xf32> to vector<4x1xf32>
    %809 = arith.mulf %804, %808 : vector<4x1xf32>
    %810 = vector.broadcast %795 : vector<4x1xf32> to vector<4x9xf32>
    %811 = arith.mulf %810, %781 : vector<4x9xf32>
    %cst_311 = arith.constant dense<0.000000e+00> : vector<9xf32>
    %812 = vector.multi_reduction <add>, %811, %cst_311 [0] : vector<4x9xf32> to vector<9xf32>
    %813 = vector.shape_cast %812 : vector<9xf32> to vector<1x9xf32>
    %814 = vector.broadcast %809 : vector<4x1xf32> to vector<4x9xf32>
    %815 = arith.mulf %814, %770 : vector<4x9xf32>
    %cst_312 = arith.constant dense<0.000000e+00> : vector<9xf32>
    %816 = vector.multi_reduction <add>, %815, %cst_312 [0] : vector<4x9xf32> to vector<9xf32>
    %817 = vector.shape_cast %816 : vector<9xf32> to vector<1x9xf32>
    %818 = arith.addf %813, %817 : vector<1x9xf32>
    %819 = arith.negf %818 : vector<1x9xf32>
    %820 = math.exp %819 : vector<1x9xf32>
    %cst_313 = arith.constant 1.000000e+00 : f32
    %821 = vector.broadcast %cst_313 : f32 to vector<1x9xf32>
    %822 = arith.addf %821, %820 : vector<1x9xf32>
    %823 = arith.divf %821, %822 : vector<1x9xf32>
    %824 = vector.broadcast %823 : vector<1x9xf32> to vector<4x9xf32>
    %825 = arith.mulf %728, %824 : vector<4x9xf32>
    %c7_314 = arith.constant 7 : index
    %c0_315 = arith.constant 0 : index
    %c0_316 = arith.constant 0 : index
    %826 = vector.load %arg8[%c7_314, %c0_315, %c0_316] : memref<8x4x9xf32, #tpu.memory_space<vmem>>, vector<1x4x9xf32>
    %827 = vector.shape_cast %826 : vector<1x4x9xf32> to vector<4x9xf32>
    %828 = vector.shape_cast %825 : vector<4x9xf32> to vector<1x4x9xf32>
    tpu.vector_store %arg8[%c7_314, %c0_315, %c0_316], %828 {strides = array<i32>} : memref<8x4x9xf32, #tpu.memory_space<vmem>>, vector<1x4x9xf32>,
    return
  }
  func.func @transform_0(%arg0: i32) -> (i32, i32, i32) {
    %c0_i32 = arith.constant 0 : i32
    %c0_i32_0 = arith.constant 0 : i32
    %c0_i32_1 = arith.constant 0 : i32
    return %arg0, %c0_i32, %c0_i32_0 : i32, i32, i32
  }
  func.func @transform_1(%arg0: i32) -> (i32, i32) {
    %c0_i32 = arith.constant 0 : i32
    %c0_i32_0 = arith.constant 0 : i32
    %c0_i32_1 = arith.constant 0 : i32
    return %c0_i32, %c0_i32_0 : i32, i32
  }
  func.func @transform_2(%arg0: i32) -> (i32, i32) {
    %c0_i32 = arith.constant 0 : i32
    %c0_i32_0 = arith.constant 0 : i32
    %c0_i32_1 = arith.constant 0 : i32
    return %c0_i32, %c0_i32_0 : i32, i32
  }
  func.func @transform_3(%arg0: i32) -> (i32, i32, i32) {
    %c0_i32 = arith.constant 0 : i32
    %c0_i32_0 = arith.constant 0 : i32
    %c0_i32_1 = arith.constant 0 : i32
    %c0_i32_2 = arith.constant 0 : i32
    return %c0_i32, %c0_i32_0, %c0_i32_1 : i32, i32, i32
  }
  func.func @transform_4(%arg0: i32) -> (i32, i32) {
    %c0_i32 = arith.constant 0 : i32
    %c0_i32_0 = arith.constant 0 : i32
    %c0_i32_1 = arith.constant 0 : i32
    return %c0_i32, %c0_i32_0 : i32, i32
  }
  func.func @transform_5(%arg0: i32) -> (i32, i32) {
    %c0_i32 = arith.constant 0 : i32
    %c0_i32_0 = arith.constant 0 : i32
    %c0_i32_1 = arith.constant 0 : i32
    return %c0_i32, %c0_i32_0 : i32, i32
  }
  func.func @transform_6(%arg0: i32) -> (i32, i32) {
    %c0_i32 = arith.constant 0 : i32
    %c0_i32_0 = arith.constant 0 : i32
    %c0_i32_1 = arith.constant 0 : i32
    return %c0_i32, %c0_i32_0 : i32, i32
  }
  func.func @transform_7(%arg0: i32) -> (i32, i32, i32) {
    %c0_i32 = arith.constant 0 : i32
    %c0_i32_0 = arith.constant 0 : i32
    %c0_i32_1 = arith.constant 0 : i32
    return %arg0, %c0_i32, %c0_i32_0 : i32, i32, i32
  }
}

</mosaic_0001>

<llo_original>
// kernel: tile.9
$region0: #{tile.9}
  %s0 = inlined_call_operand.vmem [shape: f32[2,9,32], index: 0, kind: input, shape index: {}]
  %s1 = inlined_call_operand.vmem [shape: f32[18,32], index: 1, kind: output, shape index: {}]
  %v2 = vld [vmem:[%s0] sm:$0xff]
  %vm3 = vcmask 261120
  %4 = vst.msk [vmem:[%s1] sm:$0xff] %vm3, %v2
  %s5 = scalar_lea.vmem %s0, 8
  %s6 = smov 3
  %v7 = vld [vmem:[%s5] ss:$8 sm:%s6]
  %vm8 = vcmask 261120
  %s9 = scalar_lea.vmem %s1, 8
  %10 = vst.msk [vmem:[%s9] sm:$0x3] %vm8, %v7
  %s11 = scalar_lea.vmem %s0, 17
  %v12 = vld [vmem:[%s11] sm:$0xff]
  %vm13 = vcmask 261120
  %s14 = scalar_lea.vmem %s1, 10
  %15 = vst.msk [vmem:[%s14] sm:$0xff] %vm13, %v12

// kernel: midi_former_forward.3
$region0: #{midi_former_forward.3}
  #allocation0 [shape = 'u32[]', space=smem, size = 0x4, offset = 0x4, fixed_abs, tag = 'smem constant byte address 0x4 - core index']
  #allocation1 [shape = 'u32[144,128]{1,0:T(1,128)}', space=vmem, size = 0x12000, scoped, tag = 'internal scratch']
  #allocation2 [shape = 'f32[4,11]{1,0:T(4,128)}', space=vmem, size = 0x800, scoped, tag = 'scratch operand']
  %s0 = inlined_call_operand.vmem [shape: f32[16,4,9], index: 0, kind: input, shape index: {}]
  %s1 = inlined_call_operand.vmem [shape: f32[4,4], index: 1, kind: input, shape index: {}]
  %s2 = inlined_call_operand.vmem [shape: f32[4,1], index: 2, kind: input, shape index: {}]
  %s3 = inlined_call_operand.vmem [shape: f32[3,4,4], index: 3, kind: input, shape index: {}]
  %s4 = inlined_call_operand.vmem [shape: f32[4,1], index: 4, kind: input, shape index: {}]
  %s5 = inlined_call_operand.vmem [shape: f32[4,1], index: 5, kind: input, shape index: {}]
  %s6 = inlined_call_operand.vmem [shape: f32[4,1], index: 6, kind: input, shape index: {}]
  %s7 = inlined_call_operand.vmem [shape: f32[16,4,9], index: 7, kind: output, shape index: {}]
  %s8 = sld [smem:[#allocation0]]
  $region61: #{midi_former_forward.3} parent=0
    _
  %s10 = ssub.s32 1, %s8
  %s11 = scalar_select 0, %s10, %s8
  loop: start=0, step=1, limit=4
  $region2: #{midi_former_forward.3} parent=0 // loop_pre_header
    _
  $region3: #{midi_former_forward.3} parent=0 // loop_header
    %s13 = sphi 0, %s17
    %p14 = scmp.ge.s32.totalorder %s13, 4
    %s23 = sphi 0, %s25
    %s26 = sphi 0, %s23
    %s27 = sphi 0, %s26
    %s43 = sphi 0, %s27
    %s47 = sphi 0, %s47
    %s49 = sphi 0, %s47
    %s50 = sphi 0, %s49
    %s64 = sphi 0, %s50
    %s68 = sphi 0, %s68
    %s70 = sphi 0, %s68
    %s71 = sphi 0, %s70
    %s85 = sphi 0, %s71
    %s89 = sphi 0, %s89
    %s91 = sphi 0, %s89
    %s92 = sphi 0, %s91
    %s106 = sphi 0, %s92
    %s110 = sphi 0, %s110
    %s112 = sphi 0, %s110
    %s113 = sphi 0, %s112
    %s127 = sphi 0, %s113
    %s131 = sphi 0, %s131
    %s133 = sphi 0, %s131
    %s134 = sphi 0, %s133
    %s148 = sphi 0, %s134
    %s152 = sphi 0, %s152
    %s154 = sphi 0, %s152
    %s155 = sphi 0, %s154
    %s169 = sphi 0, %s155
    %s175 = sphi 0, %s177
    %s178 = sphi 0, %s175
    %s179 = sphi 0, %s178
    %s195 = sphi 0, %s179
  $region4: #{midi_former_forward.3} parent=0 // loop_header_branch
    %16 = sbr.rel (%p14) target = $region8
  $region5: #{midi_former_forward.3} parent=0 // loop_body
    %s18 = ssub.s32 %s13, 1
    %s19 = ssub.s32 %s13, 2
    %s20 = sadd.s32 %s13, 1
    %s21 = ssub.s32 %s13, %s20
    %p22 = scmp.eq.s32.totalorder %s21, 0
    %s24 = sadd.s32 %s23, 1
    %s25 = scalar_select %p22, %s23, %s24
    %p28 = pneg %p22
    %p29 = scmp.eq.s32.totalorder %s13, 1
    %p30 = por %p28, %p29
    %p31 = scmp.ne.s32.totalorder %s23, %s26
    %p32 = scmp.eq.s32.totalorder %s13, 0
    %p33 = por %p31, %p32
    %p34 = scmp.ne.s32.totalorder %s23, %s26
    %p35 = scmp.eq.s32.totalorder %s18, 1
    %p36 = por %p34, %p35
    %p37 = scmp.ne.s32.totalorder %s26, %s27
    %p38 = scmp.eq.s32.totalorder %s18, 0
    %p39 = por %p37, %p38
    %p40 = scmp.ne.s32.totalorder %s26, %s27
    %p41 = scmp.eq.s32.totalorder %s19, 1
    %p42 = por %p40, %p41
    %p44 = scmp.ne.s32.totalorder %s27, %s43
    %p45 = scmp.eq.s32.totalorder %s19, 0
    %p46 = por %p44, %p45
    %s48 = sadd.s32 %s47, 1
    %p51 = scmp.eq.s32.totalorder %s13, 1
    %p52 = scmp.ne.s32.totalorder %s47, %s49
    %p53 = scmp.eq.s32.totalorder %s13, 0
    %p54 = por %p52, %p53
    %p55 = scmp.ne.s32.totalorder %s47, %s49
    %p56 = scmp.eq.s32.totalorder %s18, 1
    %p57 = por %p55, %p56
    %p58 = scmp.ne.s32.totalorder %s49, %s50
    %p59 = scmp.eq.s32.totalorder %s18, 0
    %p60 = por %p58, %p59
    %p61 = scmp.ne.s32.totalorder %s49, %s50
    %p62 = scmp.eq.s32.totalorder %s19, 1
    %p63 = por %p61, %p62
    %p65 = scmp.ne.s32.totalorder %s50, %s64
    %p66 = scmp.eq.s32.totalorder %s19, 0
    %p67 = por %p65, %p66
    %s69 = sadd.s32 %s68, 1
    %p72 = scmp.eq.s32.totalorder %s13, 1
    %p73 = scmp.ne.s32.totalorder %s68, %s70
    %p74 = scmp.eq.s32.totalorder %s13, 0
    %p75 = por %p73, %p74
    %p76 = scmp.ne.s32.totalorder %s68, %s70
    %p77 = scmp.eq.s32.totalorder %s18, 1
    %p78 = por %p76, %p77
    %p79 = scmp.ne.s32.totalorder %s70, %s71
    %p80 = scmp.eq.s32.totalorder %s18, 0
    %p81 = por %p79, %p80
    %p82 = scmp.ne.s32.totalorder %s70, %s71
    %p83 = scmp.eq.s32.totalorder %s19, 1
    %p84 = por %p82, %p83
    %p86 = scmp.ne.s32.totalorder %s71, %s85
    %p87 = scmp.eq.s32.totalorder %s19, 0
    %p88 = por %p86, %p87
    %s90 = sadd.s32 %s89, 1
    %p93 = scmp.eq.s32.totalorder %s13, 1
    %p94 = scmp.ne.s32.totalorder %s89, %s91
    %p95 = scmp.eq.s32.totalorder %s13, 0
    %p96 = por %p94, %p95
    %p97 = scmp.ne.s32.totalorder %s89, %s91
    %p98 = scmp.eq.s32.totalorder %s18, 1
    %p99 = por %p97, %p98
    %p100 = scmp.ne.s32.totalorder %s91, %s92
    %p101 = scmp.eq.s32.totalorder %s18, 0
    %p102 = por %p100, %p101
    %p103 = scmp.ne.s32.totalorder %s91, %s92
    %p104 = scmp.eq.s32.totalorder %s19, 1
    %p105 = por %p103, %p104
    %p107 = scmp.ne.s32.totalorder %s92, %s106
    %p108 = scmp.eq.s32.totalorder %s19, 0
    %p109 = por %p107, %p108
    %s111 = sadd.s32 %s110, 1
    %p114 = scmp.eq.s32.totalorder %s13, 1
    %p115 = scmp.ne.s32.totalorder %s110, %s112
    %p116 = scmp.eq.s32.totalorder %s13, 0
    %p117 = por %p115, %p116
    %p118 = scmp.ne.s32.totalorder %s110, %s112
    %p119 = scmp.eq.s32.totalorder %s18, 1
    %p120 = por %p118, %p119
    %p121 = scmp.ne.s32.totalorder %s112, %s113
    %p122 = scmp.eq.s32.totalorder %s18, 0
    %p123 = por %p121, %p122
    %p124 = scmp.ne.s32.totalorder %s112, %s113
    %p125 = scmp.eq.s32.totalorder %s19, 1
    %p126 = por %p124, %p125
    %p128 = scmp.ne.s32.totalorder %s113, %s127
    %p129 = scmp.eq.s32.totalorder %s19, 0
    %p130 = por %p128, %p129
    %s132 = sadd.s32 %s131, 1
    %p135 = scmp.eq.s32.totalorder %s13, 1
    %p136 = scmp.ne.s32.totalorder %s131, %s133
    %p137 = scmp.eq.s32.totalorder %s13, 0
    %p138 = por %p136, %p137
    %p139 = scmp.ne.s32.totalorder %s131, %s133
    %p140 = scmp.eq.s32.totalorder %s18, 1
    %p141 = por %p139, %p140
    %p142 = scmp.ne.s32.totalorder %s133, %s134
    %p143 = scmp.eq.s32.totalorder %s18, 0
    %p144 = por %p142, %p143
    %p145 = scmp.ne.s32.totalorder %s133, %s134
    %p146 = scmp.eq.s32.totalorder %s19, 1
    %p147 = por %p145, %p146
    %p149 = scmp.ne.s32.totalorder %s134, %s148
    %p150 = scmp.eq.s32.totalorder %s19, 0
    %p151 = por %p149, %p150
    %s153 = sadd.s32 %s152, 1
    %p156 = scmp.eq.s32.totalorder %s13, 1
    %p157 = scmp.ne.s32.totalorder %s152, %s154
    %p158 = scmp.eq.s32.totalorder %s13, 0
    %p159 = por %p157, %p158
    %p160 = scmp.ne.s32.totalorder %s152, %s154
    %p161 = scmp.eq.s32.totalorder %s18, 1
    %p162 = por %p160, %p161
    %p163 = scmp.ne.s32.totalorder %s154, %s155
    %p164 = scmp.eq.s32.totalorder %s18, 0
    %p165 = por %p163, %p164
    %p166 = scmp.ne.s32.totalorder %s154, %s155
    %p167 = scmp.eq.s32.totalorder %s19, 1
    %p168 = por %p166, %p167
    %p170 = scmp.ne.s32.totalorder %s155, %s169
    %p171 = scmp.eq.s32.totalorder %s19, 0
    %p172 = por %p170, %p171
    %s173 = ssub.s32 %s13, %s20
    %p174 = scmp.eq.s32.totalorder %s173, 0
    %s176 = sadd.s32 %s175, 1
    %s177 = scalar_select %p174, %s175, %s176
    %p180 = pneg %p174
    %p181 = scmp.eq.s32.totalorder %s13, 1
    %p182 = por %p180, %p181
    %p183 = scmp.ne.s32.totalorder %s175, %s178
    %p184 = scmp.eq.s32.totalorder %s13, 0
    %p185 = por %p183, %p184
    %p186 = scmp.ne.s32.totalorder %s175, %s178
    %p187 = scmp.eq.s32.totalorder %s18, 1
    %p188 = por %p186, %p187
    %p189 = scmp.ne.s32.totalorder %s178, %s179
    %p190 = scmp.eq.s32.totalorder %s18, 0
    %p191 = por %p189, %p190
    %p192 = scmp.ne.s32.totalorder %s178, %s179
    %p193 = scmp.eq.s32.totalorder %s19, 1
    %p194 = por %p192, %p193
    %p196 = scmp.ne.s32.totalorder %s179, %s195
    %p197 = scmp.eq.s32.totalorder %s19, 0
    %p198 = por %p196, %p197
    %p199 = scmp.le.s32.totalorder 1, %s13
    %p200 = scmp.lt.s32.totalorder %s13, 3
    %p201 = pnand %p199, %p200
    %p202 = pneg %p201
    // Predicated region
    $region9: #{midi_former_forward.3} parent=5 // pred_check
      _
    $region10: #{midi_former_forward.3} parent=5 // pred_check_branch
      %204 = sbr.rel (%p201) target = $region12
    $region11: #{midi_former_forward.3} parent=5 // pred_region
      %s205 = ssub.s32 %s13, 1
      // Predicated region
      $region13: #{midi_former_forward.3} parent=11 // pred_check
        %p206 = pneg %p60
      $region14: #{midi_former_forward.3} parent=11 // pred_check_branch
        %208 = sbr.rel (%p206) target = $region16
      $region15: #{midi_former_forward.3} parent=11 // pred_region
        _
      $region16: #{midi_former_forward.3} parent=11 // pred_fallthru
        _
      // Predicated region
      $region17: #{midi_former_forward.3} parent=11 // pred_check
        %p209 = pneg %p81
      $region18: #{midi_former_forward.3} parent=11 // pred_check_branch
        %211 = sbr.rel (%p209) target = $region20
      $region19: #{midi_former_forward.3} parent=11 // pred_region
        _
      $region20: #{midi_former_forward.3} parent=11 // pred_fallthru
        _
      // Predicated region
      $region21: #{midi_former_forward.3} parent=11 // pred_check
        %p212 = pneg %p102
      $region22: #{midi_former_forward.3} parent=11 // pred_check_branch
        %214 = sbr.rel (%p212) target = $region24
      $region23: #{midi_former_forward.3} parent=11 // pred_region
        _
      $region24: #{midi_former_forward.3} parent=11 // pred_fallthru
        _
      // Predicated region
      $region25: #{midi_former_forward.3} parent=11 // pred_check
        %p215 = pneg %p123
      $region26: #{midi_former_forward.3} parent=11 // pred_check_branch
        %217 = sbr.rel (%p215) target = $region28
      $region27: #{midi_former_forward.3} parent=11 // pred_region
        _
      $region28: #{midi_former_forward.3} parent=11 // pred_fallthru
        _
      // Predicated region
      $region29: #{midi_former_forward.3} parent=11 // pred_check
        %p218 = pneg %p144
      $region30: #{midi_former_forward.3} parent=11 // pred_check_branch
        %220 = sbr.rel (%p218) target = $region32
      $region31: #{midi_former_forward.3} parent=11 // pred_region
        _
      $region32: #{midi_former_forward.3} parent=11 // pred_fallthru
        _
      // Predicated region
      $region33: #{midi_former_forward.3} parent=11 // pred_check
        %p221 = pneg %p165
      $region34: #{midi_former_forward.3} parent=11 // pred_check_branch
        %223 = sbr.rel (%p221) target = $region36
      $region35: #{midi_former_forward.3} parent=11 // pred_region
        _
      $region36: #{midi_former_forward.3} parent=11 // pred_fallthru
        _
    $region12: #{midi_former_forward.3} parent=5 // pred_fallthru
      _
    %p224 = scmp.lt.s32.totalorder %s13, 2
    // Predicated region
    $region37: #{midi_former_forward.3} parent=5 // pred_check
      %p225 = pneg %p224
    $region38: #{midi_former_forward.3} parent=5 // pred_check_branch
      %227 = sbr.rel (%p225) target = $region40
    $region39: #{midi_former_forward.3} parent=5 // pred_region
      // Predicated region
      $region41: #{midi_former_forward.3} parent=39 // pred_check
        %p228 = pneg %p33
      $region42: #{midi_former_forward.3} parent=39 // pred_check_branch
        %230 = sbr.rel (%p228) target = $region44
      $region43: #{midi_former_forward.3} parent=39 // pred_region
        %s231 = smul.u32 8, %s13
        %p232 = scmp.lt.s32.totalorder %s231, 15
        %s233 = scalar_select %p232, %s231, 15
        %s234 = smul.addr %s233, 4
        %s235 = scalar_lea.vmem %s0, %s234
        %s236 = smul.u32 8, %s13
      $region44: #{midi_former_forward.3} parent=39 // pred_fallthru
        _
    $region40: #{midi_former_forward.3} parent=5 // pred_fallthru
      _
    %p237 = scmp.le.s32.totalorder 1, %s13
    %p238 = scmp.lt.s32.totalorder %s13, 3
    %p239 = pnand %p237, %p238
    %p240 = pneg %p239
    // Predicated region
    $region45: #{midi_former_forward.3} parent=5 // pred_check
      _
    $region46: #{midi_former_forward.3} parent=5 // pred_check_branch
      %242 = sbr.rel (%p239) target = $region48
    $region47: #{midi_former_forward.3} parent=5 // pred_region
      %s243 = ssub.s32 %s13, 1
      %s244 = smul.u32 8, %s18
      %p245 = scmp.lt.s32.totalorder %s244, 15
      %s246 = scalar_select %p245, %s244, 15
      %s247 = smul.addr %s246, 4
      %s248 = scalar_lea.vmem %s0, %s247
      %p249 = pneg %p39
      %p250 = pneg %p36
      %p251 = pneg %p60
      %p252 = pneg %p57
      %p253 = pneg %p81
      %p254 = pneg %p78
      %p255 = pneg %p102
      %p256 = pneg %p99
      %p257 = pneg %p123
      %p258 = pneg %p120
      %p259 = pneg %p144
      %p260 = pneg %p141
      %p261 = pneg %p165
      %p262 = pneg %p162
      %p263 = pneg %p191
      %p264 = pneg %p188
      %s265 = smul.u32 8, %s18
      %p266 = scmp.lt.s32.totalorder %s265, 15
      %s267 = scalar_select %p266, %s265, 15
      %s268 = smul.addr %s267, 4
      %s269 = scalar_lea.vmem %s7, %s268
      %s270 = smul.u32 8, %s18
      %p271 = scmp.lt.s32.totalorder %s270, 15
      %s272 = scalar_select %p271, %s270, 15
      %s273 = smul.addr %s272, 4
      %s274 = scalar_lea.vmem %s0, %s273
      %s275 = smul.u32 8, %s18
      %s276 = smul.u32 8, %s18
      %p277 = scmp.lt.s32.totalorder %s276, 15
      %s278 = scalar_select %p277, %s276, 15
      %s279 = smul.addr %s278, 4
      %s280 = scalar_lea.vmem %s7, %s279
      %s281 = smul.u32 8, %s18
      %v282 = vld [vmem:[%s1] sm:$0xf]
      %v283 = vld [vmem:[%s2] sm:$0xf]
      %v284 = vld [vmem:[%s4] sm:$0xf]
      %v285 = vld [vmem:[%s5] sm:$0xf]
      %v286 = vld [vmem:[%s6] sm:$0xf]
      %v287 = vld [vmem:[%s3] sm:$0xf]
      %s288 = scalar_lea.vmem %s3, 4
      %v289 = vld [vmem:[%s288] sm:$0xf]
      %s290 = scalar_lea.vmem %s3, 8
      %v291 = vld [vmem:[%s290] sm:$0xf]
      %vm292 = vcmask 84992
      %293 = vst.msk [vmem:[#allocation2] sm:$0xf] %vm292, 0.0
      %v294 = vld [vmem:[%s274] sm:$0xf]
      %296 = vset.pattern.permute.xlu0 0
      %297 = vperm.xlu0 %296, %v283
      %v298 = vpop.permute.xlu0 %297
      %vm300 = vcmask 31744
      %v302 = vsel %vm300, %v282, 0
      %vm304 = vcmask 1043456
      %v306 = vsel %vm304, %v294, 0
      %308 = vmatprep.subr.mxu0 0.0
      %309 = vmatpush1.msra.mxu0 %v306
      %310 = vmatprep.subr.mxu0 0.0
      %311 = vmatpush1.msra.mxu0 0.0
      %312 = vmatprep.subr.mxu0 0.0
      %313 = vmatpush1.msra.mxu0 0.0
      %314 = vmatprep.subr.mxu0 0.0
      %315 = vmatpush1.msra.mxu0 0.0
      %316 = vmatprep.subr.mxu0 0.0
      %317 = vmatpush1.msra.mxu0 0.0
      %318 = vmatprep.subr.mxu0 0.0
      %319 = vmatpush1.msra.mxu0 0.0
      %320 = vmatprep.subr.mxu0 0.0
      %321 = vmatpush1.msra.mxu0 0.0
      %322 = vmatprep.subr.mxu0 0.0
      %323 = vmatpush1.msra.mxu0 0.0
      %324 = vmatprep.subr.mxu0 0.0
      %325 = vmatpush1.msra.mxu0 0.0
      %326 = vmatprep.subr.mxu0 0.0
      %327 = vmatpush1.msra.mxu0 0.0
      %328 = vmatprep.subr.mxu0 0.0
      %329 = vmatpush1.msra.mxu0 0.0
      %330 = vmatprep.subr.mxu0 0.0
      %331 = vmatpush1.msra.mxu0 0.0
      %332 = vmatprep.subr.mxu0 0.0
      %333 = vmatpush1.msra.mxu0 0.0
      %334 = vmatprep.subr.mxu0 0.0
      %335 = vmatpush1.msra.mxu0 0.0
      %336 = vmatprep.subr.mxu0 0.0
      %337 = vmatpush1.msra.mxu0 0.0
      %338 = vmatprep.subr.mxu0 0.0
      %339 = vmatpush1.msra.mxu0 0.0
      %340 = vmatprep.subr.mxu0 0.0
      %341 = vmatpush1.msra.mxu0 0.0
      %342 = vmatprep.subr.mxu0 0.0
      %343 = vmatpush1.msra.mxu0 0.0
      %344 = vmatprep.subr.mxu0 0.0
      %345 = vmatpush1.msra.mxu0 0.0
      %346 = vmatprep.subr.mxu0 0.0
      %347 = vmatpush1.msra.mxu0 0.0
      %348 = vmatprep.subr.mxu0 0.0
      %349 = vmatpush1.msra.mxu0 0.0
      %350 = vmatprep.subr.mxu0 0.0
      %351 = vmatpush1.msra.mxu0 0.0
      %352 = vmatprep.subr.mxu0 0.0
      %353 = vmatpush1.msra.mxu0 0.0
      %354 = vmatprep.subr.mxu0 0.0
      %355 = vmatpush1.msra.mxu0 0.0
      %356 = vmatprep.subr.mxu0 0.0
      %357 = vmatpush1.msra.mxu0 0.0
      %358 = vmatprep.subr.mxu0 0.0
      %359 = vmatpush1.msra.mxu0 0.0
      %360 = vmatprep.subr.mxu0 0.0
      %361 = vmatpush1.msra.mxu0 0.0
      %362 = vmatprep.subr.mxu0 0.0
      %363 = vmatpush1.msra.mxu0 0.0
      %364 = vmatprep.subr.mxu0 0.0
      %365 = vmatpush1.msra.mxu0 0.0
      %366 = vmatprep.subr.mxu0 0.0
      %367 = vmatpush1.msra.mxu0 0.0
      %368 = vmatprep.subr.mxu0 0.0
      %369 = vmatpush1.msra.mxu0 0.0
      %370 = vmatprep.subr.mxu0 0.0
      %371 = vmatpush1.msra.mxu0 0.0
      %372 = vmatprep.mubr.f32.mxu0 0.0
      %373 = vmatmul.mubr.f32.gmra.mrb[0].mxu0 %v302
      %v374 = vpop.f32.mrb[0].mxu0
      %v375 = vadd.f32 %v298, %v374
      %v376 = vpop.f32.mrb[0].mxu0
      %377 = vdwg.mxu0
      %vm378 = vcmask 68608
      %v379 = vsel %vm378, %v375, 0.0
      %380 = vadd.xlane.f32.xlu0 %v379
      %v381 = vpop.xlane.xlu0 %380
      %v382 = vrcp.pop 9.0
      %v383 = vmul.f32 %v381, %v382
      %v384 = vxor.u32 %v375, 2147483648
      %v385 = vmul.f32 %v384, 1.442695
      %v386 = vpow.pop %v385
      %v387 = vadd.f32 %v386, 1.0
      %v388 = vrcp.pop %v387
      %v389 = vmul.f32 1.0, %v388
      %v390 = vmul.f32 %v294, %v389
      %v391 = vxor.u32 %v383, 2147483648
      %v392 = vmul.f32 %v391, 1.442695
      %v393 = vpow.pop %v392
      %v394 = vadd.f32 %v393, 1.0
      %v395 = vrcp.pop %v394
      %v396 = vmul.f32 1.0, %v395
      %v397 = vmul.f32 %v390, %v396
      %v398 = vsel %vm378, %v397, 0.0
      %399 = vadd.xlane.f32.xlu0 %v398
      %v400 = vpop.xlane.xlu0 %399
      %v401 = vmul.f32 %v400, %v382
      %v402 = vsub.f32 %v397, %v401
      %v403 = vmul.f32 %v402, %v402
      %v404 = vsel %vm378, %v403, 0.0
      %405 = vadd.xlane.f32.xlu0 %v404
      %v406 = vpop.xlane.xlu0 %405
      %v407 = vmul.f32 %v406, %v382
      %v408 = vadd.f32 %v407, 1e-05
      %v409 = vrsqrt.pop %v408
      %v410 = vmul.f32 %v402, %v409
      %412 = vset.pattern.permute.xlu0 0
      %413 = vperm.xlu0 %412, %v285
      %v414 = vpop.permute.xlu0 %413
      %v416 = vmul.f32 %v410, %v414
      %418 = vset.pattern.permute.xlu0 0
      %419 = vperm.xlu0 %418, %v286
      %v420 = vpop.permute.xlu0 %419
      %v422 = vadd.f32 %v416, %v420
      %423 = vrot.lane.b32.xlu0 %v294, 1
      %v424 = vpop.permute.xlu0 %423
      %vm426 = vcmask 76808
      %427 = vst.msk [vmem:[#allocation2] sm:$0xf] %vm426, %v424
      %v428 = vld [vmem:[#allocation2] sm:$0xf]
      %430 = vrot.lane.b32.xlu0 %v428, 127
      %v431 = vpop.permute.xlu0 %430
      %v433 = vsel %vm300, %v289, 0
      %v435 = vsel %vm304, %v431, 0
      %437 = vmatprep.subr.mxu0 0.0
      %438 = vmatpush1.msra.mxu0 %v435
      %439 = vmatprep.subr.mxu0 0.0
      %440 = vmatpush1.msra.mxu0 0.0
      %441 = vmatprep.subr.mxu0 0.0
      %442 = vmatpush1.msra.mxu0 0.0
      %443 = vmatprep.subr.mxu0 0.0
      %444 = vmatpush1.msra.mxu0 0.0
      %445 = vmatprep.subr.mxu0 0.0
      %446 = vmatpush1.msra.mxu0 0.0
      %447 = vmatprep.subr.mxu0 0.0
      %448 = vmatpush1.msra.mxu0 0.0
      %449 = vmatprep.subr.mxu0 0.0
      %450 = vmatpush1.msra.mxu0 0.0
      %451 = vmatprep.subr.mxu0 0.0
      %452 = vmatpush1.msra.mxu0 0.0
      %453 = vmatprep.subr.mxu0 0.0
      %454 = vmatpush1.msra.mxu0 0.0
      %455 = vmatprep.subr.mxu0 0.0
      %456 = vmatpush1.msra.mxu0 0.0
      %457 = vmatprep.subr.mxu0 0.0
      %458 = vmatpush1.msra.mxu0 0.0
      %459 = vmatprep.subr.mxu0 0.0
      %460 = vmatpush1.msra.mxu0 0.0
      %461 = vmatprep.subr.mxu0 0.0
      %462 = vmatpush1.msra.mxu0 0.0
      %463 = vmatprep.subr.mxu0 0.0
      %464 = vmatpush1.msra.mxu0 0.0
      %465 = vmatprep.subr.mxu0 0.0
      %466 = vmatpush1.msra.mxu0 0.0
      %467 = vmatprep.subr.mxu0 0.0
      %468 = vmatpush1.msra.mxu0 0.0
      %469 = vmatprep.subr.mxu0 0.0
      %470 = vmatpush1.msra.mxu0 0.0
      %471 = vmatprep.subr.mxu0 0.0
      %472 = vmatpush1.msra.mxu0 0.0
      %473 = vmatprep.subr.mxu0 0.0
      %474 = vmatpush1.msra.mxu0 0.0
      %475 = vmatprep.subr.mxu0 0.0
      %476 = vmatpush1.msra.mxu0 0.0
      %477 = vmatprep.subr.mxu0 0.0
      %478 = vmatpush1.msra.mxu0 0.0
      %479 = vmatprep.subr.mxu0 0.0
      %480 = vmatpush1.msra.mxu0 0.0
      %481 = vmatprep.subr.mxu0 0.0
      %482 = vmatpush1.msra.mxu0 0.0
      %483 = vmatprep.subr.mxu0 0.0
      %484 = vmatpush1.msra.mxu0 0.0
      %485 = vmatprep.subr.mxu0 0.0
      %486 = vmatpush1.msra.mxu0 0.0
      %487 = vmatprep.subr.mxu0 0.0
      %488 = vmatpush1.msra.mxu0 0.0
      %489 = vmatprep.subr.mxu0 0.0
      %490 = vmatpush1.msra.mxu0 0.0
      %491 = vmatprep.subr.mxu0 0.0
      %492 = vmatpush1.msra.mxu0 0.0
      %493 = vmatprep.subr.mxu0 0.0
      %494 = vmatpush1.msra.mxu0 0.0
      %495 = vmatprep.subr.mxu0 0.0
      %496 = vmatpush1.msra.mxu0 0.0
      %497 = vmatprep.subr.mxu0 0.0
      %498 = vmatpush1.msra.mxu0 0.0
      %499 = vmatprep.subr.mxu0 0.0
      %500 = vmatpush1.msra.mxu0 0.0
      %501 = vmatprep.mubr.f32.mxu0 0.0
      %502 = vmatmul.mubr.f32.gmra.mrb[0].mxu0 %v433
      %v503 = vpop.f32.mrb[0].mxu0
      %v504 = vadd.f32 0.0, %v503
      %v505 = vpop.f32.mrb[0].mxu0
      %506 = vdwg.mxu0
      %v508 = vsel %vm300, %v287, 0
      %v510 = vsel %vm304, %v428, 0
      %512 = vmatprep.subr.mxu0 0.0
      %513 = vmatpush1.msra.mxu0 %v510
      %514 = vmatprep.subr.mxu0 0.0
      %515 = vmatpush1.msra.mxu0 0.0
      %516 = vmatprep.subr.mxu0 0.0
      %517 = vmatpush1.msra.mxu0 0.0
      %518 = vmatprep.subr.mxu0 0.0
      %519 = vmatpush1.msra.mxu0 0.0
      %520 = vmatprep.subr.mxu0 0.0
      %521 = vmatpush1.msra.mxu0 0.0
      %522 = vmatprep.subr.mxu0 0.0
      %523 = vmatpush1.msra.mxu0 0.0
      %524 = vmatprep.subr.mxu0 0.0
      %525 = vmatpush1.msra.mxu0 0.0
      %526 = vmatprep.subr.mxu0 0.0
      %527 = vmatpush1.msra.mxu0 0.0
      %528 = vmatprep.subr.mxu0 0.0
      %529 = vmatpush1.msra.mxu0 0.0
      %530 = vmatprep.subr.mxu0 0.0
      %531 = vmatpush1.msra.mxu0 0.0
      %532 = vmatprep.subr.mxu0 0.0
      %533 = vmatpush1.msra.mxu0 0.0
      %534 = vmatprep.subr.mxu0 0.0
      %535 = vmatpush1.msra.mxu0 0.0
      %536 = vmatprep.subr.mxu0 0.0
      %537 = vmatpush1.msra.mxu0 0.0
      %538 = vmatprep.subr.mxu0 0.0
      %539 = vmatpush1.msra.mxu0 0.0
      %540 = vmatprep.subr.mxu0 0.0
      %541 = vmatpush1.msra.mxu0 0.0
      %542 = vmatprep.subr.mxu0 0.0
      %543 = vmatpush1.msra.mxu0 0.0
      %544 = vmatprep.subr.mxu0 0.0
      %545 = vmatpush1.msra.mxu0 0.0
      %546 = vmatprep.subr.mxu0 0.0
      %547 = vmatpush1.msra.mxu0 0.0
      %548 = vmatprep.subr.mxu0 0.0
      %549 = vmatpush1.msra.mxu0 0.0
      %550 = vmatprep.subr.mxu0 0.0
      %551 = vmatpush1.msra.mxu0 0.0
      %552 = vmatprep.subr.mxu0 0.0
      %553 = vmatpush1.msra.mxu0 0.0
      %554 = vmatprep.subr.mxu0 0.0
      %555 = vmatpush1.msra.mxu0 0.0
      %556 = vmatprep.subr.mxu0 0.0
      %557 = vmatpush1.msra.mxu0 0.0
      %558 = vmatprep.subr.mxu0 0.0
      %559 = vmatpush1.msra.mxu0 0.0
      %560 = vmatprep.subr.mxu0 0.0
      %561 = vmatpush1.msra.mxu0 0.0
      %562 = vmatprep.subr.mxu0 0.0
      %563 = vmatpush1.msra.mxu0 0.0
      %564 = vmatprep.subr.mxu0 0.0
      %565 = vmatpush1.msra.mxu0 0.0
      %566 = vmatprep.subr.mxu0 0.0
      %567 = vmatpush1.msra.mxu0 0.0
      %568 = vmatprep.subr.mxu0 0.0
      %569 = vmatpush1.msra.mxu0 0.0
      %570 = vmatprep.subr.mxu0 0.0
      %571 = vmatpush1.msra.mxu0 0.0
      %572 = vmatprep.subr.mxu0 0.0
      %573 = vmatpush1.msra.mxu0 0.0
      %574 = vmatprep.subr.mxu0 0.0
      %575 = vmatpush1.msra.mxu0 0.0
      %576 = vmatprep.mubr.f32.mxu0 0.0
      %577 = vmatmul.mubr.f32.gmra.mrb[0].mxu0 %v508
      %v578 = vpop.f32.mrb[0].mxu0
      %v579 = vadd.f32 %v504, %v578
      %v580 = vpop.f32.mrb[0].mxu0
      %581 = vdwg.mxu0
      %582 = vrot.lane.b32.xlu0 %v428, 126
      %v583 = vpop.permute.xlu0 %582
      %v585 = vsel %vm300, %v291, 0
      %v587 = vsel %vm304, %v583, 0
      %589 = vmatprep.subr.mxu0 0.0
      %590 = vmatpush1.msra.mxu0 %v587
      %591 = vmatprep.subr.mxu0 0.0
      %592 = vmatpush1.msra.mxu0 0.0
      %593 = vmatprep.subr.mxu0 0.0
      %594 = vmatpush1.msra.mxu0 0.0
      %595 = vmatprep.subr.mxu0 0.0
      %596 = vmatpush1.msra.mxu0 0.0
      %597 = vmatprep.subr.mxu0 0.0
      %598 = vmatpush1.msra.mxu0 0.0
      %599 = vmatprep.subr.mxu0 0.0
      %600 = vmatpush1.msra.mxu0 0.0
      %601 = vmatprep.subr.mxu0 0.0
      %602 = vmatpush1.msra.mxu0 0.0
      %603 = vmatprep.subr.mxu0 0.0
      %604 = vmatpush1.msra.mxu0 0.0
      %605 = vmatprep.subr.mxu0 0.0
      %606 = vmatpush1.msra.mxu0 0.0
      %607 = vmatprep.subr.mxu0 0.0
      %608 = vmatpush1.msra.mxu0 0.0
      %609 = vmatprep.subr.mxu0 0.0
      %610 = vmatpush1.msra.mxu0 0.0
      %611 = vmatprep.subr.mxu0 0.0
      %612 = vmatpush1.msra.mxu0 0.0
      %613 = vmatprep.subr.mxu0 0.0
      %614 = vmatpush1.msra.mxu0 0.0
      %615 = vmatprep.subr.mxu0 0.0
      %616 = vmatpush1.msra.mxu0 0.0
      %617 = vmatprep.subr.mxu0 0.0
      %618 = vmatpush1.msra.mxu0 0.0
      %619 = vmatprep.subr.mxu0 0.0
      %620 = vmatpush1.msra.mxu0 0.0
      %621 = vmatprep.subr.mxu0 0.0
      %622 = vmatpush1.msra.mxu0 0.0
      %623 = vmatprep.subr.mxu0 0.0
      %624 = vmatpush1.msra.mxu0 0.0
      %625 = vmatprep.subr.mxu0 0.0
      %626 = vmatpush1.msra.mxu0 0.0
      %627 = vmatprep.subr.mxu0 0.0
      %628 = vmatpush1.msra.mxu0 0.0
      %629 = vmatprep.subr.mxu0 0.0
      %630 = vmatpush1.msra.mxu0 0.0
      %631 = vmatprep.subr.mxu0 0.0
      %632 = vmatpush1.msra.mxu0 0.0
      %633 = vmatprep.subr.mxu0 0.0
      %634 = vmatpush1.msra.mxu0 0.0
      %635 = vmatprep.subr.mxu0 0.0
      %636 = vmatpush1.msra.mxu0 0.0
      %637 = vmatprep.subr.mxu0 0.0
      %638 = vmatpush1.msra.mxu0 0.0
      %639 = vmatprep.subr.mxu0 0.0
      %640 = vmatpush1.msra.mxu0 0.0
      %641 = vmatprep.subr.mxu0 0.0
      %642 = vmatpush1.msra.mxu0 0.0
      %643 = vmatprep.subr.mxu0 0.0
      %644 = vmatpush1.msra.mxu0 0.0
      %645 = vmatprep.subr.mxu0 0.0
      %646 = vmatpush1.msra.mxu0 0.0
      %647 = vmatprep.subr.mxu0 0.0
      %648 = vmatpush1.msra.mxu0 0.0
      %649 = vmatprep.subr.mxu0 0.0
      %650 = vmatpush1.msra.mxu0 0.0
      %651 = vmatprep.subr.mxu0 0.0
      %652 = vmatpush1.msra.mxu0 0.0
      %653 = vmatprep.mubr.f32.mxu0 0.0
      %654 = vmatmul.mubr.f32.gmra.mrb[0].mxu0 %v585
      %v655 = vpop.f32.mrb[0].mxu0
      %v656 = vadd.f32 0.0, %v655
      %v657 = vpop.f32.mrb[0].mxu0
      %658 = vdwg.mxu0
      %v659 = vadd.f32 %v579, %v656
      %661 = vset.pattern.permute.xlu0 0
      %662 = vperm.xlu0 %661, %v284
      %v663 = vpop.permute.xlu0 %662
      %v665 = vadd.f32 %v659, %v663
      %v666 = vsel %vm378, %v422, 0.0
      %667 = vadd.xlane.f32.xlu0 %v666
      %v668 = vpop.xlane.xlu0 %667
      %v669 = vmul.f32 %v668, %v382
      %v670 = vsel %vm304, %v669, -inf
      %v671 = vrot.slane %v670, 4
      %v672 = vmax.f32 %v670, %v671
      %v673 = vrot.slane %v672, 2
      %v674 = vmax.f32 %v672, %v673
      %v675 = vrot.slane %v674, 1
      %v676 = vmax.f32 %v674, %v675
      %v677 = vsub.f32 %v669, %v676
      %v678 = vmul.f32 %v677, 1.442695
      %v679 = vpow.pop %v678
      %v680 = vsel %vm304, %v679, 0.0
      %v681 = vrot.slane %v680, 4
      %v682 = vadd.f32 %v680, %v681
      %v683 = vrot.slane %v682, 2
      %v684 = vadd.f32 %v682, %v683
      %v685 = vrot.slane %v684, 1
      %v686 = vadd.f32 %v684, %v685
      %v687 = vrcp.pop %v686
      %v688 = vmul.f32 %v679, %v687
      %v689 = vsel %vm378, %v665, 0.0
      %690 = vadd.xlane.f32.xlu0 %v689
      %v691 = vpop.xlane.xlu0 %690
      %v692 = vmul.f32 %v691, %v382
      %v693 = vsel %vm304, %v692, -inf
      %v694 = vrot.slane %v693, 4
      %v695 = vmax.f32 %v693, %v694
      %v696 = vrot.slane %v695, 2
      %v697 = vmax.f32 %v695, %v696
      %v698 = vrot.slane %v697, 1
      %v699 = vmax.f32 %v697, %v698
      %v700 = vsub.f32 %v692, %v699
      %v701 = vmul.f32 %v700, 1.442695
      %v702 = vpow.pop %v701
      %v703 = vsel %vm304, %v702, 0.0
      %v704 = vrot.slane %v703, 4
      %v705 = vadd.f32 %v703, %v704
      %v706 = vrot.slane %v705, 2
      %v707 = vadd.f32 %v705, %v706
      %v708 = vrot.slane %v707, 1
      %v709 = vadd.f32 %v707, %v708
      %v710 = vrcp.pop %v709
      %v711 = vmul.f32 %v702, %v710
      %v712 = vmul.f32 %v688, %v665
      %v713 = vsel %vm378, %v712, 0.0
      %v714 = vrot.slane %v713, 4
      %v715 = vadd.f32 %v713, %v714
      %v716 = vrot.slane %v715, 2
      %v717 = vadd.f32 %v715, %v716
      %v718 = vrot.slane %v717, 1
      %v719 = vadd.f32 %v717, %v718
      %v720 = vmul.f32 %v711, %v422
      %v721 = vsel %vm378, %v720, 0.0
      %v722 = vrot.slane %v721, 4
      %v723 = vadd.f32 %v721, %v722
      %v724 = vrot.slane %v723, 2
      %v725 = vadd.f32 %v723, %v724
      %v726 = vrot.slane %v725, 1
      %v727 = vadd.f32 %v725, %v726
      %v728 = vadd.f32 %v719, %v727
      %v729 = vxor.u32 %v728, 2147483648
      %v730 = vmul.f32 %v729, 1.442695
      %v731 = vpow.pop %v730
      %v732 = vadd.f32 %v731, 1.0
      %v733 = vrcp.pop %v732
      %v734 = vmul.f32 1.0, %v733
      %v735 = vmul.f32 %v294, %v734
      %736 = vst.msk [vmem:[%s280] sm:$0xf] %vm378, %v735
      %s737 = scalar_lea.vmem %s274, 4
      %v738 = vld [vmem:[%s737] sm:$0xf]
      %v740 = vsel %vm304, %v738, 0
      %742 = vmatprep.subr.mxu0 0.0
      %743 = vmatpush1.msra.mxu0 %v740
      %744 = vmatprep.subr.mxu0 0.0
      %745 = vmatpush1.msra.mxu0 0.0
      %746 = vmatprep.subr.mxu0 0.0
      %747 = vmatpush1.msra.mxu0 0.0
      %748 = vmatprep.subr.mxu0 0.0
      %749 = vmatpush1.msra.mxu0 0.0
      %750 = vmatprep.subr.mxu0 0.0
      %751 = vmatpush1.msra.mxu0 0.0
      %752 = vmatprep.subr.mxu0 0.0
      %753 = vmatpush1.msra.mxu0 0.0
      %754 = vmatprep.subr.mxu0 0.0
      %755 = vmatpush1.msra.mxu0 0.0
      %756 = vmatprep.subr.mxu0 0.0
      %757 = vmatpush1.msra.mxu0 0.0
      %758 = vmatprep.subr.mxu0 0.0
      %759 = vmatpush1.msra.mxu0 0.0
      %760 = vmatprep.subr.mxu0 0.0
      %761 = vmatpush1.msra.mxu0 0.0
      %762 = vmatprep.subr.mxu0 0.0
      %763 = vmatpush1.msra.mxu0 0.0
      %764 = vmatprep.subr.mxu0 0.0
      %765 = vmatpush1.msra.mxu0 0.0
      %766 = vmatprep.subr.mxu0 0.0
      %767 = vmatpush1.msra.mxu0 0.0
      %768 = vmatprep.subr.mxu0 0.0
      %769 = vmatpush1.msra.mxu0 0.0
      %770 = vmatprep.subr.mxu0 0.0
      %771 = vmatpush1.msra.mxu0 0.0
      %772 = vmatprep.subr.mxu0 0.0
      %773 = vmatpush1.msra.mxu0 0.0
      %774 = vmatprep.subr.mxu0 0.0
      %775 = vmatpush1.msra.mxu0 0.0
      %776 = vmatprep.subr.mxu0 0.0
      %777 = vmatpush1.msra.mxu0 0.0
      %778 = vmatprep.subr.mxu0 0.0
      %779 = vmatpush1.msra.mxu0 0.0
      %780 = vmatprep.subr.mxu0 0.0
      %781 = vmatpush1.msra.mxu0 0.0
      %782 = vmatprep.subr.mxu0 0.0
      %783 = vmatpush1.msra.mxu0 0.0
      %784 = vmatprep.subr.mxu0 0.0
      %785 = vmatpush1.msra.mxu0 0.0
      %786 = vmatprep.subr.mxu0 0.0
      %787 = vmatpush1.msra.mxu0 0.0
      %788 = vmatprep.subr.mxu0 0.0
      %789 = vmatpush1.msra.mxu0 0.0
      %790 = vmatprep.subr.mxu0 0.0
      %791 = vmatpush1.msra.mxu0 0.0
      %792 = vmatprep.subr.mxu0 0.0
      %793 = vmatpush1.msra.mxu0 0.0
      %794 = vmatprep.subr.mxu0 0.0
      %795 = vmatpush1.msra.mxu0 0.0
      %796 = vmatprep.subr.mxu0 0.0
      %797 = vmatpush1.msra.mxu0 0.0
      %798 = vmatprep.subr.mxu0 0.0
      %799 = vmatpush1.msra.mxu0 0.0
      %800 = vmatprep.subr.mxu0 0.0
      %801 = vmatpush1.msra.mxu0 0.0
      %802 = vmatprep.subr.mxu0 0.0
      %803 = vmatpush1.msra.mxu0 0.0
      %804 = vmatprep.subr.mxu0 0.0
      %805 = vmatpush1.msra.mxu0 0.0
      %806 = vmatprep.mubr.f32.mxu0 0.0
      %807 = vmatmul.mubr.f32.gmra.mrb[0].mxu0 %v302
      %v808 = vpop.f32.mrb[0].mxu0
      %v809 = vadd.f32 %v298, %v808
      %v810 = vpop.f32.mrb[0].mxu0
      %811 = vdwg.mxu0
      %v812 = vsel %vm378, %v809, 0.0
      %813 = vadd.xlane.f32.xlu0 %v812
      %v814 = vpop.xlane.xlu0 %813
      %v815 = vmul.f32 %v814, %v382
      %v816 = vxor.u32 %v809, 2147483648
      %v817 = vmul.f32 %v816, 1.442695
      %v818 = vpow.pop %v817
      %v819 = vadd.f32 %v818, 1.0
      %v820 = vrcp.pop %v819
      %v821 = vmul.f32 1.0, %v820
      %v822 = vmul.f32 %v738, %v821
      %v823 = vxor.u32 %v815, 2147483648
      %v824 = vmul.f32 %v823, 1.442695
      %v825 = vpow.pop %v824
      %v826 = vadd.f32 %v825, 1.0
      %v827 = vrcp.pop %v826
      %v828 = vmul.f32 1.0, %v827
      %v829 = vmul.f32 %v822, %v828
      %v830 = vsel %vm378, %v829, 0.0
      %831 = vadd.xlane.f32.xlu0 %v830
      %v832 = vpop.xlane.xlu0 %831
      %v833 = vmul.f32 %v832, %v382
      %v834 = vsub.f32 %v829, %v833
      %v835 = vmul.f32 %v834, %v834
      %v836 = vsel %vm378, %v835, 0.0
      %837 = vadd.xlane.f32.xlu0 %v836
      %v838 = vpop.xlane.xlu0 %837
      %v839 = vmul.f32 %v838, %v382
      %v840 = vadd.f32 %v839, 1e-05
      %v841 = vrsqrt.pop %v840
      %v842 = vmul.f32 %v834, %v841
      %v843 = vmul.f32 %v842, %v414
      %v844 = vadd.f32 %v843, %v420
      %845 = vrot.lane.b32.xlu0 %v738, 1
      %v846 = vpop.permute.xlu0 %845
      %848 = vst.msk [vmem:[#allocation2] sm:$0xf] %vm426, %v846
      %v849 = vld [vmem:[#allocation2] sm:$0xf]
      %851 = vrot.lane.b32.xlu0 %v849, 127
      %v852 = vpop.permute.xlu0 %851
      %v853 = vsel %vm304, %v852, 0
      %855 = vmatprep.subr.mxu0 0.0
      %856 = vmatpush1.msra.mxu0 %v853
      %857 = vmatprep.subr.mxu0 0.0
      %858 = vmatpush1.msra.mxu0 0.0
      %859 = vmatprep.subr.mxu0 0.0
      %860 = vmatpush1.msra.mxu0 0.0
      %861 = vmatprep.subr.mxu0 0.0
      %862 = vmatpush1.msra.mxu0 0.0
      %863 = vmatprep.subr.mxu0 0.0
      %864 = vmatpush1.msra.mxu0 0.0
      %865 = vmatprep.subr.mxu0 0.0
      %866 = vmatpush1.msra.mxu0 0.0
      %867 = vmatprep.subr.mxu0 0.0
      %868 = vmatpush1.msra.mxu0 0.0
      %869 = vmatprep.subr.mxu0 0.0
      %870 = vmatpush1.msra.mxu0 0.0
      %871 = vmatprep.subr.mxu0 0.0
      %872 = vmatpush1.msra.mxu0 0.0
      %873 = vmatprep.subr.mxu0 0.0
      %874 = vmatpush1.msra.mxu0 0.0
      %875 = vmatprep.subr.mxu0 0.0
      %876 = vmatpush1.msra.mxu0 0.0
      %877 = vmatprep.subr.mxu0 0.0
      %878 = vmatpush1.msra.mxu0 0.0
      %879 = vmatprep.subr.mxu0 0.0
      %880 = vmatpush1.msra.mxu0 0.0
      %881 = vmatprep.subr.mxu0 0.0
      %882 = vmatpush1.msra.mxu0 0.0
      %883 = vmatprep.subr.mxu0 0.0
      %884 = vmatpush1.msra.mxu0 0.0
      %885 = vmatprep.subr.mxu0 0.0
      %886 = vmatpush1.msra.mxu0 0.0
      %887 = vmatprep.subr.mxu0 0.0
      %888 = vmatpush1.msra.mxu0 0.0
      %889 = vmatprep.subr.mxu0 0.0
      %890 = vmatpush1.msra.mxu0 0.0
      %891 = vmatprep.subr.mxu0 0.0
      %892 = vmatpush1.msra.mxu0 0.0
      %893 = vmatprep.subr.mxu0 0.0
      %894 = vmatpush1.msra.mxu0 0.0
      %895 = vmatprep.subr.mxu0 0.0
      %896 = vmatpush1.msra.mxu0 0.0
      %897 = vmatprep.subr.mxu0 0.0
      %898 = vmatpush1.msra.mxu0 0.0
      %899 = vmatprep.subr.mxu0 0.0
      %900 = vmatpush1.msra.mxu0 0.0
      %901 = vmatprep.subr.mxu0 0.0
      %902 = vmatpush1.msra.mxu0 0.0
      %903 = vmatprep.subr.mxu0 0.0
      %904 = vmatpush1.msra.mxu0 0.0
      %905 = vmatprep.subr.mxu0 0.0
      %906 = vmatpush1.msra.mxu0 0.0
      %907 = vmatprep.subr.mxu0 0.0
      %908 = vmatpush1.msra.mxu0 0.0
      %909 = vmatprep.subr.mxu0 0.0
      %910 = vmatpush1.msra.mxu0 0.0
      %911 = vmatprep.subr.mxu0 0.0
      %912 = vmatpush1.msra.mxu0 0.0
      %913 = vmatprep.subr.mxu0 0.0
      %914 = vmatpush1.msra.mxu0 0.0
      %915 = vmatprep.subr.mxu0 0.0
      %916 = vmatpush1.msra.mxu0 0.0
      %917 = vmatprep.subr.mxu0 0.0
      %918 = vmatpush1.msra.mxu0 0.0
      %919 = vmatprep.mubr.f32.mxu0 0.0
      %920 = vmatmul.mubr.f32.gmra.mrb[0].mxu0 %v433
      %v921 = vpop.f32.mrb[0].mxu0
      %v922 = vadd.f32 0.0, %v921
      %v923 = vpop.f32.mrb[0].mxu0
      %924 = vdwg.mxu0
      %v925 = vsel %vm304, %v849, 0
      %927 = vmatprep.subr.mxu0 0.0
      %928 = vmatpush1.msra.mxu0 %v925
      %929 = vmatprep.subr.mxu0 0.0
      %930 = vmatpush1.msra.mxu0 0.0
      %931 = vmatprep.subr.mxu0 0.0
      %932 = vmatpush1.msra.mxu0 0.0
      %933 = vmatprep.subr.mxu0 0.0
      %934 = vmatpush1.msra.mxu0 0.0
      %935 = vmatprep.subr.mxu0 0.0
      %936 = vmatpush1.msra.mxu0 0.0
      %937 = vmatprep.subr.mxu0 0.0
      %938 = vmatpush1.msra.mxu0 0.0
      %939 = vmatprep.subr.mxu0 0.0
      %940 = vmatpush1.msra.mxu0 0.0
      %941 = vmatprep.subr.mxu0 0.0
      %942 = vmatpush1.msra.mxu0 0.0
      %943 = vmatprep.subr.mxu0 0.0
      %944 = vmatpush1.msra.mxu0 0.0
      %945 = vmatprep.subr.mxu0 0.0
      %946 = vmatpush1.msra.mxu0 0.0
      %947 = vmatprep.subr.mxu0 0.0
      %948 = vmatpush1.msra.mxu0 0.0
      %949 = vmatprep.subr.mxu0 0.0
      %950 = vmatpush1.msra.mxu0 0.0
      %951 = vmatprep.subr.mxu0 0.0
      %952 = vmatpush1.msra.mxu0 0.0
      %953 = vmatprep.subr.mxu0 0.0
      %954 = vmatpush1.msra.mxu0 0.0
      %955 = vmatprep.subr.mxu0 0.0
      %956 = vmatpush1.msra.mxu0 0.0
      %957 = vmatprep.subr.mxu0 0.0
      %958 = vmatpush1.msra.mxu0 0.0
      %959 = vmatprep.subr.mxu0 0.0
      %960 = vmatpush1.msra.mxu0 0.0
      %961 = vmatprep.subr.mxu0 0.0
      %962 = vmatpush1.msra.mxu0 0.0
      %963 = vmatprep.subr.mxu0 0.0
      %964 = vmatpush1.msra.mxu0 0.0
      %965 = vmatprep.subr.mxu0 0.0
      %966 = vmatpush1.msra.mxu0 0.0
      %967 = vmatprep.subr.mxu0 0.0
      %968 = vmatpush1.msra.mxu0 0.0
      %969 = vmatprep.subr.mxu0 0.0
      %970 = vmatpush1.msra.mxu0 0.0
      %971 = vmatprep.subr.mxu0 0.0
      %972 = vmatpush1.msra.mxu0 0.0
      %973 = vmatprep.subr.mxu0 0.0
      %974 = vmatpush1.msra.mxu0 0.0
      %975 = vmatprep.subr.mxu0 0.0
      %976 = vmatpush1.msra.mxu0 0.0
      %977 = vmatprep.subr.mxu0 0.0
      %978 = vmatpush1.msra.mxu0 0.0
      %979 = vmatprep.subr.mxu0 0.0
      %980 = vmatpush1.msra.mxu0 0.0
      %981 = vmatprep.subr.mxu0 0.0
      %982 = vmatpush1.msra.mxu0 0.0
      %983 = vmatprep.subr.mxu0 0.0
      %984 = vmatpush1.msra.mxu0 0.0
      %985 = vmatprep.subr.mxu0 0.0
      %986 = vmatpush1.msra.mxu0 0.0
      %987 = vmatprep.subr.mxu0 0.0
      %988 = vmatpush1.msra.mxu0 0.0
      %989 = vmatprep.subr.mxu0 0.0
      %990 = vmatpush1.msra.mxu0 0.0
      %991 = vmatprep.mubr.f32.mxu0 0.0
      %992 = vmatmul.mubr.f32.gmra.mrb[0].mxu0 %v508
      %v993 = vpop.f32.mrb[0].mxu0
      %v994 = vadd.f32 %v922, %v993
      %v995 = vpop.f32.mrb[0].mxu0
      %996 = vdwg.mxu0
      %997 = vrot.lane.b32.xlu0 %v849, 126
      %v998 = vpop.permute.xlu0 %997
      %v999 = vsel %vm304, %v998, 0
      %1001 = vmatprep.subr.mxu0 0.0
      %1002 = vmatpush1.msra.mxu0 %v999
      %1003 = vmatprep.subr.mxu0 0.0
      %1004 = vmatpush1.msra.mxu0 0.0
      %1005 = vmatprep.subr.mxu0 0.0
      %1006 = vmatpush1.msra.mxu0 0.0
      %1007 = vmatprep.subr.mxu0 0.0
      %1008 = vmatpush1.msra.mxu0 0.0
      %1009 = vmatprep.subr.mxu0 0.0
      %1010 = vmatpush1.msra.mxu0 0.0
      %1011 = vmatprep.subr.mxu0 0.0
      %1012 = vmatpush1.msra.mxu0 0.0
      %1013 = vmatprep.subr.mxu0 0.0
      %1014 = vmatpush1.msra.mxu0 0.0
      %1015 = vmatprep.subr.mxu0 0.0
      %1016 = vmatpush1.msra.mxu0 0.0
      %1017 = vmatprep.subr.mxu0 0.0
      %1018 = vmatpush1.msra.mxu0 0.0
      %1019 = vmatprep.subr.mxu0 0.0
      %1020 = vmatpush1.msra.mxu0 0.0
      %1021 = vmatprep.subr.mxu0 0.0
      %1022 = vmatpush1.msra.mxu0 0.0
      %1023 = vmatprep.subr.mxu0 0.0
      %1024 = vmatpush1.msra.mxu0 0.0
      %1025 = vmatprep.subr.mxu0 0.0
      %1026 = vmatpush1.msra.mxu0 0.0
      %1027 = vmatprep.subr.mxu0 0.0
      %1028 = vmatpush1.msra.mxu0 0.0
      %1029 = vmatprep.subr.mxu0 0.0
      %1030 = vmatpush1.msra.mxu0 0.0
      %1031 = vmatprep.subr.mxu0 0.0
      %1032 = vmatpush1.msra.mxu0 0.0
      %1033 = vmatprep.subr.mxu0 0.0
      %1034 = vmatpush1.msra.mxu0 0.0
      %1035 = vmatprep.subr.mxu0 0.0
      %1036 = vmatpush1.msra.mxu0 0.0
      %1037 = vmatprep.subr.mxu0 0.0
      %1038 = vmatpush1.msra.mxu0 0.0
      %1039 = vmatprep.subr.mxu0 0.0
      %1040 = vmatpush1.msra.mxu0 0.0
      %1041 = vmatprep.subr.mxu0 0.0
      %1042 = vmatpush1.msra.mxu0 0.0
      %1043 = vmatprep.subr.mxu0 0.0
      %1044 = vmatpush1.msra.mxu0 0.0
      %1045 = vmatprep.subr.mxu0 0.0
      %1046 = vmatpush1.msra.mxu0 0.0
      %1047 = vmatprep.subr.mxu0 0.0
      %1048 = vmatpush1.msra.mxu0 0.0
      %1049 = vmatprep.subr.mxu0 0.0
      %1050 = vmatpush1.msra.mxu0 0.0
      %1051 = vmatprep.subr.mxu0 0.0
      %1052 = vmatpush1.msra.mxu0 0.0
      %1053 = vmatprep.subr.mxu0 0.0
      %1054 = vmatpush1.msra.mxu0 0.0
      %1055 = vmatprep.subr.mxu0 0.0
      %1056 = vmatpush1.msra.mxu0 0.0
      %1057 = vmatprep.subr.mxu0 0.0
      %1058 = vmatpush1.msra.mxu0 0.0
      %1059 = vmatprep.subr.mxu0 0.0
      %1060 = vmatpush1.msra.mxu0 0.0
      %1061 = vmatprep.subr.mxu0 0.0
      %1062 = vmatpush1.msra.mxu0 0.0
      %1063 = vmatprep.subr.mxu0 0.0
      %1064 = vmatpush1.msra.mxu0 0.0
      %1065 = vmatprep.mubr.f32.mxu0 0.0
      %1066 = vmatmul.mubr.f32.gmra.mrb[0].mxu0 %v585
      %v1067 = vpop.f32.mrb[0].mxu0
      %v1068 = vadd.f32 0.0, %v1067
      %v1069 = vpop.f32.mrb[0].mxu0
      %1070 = vdwg.mxu0
      %v1071 = vadd.f32 %v994, %v1068
      %v1072 = vadd.f32 %v1071, %v663
      %v1073 = vsel %vm378, %v844, 0.0
      %1074 = vadd.xlane.f32.xlu0 %v1073
      %v1075 = vpop.xlane.xlu0 %1074
      %v1076 = vmul.f32 %v1075, %v382
      %v1077 = vsel %vm304, %v1076, -inf
      %v1078 = vrot.slane %v1077, 4
      %v1079 = vmax.f32 %v1077, %v1078
      %v1080 = vrot.slane %v1079, 2
      %v1081 = vmax.f32 %v1079, %v1080
      %v1082 = vrot.slane %v1081, 1
      %v1083 = vmax.f32 %v1081, %v1082
      %v1084 = vsub.f32 %v1076, %v1083
      %v1085 = vmul.f32 %v1084, 1.442695
      %v1086 = vpow.pop %v1085
      %v1087 = vsel %vm304, %v1086, 0.0
      %v1088 = vrot.slane %v1087, 4
      %v1089 = vadd.f32 %v1087, %v1088
      %v1090 = vrot.slane %v1089, 2
      %v1091 = vadd.f32 %v1089, %v1090
      %v1092 = vrot.slane %v1091, 1
      %v1093 = vadd.f32 %v1091, %v1092
      %v1094 = vrcp.pop %v1093
      %v1095 = vmul.f32 %v1086, %v1094
      %v1096 = vsel %vm378, %v1072, 0.0
      %1097 = vadd.xlane.f32.xlu0 %v1096
      %v1098 = vpop.xlane.xlu0 %1097
      %v1099 = vmul.f32 %v1098, %v382
      %v1100 = vsel %vm304, %v1099, -inf
      %v1101 = vrot.slane %v1100, 4
      %v1102 = vmax.f32 %v1100, %v1101
      %v1103 = vrot.slane %v1102, 2
      %v1104 = vmax.f32 %v1102, %v1103
      %v1105 = vrot.slane %v1104, 1
      %v1106 = vmax.f32 %v1104, %v1105
      %v1107 = vsub.f32 %v1099, %v1106
      %v1108 = vmul.f32 %v1107, 1.442695
      %v1109 = vpow.pop %v1108
      %v1110 = vsel %vm304, %v1109, 0.0
      %v1111 = vrot.slane %v1110, 4
      %v1112 = vadd.f32 %v1110, %v1111
      %v1113 = vrot.slane %v1112, 2
      %v1114 = vadd.f32 %v1112, %v1113
      %v1115 = vrot.slane %v1114, 1
      %v1116 = vadd.f32 %v1114, %v1115
      %v1117 = vrcp.pop %v1116
      %v1118 = vmul.f32 %v1109, %v1117
      %v1119 = vmul.f32 %v1095, %v1072
      %v1120 = vsel %vm378, %v1119, 0.0
      %v1121 = vrot.slane %v1120, 4
      %v1122 = vadd.f32 %v1120, %v1121
      %v1123 = vrot.slane %v1122, 2
      %v1124 = vadd.f32 %v1122, %v1123
      %v1125 = vrot.slane %v1124, 1
      %v1126 = vadd.f32 %v1124, %v1125
      %v1127 = vmul.f32 %v1118, %v844
      %v1128 = vsel %vm378, %v1127, 0.0
      %v1129 = vrot.slane %v1128, 4
      %v1130 = vadd.f32 %v1128, %v1129
      %v1131 = vrot.slane %v1130, 2
      %v1132 = vadd.f32 %v1130, %v1131
      %v1133 = vrot.slane %v1132, 1
      %v1134 = vadd.f32 %v1132, %v1133
      %v1135 = vadd.f32 %v1126, %v1134
      %v1136 = vxor.u32 %v1135, 2147483648
      %v1137 = vmul.f32 %v1136, 1.442695
      %v1138 = vpow.pop %v1137
      %v1139 = vadd.f32 %v1138, 1.0
      %v1140 = vrcp.pop %v1139
      %v1141 = vmul.f32 1.0, %v1140
      %v1142 = vmul.f32 %v738, %v1141
      %s1143 = scalar_lea.vmem %s280, 4
      %1144 = vst.msk [vmem:[%s1143] sm:$0xf] %vm378, %v1142
      %s1145 = scalar_lea.vmem %s274, 8
      %v1146 = vld [vmem:[%s1145] sm:$0xf]
      %v1148 = vsel %vm304, %v1146, 0
      %1150 = vmatprep.subr.mxu0 0.0
      %1151 = vmatpush1.msra.mxu0 %v1148
      %1152 = vmatprep.subr.mxu0 0.0
      %1153 = vmatpush1.msra.mxu0 0.0
      %1154 = vmatprep.subr.mxu0 0.0
      %1155 = vmatpush1.msra.mxu0 0.0
      %1156 = vmatprep.subr.mxu0 0.0
      %1157 = vmatpush1.msra.mxu0 0.0
      %1158 = vmatprep.subr.mxu0 0.0
      %1159 = vmatpush1.msra.mxu0 0.0
      %1160 = vmatprep.subr.mxu0 0.0
      %1161 = vmatpush1.msra.mxu0 0.0
      %1162 = vmatprep.subr.mxu0 0.0
      %1163 = vmatpush1.msra.mxu0 0.0
      %1164 = vmatprep.subr.mxu0 0.0
      %1165 = vmatpush1.msra.mxu0 0.0
      %1166 = vmatprep.subr.mxu0 0.0
      %1167 = vmatpush1.msra.mxu0 0.0
      %1168 = vmatprep.subr.mxu0 0.0
      %1169 = vmatpush1.msra.mxu0 0.0
      %1170 = vmatprep.subr.mxu0 0.0
      %1171 = vmatpush1.msra.mxu0 0.0
      %1172 = vmatprep.subr.mxu0 0.0
      %1173 = vmatpush1.msra.mxu0 0.0
      %1174 = vmatprep.subr.mxu0 0.0
      %1175 = vmatpush1.msra.mxu0 0.0
      %1176 = vmatprep.subr.mxu0 0.0
      %1177 = vmatpush1.msra.mxu0 0.0
      %1178 = vmatprep.subr.mxu0 0.0
      %1179 = vmatpush1.msra.mxu0 0.0
      %1180 = vmatprep.subr.mxu0 0.0
      %1181 = vmatpush1.msra.mxu0 0.0
      %1182 = vmatprep.subr.mxu0 0.0
      %1183 = vmatpush1.msra.mxu0 0.0
      %1184 = vmatprep.subr.mxu0 0.0
      %1185 = vmatpush1.msra.mxu0 0.0
      %1186 = vmatprep.subr.mxu0 0.0
      %1187 = vmatpush1.msra.mxu0 0.0
      %1188 = vmatprep.subr.mxu0 0.0
      %1189 = vmatpush1.msra.mxu0 0.0
      %1190 = vmatprep.subr.mxu0 0.0
      %1191 = vmatpush1.msra.mxu0 0.0
      %1192 = vmatprep.subr.mxu0 0.0
      %1193 = vmatpush1.msra.mxu0 0.0
      %1194 = vmatprep.subr.mxu0 0.0
      %1195 = vmatpush1.msra.mxu0 0.0
      %1196 = vmatprep.subr.mxu0 0.0
      %1197 = vmatpush1.msra.mxu0 0.0
      %1198 = vmatprep.subr.mxu0 0.0
      %1199 = vmatpush1.msra.mxu0 0.0
      %1200 = vmatprep.subr.mxu0 0.0
      %1201 = vmatpush1.msra.mxu0 0.0
      %1202 = vmatprep.subr.mxu0 0.0
      %1203 = vmatpush1.msra.mxu0 0.0
      %1204 = vmatprep.subr.mxu0 0.0
      %1205 = vmatpush1.msra.mxu0 0.0
      %1206 = vmatprep.subr.mxu0 0.0
      %1207 = vmatpush1.msra.mxu0 0.0
      %1208 = vmatprep.subr.mxu0 0.0
      %1209 = vmatpush1.msra.mxu0 0.0
      %1210 = vmatprep.subr.mxu0 0.0
      %1211 = vmatpush1.msra.mxu0 0.0
      %1212 = vmatprep.subr.mxu0 0.0
      %1213 = vmatpush1.msra.mxu0 0.0
      %1214 = vmatprep.mubr.f32.mxu0 0.0
      %1215 = vmatmul.mubr.f32.gmra.mrb[0].mxu0 %v302
      %v1216 = vpop.f32.mrb[0].mxu0
      %v1217 = vadd.f32 %v298, %v1216
      %v1218 = vpop.f32.mrb[0].mxu0
      %1219 = vdwg.mxu0
      %v1220 = vsel %vm378, %v1217, 0.0
      %1221 = vadd.xlane.f32.xlu0 %v1220
      %v1222 = vpop.xlane.xlu0 %1221
      %v1223 = vmul.f32 %v1222, %v382
      %v1224 = vxor.u32 %v1217, 2147483648
      %v1225 = vmul.f32 %v1224, 1.442695
      %v1226 = vpow.pop %v1225
      %v1227 = vadd.f32 %v1226, 1.0
      %v1228 = vrcp.pop %v1227
      %v1229 = vmul.f32 1.0, %v1228
      %v1230 = vmul.f32 %v1146, %v1229
      %v1231 = vxor.u32 %v1223, 2147483648
      %v1232 = vmul.f32 %v1231, 1.442695
      %v1233 = vpow.pop %v1232
      %v1234 = vadd.f32 %v1233, 1.0
      %v1235 = vrcp.pop %v1234
      %v1236 = vmul.f32 1.0, %v1235
      %v1237 = vmul.f32 %v1230, %v1236
      %v1238 = vsel %vm378, %v1237, 0.0
      %1239 = vadd.xlane.f32.xlu0 %v1238
      %v1240 = vpop.xlane.xlu0 %1239
      %v1241 = vmul.f32 %v1240, %v382
      %v1242 = vsub.f32 %v1237, %v1241
      %v1243 = vmul.f32 %v1242, %v1242
      %v1244 = vsel %vm378, %v1243, 0.0
      %1245 = vadd.xlane.f32.xlu0 %v1244
      %v1246 = vpop.xlane.xlu0 %1245
      %v1247 = vmul.f32 %v1246, %v382
      %v1248 = vadd.f32 %v1247, 1e-05
      %v1249 = vrsqrt.pop %v1248
      %v1250 = vmul.f32 %v1242, %v1249
      %v1251 = vmul.f32 %v1250, %v414
      %v1252 = vadd.f32 %v1251, %v420
      %1253 = vrot.lane.b32.xlu0 %v1146, 1
      %v1254 = vpop.permute.xlu0 %1253
      %1256 = vst.msk [vmem:[#allocation2] sm:$0xf] %vm426, %v1254
      %v1257 = vld [vmem:[#allocation2] sm:$0xf]
      %1259 = vrot.lane.b32.xlu0 %v1257, 127
      %v1260 = vpop.permute.xlu0 %1259
      %v1261 = vsel %vm304, %v1260, 0
      %1263 = vmatprep.subr.mxu0 0.0
      %1264 = vmatpush1.msra.mxu0 %v1261
      %1265 = vmatprep.subr.mxu0 0.0
      %1266 = vmatpush1.msra.mxu0 0.0
      %1267 = vmatprep.subr.mxu0 0.0
      %1268 = vmatpush1.msra.mxu0 0.0
      %1269 = vmatprep.subr.mxu0 0.0
      %1270 = vmatpush1.msra.mxu0 0.0
      %1271 = vmatprep.subr.mxu0 0.0
      %1272 = vmatpush1.msra.mxu0 0.0
      %1273 = vmatprep.subr.mxu0 0.0
      %1274 = vmatpush1.msra.mxu0 0.0
      %1275 = vmatprep.subr.mxu0 0.0
      %1276 = vmatpush1.msra.mxu0 0.0
      %1277 = vmatprep.subr.mxu0 0.0
      %1278 = vmatpush1.msra.mxu0 0.0
      %1279 = vmatprep.subr.mxu0 0.0
      %1280 = vmatpush1.msra.mxu0 0.0
      %1281 = vmatprep.subr.mxu0 0.0
      %1282 = vmatpush1.msra.mxu0 0.0
      %1283 = vmatprep.subr.mxu0 0.0
      %1284 = vmatpush1.msra.mxu0 0.0
      %1285 = vmatprep.subr.mxu0 0.0
      %1286 = vmatpush1.msra.mxu0 0.0
      %1287 = vmatprep.subr.mxu0 0.0
      %1288 = vmatpush1.msra.mxu0 0.0
      %1289 = vmatprep.subr.mxu0 0.0
      %1290 = vmatpush1.msra.mxu0 0.0
      %1291 = vmatprep.subr.mxu0 0.0
      %1292 = vmatpush1.msra.mxu0 0.0
      %1293 = vmatprep.subr.mxu0 0.0
      %1294 = vmatpush1.msra.mxu0 0.0
      %1295 = vmatprep.subr.mxu0 0.0
      %1296 = vmatpush1.msra.mxu0 0.0
      %1297 = vmatprep.subr.mxu0 0.0
      %1298 = vmatpush1.msra.mxu0 0.0
      %1299 = vmatprep.subr.mxu0 0.0
      %1300 = vmatpush1.msra.mxu0 0.0
      %1301 = vmatprep.subr.mxu0 0.0
      %1302 = vmatpush1.msra.mxu0 0.0
      %1303 = vmatprep.subr.mxu0 0.0
      %1304 = vmatpush1.msra.mxu0 0.0
      %1305 = vmatprep.subr.mxu0 0.0
      %1306 = vmatpush1.msra.mxu0 0.0
      %1307 = vmatprep.subr.mxu0 0.0
      %1308 = vmatpush1.msra.mxu0 0.0
      %1309 = vmatprep.subr.mxu0 0.0
      %1310 = vmatpush1.msra.mxu0 0.0
      %1311 = vmatprep.subr.mxu0 0.0
      %1312 = vmatpush1.msra.mxu0 0.0
      %1313 = vmatprep.subr.mxu0 0.0
      %1314 = vmatpush1.msra.mxu0 0.0
      %1315 = vmatprep.subr.mxu0 0.0
      %1316 = vmatpush1.msra.mxu0 0.0
      %1317 = vmatprep.subr.mxu0 0.0
      %1318 = vmatpush1.msra.mxu0 0.0
      %1319 = vmatprep.subr.mxu0 0.0
      %1320 = vmatpush1.msra.mxu0 0.0
      %1321 = vmatprep.subr.mxu0 0.0
      %1322 = vmatpush1.msra.mxu0 0.0
      %1323 = vmatprep.subr.mxu0 0.0
      %1324 = vmatpush1.msra.mxu0 0.0
      %1325 = vmatprep.subr.mxu0 0.0
      %1326 = vmatpush1.msra.mxu0 0.0
      %1327 = vmatprep.mubr.f32.mxu0 0.0
      %1328 = vmatmul.mubr.f32.gmra.mrb[0].mxu0 %v433
      %v1329 = vpop.f32.mrb[0].mxu0
      %v1330 = vadd.f32 0.0, %v1329
      %v1331 = vpop.f32.mrb[0].mxu0
      %1332 = vdwg.mxu0
      %v1333 = vsel %vm304, %v1257, 0
      %1335 = vmatprep.subr.mxu0 0.0
      %1336 = vmatpush1.msra.mxu0 %v1333
      %1337 = vmatprep.subr.mxu0 0.0
      %1338 = vmatpush1.msra.mxu0 0.0
      %1339 = vmatprep.subr.mxu0 0.0
      %1340 = vmatpush1.msra.mxu0 0.0
      %1341 = vmatprep.subr.mxu0 0.0
      %1342 = vmatpush1.msra.mxu0 0.0
      %1343 = vmatprep.subr.mxu0 0.0
      %1344 = vmatpush1.msra.mxu0 0.0
      %1345 = vmatprep.subr.mxu0 0.0
      %1346 = vmatpush1.msra.mxu0 0.0
      %1347 = vmatprep.subr.mxu0 0.0
      %1348 = vmatpush1.msra.mxu0 0.0
      %1349 = vmatprep.subr.mxu0 0.0
      %1350 = vmatpush1.msra.mxu0 0.0
      %1351 = vmatprep.subr.mxu0 0.0
      %1352 = vmatpush1.msra.mxu0 0.0
      %1353 = vmatprep.subr.mxu0 0.0
      %1354 = vmatpush1.msra.mxu0 0.0
      %1355 = vmatprep.subr.mxu0 0.0
      %1356 = vmatpush1.msra.mxu0 0.0
      %1357 = vmatprep.subr.mxu0 0.0
      %1358 = vmatpush1.msra.mxu0 0.0
      %1359 = vmatprep.subr.mxu0 0.0
      %1360 = vmatpush1.msra.mxu0 0.0
      %1361 = vmatprep.subr.mxu0 0.0
      %1362 = vmatpush1.msra.mxu0 0.0
      %1363 = vmatprep.subr.mxu0 0.0
      %1364 = vmatpush1.msra.mxu0 0.0
      %1365 = vmatprep.subr.mxu0 0.0
      %1366 = vmatpush1.msra.mxu0 0.0
      %1367 = vmatprep.subr.mxu0 0.0
      %1368 = vmatpush1.msra.mxu0 0.0
      %1369 = vmatprep.subr.mxu0 0.0
      %1370 = vmatpush1.msra.mxu0 0.0
      %1371 = vmatprep.subr.mxu0 0.0
      %1372 = vmatpush1.msra.mxu0 0.0
      %1373 = vmatprep.subr.mxu0 0.0
      %1374 = vmatpush1.msra.mxu0 0.0
      %1375 = vmatprep.subr.mxu0 0.0
      %1376 = vmatpush1.msra.mxu0 0.0
      %1377 = vmatprep.subr.mxu0 0.0
      %1378 = vmatpush1.msra.mxu0 0.0
      %1379 = vmatprep.subr.mxu0 0.0
      %1380 = vmatpush1.msra.mxu0 0.0
      %1381 = vmatprep.subr.mxu0 0.0
      %1382 = vmatpush1.msra.mxu0 0.0
      %1383 = vmatprep.subr.mxu0 0.0
      %1384 = vmatpush1.msra.mxu0 0.0
      %1385 = vmatprep.subr.mxu0 0.0
      %1386 = vmatpush1.msra.mxu0 0.0
      %1387 = vmatprep.subr.mxu0 0.0
      %1388 = vmatpush1.msra.mxu0 0.0
      %1389 = vmatprep.subr.mxu0 0.0
      %1390 = vmatpush1.msra.mxu0 0.0
      %1391 = vmatprep.subr.mxu0 0.0
      %1392 = vmatpush1.msra.mxu0 0.0
      %1393 = vmatprep.subr.mxu0 0.0
      %1394 = vmatpush1.msra.mxu0 0.0
      %1395 = vmatprep.subr.mxu0 0.0
      %1396 = vmatpush1.msra.mxu0 0.0
      %1397 = vmatprep.subr.mxu0 0.0
      %1398 = vmatpush1.msra.mxu0 0.0
      %1399 = vmatprep.mubr.f32.mxu0 0.0
      %1400 = vmatmul.mubr.f32.gmra.mrb[0].mxu0 %v508
      %v1401 = vpop.f32.mrb[0].mxu0
      %v1402 = vadd.f32 %v1330, %v1401
      %v1403 = vpop.f32.mrb[0].mxu0
      %1404 = vdwg.mxu0
      %1405 = vrot.lane.b32.xlu0 %v1257, 126
      %v1406 = vpop.permute.xlu0 %1405
      %v1407 = vsel %vm304, %v1406, 0
      %1409 = vmatprep.subr.mxu0 0.0
      %1410 = vmatpush1.msra.mxu0 %v1407
      %1411 = vmatprep.subr.mxu0 0.0
      %1412 = vmatpush1.msra.mxu0 0.0
      %1413 = vmatprep.subr.mxu0 0.0
      %1414 = vmatpush1.msra.mxu0 0.0
      %1415 = vmatprep.subr.mxu0 0.0
      %1416 = vmatpush1.msra.mxu0 0.0
      %1417 = vmatprep.subr.mxu0 0.0
      %1418 = vmatpush1.msra.mxu0 0.0
      %1419 = vmatprep.subr.mxu0 0.0
      %1420 = vmatpush1.msra.mxu0 0.0
      %1421 = vmatprep.subr.mxu0 0.0
      %1422 = vmatpush1.msra.mxu0 0.0
      %1423 = vmatprep.subr.mxu0 0.0
      %1424 = vmatpush1.msra.mxu0 0.0
      %1425 = vmatprep.subr.mxu0 0.0
      %1426 = vmatpush1.msra.mxu0 0.0
      %1427 = vmatprep.subr.mxu0 0.0
      %1428 = vmatpush1.msra.mxu0 0.0
      %1429 = vmatprep.subr.mxu0 0.0
      %1430 = vmatpush1.msra.mxu0 0.0
      %1431 = vmatprep.subr.mxu0 0.0
      %1432 = vmatpush1.msra.mxu0 0.0
      %1433 = vmatprep.subr.mxu0 0.0
      %1434 = vmatpush1.msra.mxu0 0.0
      %1435 = vmatprep.subr.mxu0 0.0
      %1436 = vmatpush1.msra.mxu0 0.0
      %1437 = vmatprep.subr.mxu0 0.0
      %1438 = vmatpush1.msra.mxu0 0.0
      %1439 = vmatprep.subr.mxu0 0.0
      %1440 = vmatpush1.msra.mxu0 0.0
      %1441 = vmatprep.subr.mxu0 0.0
      %1442 = vmatpush1.msra.mxu0 0.0
      %1443 = vmatprep.subr.mxu0 0.0
      %1444 = vmatpush1.msra.mxu0 0.0
      %1445 = vmatprep.subr.mxu0 0.0
      %1446 = vmatpush1.msra.mxu0 0.0
      %1447 = vmatprep.subr.mxu0 0.0
      %1448 = vmatpush1.msra.mxu0 0.0
      %1449 = vmatprep.subr.mxu0 0.0
      %1450 = vmatpush1.msra.mxu0 0.0
      %1451 = vmatprep.subr.mxu0 0.0
      %1452 = vmatpush1.msra.mxu0 0.0
      %1453 = vmatprep.subr.mxu0 0.0
      %1454 = vmatpush1.msra.mxu0 0.0
      %1455 = vmatprep.subr.mxu0 0.0
      %1456 = vmatpush1.msra.mxu0 0.0
      %1457 = vmatprep.subr.mxu0 0.0
      %1458 = vmatpush1.msra.mxu0 0.0
      %1459 = vmatprep.subr.mxu0 0.0
      %1460 = vmatpush1.msra.mxu0 0.0
      %1461 = vmatprep.subr.mxu0 0.0
      %1462 = vmatpush1.msra.mxu0 0.0
      %1463 = vmatprep.subr.mxu0 0.0
      %1464 = vmatpush1.msra.mxu0 0.0
      %1465 = vmatprep.subr.mxu0 0.0
      %1466 = vmatpush1.msra.mxu0 0.0
      %1467 = vmatprep.subr.mxu0 0.0
      %1468 = vmatpush1.msra.mxu0 0.0
      %1469 = vmatprep.subr.mxu0 0.0
      %1470 = vmatpush1.msra.mxu0 0.0
      %1471 = vmatprep.subr.mxu0 0.0
      %1472 = vmatpush1.msra.mxu0 0.0
      %1473 = vmatprep.mubr.f32.mxu0 0.0
      %1474 = vmatmul.mubr.f32.gmra.mrb[0].mxu0 %v585
      %v1475 = vpop.f32.mrb[0].mxu0
      %v1476 = vadd.f32 0.0, %v1475
      %v1477 = vpop.f32.mrb[0].mxu0
      %1478 = vdwg.mxu0
      %v1479 = vadd.f32 %v1402, %v1476
      %v1480 = vadd.f32 %v1479, %v663
      %v1481 = vsel %vm378, %v1252, 0.0
      %1482 = vadd.xlane.f32.xlu0 %v1481
      %v1483 = vpop.xlane.xlu0 %1482
      %v1484 = vmul.f32 %v1483, %v382
      %v1485 = vsel %vm304, %v1484, -inf
      %v1486 = vrot.slane %v1485, 4
      %v1487 = vmax.f32 %v1485, %v1486
      %v1488 = vrot.slane %v1487, 2
      %v1489 = vmax.f32 %v1487, %v1488
      %v1490 = vrot.slane %v1489, 1
      %v1491 = vmax.f32 %v1489, %v1490
      %v1492 = vsub.f32 %v1484, %v1491
      %v1493 = vmul.f32 %v1492, 1.442695
      %v1494 = vpow.pop %v1493
      %v1495 = vsel %vm304, %v1494, 0.0
      %v1496 = vrot.slane %v1495, 4
      %v1497 = vadd.f32 %v1495, %v1496
      %v1498 = vrot.slane %v1497, 2
      %v1499 = vadd.f32 %v1497, %v1498
      %v1500 = vrot.slane %v1499, 1
      %v1501 = vadd.f32 %v1499, %v1500
      %v1502 = vrcp.pop %v1501
      %v1503 = vmul.f32 %v1494, %v1502
      %v1504 = vsel %vm378, %v1480, 0.0
      %1505 = vadd.xlane.f32.xlu0 %v1504
      %v1506 = vpop.xlane.xlu0 %1505
      %v1507 = vmul.f32 %v1506, %v382
      %v1508 = vsel %vm304, %v1507, -inf
      %v1509 = vrot.slane %v1508, 4
      %v1510 = vmax.f32 %v1508, %v1509
      %v1511 = vrot.slane %v1510, 2
      %v1512 = vmax.f32 %v1510, %v1511
      %v1513 = vrot.slane %v1512, 1
      %v1514 = vmax.f32 %v1512, %v1513
      %v1515 = vsub.f32 %v1507, %v1514
      %v1516 = vmul.f32 %v1515, 1.442695
      %v1517 = vpow.pop %v1516
      %v1518 = vsel %vm304, %v1517, 0.0
      %v1519 = vrot.slane %v1518, 4
      %v1520 = vadd.f32 %v1518, %v1519
      %v1521 = vrot.slane %v1520, 2
      %v1522 = vadd.f32 %v1520, %v1521
      %v1523 = vrot.slane %v1522, 1
      %v1524 = vadd.f32 %v1522, %v1523
      %v1525 = vrcp.pop %v1524
      %v1526 = vmul.f32 %v1517, %v1525
      %v1527 = vmul.f32 %v1503, %v1480
      %v1528 = vsel %vm378, %v1527, 0.0
      %v1529 = vrot.slane %v1528, 4
      %v1530 = vadd.f32 %v1528, %v1529
      %v1531 = vrot.slane %v1530, 2
      %v1532 = vadd.f32 %v1530, %v1531
      %v1533 = vrot.slane %v1532, 1
      %v1534 = vadd.f32 %v1532, %v1533
      %v1535 = vmul.f32 %v1526, %v1252
      %v1536 = vsel %vm378, %v1535, 0.0
      %v1537 = vrot.slane %v1536, 4
      %v1538 = vadd.f32 %v1536, %v1537
      %v1539 = vrot.slane %v1538, 2
      %v1540 = vadd.f32 %v1538, %v1539
      %v1541 = vrot.slane %v1540, 1
      %v1542 = vadd.f32 %v1540, %v1541
      %v1543 = vadd.f32 %v1534, %v1542
      %v1544 = vxor.u32 %v1543, 2147483648
      %v1545 = vmul.f32 %v1544, 1.442695
      %v1546 = vpow.pop %v1545
      %v1547 = vadd.f32 %v1546, 1.0
      %v1548 = vrcp.pop %v1547
      %v1549 = vmul.f32 1.0, %v1548
      %v1550 = vmul.f32 %v1146, %v1549
      %s1551 = scalar_lea.vmem %s280, 8
      %1552 = vst.msk [vmem:[%s1551] sm:$0xf] %vm378, %v1550
      %s1553 = scalar_lea.vmem %s274, 12
      %v1554 = vld [vmem:[%s1553] sm:$0xf]
      %v1556 = vsel %vm304, %v1554, 0
      %1558 = vmatprep.subr.mxu0 0.0
      %1559 = vmatpush1.msra.mxu0 %v1556
      %1560 = vmatprep.subr.mxu0 0.0
      %1561 = vmatpush1.msra.mxu0 0.0
      %1562 = vmatprep.subr.mxu0 0.0
      %1563 = vmatpush1.msra.mxu0 0.0
      %1564 = vmatprep.subr.mxu0 0.0
      %1565 = vmatpush1.msra.mxu0 0.0
      %1566 = vmatprep.subr.mxu0 0.0
      %1567 = vmatpush1.msra.mxu0 0.0
      %1568 = vmatprep.subr.mxu0 0.0
      %1569 = vmatpush1.msra.mxu0 0.0
      %1570 = vmatprep.subr.mxu0 0.0
      %1571 = vmatpush1.msra.mxu0 0.0
      %1572 = vmatprep.subr.mxu0 0.0
      %1573 = vmatpush1.msra.mxu0 0.0
      %1574 = vmatprep.subr.mxu0 0.0
      %1575 = vmatpush1.msra.mxu0 0.0
      %1576 = vmatprep.subr.mxu0 0.0
      %1577 = vmatpush1.msra.mxu0 0.0
      %1578 = vmatprep.subr.mxu0 0.0
      %1579 = vmatpush1.msra.mxu0 0.0
      %1580 = vmatprep.subr.mxu0 0.0
      %1581 = vmatpush1.msra.mxu0 0.0
      %1582 = vmatprep.subr.mxu0 0.0
      %1583 = vmatpush1.msra.mxu0 0.0
      %1584 = vmatprep.subr.mxu0 0.0
      %1585 = vmatpush1.msra.mxu0 0.0
      %1586 = vmatprep.subr.mxu0 0.0
      %1587 = vmatpush1.msra.mxu0 0.0
      %1588 = vmatprep.subr.mxu0 0.0
      %1589 = vmatpush1.msra.mxu0 0.0
      %1590 = vmatprep.subr.mxu0 0.0
      %1591 = vmatpush1.msra.mxu0 0.0
      %1592 = vmatprep.subr.mxu0 0.0
      %1593 = vmatpush1.msra.mxu0 0.0
      %1594 = vmatprep.subr.mxu0 0.0
      %1595 = vmatpush1.msra.mxu0 0.0
      %1596 = vmatprep.subr.mxu0 0.0
      %1597 = vmatpush1.msra.mxu0 0.0
      %1598 = vmatprep.subr.mxu0 0.0
      %1599 = vmatpush1.msra.mxu0 0.0
      %1600 = vmatprep.subr.mxu0 0.0
      %1601 = vmatpush1.msra.mxu0 0.0
      %1602 = vmatprep.subr.mxu0 0.0
      %1603 = vmatpush1.msra.mxu0 0.0
      %1604 = vmatprep.subr.mxu0 0.0
      %1605 = vmatpush1.msra.mxu0 0.0
      %1606 = vmatprep.subr.mxu0 0.0
      %1607 = vmatpush1.msra.mxu0 0.0
      %1608 = vmatprep.subr.mxu0 0.0
      %1609 = vmatpush1.msra.mxu0 0.0
      %1610 = vmatprep.subr.mxu0 0.0
      %1611 = vmatpush1.msra.mxu0 0.0
      %1612 = vmatprep.subr.mxu0 0.0
      %1613 = vmatpush1.msra.mxu0 0.0
      %1614 = vmatprep.subr.mxu0 0.0
      %1615 = vmatpush1.msra.mxu0 0.0
      %1616 = vmatprep.subr.mxu0 0.0
      %1617 = vmatpush1.msra.mxu0 0.0
      %1618 = vmatprep.subr.mxu0 0.0
      %1619 = vmatpush1.msra.mxu0 0.0
      %1620 = vmatprep.subr.mxu0 0.0
      %1621 = vmatpush1.msra.mxu0 0.0
      %1622 = vmatprep.mubr.f32.mxu0 0.0
      %1623 = vmatmul.mubr.f32.gmra.mrb[0].mxu0 %v302
      %v1624 = vpop.f32.mrb[0].mxu0
      %v1625 = vadd.f32 %v298, %v1624
      %v1626 = vpop.f32.mrb[0].mxu0
      %1627 = vdwg.mxu0
      %v1628 = vsel %vm378, %v1625, 0.0
      %1629 = vadd.xlane.f32.xlu0 %v1628
      %v1630 = vpop.xlane.xlu0 %1629
      %v1631 = vmul.f32 %v1630, %v382
      %v1632 = vxor.u32 %v1625, 2147483648
      %v1633 = vmul.f32 %v1632, 1.442695
      %v1634 = vpow.pop %v1633
      %v1635 = vadd.f32 %v1634, 1.0
      %v1636 = vrcp.pop %v1635
      %v1637 = vmul.f32 1.0, %v1636
      %v1638 = vmul.f32 %v1554, %v1637
      %v1639 = vxor.u32 %v1631, 2147483648
      %v1640 = vmul.f32 %v1639, 1.442695
      %v1641 = vpow.pop %v1640
      %v1642 = vadd.f32 %v1641, 1.0
      %v1643 = vrcp.pop %v1642
      %v1644 = vmul.f32 1.0, %v1643
      %v1645 = vmul.f32 %v1638, %v1644
      %v1646 = vsel %vm378, %v1645, 0.0
      %1647 = vadd.xlane.f32.xlu0 %v1646
      %v1648 = vpop.xlane.xlu0 %1647
      %v1649 = vmul.f32 %v1648, %v382
      %v1650 = vsub.f32 %v1645, %v1649
      %v1651 = vmul.f32 %v1650, %v1650
      %v1652 = vsel %vm378, %v1651, 0.0
      %1653 = vadd.xlane.f32.xlu0 %v1652
      %v1654 = vpop.xlane.xlu0 %1653
      %v1655 = vmul.f32 %v1654, %v382
      %v1656 = vadd.f32 %v1655, 1e-05
      %v1657 = vrsqrt.pop %v1656
      %v1658 = vmul.f32 %v1650, %v1657
      %v1659 = vmul.f32 %v1658, %v414
      %v1660 = vadd.f32 %v1659, %v420
      %1661 = vrot.lane.b32.xlu0 %v1554, 1
      %v1662 = vpop.permute.xlu0 %1661
      %1664 = vst.msk [vmem:[#allocation2] sm:$0xf] %vm426, %v1662
      %v1665 = vld [vmem:[#allocation2] sm:$0xf]
      %1667 = vrot.lane.b32.xlu0 %v1665, 127
      %v1668 = vpop.permute.xlu0 %1667
      %v1669 = vsel %vm304, %v1668, 0
      %1671 = vmatprep.subr.mxu0 0.0
      %1672 = vmatpush1.msra.mxu0 %v1669
      %1673 = vmatprep.subr.mxu0 0.0
      %1674 = vmatpush1.msra.mxu0 0.0
      %1675 = vmatprep.subr.mxu0 0.0
      %1676 = vmatpush1.msra.mxu0 0.0
      %1677 = vmatprep.subr.mxu0 0.0
      %1678 = vmatpush1.msra.mxu0 0.0
      %1679 = vmatprep.subr.mxu0 0.0
      %1680 = vmatpush1.msra.mxu0 0.0
      %1681 = vmatprep.subr.mxu0 0.0
      %1682 = vmatpush1.msra.mxu0 0.0
      %1683 = vmatprep.subr.mxu0 0.0
      %1684 = vmatpush1.msra.mxu0 0.0
      %1685 = vmatprep.subr.mxu0 0.0
      %1686 = vmatpush1.msra.mxu0 0.0
      %1687 = vmatprep.subr.mxu0 0.0
      %1688 = vmatpush1.msra.mxu0 0.0
      %1689 = vmatprep.subr.mxu0 0.0
      %1690 = vmatpush1.msra.mxu0 0.0
      %1691 = vmatprep.subr.mxu0 0.0
      %1692 = vmatpush1.msra.mxu0 0.0
      %1693 = vmatprep.subr.mxu0 0.0
      %1694 = vmatpush1.msra.mxu0 0.0
      %1695 = vmatprep.subr.mxu0 0.0
      %1696 = vmatpush1.msra.mxu0 0.0
      %1697 = vmatprep.subr.mxu0 0.0
      %1698 = vmatpush1.msra.mxu0 0.0
      %1699 = vmatprep.subr.mxu0 0.0
      %1700 = vmatpush1.msra.mxu0 0.0
      %1701 = vmatprep.subr.mxu0 0.0
      %1702 = vmatpush1.msra.mxu0 0.0
      %1703 = vmatprep.subr.mxu0 0.0
      %1704 = vmatpush1.msra.mxu0 0.0
      %1705 = vmatprep.subr.mxu0 0.0
      %1706 = vmatpush1.msra.mxu0 0.0
      %1707 = vmatprep.subr.mxu0 0.0
      %1708 = vmatpush1.msra.mxu0 0.0
      %1709 = vmatprep.subr.mxu0 0.0
      %1710 = vmatpush1.msra.mxu0 0.0
      %1711 = vmatprep.subr.mxu0 0.0
      %1712 = vmatpush1.msra.mxu0 0.0
      %1713 = vmatprep.subr.mxu0 0.0
      %1714 = vmatpush1.msra.mxu0 0.0
      %1715 = vmatprep.subr.mxu0 0.0
      %1716 = vmatpush1.msra.mxu0 0.0
      %1717 = vmatprep.subr.mxu0 0.0
      %1718 = vmatpush1.msra.mxu0 0.0
      %1719 = vmatprep.subr.mxu0 0.0
      %1720 = vmatpush1.msra.mxu0 0.0
      %1721 = vmatprep.subr.mxu0 0.0
      %1722 = vmatpush1.msra.mxu0 0.0
      %1723 = vmatprep.subr.mxu0 0.0
      %1724 = vmatpush1.msra.mxu0 0.0
      %1725 = vmatprep.subr.mxu0 0.0
      %1726 = vmatpush1.msra.mxu0 0.0
      %1727 = vmatprep.subr.mxu0 0.0
      %1728 = vmatpush1.msra.mxu0 0.0
      %1729 = vmatprep.subr.mxu0 0.0
      %1730 = vmatpush1.msra.mxu0 0.0
      %1731 = vmatprep.subr.mxu0 0.0
      %1732 = vmatpush1.msra.mxu0 0.0
      %1733 = vmatprep.subr.mxu0 0.0
      %1734 = vmatpush1.msra.mxu0 0.0
      %1735 = vmatprep.mubr.f32.mxu0 0.0
      %1736 = vmatmul.mubr.f32.gmra.mrb[0].mxu0 %v433
      %v1737 = vpop.f32.mrb[0].mxu0
      %v1738 = vadd.f32 0.0, %v1737
      %v1739 = vpop.f32.mrb[0].mxu0
      %1740 = vdwg.mxu0
      %v1741 = vsel %vm304, %v1665, 0
      %1743 = vmatprep.subr.mxu0 0.0
      %1744 = vmatpush1.msra.mxu0 %v1741
      %1745 = vmatprep.subr.mxu0 0.0
      %1746 = vmatpush1.msra.mxu0 0.0
      %1747 = vmatprep.subr.mxu0 0.0
      %1748 = vmatpush1.msra.mxu0 0.0
      %1749 = vmatprep.subr.mxu0 0.0
      %1750 = vmatpush1.msra.mxu0 0.0
      %1751 = vmatprep.subr.mxu0 0.0
      %1752 = vmatpush1.msra.mxu0 0.0
      %1753 = vmatprep.subr.mxu0 0.0
      %1754 = vmatpush1.msra.mxu0 0.0
      %1755 = vmatprep.subr.mxu0 0.0
      %1756 = vmatpush1.msra.mxu0 0.0
      %1757 = vmatprep.subr.mxu0 0.0
      %1758 = vmatpush1.msra.mxu0 0.0
      %1759 = vmatprep.subr.mxu0 0.0
      %1760 = vmatpush1.msra.mxu0 0.0
      %1761 = vmatprep.subr.mxu0 0.0
      %1762 = vmatpush1.msra.mxu0 0.0
      %1763 = vmatprep.subr.mxu0 0.0
      %1764 = vmatpush1.msra.mxu0 0.0
      %1765 = vmatprep.subr.mxu0 0.0
      %1766 = vmatpush1.msra.mxu0 0.0
      %1767 = vmatprep.subr.mxu0 0.0
      %1768 = vmatpush1.msra.mxu0 0.0
      %1769 = vmatprep.subr.mxu0 0.0
      %1770 = vmatpush1.msra.mxu0 0.0
      %1771 = vmatprep.subr.mxu0 0.0
      %1772 = vmatpush1.msra.mxu0 0.0
      %1773 = vmatprep.subr.mxu0 0.0
      %1774 = vmatpush1.msra.mxu0 0.0
      %1775 = vmatprep.subr.mxu0 0.0
      %1776 = vmatpush1.msra.mxu0 0.0
      %1777 = vmatprep.subr.mxu0 0.0
      %1778 = vmatpush1.msra.mxu0 0.0
      %1779 = vmatprep.subr.mxu0 0.0
      %1780 = vmatpush1.msra.mxu0 0.0
      %1781 = vmatprep.subr.mxu0 0.0
      %1782 = vmatpush1.msra.mxu0 0.0
      %1783 = vmatprep.subr.mxu0 0.0
      %1784 = vmatpush1.msra.mxu0 0.0
      %1785 = vmatprep.subr.mxu0 0.0
      %1786 = vmatpush1.msra.mxu0 0.0
      %1787 = vmatprep.subr.mxu0 0.0
      %1788 = vmatpush1.msra.mxu0 0.0
      %1789 = vmatprep.subr.mxu0 0.0
      %1790 = vmatpush1.msra.mxu0 0.0
      %1791 = vmatprep.subr.mxu0 0.0
      %1792 = vmatpush1.msra.mxu0 0.0
      %1793 = vmatprep.subr.mxu0 0.0
      %1794 = vmatpush1.msra.mxu0 0.0
      %1795 = vmatprep.subr.mxu0 0.0
      %1796 = vmatpush1.msra.mxu0 0.0
      %1797 = vmatprep.subr.mxu0 0.0
      %1798 = vmatpush1.msra.mxu0 0.0
      %1799 = vmatprep.subr.mxu0 0.0
      %1800 = vmatpush1.msra.mxu0 0.0
      %1801 = vmatprep.subr.mxu0 0.0
      %1802 = vmatpush1.msra.mxu0 0.0
      %1803 = vmatprep.subr.mxu0 0.0
      %1804 = vmatpush1.msra.mxu0 0.0
      %1805 = vmatprep.subr.mxu0 0.0
      %1806 = vmatpush1.msra.mxu0 0.0
      %1807 = vmatprep.mubr.f32.mxu0 0.0
      %1808 = vmatmul.mubr.f32.gmra.mrb[0].mxu0 %v508
      %v1809 = vpop.f32.mrb[0].mxu0
      %v1810 = vadd.f32 %v1738, %v1809
      %v1811 = vpop.f32.mrb[0].mxu0
      %1812 = vdwg.mxu0
      %1813 = vrot.lane.b32.xlu0 %v1665, 126
      %v1814 = vpop.permute.xlu0 %1813
      %v1815 = vsel %vm304, %v1814, 0
      %1817 = vmatprep.subr.mxu0 0.0
      %1818 = vmatpush1.msra.mxu0 %v1815
      %1819 = vmatprep.subr.mxu0 0.0
      %1820 = vmatpush1.msra.mxu0 0.0
      %1821 = vmatprep.subr.mxu0 0.0
      %1822 = vmatpush1.msra.mxu0 0.0
      %1823 = vmatprep.subr.mxu0 0.0
      %1824 = vmatpush1.msra.mxu0 0.0
      %1825 = vmatprep.subr.mxu0 0.0
      %1826 = vmatpush1.msra.mxu0 0.0
      %1827 = vmatprep.subr.mxu0 0.0
      %1828 = vmatpush1.msra.mxu0 0.0
      %1829 = vmatprep.subr.mxu0 0.0
      %1830 = vmatpush1.msra.mxu0 0.0
      %1831 = vmatprep.subr.mxu0 0.0
      %1832 = vmatpush1.msra.mxu0 0.0
      %1833 = vmatprep.subr.mxu0 0.0
      %1834 = vmatpush1.msra.mxu0 0.0
      %1835 = vmatprep.subr.mxu0 0.0
      %1836 = vmatpush1.msra.mxu0 0.0
      %1837 = vmatprep.subr.mxu0 0.0
      %1838 = vmatpush1.msra.mxu0 0.0
      %1839 = vmatprep.subr.mxu0 0.0
      %1840 = vmatpush1.msra.mxu0 0.0
      %1841 = vmatprep.subr.mxu0 0.0
      %1842 = vmatpush1.msra.mxu0 0.0
      %1843 = vmatprep.subr.mxu0 0.0
      %1844 = vmatpush1.msra.mxu0 0.0
      %1845 = vmatprep.subr.mxu0 0.0
      %1846 = vmatpush1.msra.mxu0 0.0
      %1847 = vmatprep.subr.mxu0 0.0
      %1848 = vmatpush1.msra.mxu0 0.0
      %1849 = vmatprep.subr.mxu0 0.0
      %1850 = vmatpush1.msra.mxu0 0.0
      %1851 = vmatprep.subr.mxu0 0.0
      %1852 = vmatpush1.msra.mxu0 0.0
      %1853 = vmatprep.subr.mxu0 0.0
      %1854 = vmatpush1.msra.mxu0 0.0
      %1855 = vmatprep.subr.mxu0 0.0
      %1856 = vmatpush1.msra.mxu0 0.0
      %1857 = vmatprep.subr.mxu0 0.0
      %1858 = vmatpush1.msra.mxu0 0.0
      %1859 = vmatprep.subr.mxu0 0.0
      %1860 = vmatpush1.msra.mxu0 0.0
      %1861 = vmatprep.subr.mxu0 0.0
      %1862 = vmatpush1.msra.mxu0 0.0
      %1863 = vmatprep.subr.mxu0 0.0
      %1864 = vmatpush1.msra.mxu0 0.0
      %1865 = vmatprep.subr.mxu0 0.0
      %1866 = vmatpush1.msra.mxu0 0.0
      %1867 = vmatprep.subr.mxu0 0.0
      %1868 = vmatpush1.msra.mxu0 0.0
      %1869 = vmatprep.subr.mxu0 0.0
      %1870 = vmatpush1.msra.mxu0 0.0
      %1871 = vmatprep.subr.mxu0 0.0
      %1872 = vmatpush1.msra.mxu0 0.0
      %1873 = vmatprep.subr.mxu0 0.0
      %1874 = vmatpush1.msra.mxu0 0.0
      %1875 = vmatprep.subr.mxu0 0.0
      %1876 = vmatpush1.msra.mxu0 0.0
      %1877 = vmatprep.subr.mxu0 0.0
      %1878 = vmatpush1.msra.mxu0 0.0
      %1879 = vmatprep.subr.mxu0 0.0
      %1880 = vmatpush1.msra.mxu0 0.0
      %1881 = vmatprep.mubr.f32.mxu0 0.0
      %1882 = vmatmul.mubr.f32.gmra.mrb[0].mxu0 %v585
      %v1883 = vpop.f32.mrb[0].mxu0
      %v1884 = vadd.f32 0.0, %v1883
      %v1885 = vpop.f32.mrb[0].mxu0
      %1886 = vdwg.mxu0
      %v1887 = vadd.f32 %v1810, %v1884
      %v1888 = vadd.f32 %v1887, %v663
      %v1889 = vsel %vm378, %v1660, 0.0
      %1890 = vadd.xlane.f32.xlu0 %v1889
      %v1891 = vpop.xlane.xlu0 %1890
      %v1892 = vmul.f32 %v1891, %v382
      %v1893 = vsel %vm304, %v1892, -inf
      %v1894 = vrot.slane %v1893, 4
      %v1895 = vmax.f32 %v1893, %v1894
      %v1896 = vrot.slane %v1895, 2
      %v1897 = vmax.f32 %v1895, %v1896
      %v1898 = vrot.slane %v1897, 1
      %v1899 = vmax.f32 %v1897, %v1898
      %v1900 = vsub.f32 %v1892, %v1899
      %v1901 = vmul.f32 %v1900, 1.442695
      %v1902 = vpow.pop %v1901
      %v1903 = vsel %vm304, %v1902, 0.0
      %v1904 = vrot.slane %v1903, 4
      %v1905 = vadd.f32 %v1903, %v1904
      %v1906 = vrot.slane %v1905, 2
      %v1907 = vadd.f32 %v1905, %v1906
      %v1908 = vrot.slane %v1907, 1
      %v1909 = vadd.f32 %v1907, %v1908
      %v1910 = vrcp.pop %v1909
      %v1911 = vmul.f32 %v1902, %v1910
      %v1912 = vsel %vm378, %v1888, 0.0
      %1913 = vadd.xlane.f32.xlu0 %v1912
      %v1914 = vpop.xlane.xlu0 %1913
      %v1915 = vmul.f32 %v1914, %v382
      %v1916 = vsel %vm304, %v1915, -inf
      %v1917 = vrot.slane %v1916, 4
      %v1918 = vmax.f32 %v1916, %v1917
      %v1919 = vrot.slane %v1918, 2
      %v1920 = vmax.f32 %v1918, %v1919
      %v1921 = vrot.slane %v1920, 1
      %v1922 = vmax.f32 %v1920, %v1921
      %v1923 = vsub.f32 %v1915, %v1922
      %v1924 = vmul.f32 %v1923, 1.442695
      %v1925 = vpow.pop %v1924
      %v1926 = vsel %vm304, %v1925, 0.0
      %v1927 = vrot.slane %v1926, 4
      %v1928 = vadd.f32 %v1926, %v1927
      %v1929 = vrot.slane %v1928, 2
      %v1930 = vadd.f32 %v1928, %v1929
      %v1931 = vrot.slane %v1930, 1
      %v1932 = vadd.f32 %v1930, %v1931
      %v1933 = vrcp.pop %v1932
      %v1934 = vmul.f32 %v1925, %v1933
      %v1935 = vmul.f32 %v1911, %v1888
      %v1936 = vsel %vm378, %v1935, 0.0
      %v1937 = vrot.slane %v1936, 4
      %v1938 = vadd.f32 %v1936, %v1937
      %v1939 = vrot.slane %v1938, 2
      %v1940 = vadd.f32 %v1938, %v1939
      %v1941 = vrot.slane %v1940, 1
      %v1942 = vadd.f32 %v1940, %v1941
      %v1943 = vmul.f32 %v1934, %v1660
      %v1944 = vsel %vm378, %v1943, 0.0
      %v1945 = vrot.slane %v1944, 4
      %v1946 = vadd.f32 %v1944, %v1945
      %v1947 = vrot.slane %v1946, 2
      %v1948 = vadd.f32 %v1946, %v1947
      %v1949 = vrot.slane %v1948, 1
      %v1950 = vadd.f32 %v1948, %v1949
      %v1951 = vadd.f32 %v1942, %v1950
      %v1952 = vxor.u32 %v1951, 2147483648
      %v1953 = vmul.f32 %v1952, 1.442695
      %v1954 = vpow.pop %v1953
      %v1955 = vadd.f32 %v1954, 1.0
      %v1956 = vrcp.pop %v1955
      %v1957 = vmul.f32 1.0, %v1956
      %v1958 = vmul.f32 %v1554, %v1957
      %s1959 = scalar_lea.vmem %s280, 12
      %1960 = vst.msk [vmem:[%s1959] sm:$0xf] %vm378, %v1958
      %s1961 = scalar_lea.vmem %s274, 16
      %v1962 = vld [vmem:[%s1961] sm:$0xf]
      %v1964 = vsel %vm304, %v1962, 0
      %1966 = vmatprep.subr.mxu0 0.0
      %1967 = vmatpush1.msra.mxu0 %v1964
      %1968 = vmatprep.subr.mxu0 0.0
      %1969 = vmatpush1.msra.mxu0 0.0
      %1970 = vmatprep.subr.mxu0 0.0
      %1971 = vmatpush1.msra.mxu0 0.0
      %1972 = vmatprep.subr.mxu0 0.0
      %1973 = vmatpush1.msra.mxu0 0.0
      %1974 = vmatprep.subr.mxu0 0.0
      %1975 = vmatpush1.msra.mxu0 0.0
      %1976 = vmatprep.subr.mxu0 0.0
      %1977 = vmatpush1.msra.mxu0 0.0
      %1978 = vmatprep.subr.mxu0 0.0
      %1979 = vmatpush1.msra.mxu0 0.0
      %1980 = vmatprep.subr.mxu0 0.0
      %1981 = vmatpush1.msra.mxu0 0.0
      %1982 = vmatprep.subr.mxu0 0.0
      %1983 = vmatpush1.msra.mxu0 0.0
      %1984 = vmatprep.subr.mxu0 0.0
      %1985 = vmatpush1.msra.mxu0 0.0
      %1986 = vmatprep.subr.mxu0 0.0
      %1987 = vmatpush1.msra.mxu0 0.0
      %1988 = vmatprep.subr.mxu0 0.0
      %1989 = vmatpush1.msra.mxu0 0.0
      %1990 = vmatprep.subr.mxu0 0.0
      %1991 = vmatpush1.msra.mxu0 0.0
      %1992 = vmatprep.subr.mxu0 0.0
      %1993 = vmatpush1.msra.mxu0 0.0
      %1994 = vmatprep.subr.mxu0 0.0
      %1995 = vmatpush1.msra.mxu0 0.0
      %1996 = vmatprep.subr.mxu0 0.0
      %1997 = vmatpush1.msra.mxu0 0.0
      %1998 = vmatprep.subr.mxu0 0.0
      %1999 = vmatpush1.msra.mxu0 0.0
      %2000 = vmatprep.subr.mxu0 0.0
      %2001 = vmatpush1.msra.mxu0 0.0
      %2002 = vmatprep.subr.mxu0 0.0
      %2003 = vmatpush1.msra.mxu0 0.0
      %2004 = vmatprep.subr.mxu0 0.0
      %2005 = vmatpush1.msra.mxu0 0.0
      %2006 = vmatprep.subr.mxu0 0.0
      %2007 = vmatpush1.msra.mxu0 0.0
      %2008 = vmatprep.subr.mxu0 0.0
      %2009 = vmatpush1.msra.mxu0 0.0
      %2010 = vmatprep.subr.mxu0 0.0
      %2011 = vmatpush1.msra.mxu0 0.0
      %2012 = vmatprep.subr.mxu0 0.0
      %2013 = vmatpush1.msra.mxu0 0.0
      %2014 = vmatprep.subr.mxu0 0.0
      %2015 = vmatpush1.msra.mxu0 0.0
      %2016 = vmatprep.subr.mxu0 0.0
      %2017 = vmatpush1.msra.mxu0 0.0
      %2018 = vmatprep.subr.mxu0 0.0
      %2019 = vmatpush1.msra.mxu0 0.0
      %2020 = vmatprep.subr.mxu0 0.0
      %2021 = vmatpush1.msra.mxu0 0.0
      %2022 = vmatprep.subr.mxu0 0.0
      %2023 = vmatpush1.msra.mxu0 0.0
      %2024 = vmatprep.subr.mxu0 0.0
      %2025 = vmatpush1.msra.mxu0 0.0
      %2026 = vmatprep.subr.mxu0 0.0
      %2027 = vmatpush1.msra.mxu0 0.0
      %2028 = vmatprep.subr.mxu0 0.0
      %2029 = vmatpush1.msra.mxu0 0.0
      %2030 = vmatprep.mubr.f32.mxu0 0.0
      %2031 = vmatmul.mubr.f32.gmra.mrb[0].mxu0 %v302
      %v2032 = vpop.f32.mrb[0].mxu0
      %v2033 = vadd.f32 %v298, %v2032
      %v2034 = vpop.f32.mrb[0].mxu0
      %2035 = vdwg.mxu0
      %v2036 = vsel %vm378, %v2033, 0.0
      %2037 = vadd.xlane.f32.xlu0 %v2036
      %v2038 = vpop.xlane.xlu0 %2037
      %v2039 = vmul.f32 %v2038, %v382
      %v2040 = vxor.u32 %v2033, 2147483648
      %v2041 = vmul.f32 %v2040, 1.442695
      %v2042 = vpow.pop %v2041
      %v2043 = vadd.f32 %v2042, 1.0
      %v2044 = vrcp.pop %v2043
      %v2045 = vmul.f32 1.0, %v2044
      %v2046 = vmul.f32 %v1962, %v2045
      %v2047 = vxor.u32 %v2039, 2147483648
      %v2048 = vmul.f32 %v2047, 1.442695
      %v2049 = vpow.pop %v2048
      %v2050 = vadd.f32 %v2049, 1.0
      %v2051 = vrcp.pop %v2050
      %v2052 = vmul.f32 1.0, %v2051
      %v2053 = vmul.f32 %v2046, %v2052
      %v2054 = vsel %vm378, %v2053, 0.0
      %2055 = vadd.xlane.f32.xlu0 %v2054
      %v2056 = vpop.xlane.xlu0 %2055
      %v2057 = vmul.f32 %v2056, %v382
      %v2058 = vsub.f32 %v2053, %v2057
      %v2059 = vmul.f32 %v2058, %v2058
      %v2060 = vsel %vm378, %v2059, 0.0
      %2061 = vadd.xlane.f32.xlu0 %v2060
      %v2062 = vpop.xlane.xlu0 %2061
      %v2063 = vmul.f32 %v2062, %v382
      %v2064 = vadd.f32 %v2063, 1e-05
      %v2065 = vrsqrt.pop %v2064
      %v2066 = vmul.f32 %v2058, %v2065
      %v2067 = vmul.f32 %v2066, %v414
      %v2068 = vadd.f32 %v2067, %v420
      %2069 = vrot.lane.b32.xlu0 %v1962, 1
      %v2070 = vpop.permute.xlu0 %2069
      %2072 = vst.msk [vmem:[#allocation2] sm:$0xf] %vm426, %v2070
      %v2073 = vld [vmem:[#allocation2] sm:$0xf]
      %2075 = vrot.lane.b32.xlu0 %v2073, 127
      %v2076 = vpop.permute.xlu0 %2075
      %v2077 = vsel %vm304, %v2076, 0
      %2079 = vmatprep.subr.mxu0 0.0
      %2080 = vmatpush1.msra.mxu0 %v2077
      %2081 = vmatprep.subr.mxu0 0.0
      %2082 = vmatpush1.msra.mxu0 0.0
      %2083 = vmatprep.subr.mxu0 0.0
      %2084 = vmatpush1.msra.mxu0 0.0
      %2085 = vmatprep.subr.mxu0 0.0
      %2086 = vmatpush1.msra.mxu0 0.0
      %2087 = vmatprep.subr.mxu0 0.0
      %2088 = vmatpush1.msra.mxu0 0.0
      %2089 = vmatprep.subr.mxu0 0.0
      %2090 = vmatpush1.msra.mxu0 0.0
      %2091 = vmatprep.subr.mxu0 0.0
      %2092 = vmatpush1.msra.mxu0 0.0
      %2093 = vmatprep.subr.mxu0 0.0
      %2094 = vmatpush1.msra.mxu0 0.0
      %2095 = vmatprep.subr.mxu0 0.0
      %2096 = vmatpush1.msra.mxu0 0.0
      %2097 = vmatprep.subr.mxu0 0.0
      %2098 = vmatpush1.msra.mxu0 0.0
      %2099 = vmatprep.subr.mxu0 0.0
      %2100 = vmatpush1.msra.mxu0 0.0
      %2101 = vmatprep.subr.mxu0 0.0
      %2102 = vmatpush1.msra.mxu0 0.0
      %2103 = vmatprep.subr.mxu0 0.0
      %2104 = vmatpush1.msra.mxu0 0.0
      %2105 = vmatprep.subr.mxu0 0.0
      %2106 = vmatpush1.msra.mxu0 0.0
      %2107 = vmatprep.subr.mxu0 0.0
      %2108 = vmatpush1.msra.mxu0 0.0
      %2109 = vmatprep.subr.mxu0 0.0
      %2110 = vmatpush1.msra.mxu0 0.0
      %2111 = vmatprep.subr.mxu0 0.0
      %2112 = vmatpush1.msra.mxu0 0.0
      %2113 = vmatprep.subr.mxu0 0.0
      %2114 = vmatpush1.msra.mxu0 0.0
      %2115 = vmatprep.subr.mxu0 0.0
      %2116 = vmatpush1.msra.mxu0 0.0
      %2117 = vmatprep.subr.mxu0 0.0
      %2118 = vmatpush1.msra.mxu0 0.0
      %2119 = vmatprep.subr.mxu0 0.0
      %2120 = vmatpush1.msra.mxu0 0.0
      %2121 = vmatprep.subr.mxu0 0.0
      %2122 = vmatpush1.msra.mxu0 0.0
      %2123 = vmatprep.subr.mxu0 0.0
      %2124 = vmatpush1.msra.mxu0 0.0
      %2125 = vmatprep.subr.mxu0 0.0
      %2126 = vmatpush1.msra.mxu0 0.0
      %2127 = vmatprep.subr.mxu0 0.0
      %2128 = vmatpush1.msra.mxu0 0.0
      %2129 = vmatprep.subr.mxu0 0.0
      %2130 = vmatpush1.msra.mxu0 0.0
      %2131 = vmatprep.subr.mxu0 0.0
      %2132 = vmatpush1.msra.mxu0 0.0
      %2133 = vmatprep.subr.mxu0 0.0
      %2134 = vmatpush1.msra.mxu0 0.0
      %2135 = vmatprep.subr.mxu0 0.0
      %2136 = vmatpush1.msra.mxu0 0.0
      %2137 = vmatprep.subr.mxu0 0.0
      %2138 = vmatpush1.msra.mxu0 0.0
      %2139 = vmatprep.subr.mxu0 0.0
      %2140 = vmatpush1.msra.mxu0 0.0
      %2141 = vmatprep.subr.mxu0 0.0
      %2142 = vmatpush1.msra.mxu0 0.0
      %2143 = vmatprep.mubr.f32.mxu0 0.0
      %2144 = vmatmul.mubr.f32.gmra.mrb[0].mxu0 %v433
      %v2145 = vpop.f32.mrb[0].mxu0
      %v2146 = vadd.f32 0.0, %v2145
      %v2147 = vpop.f32.mrb[0].mxu0
      %2148 = vdwg.mxu0
      %v2149 = vsel %vm304, %v2073, 0
      %2151 = vmatprep.subr.mxu0 0.0
      %2152 = vmatpush1.msra.mxu0 %v2149
      %2153 = vmatprep.subr.mxu0 0.0
      %2154 = vmatpush1.msra.mxu0 0.0
      %2155 = vmatprep.subr.mxu0 0.0
      %2156 = vmatpush1.msra.mxu0 0.0
      %2157 = vmatprep.subr.mxu0 0.0
      %2158 = vmatpush1.msra.mxu0 0.0
      %2159 = vmatprep.subr.mxu0 0.0
      %2160 = vmatpush1.msra.mxu0 0.0
      %2161 = vmatprep.subr.mxu0 0.0
      %2162 = vmatpush1.msra.mxu0 0.0
      %2163 = vmatprep.subr.mxu0 0.0
      %2164 = vmatpush1.msra.mxu0 0.0
      %2165 = vmatprep.subr.mxu0 0.0
      %2166 = vmatpush1.msra.mxu0 0.0
      %2167 = vmatprep.subr.mxu0 0.0
      %2168 = vmatpush1.msra.mxu0 0.0
      %2169 = vmatprep.subr.mxu0 0.0
      %2170 = vmatpush1.msra.mxu0 0.0
      %2171 = vmatprep.subr.mxu0 0.0
      %2172 = vmatpush1.msra.mxu0 0.0
      %2173 = vmatprep.subr.mxu0 0.0
      %2174 = vmatpush1.msra.mxu0 0.0
      %2175 = vmatprep.subr.mxu0 0.0
      %2176 = vmatpush1.msra.mxu0 0.0
      %2177 = vmatprep.subr.mxu0 0.0
      %2178 = vmatpush1.msra.mxu0 0.0
      %2179 = vmatprep.subr.mxu0 0.0
      %2180 = vmatpush1.msra.mxu0 0.0
      %2181 = vmatprep.subr.mxu0 0.0
      %2182 = vmatpush1.msra.mxu0 0.0
      %2183 = vmatprep.subr.mxu0 0.0
      %2184 = vmatpush1.msra.mxu0 0.0
      %2185 = vmatprep.subr.mxu0 0.0
      %2186 = vmatpush1.msra.mxu0 0.0
      %2187 = vmatprep.subr.mxu0 0.0
      %2188 = vmatpush1.msra.mxu0 0.0
      %2189 = vmatprep.subr.mxu0 0.0
      %2190 = vmatpush1.msra.mxu0 0.0
      %2191 = vmatprep.subr.mxu0 0.0
      %2192 = vmatpush1.msra.mxu0 0.0
      %2193 = vmatprep.subr.mxu0 0.0
      %2194 = vmatpush1.msra.mxu0 0.0
      %2195 = vmatprep.subr.mxu0 0.0
      %2196 = vmatpush1.msra.mxu0 0.0
      %2197 = vmatprep.subr.mxu0 0.0
      %2198 = vmatpush1.msra.mxu0 0.0
      %2199 = vmatprep.subr.mxu0 0.0
      %2200 = vmatpush1.msra.mxu0 0.0
      %2201 = vmatprep.subr.mxu0 0.0
      %2202 = vmatpush1.msra.mxu0 0.0
      %2203 = vmatprep.subr.mxu0 0.0
      %2204 = vmatpush1.msra.mxu0 0.0
      %2205 = vmatprep.subr.mxu0 0.0
      %2206 = vmatpush1.msra.mxu0 0.0
      %2207 = vmatprep.subr.mxu0 0.0
      %2208 = vmatpush1.msra.mxu0 0.0
      %2209 = vmatprep.subr.mxu0 0.0
      %2210 = vmatpush1.msra.mxu0 0.0
      %2211 = vmatprep.subr.mxu0 0.0
      %2212 = vmatpush1.msra.mxu0 0.0
      %2213 = vmatprep.subr.mxu0 0.0
      %2214 = vmatpush1.msra.mxu0 0.0
      %2215 = vmatprep.mubr.f32.mxu0 0.0
      %2216 = vmatmul.mubr.f32.gmra.mrb[0].mxu0 %v508
      %v2217 = vpop.f32.mrb[0].mxu0
      %v2218 = vadd.f32 %v2146, %v2217
      %v2219 = vpop.f32.mrb[0].mxu0
      %2220 = vdwg.mxu0
      %2221 = vrot.lane.b32.xlu0 %v2073, 126
      %v2222 = vpop.permute.xlu0 %2221
      %v2223 = vsel %vm304, %v2222, 0
      %2225 = vmatprep.subr.mxu0 0.0
      %2226 = vmatpush1.msra.mxu0 %v2223
      %2227 = vmatprep.subr.mxu0 0.0
      %2228 = vmatpush1.msra.mxu0 0.0
      %2229 = vmatprep.subr.mxu0 0.0
      %2230 = vmatpush1.msra.mxu0 0.0
      %2231 = vmatprep.subr.mxu0 0.0
      %2232 = vmatpush1.msra.mxu0 0.0
      %2233 = vmatprep.subr.mxu0 0.0
      %2234 = vmatpush1.msra.mxu0 0.0
      %2235 = vmatprep.subr.mxu0 0.0
      %2236 = vmatpush1.msra.mxu0 0.0
      %2237 = vmatprep.subr.mxu0 0.0
      %2238 = vmatpush1.msra.mxu0 0.0
      %2239 = vmatprep.subr.mxu0 0.0
      %2240 = vmatpush1.msra.mxu0 0.0
      %2241 = vmatprep.subr.mxu0 0.0
      %2242 = vmatpush1.msra.mxu0 0.0
      %2243 = vmatprep.subr.mxu0 0.0
      %2244 = vmatpush1.msra.mxu0 0.0
      %2245 = vmatprep.subr.mxu0 0.0
      %2246 = vmatpush1.msra.mxu0 0.0
      %2247 = vmatprep.subr.mxu0 0.0
      %2248 = vmatpush1.msra.mxu0 0.0
      %2249 = vmatprep.subr.mxu0 0.0
      %2250 = vmatpush1.msra.mxu0 0.0
      %2251 = vmatprep.subr.mxu0 0.0
      %2252 = vmatpush1.msra.mxu0 0.0
      %2253 = vmatprep.subr.mxu0 0.0
      %2254 = vmatpush1.msra.mxu0 0.0
      %2255 = vmatprep.subr.mxu0 0.0
      %2256 = vmatpush1.msra.mxu0 0.0
      %2257 = vmatprep.subr.mxu0 0.0
      %2258 = vmatpush1.msra.mxu0 0.0
      %2259 = vmatprep.subr.mxu0 0.0
      %2260 = vmatpush1.msra.mxu0 0.0
      %2261 = vmatprep.subr.mxu0 0.0
      %2262 = vmatpush1.msra.mxu0 0.0
      %2263 = vmatprep.subr.mxu0 0.0
      %2264 = vmatpush1.msra.mxu0 0.0
      %2265 = vmatprep.subr.mxu0 0.0
      %2266 = vmatpush1.msra.mxu0 0.0
      %2267 = vmatprep.subr.mxu0 0.0
      %2268 = vmatpush1.msra.mxu0 0.0
      %2269 = vmatprep.subr.mxu0 0.0
      %2270 = vmatpush1.msra.mxu0 0.0
      %2271 = vmatprep.subr.mxu0 0.0
      %2272 = vmatpush1.msra.mxu0 0.0
      %2273 = vmatprep.subr.mxu0 0.0
      %2274 = vmatpush1.msra.mxu0 0.0
      %2275 = vmatprep.subr.mxu0 0.0
      %2276 = vmatpush1.msra.mxu0 0.0
      %2277 = vmatprep.subr.mxu0 0.0
      %2278 = vmatpush1.msra.mxu0 0.0
      %2279 = vmatprep.subr.mxu0 0.0
      %2280 = vmatpush1.msra.mxu0 0.0
      %2281 = vmatprep.subr.mxu0 0.0
      %2282 = vmatpush1.msra.mxu0 0.0
      %2283 = vmatprep.subr.mxu0 0.0
      %2284 = vmatpush1.msra.mxu0 0.0
      %2285 = vmatprep.subr.mxu0 0.0
      %2286 = vmatpush1.msra.mxu0 0.0
      %2287 = vmatprep.subr.mxu0 0.0
      %2288 = vmatpush1.msra.mxu0 0.0
      %2289 = vmatprep.mubr.f32.mxu0 0.0
      %2290 = vmatmul.mubr.f32.gmra.mrb[0].mxu0 %v585
      %v2291 = vpop.f32.mrb[0].mxu0
      %v2292 = vadd.f32 0.0, %v2291
      %v2293 = vpop.f32.mrb[0].mxu0
      %2294 = vdwg.mxu0
      %v2295 = vadd.f32 %v2218, %v2292
      %v2296 = vadd.f32 %v2295, %v663
      %v2297 = vsel %vm378, %v2068, 0.0
      %2298 = vadd.xlane.f32.xlu0 %v2297
      %v2299 = vpop.xlane.xlu0 %2298
      %v2300 = vmul.f32 %v2299, %v382
      %v2301 = vsel %vm304, %v2300, -inf
      %v2302 = vrot.slane %v2301, 4
      %v2303 = vmax.f32 %v2301, %v2302
      %v2304 = vrot.slane %v2303, 2
      %v2305 = vmax.f32 %v2303, %v2304
      %v2306 = vrot.slane %v2305, 1
      %v2307 = vmax.f32 %v2305, %v2306
      %v2308 = vsub.f32 %v2300, %v2307
      %v2309 = vmul.f32 %v2308, 1.442695
      %v2310 = vpow.pop %v2309
      %v2311 = vsel %vm304, %v2310, 0.0
      %v2312 = vrot.slane %v2311, 4
      %v2313 = vadd.f32 %v2311, %v2312
      %v2314 = vrot.slane %v2313, 2
      %v2315 = vadd.f32 %v2313, %v2314
      %v2316 = vrot.slane %v2315, 1
      %v2317 = vadd.f32 %v2315, %v2316
      %v2318 = vrcp.pop %v2317
      %v2319 = vmul.f32 %v2310, %v2318
      %v2320 = vsel %vm378, %v2296, 0.0
      %2321 = vadd.xlane.f32.xlu0 %v2320
      %v2322 = vpop.xlane.xlu0 %2321
      %v2323 = vmul.f32 %v2322, %v382
      %v2324 = vsel %vm304, %v2323, -inf
      %v2325 = vrot.slane %v2324, 4
      %v2326 = vmax.f32 %v2324, %v2325
      %v2327 = vrot.slane %v2326, 2
      %v2328 = vmax.f32 %v2326, %v2327
      %v2329 = vrot.slane %v2328, 1
      %v2330 = vmax.f32 %v2328, %v2329
      %v2331 = vsub.f32 %v2323, %v2330
      %v2332 = vmul.f32 %v2331, 1.442695
      %v2333 = vpow.pop %v2332
      %v2334 = vsel %vm304, %v2333, 0.0
      %v2335 = vrot.slane %v2334, 4
      %v2336 = vadd.f32 %v2334, %v2335
      %v2337 = vrot.slane %v2336, 2
      %v2338 = vadd.f32 %v2336, %v2337
      %v2339 = vrot.slane %v2338, 1
      %v2340 = vadd.f32 %v2338, %v2339
      %v2341 = vrcp.pop %v2340
      %v2342 = vmul.f32 %v2333, %v2341
      %v2343 = vmul.f32 %v2319, %v2296
      %v2344 = vsel %vm378, %v2343, 0.0
      %v2345 = vrot.slane %v2344, 4
      %v2346 = vadd.f32 %v2344, %v2345
      %v2347 = vrot.slane %v2346, 2
      %v2348 = vadd.f32 %v2346, %v2347
      %v2349 = vrot.slane %v2348, 1
      %v2350 = vadd.f32 %v2348, %v2349
      %v2351 = vmul.f32 %v2342, %v2068
      %v2352 = vsel %vm378, %v2351, 0.0
      %v2353 = vrot.slane %v2352, 4
      %v2354 = vadd.f32 %v2352, %v2353
      %v2355 = vrot.slane %v2354, 2
      %v2356 = vadd.f32 %v2354, %v2355
      %v2357 = vrot.slane %v2356, 1
      %v2358 = vadd.f32 %v2356, %v2357
      %v2359 = vadd.f32 %v2350, %v2358
      %v2360 = vxor.u32 %v2359, 2147483648
      %v2361 = vmul.f32 %v2360, 1.442695
      %v2362 = vpow.pop %v2361
      %v2363 = vadd.f32 %v2362, 1.0
      %v2364 = vrcp.pop %v2363
      %v2365 = vmul.f32 1.0, %v2364
      %v2366 = vmul.f32 %v1962, %v2365
      %s2367 = scalar_lea.vmem %s280, 16
      %2368 = vst.msk [vmem:[%s2367] sm:$0xf] %vm378, %v2366
      %s2369 = scalar_lea.vmem %s274, 20
      %v2370 = vld [vmem:[%s2369] sm:$0xf]
      %v2372 = vsel %vm304, %v2370, 0
      %2374 = vmatprep.subr.mxu0 0.0
      %2375 = vmatpush1.msra.mxu0 %v2372
      %2376 = vmatprep.subr.mxu0 0.0
      %2377 = vmatpush1.msra.mxu0 0.0
      %2378 = vmatprep.subr.mxu0 0.0
      %2379 = vmatpush1.msra.mxu0 0.0
      %2380 = vmatprep.subr.mxu0 0.0
      %2381 = vmatpush1.msra.mxu0 0.0
      %2382 = vmatprep.subr.mxu0 0.0
      %2383 = vmatpush1.msra.mxu0 0.0
      %2384 = vmatprep.subr.mxu0 0.0
      %2385 = vmatpush1.msra.mxu0 0.0
      %2386 = vmatprep.subr.mxu0 0.0
      %2387 = vmatpush1.msra.mxu0 0.0
      %2388 = vmatprep.subr.mxu0 0.0
      %2389 = vmatpush1.msra.mxu0 0.0
      %2390 = vmatprep.subr.mxu0 0.0
      %2391 = vmatpush1.msra.mxu0 0.0
      %2392 = vmatprep.subr.mxu0 0.0
      %2393 = vmatpush1.msra.mxu0 0.0
      %2394 = vmatprep.subr.mxu0 0.0
      %2395 = vmatpush1.msra.mxu0 0.0
      %2396 = vmatprep.subr.mxu0 0.0
      %2397 = vmatpush1.msra.mxu0 0.0
      %2398 = vmatprep.subr.mxu0 0.0
      %2399 = vmatpush1.msra.mxu0 0.0
      %2400 = vmatprep.subr.mxu0 0.0
      %2401 = vmatpush1.msra.mxu0 0.0
      %2402 = vmatprep.subr.mxu0 0.0
      %2403 = vmatpush1.msra.mxu0 0.0
      %2404 = vmatprep.subr.mxu0 0.0
      %2405 = vmatpush1.msra.mxu0 0.0
      %2406 = vmatprep.subr.mxu0 0.0
      %2407 = vmatpush1.msra.mxu0 0.0
      %2408 = vmatprep.subr.mxu0 0.0
      %2409 = vmatpush1.msra.mxu0 0.0
      %2410 = vmatprep.subr.mxu0 0.0
      %2411 = vmatpush1.msra.mxu0 0.0
      %2412 = vmatprep.subr.mxu0 0.0
      %2413 = vmatpush1.msra.mxu0 0.0
      %2414 = vmatprep.subr.mxu0 0.0
      %2415 = vmatpush1.msra.mxu0 0.0
      %2416 = vmatprep.subr.mxu0 0.0
      %2417 = vmatpush1.msra.mxu0 0.0
      %2418 = vmatprep.subr.mxu0 0.0
      %2419 = vmatpush1.msra.mxu0 0.0
      %2420 = vmatprep.subr.mxu0 0.0
      %2421 = vmatpush1.msra.mxu0 0.0
      %2422 = vmatprep.subr.mxu0 0.0
      %2423 = vmatpush1.msra.mxu0 0.0
      %2424 = vmatprep.subr.mxu0 0.0
      %2425 = vmatpush1.msra.mxu0 0.0
      %2426 = vmatprep.subr.mxu0 0.0
      %2427 = vmatpush1.msra.mxu0 0.0
      %2428 = vmatprep.subr.mxu0 0.0
      %2429 = vmatpush1.msra.mxu0 0.0
      %2430 = vmatprep.subr.mxu0 0.0
      %2431 = vmatpush1.msra.mxu0 0.0
      %2432 = vmatprep.subr.mxu0 0.0
      %2433 = vmatpush1.msra.mxu0 0.0
      %2434 = vmatprep.subr.mxu0 0.0
      %2435 = vmatpush1.msra.mxu0 0.0
      %2436 = vmatprep.subr.mxu0 0.0
      %2437 = vmatpush1.msra.mxu0 0.0
      %2438 = vmatprep.mubr.f32.mxu0 0.0
      %2439 = vmatmul.mubr.f32.gmra.mrb[0].mxu0 %v302
      %v2440 = vpop.f32.mrb[0].mxu0
      %v2441 = vadd.f32 %v298, %v2440
      %v2442 = vpop.f32.mrb[0].mxu0
      %2443 = vdwg.mxu0
      %v2444 = vsel %vm378, %v2441, 0.0
      %2445 = vadd.xlane.f32.xlu0 %v2444
      %v2446 = vpop.xlane.xlu0 %2445
      %v2447 = vmul.f32 %v2446, %v382
      %v2448 = vxor.u32 %v2441, 2147483648
      %v2449 = vmul.f32 %v2448, 1.442695
      %v2450 = vpow.pop %v2449
      %v2451 = vadd.f32 %v2450, 1.0
      %v2452 = vrcp.pop %v2451
      %v2453 = vmul.f32 1.0, %v2452
      %v2454 = vmul.f32 %v2370, %v2453
      %v2455 = vxor.u32 %v2447, 2147483648
      %v2456 = vmul.f32 %v2455, 1.442695
      %v2457 = vpow.pop %v2456
      %v2458 = vadd.f32 %v2457, 1.0
      %v2459 = vrcp.pop %v2458
      %v2460 = vmul.f32 1.0, %v2459
      %v2461 = vmul.f32 %v2454, %v2460
      %v2462 = vsel %vm378, %v2461, 0.0
      %2463 = vadd.xlane.f32.xlu0 %v2462
      %v2464 = vpop.xlane.xlu0 %2463
      %v2465 = vmul.f32 %v2464, %v382
      %v2466 = vsub.f32 %v2461, %v2465
      %v2467 = vmul.f32 %v2466, %v2466
      %v2468 = vsel %vm378, %v2467, 0.0
      %2469 = vadd.xlane.f32.xlu0 %v2468
      %v2470 = vpop.xlane.xlu0 %2469
      %v2471 = vmul.f32 %v2470, %v382
      %v2472 = vadd.f32 %v2471, 1e-05
      %v2473 = vrsqrt.pop %v2472
      %v2474 = vmul.f32 %v2466, %v2473
      %v2475 = vmul.f32 %v2474, %v414
      %v2476 = vadd.f32 %v2475, %v420
      %2477 = vrot.lane.b32.xlu0 %v2370, 1
      %v2478 = vpop.permute.xlu0 %2477
      %2480 = vst.msk [vmem:[#allocation2] sm:$0xf] %vm426, %v2478
      %v2481 = vld [vmem:[#allocation2] sm:$0xf]
      %2483 = vrot.lane.b32.xlu0 %v2481, 127
      %v2484 = vpop.permute.xlu0 %2483
      %v2485 = vsel %vm304, %v2484, 0
      %2487 = vmatprep.subr.mxu0 0.0
      %2488 = vmatpush1.msra.mxu0 %v2485
      %2489 = vmatprep.subr.mxu0 0.0
      %2490 = vmatpush1.msra.mxu0 0.0
      %2491 = vmatprep.subr.mxu0 0.0
      %2492 = vmatpush1.msra.mxu0 0.0
      %2493 = vmatprep.subr.mxu0 0.0
      %2494 = vmatpush1.msra.mxu0 0.0
      %2495 = vmatprep.subr.mxu0 0.0
      %2496 = vmatpush1.msra.mxu0 0.0
      %2497 = vmatprep.subr.mxu0 0.0
      %2498 = vmatpush1.msra.mxu0 0.0
      %2499 = vmatprep.subr.mxu0 0.0
      %2500 = vmatpush1.msra.mxu0 0.0
      %2501 = vmatprep.subr.mxu0 0.0
      %2502 = vmatpush1.msra.mxu0 0.0
      %2503 = vmatprep.subr.mxu0 0.0
      %2504 = vmatpush1.msra.mxu0 0.0
      %2505 = vmatprep.subr.mxu0 0.0
      %2506 = vmatpush1.msra.mxu0 0.0
      %2507 = vmatprep.subr.mxu0 0.0
      %2508 = vmatpush1.msra.mxu0 0.0
      %2509 = vmatprep.subr.mxu0 0.0
      %2510 = vmatpush1.msra.mxu0 0.0
      %2511 = vmatprep.subr.mxu0 0.0
      %2512 = vmatpush1.msra.mxu0 0.0
      %2513 = vmatprep.subr.mxu0 0.0
      %2514 = vmatpush1.msra.mxu0 0.0
      %2515 = vmatprep.subr.mxu0 0.0
      %2516 = vmatpush1.msra.mxu0 0.0
      %2517 = vmatprep.subr.mxu0 0.0
      %2518 = vmatpush1.msra.mxu0 0.0
      %2519 = vmatprep.subr.mxu0 0.0
      %2520 = vmatpush1.msra.mxu0 0.0
      %2521 = vmatprep.subr.mxu0 0.0
      %2522 = vmatpush1.msra.mxu0 0.0
      %2523 = vmatprep.subr.mxu0 0.0
      %2524 = vmatpush1.msra.mxu0 0.0
      %2525 = vmatprep.subr.mxu0 0.0
      %2526 = vmatpush1.msra.mxu0 0.0
      %2527 = vmatprep.subr.mxu0 0.0
      %2528 = vmatpush1.msra.mxu0 0.0
      %2529 = vmatprep.subr.mxu0 0.0
      %2530 = vmatpush1.msra.mxu0 0.0
      %2531 = vmatprep.subr.mxu0 0.0
      %2532 = vmatpush1.msra.mxu0 0.0
      %2533 = vmatprep.subr.mxu0 0.0
      %2534 = vmatpush1.msra.mxu0 0.0
      %2535 = vmatprep.subr.mxu0 0.0
      %2536 = vmatpush1.msra.mxu0 0.0
      %2537 = vmatprep.subr.mxu0 0.0
      %2538 = vmatpush1.msra.mxu0 0.0
      %2539 = vmatprep.subr.mxu0 0.0
      %2540 = vmatpush1.msra.mxu0 0.0
      %2541 = vmatprep.subr.mxu0 0.0
      %2542 = vmatpush1.msra.mxu0 0.0
      %2543 = vmatprep.subr.mxu0 0.0
      %2544 = vmatpush1.msra.mxu0 0.0
      %2545 = vmatprep.subr.mxu0 0.0
      %2546 = vmatpush1.msra.mxu0 0.0
      %2547 = vmatprep.subr.mxu0 0.0
      %2548 = vmatpush1.msra.mxu0 0.0
      %2549 = vmatprep.subr.mxu0 0.0
      %2550 = vmatpush1.msra.mxu0 0.0
      %2551 = vmatprep.mubr.f32.mxu0 0.0
      %2552 = vmatmul.mubr.f32.gmra.mrb[0].mxu0 %v433
      %v2553 = vpop.f32.mrb[0].mxu0
      %v2554 = vadd.f32 0.0, %v2553
      %v2555 = vpop.f32.mrb[0].mxu0
      %2556 = vdwg.mxu0
      %v2557 = vsel %vm304, %v2481, 0
      %2559 = vmatprep.subr.mxu0 0.0
      %2560 = vmatpush1.msra.mxu0 %v2557
      %2561 = vmatprep.subr.mxu0 0.0
      %2562 = vmatpush1.msra.mxu0 0.0
      %2563 = vmatprep.subr.mxu0 0.0
      %2564 = vmatpush1.msra.mxu0 0.0
      %2565 = vmatprep.subr.mxu0 0.0
      %2566 = vmatpush1.msra.mxu0 0.0
      %2567 = vmatprep.subr.mxu0 0.0
      %2568 = vmatpush1.msra.mxu0 0.0
      %2569 = vmatprep.subr.mxu0 0.0
      %2570 = vmatpush1.msra.mxu0 0.0
      %2571 = vmatprep.subr.mxu0 0.0
      %2572 = vmatpush1.msra.mxu0 0.0
      %2573 = vmatprep.subr.mxu0 0.0
      %2574 = vmatpush1.msra.mxu0 0.0
      %2575 = vmatprep.subr.mxu0 0.0
      %2576 = vmatpush1.msra.mxu0 0.0
      %2577 = vmatprep.subr.mxu0 0.0
      %2578 = vmatpush1.msra.mxu0 0.0
      %2579 = vmatprep.subr.mxu0 0.0
      %2580 = vmatpush1.msra.mxu0 0.0
      %2581 = vmatprep.subr.mxu0 0.0
      %2582 = vmatpush1.msra.mxu0 0.0
      %2583 = vmatprep.subr.mxu0 0.0
      %2584 = vmatpush1.msra.mxu0 0.0
      %2585 = vmatprep.subr.mxu0 0.0
      %2586 = vmatpush1.msra.mxu0 0.0
      %2587 = vmatprep.subr.mxu0 0.0
      %2588 = vmatpush1.msra.mxu0 0.0
      %2589 = vmatprep.subr.mxu0 0.0
      %2590 = vmatpush1.msra.mxu0 0.0
      %2591 = vmatprep.subr.mxu0 0.0
      %2592 = vmatpush1.msra.mxu0 0.0
      %2593 = vmatprep.subr.mxu0 0.0
      %2594 = vmatpush1.msra.mxu0 0.0
      %2595 = vmatprep.subr.mxu0 0.0
      %2596 = vmatpush1.msra.mxu0 0.0
      %2597 = vmatprep.subr.mxu0 0.0
      %2598 = vmatpush1.msra.mxu0 0.0
      %2599 = vmatprep.subr.mxu0 0.0
      %2600 = vmatpush1.msra.mxu0 0.0
      %2601 = vmatprep.subr.mxu0 0.0
      %2602 = vmatpush1.msra.mxu0 0.0
      %2603 = vmatprep.subr.mxu0 0.0
      %2604 = vmatpush1.msra.mxu0 0.0
      %2605 = vmatprep.subr.mxu0 0.0
      %2606 = vmatpush1.msra.mxu0 0.0
      %2607 = vmatprep.subr.mxu0 0.0
      %2608 = vmatpush1.msra.mxu0 0.0
      %2609 = vmatprep.subr.mxu0 0.0
      %2610 = vmatpush1.msra.mxu0 0.0
      %2611 = vmatprep.subr.mxu0 0.0
      %2612 = vmatpush1.msra.mxu0 0.0
      %2613 = vmatprep.subr.mxu0 0.0
      %2614 = vmatpush1.msra.mxu0 0.0
      %2615 = vmatprep.subr.mxu0 0.0
      %2616 = vmatpush1.msra.mxu0 0.0
      %2617 = vmatprep.subr.mxu0 0.0
      %2618 = vmatpush1.msra.mxu0 0.0
      %2619 = vmatprep.subr.mxu0 0.0
      %2620 = vmatpush1.msra.mxu0 0.0
      %2621 = vmatprep.subr.mxu0 0.0
      %2622 = vmatpush1.msra.mxu0 0.0
      %2623 = vmatprep.mubr.f32.mxu0 0.0
      %2624 = vmatmul.mubr.f32.gmra.mrb[0].mxu0 %v508
      %v2625 = vpop.f32.mrb[0].mxu0
      %v2626 = vadd.f32 %v2554, %v2625
      %v2627 = vpop.f32.mrb[0].mxu0
      %2628 = vdwg.mxu0
      %2629 = vrot.lane.b32.xlu0 %v2481, 126
      %v2630 = vpop.permute.xlu0 %2629
      %v2631 = vsel %vm304, %v2630, 0
      %2633 = vmatprep.subr.mxu0 0.0
      %2634 = vmatpush1.msra.mxu0 %v2631
      %2635 = vmatprep.subr.mxu0 0.0
      %2636 = vmatpush1.msra.mxu0 0.0
      %2637 = vmatprep.subr.mxu0 0.0
      %2638 = vmatpush1.msra.mxu0 0.0
      %2639 = vmatprep.subr.mxu0 0.0
      %2640 = vmatpush1.msra.mxu0 0.0
      %2641 = vmatprep.subr.mxu0 0.0
      %2642 = vmatpush1.msra.mxu0 0.0
      %2643 = vmatprep.subr.mxu0 0.0
      %2644 = vmatpush1.msra.mxu0 0.0
      %2645 = vmatprep.subr.mxu0 0.0
      %2646 = vmatpush1.msra.mxu0 0.0
      %2647 = vmatprep.subr.mxu0 0.0
      %2648 = vmatpush1.msra.mxu0 0.0
      %2649 = vmatprep.subr.mxu0 0.0
      %2650 = vmatpush1.msra.mxu0 0.0
      %2651 = vmatprep.subr.mxu0 0.0
      %2652 = vmatpush1.msra.mxu0 0.0
      %2653 = vmatprep.subr.mxu0 0.0
      %2654 = vmatpush1.msra.mxu0 0.0
      %2655 = vmatprep.subr.mxu0 0.0
      %2656 = vmatpush1.msra.mxu0 0.0
      %2657 = vmatprep.subr.mxu0 0.0
      %2658 = vmatpush1.msra.mxu0 0.0
      %2659 = vmatprep.subr.mxu0 0.0
      %2660 = vmatpush1.msra.mxu0 0.0
      %2661 = vmatprep.subr.mxu0 0.0
      %2662 = vmatpush1.msra.mxu0 0.0
      %2663 = vmatprep.subr.mxu0 0.0
      %2664 = vmatpush1.msra.mxu0 0.0
      %2665 = vmatprep.subr.mxu0 0.0
      %2666 = vmatpush1.msra.mxu0 0.0
      %2667 = vmatprep.subr.mxu0 0.0
      %2668 = vmatpush1.msra.mxu0 0.0
      %2669 = vmatprep.subr.mxu0 0.0
      %2670 = vmatpush1.msra.mxu0 0.0
      %2671 = vmatprep.subr.mxu0 0.0
      %2672 = vmatpush1.msra.mxu0 0.0
      %2673 = vmatprep.subr.mxu0 0.0
      %2674 = vmatpush1.msra.mxu0 0.0
      %2675 = vmatprep.subr.mxu0 0.0
      %2676 = vmatpush1.msra.mxu0 0.0
      %2677 = vmatprep.subr.mxu0 0.0
      %2678 = vmatpush1.msra.mxu0 0.0
      %2679 = vmatprep.subr.mxu0 0.0
      %2680 = vmatpush1.msra.mxu0 0.0
      %2681 = vmatprep.subr.mxu0 0.0
      %2682 = vmatpush1.msra.mxu0 0.0
      %2683 = vmatprep.subr.mxu0 0.0
      %2684 = vmatpush1.msra.mxu0 0.0
      %2685 = vmatprep.subr.mxu0 0.0
      %2686 = vmatpush1.msra.mxu0 0.0
      %2687 = vmatprep.subr.mxu0 0.0
      %2688 = vmatpush1.msra.mxu0 0.0
      %2689 = vmatprep.subr.mxu0 0.0
      %2690 = vmatpush1.msra.mxu0 0.0
      %2691 = vmatprep.subr.mxu0 0.0
      %2692 = vmatpush1.msra.mxu0 0.0
      %2693 = vmatprep.subr.mxu0 0.0
      %2694 = vmatpush1.msra.mxu0 0.0
      %2695 = vmatprep.subr.mxu0 0.0
      %2696 = vmatpush1.msra.mxu0 0.0
      %2697 = vmatprep.mubr.f32.mxu0 0.0
      %2698 = vmatmul.mubr.f32.gmra.mrb[0].mxu0 %v585
      %v2699 = vpop.f32.mrb[0].mxu0
      %v2700 = vadd.f32 0.0, %v2699
      %v2701 = vpop.f32.mrb[0].mxu0
      %2702 = vdwg.mxu0
      %v2703 = vadd.f32 %v2626, %v2700
      %v2704 = vadd.f32 %v2703, %v663
      %v2705 = vsel %vm378, %v2476, 0.0
      %2706 = vadd.xlane.f32.xlu0 %v2705
      %v2707 = vpop.xlane.xlu0 %2706
      %v2708 = vmul.f32 %v2707, %v382
      %v2709 = vsel %vm304, %v2708, -inf
      %v2710 = vrot.slane %v2709, 4
      %v2711 = vmax.f32 %v2709, %v2710
      %v2712 = vrot.slane %v2711, 2
      %v2713 = vmax.f32 %v2711, %v2712
      %v2714 = vrot.slane %v2713, 1
      %v2715 = vmax.f32 %v2713, %v2714
      %v2716 = vsub.f32 %v2708, %v2715
      %v2717 = vmul.f32 %v2716, 1.442695
      %v2718 = vpow.pop %v2717
      %v2719 = vsel %vm304, %v2718, 0.0
      %v2720 = vrot.slane %v2719, 4
      %v2721 = vadd.f32 %v2719, %v2720
      %v2722 = vrot.slane %v2721, 2
      %v2723 = vadd.f32 %v2721, %v2722
      %v2724 = vrot.slane %v2723, 1
      %v2725 = vadd.f32 %v2723, %v2724
      %v2726 = vrcp.pop %v2725
      %v2727 = vmul.f32 %v2718, %v2726
      %v2728 = vsel %vm378, %v2704, 0.0
      %2729 = vadd.xlane.f32.xlu0 %v2728
      %v2730 = vpop.xlane.xlu0 %2729
      %v2731 = vmul.f32 %v2730, %v382
      %v2732 = vsel %vm304, %v2731, -inf
      %v2733 = vrot.slane %v2732, 4
      %v2734 = vmax.f32 %v2732, %v2733
      %v2735 = vrot.slane %v2734, 2
      %v2736 = vmax.f32 %v2734, %v2735
      %v2737 = vrot.slane %v2736, 1
      %v2738 = vmax.f32 %v2736, %v2737
      %v2739 = vsub.f32 %v2731, %v2738
      %v2740 = vmul.f32 %v2739, 1.442695
      %v2741 = vpow.pop %v2740
      %v2742 = vsel %vm304, %v2741, 0.0
      %v2743 = vrot.slane %v2742, 4
      %v2744 = vadd.f32 %v2742, %v2743
      %v2745 = vrot.slane %v2744, 2
      %v2746 = vadd.f32 %v2744, %v2745
      %v2747 = vrot.slane %v2746, 1
      %v2748 = vadd.f32 %v2746, %v2747
      %v2749 = vrcp.pop %v2748
      %v2750 = vmul.f32 %v2741, %v2749
      %v2751 = vmul.f32 %v2727, %v2704
      %v2752 = vsel %vm378, %v2751, 0.0
      %v2753 = vrot.slane %v2752, 4
      %v2754 = vadd.f32 %v2752, %v2753
      %v2755 = vrot.slane %v2754, 2
      %v2756 = vadd.f32 %v2754, %v2755
      %v2757 = vrot.slane %v2756, 1
      %v2758 = vadd.f32 %v2756, %v2757
      %v2759 = vmul.f32 %v2750, %v2476
      %v2760 = vsel %vm378, %v2759, 0.0
      %v2761 = vrot.slane %v2760, 4
      %v2762 = vadd.f32 %v2760, %v2761
      %v2763 = vrot.slane %v2762, 2
      %v2764 = vadd.f32 %v2762, %v2763
      %v2765 = vrot.slane %v2764, 1
      %v2766 = vadd.f32 %v2764, %v2765
      %v2767 = vadd.f32 %v2758, %v2766
      %v2768 = vxor.u32 %v2767, 2147483648
      %v2769 = vmul.f32 %v2768, 1.442695
      %v2770 = vpow.pop %v2769
      %v2771 = vadd.f32 %v2770, 1.0
      %v2772 = vrcp.pop %v2771
      %v2773 = vmul.f32 1.0, %v2772
      %v2774 = vmul.f32 %v2370, %v2773
      %s2775 = scalar_lea.vmem %s280, 20
      %2776 = vst.msk [vmem:[%s2775] sm:$0xf] %vm378, %v2774
      %s2777 = scalar_lea.vmem %s274, 24
      %v2778 = vld [vmem:[%s2777] sm:$0xf]
      %v2780 = vsel %vm304, %v2778, 0
      %2782 = vmatprep.subr.mxu0 0.0
      %2783 = vmatpush1.msra.mxu0 %v2780
      %2784 = vmatprep.subr.mxu0 0.0
      %2785 = vmatpush1.msra.mxu0 0.0
      %2786 = vmatprep.subr.mxu0 0.0
      %2787 = vmatpush1.msra.mxu0 0.0
      %2788 = vmatprep.subr.mxu0 0.0
      %2789 = vmatpush1.msra.mxu0 0.0
      %2790 = vmatprep.subr.mxu0 0.0
      %2791 = vmatpush1.msra.mxu0 0.0
      %2792 = vmatprep.subr.mxu0 0.0
      %2793 = vmatpush1.msra.mxu0 0.0
      %2794 = vmatprep.subr.mxu0 0.0
      %2795 = vmatpush1.msra.mxu0 0.0
      %2796 = vmatprep.subr.mxu0 0.0
      %2797 = vmatpush1.msra.mxu0 0.0
      %2798 = vmatprep.subr.mxu0 0.0
      %2799 = vmatpush1.msra.mxu0 0.0
      %2800 = vmatprep.subr.mxu0 0.0
      %2801 = vmatpush1.msra.mxu0 0.0
      %2802 = vmatprep.subr.mxu0 0.0
      %2803 = vmatpush1.msra.mxu0 0.0
      %2804 = vmatprep.subr.mxu0 0.0
      %2805 = vmatpush1.msra.mxu0 0.0
      %2806 = vmatprep.subr.mxu0 0.0
      %2807 = vmatpush1.msra.mxu0 0.0
      %2808 = vmatprep.subr.mxu0 0.0
      %2809 = vmatpush1.msra.mxu0 0.0
      %2810 = vmatprep.subr.mxu0 0.0
      %2811 = vmatpush1.msra.mxu0 0.0
      %2812 = vmatprep.subr.mxu0 0.0
      %2813 = vmatpush1.msra.mxu0 0.0
      %2814 = vmatprep.subr.mxu0 0.0
      %2815 = vmatpush1.msra.mxu0 0.0
      %2816 = vmatprep.subr.mxu0 0.0
      %2817 = vmatpush1.msra.mxu0 0.0
      %2818 = vmatprep.subr.mxu0 0.0
      %2819 = vmatpush1.msra.mxu0 0.0
      %2820 = vmatprep.subr.mxu0 0.0
      %2821 = vmatpush1.msra.mxu0 0.0
      %2822 = vmatprep.subr.mxu0 0.0
      %2823 = vmatpush1.msra.mxu0 0.0
      %2824 = vmatprep.subr.mxu0 0.0
      %2825 = vmatpush1.msra.mxu0 0.0
      %2826 = vmatprep.subr.mxu0 0.0
      %2827 = vmatpush1.msra.mxu0 0.0
      %2828 = vmatprep.subr.mxu0 0.0
      %2829 = vmatpush1.msra.mxu0 0.0
      %2830 = vmatprep.subr.mxu0 0.0
      %2831 = vmatpush1.msra.mxu0 0.0
      %2832 = vmatprep.subr.mxu0 0.0
      %2833 = vmatpush1.msra.mxu0 0.0
      %2834 = vmatprep.subr.mxu0 0.0
      %2835 = vmatpush1.msra.mxu0 0.0
      %2836 = vmatprep.subr.mxu0 0.0
      %2837 = vmatpush1.msra.mxu0 0.0
      %2838 = vmatprep.subr.mxu0 0.0
      %2839 = vmatpush1.msra.mxu0 0.0
      %2840 = vmatprep.subr.mxu0 0.0
      %2841 = vmatpush1.msra.mxu0 0.0
      %2842 = vmatprep.subr.mxu0 0.0
      %2843 = vmatpush1.msra.mxu0 0.0
      %2844 = vmatprep.subr.mxu0 0.0
      %2845 = vmatpush1.msra.mxu0 0.0
      %2846 = vmatprep.mubr.f32.mxu0 0.0
      %2847 = vmatmul.mubr.f32.gmra.mrb[0].mxu0 %v302
      %v2848 = vpop.f32.mrb[0].mxu0
      %v2849 = vadd.f32 %v298, %v2848
      %v2850 = vpop.f32.mrb[0].mxu0
      %2851 = vdwg.mxu0
      %v2852 = vsel %vm378, %v2849, 0.0
      %2853 = vadd.xlane.f32.xlu0 %v2852
      %v2854 = vpop.xlane.xlu0 %2853
      %v2855 = vmul.f32 %v2854, %v382
      %v2856 = vxor.u32 %v2849, 2147483648
      %v2857 = vmul.f32 %v2856, 1.442695
      %v2858 = vpow.pop %v2857
      %v2859 = vadd.f32 %v2858, 1.0
      %v2860 = vrcp.pop %v2859
      %v2861 = vmul.f32 1.0, %v2860
      %v2862 = vmul.f32 %v2778, %v2861
      %v2863 = vxor.u32 %v2855, 2147483648
      %v2864 = vmul.f32 %v2863, 1.442695
      %v2865 = vpow.pop %v2864
      %v2866 = vadd.f32 %v2865, 1.0
      %v2867 = vrcp.pop %v2866
      %v2868 = vmul.f32 1.0, %v2867
      %v2869 = vmul.f32 %v2862, %v2868
      %v2870 = vsel %vm378, %v2869, 0.0
      %2871 = vadd.xlane.f32.xlu0 %v2870
      %v2872 = vpop.xlane.xlu0 %2871
      %v2873 = vmul.f32 %v2872, %v382
      %v2874 = vsub.f32 %v2869, %v2873
      %v2875 = vmul.f32 %v2874, %v2874
      %v2876 = vsel %vm378, %v2875, 0.0
      %2877 = vadd.xlane.f32.xlu0 %v2876
      %v2878 = vpop.xlane.xlu0 %2877
      %v2879 = vmul.f32 %v2878, %v382
      %v2880 = vadd.f32 %v2879, 1e-05
      %v2881 = vrsqrt.pop %v2880
      %v2882 = vmul.f32 %v2874, %v2881
      %v2883 = vmul.f32 %v2882, %v414
      %v2884 = vadd.f32 %v2883, %v420
      %2885 = vrot.lane.b32.xlu0 %v2778, 1
      %v2886 = vpop.permute.xlu0 %2885
      %2888 = vst.msk [vmem:[#allocation2] sm:$0xf] %vm426, %v2886
      %v2889 = vld [vmem:[#allocation2] sm:$0xf]
      %2891 = vrot.lane.b32.xlu0 %v2889, 127
      %v2892 = vpop.permute.xlu0 %2891
      %v2893 = vsel %vm304, %v2892, 0
      %2895 = vmatprep.subr.mxu0 0.0
      %2896 = vmatpush1.msra.mxu0 %v2893
      %2897 = vmatprep.subr.mxu0 0.0
      %2898 = vmatpush1.msra.mxu0 0.0
      %2899 = vmatprep.subr.mxu0 0.0
      %2900 = vmatpush1.msra.mxu0 0.0
      %2901 = vmatprep.subr.mxu0 0.0
      %2902 = vmatpush1.msra.mxu0 0.0
      %2903 = vmatprep.subr.mxu0 0.0
      %2904 = vmatpush1.msra.mxu0 0.0
      %2905 = vmatprep.subr.mxu0 0.0
      %2906 = vmatpush1.msra.mxu0 0.0
      %2907 = vmatprep.subr.mxu0 0.0
      %2908 = vmatpush1.msra.mxu0 0.0
      %2909 = vmatprep.subr.mxu0 0.0
      %2910 = vmatpush1.msra.mxu0 0.0
      %2911 = vmatprep.subr.mxu0 0.0
      %2912 = vmatpush1.msra.mxu0 0.0
      %2913 = vmatprep.subr.mxu0 0.0
      %2914 = vmatpush1.msra.mxu0 0.0
      %2915 = vmatprep.subr.mxu0 0.0
      %2916 = vmatpush1.msra.mxu0 0.0
      %2917 = vmatprep.subr.mxu0 0.0
      %2918 = vmatpush1.msra.mxu0 0.0
      %2919 = vmatprep.subr.mxu0 0.0
      %2920 = vmatpush1.msra.mxu0 0.0
      %2921 = vmatprep.subr.mxu0 0.0
      %2922 = vmatpush1.msra.mxu0 0.0
      %2923 = vmatprep.subr.mxu0 0.0
      %2924 = vmatpush1.msra.mxu0 0.0
      %2925 = vmatprep.subr.mxu0 0.0
      %2926 = vmatpush1.msra.mxu0 0.0
      %2927 = vmatprep.subr.mxu0 0.0
      %2928 = vmatpush1.msra.mxu0 0.0
      %2929 = vmatprep.subr.mxu0 0.0
      %2930 = vmatpush1.msra.mxu0 0.0
      %2931 = vmatprep.subr.mxu0 0.0
      %2932 = vmatpush1.msra.mxu0 0.0
      %2933 = vmatprep.subr.mxu0 0.0
      %2934 = vmatpush1.msra.mxu0 0.0
      %2935 = vmatprep.subr.mxu0 0.0
      %2936 = vmatpush1.msra.mxu0 0.0
      %2937 = vmatprep.subr.mxu0 0.0
      %2938 = vmatpush1.msra.mxu0 0.0
      %2939 = vmatprep.subr.mxu0 0.0
      %2940 = vmatpush1.msra.mxu0 0.0
      %2941 = vmatprep.subr.mxu0 0.0
      %2942 = vmatpush1.msra.mxu0 0.0
      %2943 = vmatprep.subr.mxu0 0.0
      %2944 = vmatpush1.msra.mxu0 0.0
      %2945 = vmatprep.subr.mxu0 0.0
      %2946 = vmatpush1.msra.mxu0 0.0
      %2947 = vmatprep.subr.mxu0 0.0
      %2948 = vmatpush1.msra.mxu0 0.0
      %2949 = vmatprep.subr.mxu0 0.0
      %2950 = vmatpush1.msra.mxu0 0.0
      %2951 = vmatprep.subr.mxu0 0.0
      %2952 = vmatpush1.msra.mxu0 0.0
      %2953 = vmatprep.subr.mxu0 0.0
      %2954 = vmatpush1.msra.mxu0 0.0
      %2955 = vmatprep.subr.mxu0 0.0
      %2956 = vmatpush1.msra.mxu0 0.0
      %2957 = vmatprep.subr.mxu0 0.0
      %2958 = vmatpush1.msra.mxu0 0.0
      %2959 = vmatprep.mubr.f32.mxu0 0.0
      %2960 = vmatmul.mubr.f32.gmra.mrb[0].mxu0 %v433
      %v2961 = vpop.f32.mrb[0].mxu0
      %v2962 = vadd.f32 0.0, %v2961
      %v2963 = vpop.f32.mrb[0].mxu0
      %2964 = vdwg.mxu0
      %v2965 = vsel %vm304, %v2889, 0
      %2967 = vmatprep.subr.mxu0 0.0
      %2968 = vmatpush1.msra.mxu0 %v2965
      %2969 = vmatprep.subr.mxu0 0.0
      %2970 = vmatpush1.msra.mxu0 0.0
      %2971 = vmatprep.subr.mxu0 0.0
      %2972 = vmatpush1.msra.mxu0 0.0
      %2973 = vmatprep.subr.mxu0 0.0
      %2974 = vmatpush1.msra.mxu0 0.0
      %2975 = vmatprep.subr.mxu0 0.0
      %2976 = vmatpush1.msra.mxu0 0.0
      %2977 = vmatprep.subr.mxu0 0.0
      %2978 = vmatpush1.msra.mxu0 0.0
      %2979 = vmatprep.subr.mxu0 0.0
      %2980 = vmatpush1.msra.mxu0 0.0
      %2981 = vmatprep.subr.mxu0 0.0
      %2982 = vmatpush1.msra.mxu0 0.0
      %2983 = vmatprep.subr.mxu0 0.0
      %2984 = vmatpush1.msra.mxu0 0.0
      %2985 = vmatprep.subr.mxu0 0.0
      %2986 = vmatpush1.msra.mxu0 0.0
      %2987 = vmatprep.subr.mxu0 0.0
      %2988 = vmatpush1.msra.mxu0 0.0
      %2989 = vmatprep.subr.mxu0 0.0
      %2990 = vmatpush1.msra.mxu0 0.0
      %2991 = vmatprep.subr.mxu0 0.0
      %2992 = vmatpush1.msra.mxu0 0.0
      %2993 = vmatprep.subr.mxu0 0.0
      %2994 = vmatpush1.msra.mxu0 0.0
      %2995 = vmatprep.subr.mxu0 0.0
      %2996 = vmatpush1.msra.mxu0 0.0
      %2997 = vmatprep.subr.mxu0 0.0
      %2998 = vmatpush1.msra.mxu0 0.0
      %2999 = vmatprep.subr.mxu0 0.0
      %3000 = vmatpush1.msra.mxu0 0.0
      %3001 = vmatprep.subr.mxu0 0.0
      %3002 = vmatpush1.msra.mxu0 0.0
      %3003 = vmatprep.subr.mxu0 0.0
      %3004 = vmatpush1.msra.mxu0 0.0
      %3005 = vmatprep.subr.mxu0 0.0
      %3006 = vmatpush1.msra.mxu0 0.0
      %3007 = vmatprep.subr.mxu0 0.0
      %3008 = vmatpush1.msra.mxu0 0.0
      %3009 = vmatprep.subr.mxu0 0.0
      %3010 = vmatpush1.msra.mxu0 0.0
      %3011 = vmatprep.subr.mxu0 0.0
      %3012 = vmatpush1.msra.mxu0 0.0
      %3013 = vmatprep.subr.mxu0 0.0
      %3014 = vmatpush1.msra.mxu0 0.0
      %3015 = vmatprep.subr.mxu0 0.0
      %3016 = vmatpush1.msra.mxu0 0.0
      %3017 = vmatprep.subr.mxu0 0.0
      %3018 = vmatpush1.msra.mxu0 0.0
      %3019 = vmatprep.subr.mxu0 0.0
      %3020 = vmatpush1.msra.mxu0 0.0
      %3021 = vmatprep.subr.mxu0 0.0
      %3022 = vmatpush1.msra.mxu0 0.0
      %3023 = vmatprep.subr.mxu0 0.0
      %3024 = vmatpush1.msra.mxu0 0.0
      %3025 = vmatprep.subr.mxu0 0.0
      %3026 = vmatpush1.msra.mxu0 0.0
      %3027 = vmatprep.subr.mxu0 0.0
      %3028 = vmatpush1.msra.mxu0 0.0
      %3029 = vmatprep.subr.mxu0 0.0
      %3030 = vmatpush1.msra.mxu0 0.0
      %3031 = vmatprep.mubr.f32.mxu0 0.0
      %3032 = vmatmul.mubr.f32.gmra.mrb[0].mxu0 %v508
      %v3033 = vpop.f32.mrb[0].mxu0
      %v3034 = vadd.f32 %v2962, %v3033
      %v3035 = vpop.f32.mrb[0].mxu0
      %3036 = vdwg.mxu0
      %3037 = vrot.lane.b32.xlu0 %v2889, 126
      %v3038 = vpop.permute.xlu0 %3037
      %v3039 = vsel %vm304, %v3038, 0
      %3041 = vmatprep.subr.mxu0 0.0
      %3042 = vmatpush1.msra.mxu0 %v3039
      %3043 = vmatprep.subr.mxu0 0.0
      %3044 = vmatpush1.msra.mxu0 0.0
      %3045 = vmatprep.subr.mxu0 0.0
      %3046 = vmatpush1.msra.mxu0 0.0
      %3047 = vmatprep.subr.mxu0 0.0
      %3048 = vmatpush1.msra.mxu0 0.0
      %3049 = vmatprep.subr.mxu0 0.0
      %3050 = vmatpush1.msra.mxu0 0.0
      %3051 = vmatprep.subr.mxu0 0.0
      %3052 = vmatpush1.msra.mxu0 0.0
      %3053 = vmatprep.subr.mxu0 0.0
      %3054 = vmatpush1.msra.mxu0 0.0
      %3055 = vmatprep.subr.mxu0 0.0
      %3056 = vmatpush1.msra.mxu0 0.0
      %3057 = vmatprep.subr.mxu0 0.0
      %3058 = vmatpush1.msra.mxu0 0.0
      %3059 = vmatprep.subr.mxu0 0.0
      %3060 = vmatpush1.msra.mxu0 0.0
      %3061 = vmatprep.subr.mxu0 0.0
      %3062 = vmatpush1.msra.mxu0 0.0
      %3063 = vmatprep.subr.mxu0 0.0
      %3064 = vmatpush1.msra.mxu0 0.0
      %3065 = vmatprep.subr.mxu0 0.0
      %3066 = vmatpush1.msra.mxu0 0.0
      %3067 = vmatprep.subr.mxu0 0.0
      %3068 = vmatpush1.msra.mxu0 0.0
      %3069 = vmatprep.subr.mxu0 0.0
      %3070 = vmatpush1.msra.mxu0 0.0
      %3071 = vmatprep.subr.mxu0 0.0
      %3072 = vmatpush1.msra.mxu0 0.0
      %3073 = vmatprep.subr.mxu0 0.0
      %3074 = vmatpush1.msra.mxu0 0.0
      %3075 = vmatprep.subr.mxu0 0.0
      %3076 = vmatpush1.msra.mxu0 0.0
      %3077 = vmatprep.subr.mxu0 0.0
      %3078 = vmatpush1.msra.mxu0 0.0
      %3079 = vmatprep.subr.mxu0 0.0
      %3080 = vmatpush1.msra.mxu0 0.0
      %3081 = vmatprep.subr.mxu0 0.0
      %3082 = vmatpush1.msra.mxu0 0.0
      %3083 = vmatprep.subr.mxu0 0.0
      %3084 = vmatpush1.msra.mxu0 0.0
      %3085 = vmatprep.subr.mxu0 0.0
      %3086 = vmatpush1.msra.mxu0 0.0
      %3087 = vmatprep.subr.mxu0 0.0
      %3088 = vmatpush1.msra.mxu0 0.0
      %3089 = vmatprep.subr.mxu0 0.0
      %3090 = vmatpush1.msra.mxu0 0.0
      %3091 = vmatprep.subr.mxu0 0.0
      %3092 = vmatpush1.msra.mxu0 0.0
      %3093 = vmatprep.subr.mxu0 0.0
      %3094 = vmatpush1.msra.mxu0 0.0
      %3095 = vmatprep.subr.mxu0 0.0
      %3096 = vmatpush1.msra.mxu0 0.0
      %3097 = vmatprep.subr.mxu0 0.0
      %3098 = vmatpush1.msra.mxu0 0.0
      %3099 = vmatprep.subr.mxu0 0.0
      %3100 = vmatpush1.msra.mxu0 0.0
      %3101 = vmatprep.subr.mxu0 0.0
      %3102 = vmatpush1.msra.mxu0 0.0
      %3103 = vmatprep.subr.mxu0 0.0
      %3104 = vmatpush1.msra.mxu0 0.0
      %3105 = vmatprep.mubr.f32.mxu0 0.0
      %3106 = vmatmul.mubr.f32.gmra.mrb[0].mxu0 %v585
      %v3107 = vpop.f32.mrb[0].mxu0
      %v3108 = vadd.f32 0.0, %v3107
      %v3109 = vpop.f32.mrb[0].mxu0
      %3110 = vdwg.mxu0
      %v3111 = vadd.f32 %v3034, %v3108
      %v3112 = vadd.f32 %v3111, %v663
      %v3113 = vsel %vm378, %v2884, 0.0
      %3114 = vadd.xlane.f32.xlu0 %v3113
      %v3115 = vpop.xlane.xlu0 %3114
      %v3116 = vmul.f32 %v3115, %v382
      %v3117 = vsel %vm304, %v3116, -inf
      %v3118 = vrot.slane %v3117, 4
      %v3119 = vmax.f32 %v3117, %v3118
      %v3120 = vrot.slane %v3119, 2
      %v3121 = vmax.f32 %v3119, %v3120
      %v3122 = vrot.slane %v3121, 1
      %v3123 = vmax.f32 %v3121, %v3122
      %v3124 = vsub.f32 %v3116, %v3123
      %v3125 = vmul.f32 %v3124, 1.442695
      %v3126 = vpow.pop %v3125
      %v3127 = vsel %vm304, %v3126, 0.0
      %v3128 = vrot.slane %v3127, 4
      %v3129 = vadd.f32 %v3127, %v3128
      %v3130 = vrot.slane %v3129, 2
      %v3131 = vadd.f32 %v3129, %v3130
      %v3132 = vrot.slane %v3131, 1
      %v3133 = vadd.f32 %v3131, %v3132
      %v3134 = vrcp.pop %v3133
      %v3135 = vmul.f32 %v3126, %v3134
      %v3136 = vsel %vm378, %v3112, 0.0
      %3137 = vadd.xlane.f32.xlu0 %v3136
      %v3138 = vpop.xlane.xlu0 %3137
      %v3139 = vmul.f32 %v3138, %v382
      %v3140 = vsel %vm304, %v3139, -inf
      %v3141 = vrot.slane %v3140, 4
      %v3142 = vmax.f32 %v3140, %v3141
      %v3143 = vrot.slane %v3142, 2
      %v3144 = vmax.f32 %v3142, %v3143
      %v3145 = vrot.slane %v3144, 1
      %v3146 = vmax.f32 %v3144, %v3145
      %v3147 = vsub.f32 %v3139, %v3146
      %v3148 = vmul.f32 %v3147, 1.442695
      %v3149 = vpow.pop %v3148
      %v3150 = vsel %vm304, %v3149, 0.0
      %v3151 = vrot.slane %v3150, 4
      %v3152 = vadd.f32 %v3150, %v3151
      %v3153 = vrot.slane %v3152, 2
      %v3154 = vadd.f32 %v3152, %v3153
      %v3155 = vrot.slane %v3154, 1
      %v3156 = vadd.f32 %v3154, %v3155
      %v3157 = vrcp.pop %v3156
      %v3158 = vmul.f32 %v3149, %v3157
      %v3159 = vmul.f32 %v3135, %v3112
      %v3160 = vsel %vm378, %v3159, 0.0
      %v3161 = vrot.slane %v3160, 4
      %v3162 = vadd.f32 %v3160, %v3161
      %v3163 = vrot.slane %v3162, 2
      %v3164 = vadd.f32 %v3162, %v3163
      %v3165 = vrot.slane %v3164, 1
      %v3166 = vadd.f32 %v3164, %v3165
      %v3167 = vmul.f32 %v3158, %v2884
      %v3168 = vsel %vm378, %v3167, 0.0
      %v3169 = vrot.slane %v3168, 4
      %v3170 = vadd.f32 %v3168, %v3169
      %v3171 = vrot.slane %v3170, 2
      %v3172 = vadd.f32 %v3170, %v3171
      %v3173 = vrot.slane %v3172, 1
      %v3174 = vadd.f32 %v3172, %v3173
      %v3175 = vadd.f32 %v3166, %v3174
      %v3176 = vxor.u32 %v3175, 2147483648
      %v3177 = vmul.f32 %v3176, 1.442695
      %v3178 = vpow.pop %v3177
      %v3179 = vadd.f32 %v3178, 1.0
      %v3180 = vrcp.pop %v3179
      %v3181 = vmul.f32 1.0, %v3180
      %v3182 = vmul.f32 %v2778, %v3181
      %s3183 = scalar_lea.vmem %s280, 24
      %3184 = vst.msk [vmem:[%s3183] sm:$0xf] %vm378, %v3182
      %s3185 = scalar_lea.vmem %s274, 28
      %v3186 = vld [vmem:[%s3185] sm:$0xf]
      %v3188 = vsel %vm304, %v3186, 0
      %3190 = vmatprep.subr.mxu0 0.0
      %3191 = vmatpush1.msra.mxu0 %v3188
      %3192 = vmatprep.subr.mxu0 0.0
      %3193 = vmatpush1.msra.mxu0 0.0
      %3194 = vmatprep.subr.mxu0 0.0
      %3195 = vmatpush1.msra.mxu0 0.0
      %3196 = vmatprep.subr.mxu0 0.0
      %3197 = vmatpush1.msra.mxu0 0.0
      %3198 = vmatprep.subr.mxu0 0.0
      %3199 = vmatpush1.msra.mxu0 0.0
      %3200 = vmatprep.subr.mxu0 0.0
      %3201 = vmatpush1.msra.mxu0 0.0
      %3202 = vmatprep.subr.mxu0 0.0
      %3203 = vmatpush1.msra.mxu0 0.0
      %3204 = vmatprep.subr.mxu0 0.0
      %3205 = vmatpush1.msra.mxu0 0.0
      %3206 = vmatprep.subr.mxu0 0.0
      %3207 = vmatpush1.msra.mxu0 0.0
      %3208 = vmatprep.subr.mxu0 0.0
      %3209 = vmatpush1.msra.mxu0 0.0
      %3210 = vmatprep.subr.mxu0 0.0
      %3211 = vmatpush1.msra.mxu0 0.0
      %3212 = vmatprep.subr.mxu0 0.0
      %3213 = vmatpush1.msra.mxu0 0.0
      %3214 = vmatprep.subr.mxu0 0.0
      %3215 = vmatpush1.msra.mxu0 0.0
      %3216 = vmatprep.subr.mxu0 0.0
      %3217 = vmatpush1.msra.mxu0 0.0
      %3218 = vmatprep.subr.mxu0 0.0
      %3219 = vmatpush1.msra.mxu0 0.0
      %3220 = vmatprep.subr.mxu0 0.0
      %3221 = vmatpush1.msra.mxu0 0.0
      %3222 = vmatprep.subr.mxu0 0.0
      %3223 = vmatpush1.msra.mxu0 0.0
      %3224 = vmatprep.subr.mxu0 0.0
      %3225 = vmatpush1.msra.mxu0 0.0
      %3226 = vmatprep.subr.mxu0 0.0
      %3227 = vmatpush1.msra.mxu0 0.0
      %3228 = vmatprep.subr.mxu0 0.0
      %3229 = vmatpush1.msra.mxu0 0.0
      %3230 = vmatprep.subr.mxu0 0.0
      %3231 = vmatpush1.msra.mxu0 0.0
      %3232 = vmatprep.subr.mxu0 0.0
      %3233 = vmatpush1.msra.mxu0 0.0
      %3234 = vmatprep.subr.mxu0 0.0
      %3235 = vmatpush1.msra.mxu0 0.0
      %3236 = vmatprep.subr.mxu0 0.0
      %3237 = vmatpush1.msra.mxu0 0.0
      %3238 = vmatprep.subr.mxu0 0.0
      %3239 = vmatpush1.msra.mxu0 0.0
      %3240 = vmatprep.subr.mxu0 0.0
      %3241 = vmatpush1.msra.mxu0 0.0
      %3242 = vmatprep.subr.mxu0 0.0
      %3243 = vmatpush1.msra.mxu0 0.0
      %3244 = vmatprep.subr.mxu0 0.0
      %3245 = vmatpush1.msra.mxu0 0.0
      %3246 = vmatprep.subr.mxu0 0.0
      %3247 = vmatpush1.msra.mxu0 0.0
      %3248 = vmatprep.subr.mxu0 0.0
      %3249 = vmatpush1.msra.mxu0 0.0
      %3250 = vmatprep.subr.mxu0 0.0
      %3251 = vmatpush1.msra.mxu0 0.0
      %3252 = vmatprep.subr.mxu0 0.0
      %3253 = vmatpush1.msra.mxu0 0.0
      %3254 = vmatprep.mubr.f32.mxu0 0.0
      %3255 = vmatmul.mubr.f32.gmra.mrb[0].mxu0 %v302
      %v3256 = vpop.f32.mrb[0].mxu0
      %v3257 = vadd.f32 %v298, %v3256
      %v3258 = vpop.f32.mrb[0].mxu0
      %3259 = vdwg.mxu0
      %v3260 = vsel %vm378, %v3257, 0.0
      %3261 = vadd.xlane.f32.xlu0 %v3260
      %v3262 = vpop.xlane.xlu0 %3261
      %v3263 = vmul.f32 %v3262, %v382
      %v3264 = vxor.u32 %v3257, 2147483648
      %v3265 = vmul.f32 %v3264, 1.442695
      %v3266 = vpow.pop %v3265
      %v3267 = vadd.f32 %v3266, 1.0
      %v3268 = vrcp.pop %v3267
      %v3269 = vmul.f32 1.0, %v3268
      %v3270 = vmul.f32 %v3186, %v3269
      %v3271 = vxor.u32 %v3263, 2147483648
      %v3272 = vmul.f32 %v3271, 1.442695
      %v3273 = vpow.pop %v3272
      %v3274 = vadd.f32 %v3273, 1.0
      %v3275 = vrcp.pop %v3274
      %v3276 = vmul.f32 1.0, %v3275
      %v3277 = vmul.f32 %v3270, %v3276
      %v3278 = vsel %vm378, %v3277, 0.0
      %3279 = vadd.xlane.f32.xlu0 %v3278
      %v3280 = vpop.xlane.xlu0 %3279
      %v3281 = vmul.f32 %v3280, %v382
      %v3282 = vsub.f32 %v3277, %v3281
      %v3283 = vmul.f32 %v3282, %v3282
      %v3284 = vsel %vm378, %v3283, 0.0
      %3285 = vadd.xlane.f32.xlu0 %v3284
      %v3286 = vpop.xlane.xlu0 %3285
      %v3287 = vmul.f32 %v3286, %v382
      %v3288 = vadd.f32 %v3287, 1e-05
      %v3289 = vrsqrt.pop %v3288
      %v3290 = vmul.f32 %v3282, %v3289
      %v3291 = vmul.f32 %v3290, %v414
      %v3292 = vadd.f32 %v3291, %v420
      %3293 = vrot.lane.b32.xlu0 %v3186, 1
      %v3294 = vpop.permute.xlu0 %3293
      %3296 = vst.msk [vmem:[#allocation2] sm:$0xf] %vm426, %v3294
      %v3297 = vld [vmem:[#allocation2] sm:$0xf]
      %3299 = vrot.lane.b32.xlu0 %v3297, 127
      %v3300 = vpop.permute.xlu0 %3299
      %v3301 = vsel %vm304, %v3300, 0
      %3303 = vmatprep.subr.mxu0 0.0
      %3304 = vmatpush1.msra.mxu0 %v3301
      %3305 = vmatprep.subr.mxu0 0.0
      %3306 = vmatpush1.msra.mxu0 0.0
      %3307 = vmatprep.subr.mxu0 0.0
      %3308 = vmatpush1.msra.mxu0 0.0
      %3309 = vmatprep.subr.mxu0 0.0
      %3310 = vmatpush1.msra.mxu0 0.0
      %3311 = vmatprep.subr.mxu0 0.0
      %3312 = vmatpush1.msra.mxu0 0.0
      %3313 = vmatprep.subr.mxu0 0.0
      %3314 = vmatpush1.msra.mxu0 0.0
      %3315 = vmatprep.subr.mxu0 0.0
      %3316 = vmatpush1.msra.mxu0 0.0
      %3317 = vmatprep.subr.mxu0 0.0
      %3318 = vmatpush1.msra.mxu0 0.0
      %3319 = vmatprep.subr.mxu0 0.0
      %3320 = vmatpush1.msra.mxu0 0.0
      %3321 = vmatprep.subr.mxu0 0.0
      %3322 = vmatpush1.msra.mxu0 0.0
      %3323 = vmatprep.subr.mxu0 0.0
      %3324 = vmatpush1.msra.mxu0 0.0
      %3325 = vmatprep.subr.mxu0 0.0
      %3326 = vmatpush1.msra.mxu0 0.0
      %3327 = vmatprep.subr.mxu0 0.0
      %3328 = vmatpush1.msra.mxu0 0.0
      %3329 = vmatprep.subr.mxu0 0.0
      %3330 = vmatpush1.msra.mxu0 0.0
      %3331 = vmatprep.subr.mxu0 0.0
      %3332 = vmatpush1.msra.mxu0 0.0
      %3333 = vmatprep.subr.mxu0 0.0
      %3334 = vmatpush1.msra.mxu0 0.0
      %3335 = vmatprep.subr.mxu0 0.0
      %3336 = vmatpush1.msra.mxu0 0.0
      %3337 = vmatprep.subr.mxu0 0.0
      %3338 = vmatpush1.msra.mxu0 0.0
      %3339 = vmatprep.subr.mxu0 0.0
      %3340 = vmatpush1.msra.mxu0 0.0
      %3341 = vmatprep.subr.mxu0 0.0
      %3342 = vmatpush1.msra.mxu0 0.0
      %3343 = vmatprep.subr.mxu0 0.0
      %3344 = vmatpush1.msra.mxu0 0.0
      %3345 = vmatprep.subr.mxu0 0.0
      %3346 = vmatpush1.msra.mxu0 0.0
      %3347 = vmatprep.subr.mxu0 0.0
      %3348 = vmatpush1.msra.mxu0 0.0
      %3349 = vmatprep.subr.mxu0 0.0
      %3350 = vmatpush1.msra.mxu0 0.0
      %3351 = vmatprep.subr.mxu0 0.0
      %3352 = vmatpush1.msra.mxu0 0.0
      %3353 = vmatprep.subr.mxu0 0.0
      %3354 = vmatpush1.msra.mxu0 0.0
      %3355 = vmatprep.subr.mxu0 0.0
      %3356 = vmatpush1.msra.mxu0 0.0
      %3357 = vmatprep.subr.mxu0 0.0
      %3358 = vmatpush1.msra.mxu0 0.0
      %3359 = vmatprep.subr.mxu0 0.0
      %3360 = vmatpush1.msra.mxu0 0.0
      %3361 = vmatprep.subr.mxu0 0.0
      %3362 = vmatpush1.msra.mxu0 0.0
      %3363 = vmatprep.subr.mxu0 0.0
      %3364 = vmatpush1.msra.mxu0 0.0
      %3365 = vmatprep.subr.mxu0 0.0
      %3366 = vmatpush1.msra.mxu0 0.0
      %3367 = vmatprep.mubr.f32.mxu0 0.0
      %3368 = vmatmul.mubr.f32.gmra.mrb[0].mxu0 %v433
      %v3369 = vpop.f32.mrb[0].mxu0
      %v3370 = vadd.f32 0.0, %v3369
      %v3371 = vpop.f32.mrb[0].mxu0
      %3372 = vdwg.mxu0
      %v3373 = vsel %vm304, %v3297, 0
      %3375 = vmatprep.subr.mxu0 0.0
      %3376 = vmatpush1.msra.mxu0 %v3373
      %3377 = vmatprep.subr.mxu0 0.0
      %3378 = vmatpush1.msra.mxu0 0.0
      %3379 = vmatprep.subr.mxu0 0.0
      %3380 = vmatpush1.msra.mxu0 0.0
      %3381 = vmatprep.subr.mxu0 0.0
      %3382 = vmatpush1.msra.mxu0 0.0
      %3383 = vmatprep.subr.mxu0 0.0
      %3384 = vmatpush1.msra.mxu0 0.0
      %3385 = vmatprep.subr.mxu0 0.0
      %3386 = vmatpush1.msra.mxu0 0.0
      %3387 = vmatprep.subr.mxu0 0.0
      %3388 = vmatpush1.msra.mxu0 0.0
      %3389 = vmatprep.subr.mxu0 0.0
      %3390 = vmatpush1.msra.mxu0 0.0
      %3391 = vmatprep.subr.mxu0 0.0
      %3392 = vmatpush1.msra.mxu0 0.0
      %3393 = vmatprep.subr.mxu0 0.0
      %3394 = vmatpush1.msra.mxu0 0.0
      %3395 = vmatprep.subr.mxu0 0.0
      %3396 = vmatpush1.msra.mxu0 0.0
      %3397 = vmatprep.subr.mxu0 0.0
      %3398 = vmatpush1.msra.mxu0 0.0
      %3399 = vmatprep.subr.mxu0 0.0
      %3400 = vmatpush1.msra.mxu0 0.0
      %3401 = vmatprep.subr.mxu0 0.0
      %3402 = vmatpush1.msra.mxu0 0.0
      %3403 = vmatprep.subr.mxu0 0.0
      %3404 = vmatpush1.msra.mxu0 0.0
      %3405 = vmatprep.subr.mxu0 0.0
      %3406 = vmatpush1.msra.mxu0 0.0
      %3407 = vmatprep.subr.mxu0 0.0
      %3408 = vmatpush1.msra.mxu0 0.0
      %3409 = vmatprep.subr.mxu0 0.0
      %3410 = vmatpush1.msra.mxu0 0.0
      %3411 = vmatprep.subr.mxu0 0.0
      %3412 = vmatpush1.msra.mxu0 0.0
      %3413 = vmatprep.subr.mxu0 0.0
      %3414 = vmatpush1.msra.mxu0 0.0
      %3415 = vmatprep.subr.mxu0 0.0
      %3416 = vmatpush1.msra.mxu0 0.0
      %3417 = vmatprep.subr.mxu0 0.0
      %3418 = vmatpush1.msra.mxu0 0.0
      %3419 = vmatprep.subr.mxu0 0.0
      %3420 = vmatpush1.msra.mxu0 0.0
      %3421 = vmatprep.subr.mxu0 0.0
      %3422 = vmatpush1.msra.mxu0 0.0
      %3423 = vmatprep.subr.mxu0 0.0
      %3424 = vmatpush1.msra.mxu0 0.0
      %3425 = vmatprep.subr.mxu0 0.0
      %3426 = vmatpush1.msra.mxu0 0.0
      %3427 = vmatprep.subr.mxu0 0.0
      %3428 = vmatpush1.msra.mxu0 0.0
      %3429 = vmatprep.subr.mxu0 0.0
      %3430 = vmatpush1.msra.mxu0 0.0
      %3431 = vmatprep.subr.mxu0 0.0
      %3432 = vmatpush1.msra.mxu0 0.0
      %3433 = vmatprep.subr.mxu0 0.0
      %3434 = vmatpush1.msra.mxu0 0.0
      %3435 = vmatprep.subr.mxu0 0.0
      %3436 = vmatpush1.msra.mxu0 0.0
      %3437 = vmatprep.subr.mxu0 0.0
      %3438 = vmatpush1.msra.mxu0 0.0
      %3439 = vmatprep.mubr.f32.mxu0 0.0
      %3440 = vmatmul.mubr.f32.gmra.mrb[0].mxu0 %v508
      %v3441 = vpop.f32.mrb[0].mxu0
      %v3442 = vadd.f32 %v3370, %v3441
      %v3443 = vpop.f32.mrb[0].mxu0
      %3444 = vdwg.mxu0
      %3445 = vrot.lane.b32.xlu0 %v3297, 126
      %v3446 = vpop.permute.xlu0 %3445
      %v3447 = vsel %vm304, %v3446, 0
      %3449 = vmatprep.subr.mxu0 0.0
      %3450 = vmatpush1.msra.mxu0 %v3447
      %3451 = vmatprep.subr.mxu0 0.0
      %3452 = vmatpush1.msra.mxu0 0.0
      %3453 = vmatprep.subr.mxu0 0.0
      %3454 = vmatpush1.msra.mxu0 0.0
      %3455 = vmatprep.subr.mxu0 0.0
      %3456 = vmatpush1.msra.mxu0 0.0
      %3457 = vmatprep.subr.mxu0 0.0
      %3458 = vmatpush1.msra.mxu0 0.0
      %3459 = vmatprep.subr.mxu0 0.0
      %3460 = vmatpush1.msra.mxu0 0.0
      %3461 = vmatprep.subr.mxu0 0.0
      %3462 = vmatpush1.msra.mxu0 0.0
      %3463 = vmatprep.subr.mxu0 0.0
      %3464 = vmatpush1.msra.mxu0 0.0
      %3465 = vmatprep.subr.mxu0 0.0
      %3466 = vmatpush1.msra.mxu0 0.0
      %3467 = vmatprep.subr.mxu0 0.0
      %3468 = vmatpush1.msra.mxu0 0.0
      %3469 = vmatprep.subr.mxu0 0.0
      %3470 = vmatpush1.msra.mxu0 0.0
      %3471 = vmatprep.subr.mxu0 0.0
      %3472 = vmatpush1.msra.mxu0 0.0
      %3473 = vmatprep.subr.mxu0 0.0
      %3474 = vmatpush1.msra.mxu0 0.0
      %3475 = vmatprep.subr.mxu0 0.0
      %3476 = vmatpush1.msra.mxu0 0.0
      %3477 = vmatprep.subr.mxu0 0.0
      %3478 = vmatpush1.msra.mxu0 0.0
      %3479 = vmatprep.subr.mxu0 0.0
      %3480 = vmatpush1.msra.mxu0 0.0
      %3481 = vmatprep.subr.mxu0 0.0
      %3482 = vmatpush1.msra.mxu0 0.0
      %3483 = vmatprep.subr.mxu0 0.0
      %3484 = vmatpush1.msra.mxu0 0.0
      %3485 = vmatprep.subr.mxu0 0.0
      %3486 = vmatpush1.msra.mxu0 0.0
      %3487 = vmatprep.subr.mxu0 0.0
      %3488 = vmatpush1.msra.mxu0 0.0
      %3489 = vmatprep.subr.mxu0 0.0
      %3490 = vmatpush1.msra.mxu0 0.0
      %3491 = vmatprep.subr.mxu0 0.0
      %3492 = vmatpush1.msra.mxu0 0.0
      %3493 = vmatprep.subr.mxu0 0.0
      %3494 = vmatpush1.msra.mxu0 0.0
      %3495 = vmatprep.subr.mxu0 0.0
      %3496 = vmatpush1.msra.mxu0 0.0
      %3497 = vmatprep.subr.mxu0 0.0
      %3498 = vmatpush1.msra.mxu0 0.0
      %3499 = vmatprep.subr.mxu0 0.0
      %3500 = vmatpush1.msra.mxu0 0.0
      %3501 = vmatprep.subr.mxu0 0.0
      %3502 = vmatpush1.msra.mxu0 0.0
      %3503 = vmatprep.subr.mxu0 0.0
      %3504 = vmatpush1.msra.mxu0 0.0
      %3505 = vmatprep.subr.mxu0 0.0
      %3506 = vmatpush1.msra.mxu0 0.0
      %3507 = vmatprep.subr.mxu0 0.0
      %3508 = vmatpush1.msra.mxu0 0.0
      %3509 = vmatprep.subr.mxu0 0.0
      %3510 = vmatpush1.msra.mxu0 0.0
      %3511 = vmatprep.subr.mxu0 0.0
      %3512 = vmatpush1.msra.mxu0 0.0
      %3513 = vmatprep.mubr.f32.mxu0 0.0
      %3514 = vmatmul.mubr.f32.gmra.mrb[0].mxu0 %v585
      %v3515 = vpop.f32.mrb[0].mxu0
      %v3516 = vadd.f32 0.0, %v3515
      %v3517 = vpop.f32.mrb[0].mxu0
      %3518 = vdwg.mxu0
      %v3519 = vadd.f32 %v3442, %v3516
      %v3520 = vadd.f32 %v3519, %v663
      %v3521 = vsel %vm378, %v3292, 0.0
      %3522 = vadd.xlane.f32.xlu0 %v3521
      %v3523 = vpop.xlane.xlu0 %3522
      %v3524 = vmul.f32 %v3523, %v382
      %v3525 = vsel %vm304, %v3524, -inf
      %v3526 = vrot.slane %v3525, 4
      %v3527 = vmax.f32 %v3525, %v3526
      %v3528 = vrot.slane %v3527, 2
      %v3529 = vmax.f32 %v3527, %v3528
      %v3530 = vrot.slane %v3529, 1
      %v3531 = vmax.f32 %v3529, %v3530
      %v3532 = vsub.f32 %v3524, %v3531
      %v3533 = vmul.f32 %v3532, 1.442695
      %v3534 = vpow.pop %v3533
      %v3535 = vsel %vm304, %v3534, 0.0
      %v3536 = vrot.slane %v3535, 4
      %v3537 = vadd.f32 %v3535, %v3536
      %v3538 = vrot.slane %v3537, 2
      %v3539 = vadd.f32 %v3537, %v3538
      %v3540 = vrot.slane %v3539, 1
      %v3541 = vadd.f32 %v3539, %v3540
      %v3542 = vrcp.pop %v3541
      %v3543 = vmul.f32 %v3534, %v3542
      %v3544 = vsel %vm378, %v3520, 0.0
      %3545 = vadd.xlane.f32.xlu0 %v3544
      %v3546 = vpop.xlane.xlu0 %3545
      %v3547 = vmul.f32 %v3546, %v382
      %v3548 = vsel %vm304, %v3547, -inf
      %v3549 = vrot.slane %v3548, 4
      %v3550 = vmax.f32 %v3548, %v3549
      %v3551 = vrot.slane %v3550, 2
      %v3552 = vmax.f32 %v3550, %v3551
      %v3553 = vrot.slane %v3552, 1
      %v3554 = vmax.f32 %v3552, %v3553
      %v3555 = vsub.f32 %v3547, %v3554
      %v3556 = vmul.f32 %v3555, 1.442695
      %v3557 = vpow.pop %v3556
      %v3558 = vsel %vm304, %v3557, 0.0
      %v3559 = vrot.slane %v3558, 4
      %v3560 = vadd.f32 %v3558, %v3559
      %v3561 = vrot.slane %v3560, 2
      %v3562 = vadd.f32 %v3560, %v3561
      %v3563 = vrot.slane %v3562, 1
      %v3564 = vadd.f32 %v3562, %v3563
      %v3565 = vrcp.pop %v3564
      %v3566 = vmul.f32 %v3557, %v3565
      %v3567 = vmul.f32 %v3543, %v3520
      %v3568 = vsel %vm378, %v3567, 0.0
      %v3569 = vrot.slane %v3568, 4
      %v3570 = vadd.f32 %v3568, %v3569
      %v3571 = vrot.slane %v3570, 2
      %v3572 = vadd.f32 %v3570, %v3571
      %v3573 = vrot.slane %v3572, 1
      %v3574 = vadd.f32 %v3572, %v3573
      %v3575 = vmul.f32 %v3566, %v3292
      %v3576 = vsel %vm378, %v3575, 0.0
      %v3577 = vrot.slane %v3576, 4
      %v3578 = vadd.f32 %v3576, %v3577
      %v3579 = vrot.slane %v3578, 2
      %v3580 = vadd.f32 %v3578, %v3579
      %v3581 = vrot.slane %v3580, 1
      %v3582 = vadd.f32 %v3580, %v3581
      %v3583 = vadd.f32 %v3574, %v3582
      %v3584 = vxor.u32 %v3583, 2147483648
      %v3585 = vmul.f32 %v3584, 1.442695
      %v3586 = vpow.pop %v3585
      %v3587 = vadd.f32 %v3586, 1.0
      %v3588 = vrcp.pop %v3587
      %v3589 = vmul.f32 1.0, %v3588
      %v3590 = vmul.f32 %v3186, %v3589
      %s3591 = scalar_lea.vmem %s280, 28
      %3592 = vst.msk [vmem:[%s3591] sm:$0xf] %vm378, %v3590
      %s3593 = smul.u32 8, %s18
      %p3594 = scmp.lt.s32.totalorder %s3593, 15
      %s3595 = scalar_select %p3594, %s3593, 15
      %s3596 = smul.addr %s3595, 4
      %s3597 = scalar_lea.vmem %s7, %s3596
      // Predicated region
      $region49: #{midi_former_forward.3} parent=47 // pred_check
        %p3598 = pneg %p188
      $region50: #{midi_former_forward.3} parent=47 // pred_check_branch
        %3600 = sbr.rel (%p3598) target = $region52
      $region51: #{midi_former_forward.3} parent=47 // pred_region
        %s3601 = smul.u32 8, %s18
      $region52: #{midi_former_forward.3} parent=47 // pred_fallthru
        _
    $region48: #{midi_former_forward.3} parent=5 // pred_fallthru
      _
    %p3602 = scmp.le.s32.totalorder 2, %s13
    // Predicated region
    $region53: #{midi_former_forward.3} parent=5 // pred_check
      %p3603 = pneg %p3602
    $region54: #{midi_former_forward.3} parent=5 // pred_check_branch
      %3605 = sbr.rel (%p3603) target = $region56
    $region55: #{midi_former_forward.3} parent=5 // pred_region
      %s3606 = ssub.s32 %s13, 2
      // Predicated region
      $region57: #{midi_former_forward.3} parent=55 // pred_check
        %p3607 = pneg %p194
      $region58: #{midi_former_forward.3} parent=55 // pred_check_branch
        %3609 = sbr.rel (%p3607) target = $region60
      $region59: #{midi_former_forward.3} parent=55 // pred_region
        %s3610 = smul.u32 8, %s19
        %p3611 = scmp.lt.s32.totalorder %s3610, 15
        %s3612 = scalar_select %p3611, %s3610, 15
        %s3613 = smul.addr %s3612, 4
        %s3614 = scalar_lea.vmem %s7, %s3613
      $region60: #{midi_former_forward.3} parent=55 // pred_fallthru
        _
    $region56: #{midi_former_forward.3} parent=5 // pred_fallthru
      _
  $region6: #{midi_former_forward.3} parent=0 // loop_footer
    %s17 = sadd.s32 1, %s13
  $region7: #{midi_former_forward.3} parent=0 // loop_footer_branch
    %12 = sbr.rel target = $region3
  $region8: #{midi_former_forward.3} parent=0 // loop_exit
    _

// kernel: midi_former_forward.2
$region0: #{midi_former_forward.2}
  #allocation0 [shape = 'u32[]', space=smem, size = 0x4, offset = 0x4, fixed_abs, tag = 'smem constant byte address 0x4 - core index']
  #allocation1 [shape = 'u32[144,128]{1,0:T(1,128)}', space=vmem, size = 0x12000, scoped, tag = 'internal scratch']
  #allocation2 [shape = 'f32[18,96]{1,0:T(8,128)}', space=vmem, size = 0x3000, scoped, tag = 'scratch operand']
  #allocation3 [shape = 'f32[18,32]{1,0:T(8,128)}', space=vmem, size = 0x3000, scoped, tag = 'scratch operand']
  %s0 = inlined_call_operand.vmem [shape: f32[18,256], index: 0, kind: input, shape index: {}]
  %s1 = inlined_call_operand.vmem [shape: f32[18,1], index: 1, kind: input, shape index: {}]
  %s2 = inlined_call_operand.vmem [shape: f32[18,32], index: 2, kind: input, shape index: {}]
  %s3 = inlined_call_operand.vmem [shape: f32[2,9], index: 3, kind: input, shape index: {}]
  %s4 = inlined_call_operand.vmem [shape: f32[256,32], index: 4, kind: input, shape index: {}]
  %s5 = inlined_call_operand.vmem [shape: f32[1,32], index: 5, kind: input, shape index: {}]
  %s6 = inlined_call_operand.vmem [shape: f32[1,32], index: 6, kind: input, shape index: {}]
  %s7 = inlined_call_operand.vmem [shape: f32[1,32], index: 7, kind: input, shape index: {}]
  %s8 = inlined_call_operand.vmem [shape: f32[1,32], index: 8, kind: input, shape index: {}]
  %s9 = inlined_call_operand.vmem [shape: f32[2,32,96], index: 9, kind: input, shape index: {}]
  %s10 = inlined_call_operand.vmem [shape: f32[2,1,96], index: 10, kind: input, shape index: {}]
  %s11 = inlined_call_operand.vmem [shape: f32[2,32,32], index: 11, kind: input, shape index: {}]
  %s12 = inlined_call_operand.vmem [shape: f32[2,1,32], index: 12, kind: input, shape index: {}]
  %s13 = inlined_call_operand.vmem [shape: f32[2,1,32], index: 13, kind: input, shape index: {}]
  %s14 = inlined_call_operand.vmem [shape: f32[2,1,32], index: 14, kind: input, shape index: {}]
  %s15 = inlined_call_operand.vmem [shape: f32[2,32,64], index: 15, kind: input, shape index: {}]
  %s16 = inlined_call_operand.vmem [shape: f32[2,1,64], index: 16, kind: input, shape index: {}]
  %s17 = inlined_call_operand.vmem [shape: f32[2,64,32], index: 17, kind: input, shape index: {}]
  %s18 = inlined_call_operand.vmem [shape: f32[2,1,32], index: 18, kind: input, shape index: {}]
  %s19 = inlined_call_operand.vmem [shape: f32[2,1,32], index: 19, kind: input, shape index: {}]
  %s20 = inlined_call_operand.vmem [shape: f32[2,1,32], index: 20, kind: input, shape index: {}]
  %s21 = inlined_call_operand.vmem [shape: f32[18,32], index: 21, kind: output, shape index: {}]
  %s22 = sld [smem:[#allocation0]]
  $region94: #{midi_former_forward.2} parent=0
    _
  %s24 = ssub.s32 1, %s22
  %s25 = scalar_select 0, %s24, %s22
  // Predicated region
  $region2: #{midi_former_forward.2} parent=0 // pred_check
    _
  $region3: #{midi_former_forward.2} parent=0 // pred_check_branch
    %27 = sbr.rel (0) target = $region5
  $region4: #{midi_former_forward.2} parent=0 // pred_region
    _
  $region5: #{midi_former_forward.2} parent=0 // pred_fallthru
    _
  // Predicated region
  $region6: #{midi_former_forward.2} parent=0 // pred_check
    _
  $region7: #{midi_former_forward.2} parent=0 // pred_check_branch
    %29 = sbr.rel (0) target = $region9
  $region8: #{midi_former_forward.2} parent=0 // pred_region
    _
  $region9: #{midi_former_forward.2} parent=0 // pred_fallthru
    _
  // Predicated region
  $region10: #{midi_former_forward.2} parent=0 // pred_check
    _
  $region11: #{midi_former_forward.2} parent=0 // pred_check_branch
    %31 = sbr.rel (0) target = $region13
  $region12: #{midi_former_forward.2} parent=0 // pred_region
    _
  $region13: #{midi_former_forward.2} parent=0 // pred_fallthru
    _
  // Predicated region
  $region14: #{midi_former_forward.2} parent=0 // pred_check
    _
  $region15: #{midi_former_forward.2} parent=0 // pred_check_branch
    %33 = sbr.rel (0) target = $region17
  $region16: #{midi_former_forward.2} parent=0 // pred_region
    _
  $region17: #{midi_former_forward.2} parent=0 // pred_fallthru
    _
  // Predicated region
  $region18: #{midi_former_forward.2} parent=0 // pred_check
    _
  $region19: #{midi_former_forward.2} parent=0 // pred_check_branch
    %35 = sbr.rel (0) target = $region21
  $region20: #{midi_former_forward.2} parent=0 // pred_region
    _
  $region21: #{midi_former_forward.2} parent=0 // pred_fallthru
    _
  // Predicated region
  $region22: #{midi_former_forward.2} parent=0 // pred_check
    _
  $region23: #{midi_former_forward.2} parent=0 // pred_check_branch
    %37 = sbr.rel (0) target = $region25
  $region24: #{midi_former_forward.2} parent=0 // pred_region
    _
  $region25: #{midi_former_forward.2} parent=0 // pred_fallthru
    _
  // Predicated region
  $region26: #{midi_former_forward.2} parent=0 // pred_check
    _
  $region27: #{midi_former_forward.2} parent=0 // pred_check_branch
    %39 = sbr.rel (0) target = $region29
  $region28: #{midi_former_forward.2} parent=0 // pred_region
    _
  $region29: #{midi_former_forward.2} parent=0 // pred_fallthru
    _
  // Predicated region
  $region30: #{midi_former_forward.2} parent=0 // pred_check
    _
  $region31: #{midi_former_forward.2} parent=0 // pred_check_branch
    %41 = sbr.rel (0) target = $region33
  $region32: #{midi_former_forward.2} parent=0 // pred_region
    _
  $region33: #{midi_former_forward.2} parent=0 // pred_fallthru
    _
  // Predicated region
  $region34: #{midi_former_forward.2} parent=0 // pred_check
    _
  $region35: #{midi_former_forward.2} parent=0 // pred_check_branch
    %43 = sbr.rel (0) target = $region37
  $region36: #{midi_former_forward.2} parent=0 // pred_region
    _
  $region37: #{midi_former_forward.2} parent=0 // pred_fallthru
    _
  // Predicated region
  $region38: #{midi_former_forward.2} parent=0 // pred_check
    _
  $region39: #{midi_former_forward.2} parent=0 // pred_check_branch
    %45 = sbr.rel (0) target = $region41
  $region40: #{midi_former_forward.2} parent=0 // pred_region
    _
  $region41: #{midi_former_forward.2} parent=0 // pred_fallthru
    _
  // Predicated region
  $region42: #{midi_former_forward.2} parent=0 // pred_check
    _
  $region43: #{midi_former_forward.2} parent=0 // pred_check_branch
    %47 = sbr.rel (0) target = $region45
  $region44: #{midi_former_forward.2} parent=0 // pred_region
    _
  $region45: #{midi_former_forward.2} parent=0 // pred_fallthru
    _
  // Predicated region
  $region46: #{midi_former_forward.2} parent=0 // pred_check
    _
  $region47: #{midi_former_forward.2} parent=0 // pred_check_branch
    %49 = sbr.rel (0) target = $region49
  $region48: #{midi_former_forward.2} parent=0 // pred_region
    _
  $region49: #{midi_former_forward.2} parent=0 // pred_fallthru
    _
  // Predicated region
  $region50: #{midi_former_forward.2} parent=0 // pred_check
    _
  $region51: #{midi_former_forward.2} parent=0 // pred_check_branch
    %51 = sbr.rel (0) target = $region53
  $region52: #{midi_former_forward.2} parent=0 // pred_region
    _
  $region53: #{midi_former_forward.2} parent=0 // pred_fallthru
    _
  // Predicated region
  $region54: #{midi_former_forward.2} parent=0 // pred_check
    _
  $region55: #{midi_former_forward.2} parent=0 // pred_check_branch
    %53 = sbr.rel (0) target = $region57
  $region56: #{midi_former_forward.2} parent=0 // pred_region
    _
  $region57: #{midi_former_forward.2} parent=0 // pred_fallthru
    _
  // Predicated region
  $region58: #{midi_former_forward.2} parent=0 // pred_check
    _
  $region59: #{midi_former_forward.2} parent=0 // pred_check_branch
    %55 = sbr.rel (0) target = $region61
  $region60: #{midi_former_forward.2} parent=0 // pred_region
    _
  $region61: #{midi_former_forward.2} parent=0 // pred_fallthru
    _
  // Predicated region
  $region62: #{midi_former_forward.2} parent=0 // pred_check
    _
  $region63: #{midi_former_forward.2} parent=0 // pred_check_branch
    %57 = sbr.rel (0) target = $region65
  $region64: #{midi_former_forward.2} parent=0 // pred_region
    _
  $region65: #{midi_former_forward.2} parent=0 // pred_fallthru
    _
  // Predicated region
  $region66: #{midi_former_forward.2} parent=0 // pred_check
    _
  $region67: #{midi_former_forward.2} parent=0 // pred_check_branch
    %59 = sbr.rel (0) target = $region69
  $region68: #{midi_former_forward.2} parent=0 // pred_region
    _
  $region69: #{midi_former_forward.2} parent=0 // pred_fallthru
    _
  // Predicated region
  $region70: #{midi_former_forward.2} parent=0 // pred_check
    _
  $region71: #{midi_former_forward.2} parent=0 // pred_check_branch
    %61 = sbr.rel (0) target = $region73
  $region72: #{midi_former_forward.2} parent=0 // pred_region
    _
  $region73: #{midi_former_forward.2} parent=0 // pred_fallthru
    _
  // Predicated region
  $region74: #{midi_former_forward.2} parent=0 // pred_check
    _
  $region75: #{midi_former_forward.2} parent=0 // pred_check_branch
    %63 = sbr.rel (0) target = $region77
  $region76: #{midi_former_forward.2} parent=0 // pred_region
    _
  $region77: #{midi_former_forward.2} parent=0 // pred_fallthru
    _
  // Predicated region
  $region78: #{midi_former_forward.2} parent=0 // pred_check
    _
  $region79: #{midi_former_forward.2} parent=0 // pred_check_branch
    %65 = sbr.rel (0) target = $region81
  $region80: #{midi_former_forward.2} parent=0 // pred_region
    _
  $region81: #{midi_former_forward.2} parent=0 // pred_fallthru
    _
  // Predicated region
  $region82: #{midi_former_forward.2} parent=0 // pred_check
    _
  $region83: #{midi_former_forward.2} parent=0 // pred_check_branch
    %67 = sbr.rel (0) target = $region85
  $region84: #{midi_former_forward.2} parent=0 // pred_region
    _
  $region85: #{midi_former_forward.2} parent=0 // pred_fallthru
    _
  %v68 = vld [vmem:[%s0] sm:$0xff]
  %v69 = vld [vmem:[%s0 + $0x8] sm:$0xff]
  %v70 = vld [vmem:[%s0 + $0x10] sm:$0xff]
  %v71 = vld [vmem:[%s0 + $0x18] sm:$0xff]
  %v72 = vld [vmem:[%s0 + $0x20] sm:$0x3]
  %v73 = vld [vmem:[%s0 + $0x28] sm:$0x3]
  %v74 = vld [vmem:[%s4] sm:$0xff]
  %v75 = vld [vmem:[%s4 + $0x8] sm:$0xff]
  %v76 = vld [vmem:[%s4 + $0x10] sm:$0xff]
  %v77 = vld [vmem:[%s4 + $0x18] sm:$0xff]
  %v78 = vld [vmem:[%s4 + $0x20] sm:$0xff]
  %v79 = vld [vmem:[%s4 + $0x28] sm:$0xff]
  %v80 = vld [vmem:[%s4 + $0x30] sm:$0xff]
  %v81 = vld [vmem:[%s4 + $0x38] sm:$0xff]
  %v82 = vld [vmem:[%s4 + $0x40] sm:$0xff]
  %v83 = vld [vmem:[%s4 + $0x48] sm:$0xff]
  %v84 = vld [vmem:[%s4 + $0x50] sm:$0xff]
  %v85 = vld [vmem:[%s4 + $0x58] sm:$0xff]
  %v86 = vld [vmem:[%s4 + $0x60] sm:$0xff]
  %v87 = vld [vmem:[%s4 + $0x68] sm:$0xff]
  %v88 = vld [vmem:[%s4 + $0x70] sm:$0xff]
  %v89 = vld [vmem:[%s4 + $0x78] sm:$0xff]
  %v90 = vld [vmem:[%s4 + $0x80] sm:$0xff]
  %v91 = vld [vmem:[%s4 + $0x88] sm:$0xff]
  %v92 = vld [vmem:[%s4 + $0x90] sm:$0xff]
  %v93 = vld [vmem:[%s4 + $0x98] sm:$0xff]
  %v94 = vld [vmem:[%s4 + $0xa0] sm:$0xff]
  %v95 = vld [vmem:[%s4 + $0xa8] sm:$0xff]
  %v96 = vld [vmem:[%s4 + $0xb0] sm:$0xff]
  %v97 = vld [vmem:[%s4 + $0xb8] sm:$0xff]
  %v98 = vld [vmem:[%s4 + $0xc0] sm:$0xff]
  %v99 = vld [vmem:[%s4 + $0xc8] sm:$0xff]
  %v100 = vld [vmem:[%s4 + $0xd0] sm:$0xff]
  %v101 = vld [vmem:[%s4 + $0xd8] sm:$0xff]
  %v102 = vld [vmem:[%s4 + $0xe0] sm:$0xff]
  %v103 = vld [vmem:[%s4 + $0xe8] sm:$0xff]
  %v104 = vld [vmem:[%s4 + $0xf0] sm:$0xff]
  %v105 = vld [vmem:[%s4 + $0xf8] sm:$0xff]
  %v106 = vld [vmem:[%s5] sm:$0x1]
  %v108 = vlaneseq
  %v109 = vshrl.u32 %v108, 7
  %v110 = vsub.s32 0, %v109
  %v111 = vrot.slane %v106, %v110
  %113 = vmatprep.subr.mxu0 0.0
  %114 = vmatpush1.msra.mxu0 %v74
  %115 = vmatprep.subr.mxu0 0.0
  %116 = vmatpush1.msra.mxu0 %v75
  %117 = vmatprep.subr.mxu0 0.0
  %118 = vmatpush1.msra.mxu0 %v76
  %119 = vmatprep.subr.mxu0 0.0
  %120 = vmatpush1.msra.mxu0 %v77
  %121 = vmatprep.subr.mxu0 0.0
  %122 = vmatpush1.msra.mxu0 %v78
  %123 = vmatprep.subr.mxu0 0.0
  %124 = vmatpush1.msra.mxu0 %v79
  %125 = vmatprep.subr.mxu0 0.0
  %126 = vmatpush1.msra.mxu0 %v80
  %127 = vmatprep.subr.mxu0 0.0
  %128 = vmatpush1.msra.mxu0 %v81
  %129 = vmatprep.subr.mxu0 0.0
  %130 = vmatpush1.msra.mxu0 %v82
  %131 = vmatprep.subr.mxu0 0.0
  %132 = vmatpush1.msra.mxu0 %v83
  %133 = vmatprep.subr.mxu0 0.0
  %134 = vmatpush1.msra.mxu0 %v84
  %135 = vmatprep.subr.mxu0 0.0
  %136 = vmatpush1.msra.mxu0 %v85
  %137 = vmatprep.subr.mxu0 0.0
  %138 = vmatpush1.msra.mxu0 %v86
  %139 = vmatprep.subr.mxu0 0.0
  %140 = vmatpush1.msra.mxu0 %v87
  %141 = vmatprep.subr.mxu0 0.0
  %142 = vmatpush1.msra.mxu0 %v88
  %143 = vmatprep.subr.mxu0 0.0
  %144 = vmatpush1.msra.mxu0 %v89
  %145 = vmatprep.subr.mxu0 0.0
  %146 = vmatpush1.msra.mxu0 %v90
  %147 = vmatprep.subr.mxu0 0.0
  %148 = vmatpush1.msra.mxu0 %v91
  %149 = vmatprep.subr.mxu0 0.0
  %150 = vmatpush1.msra.mxu0 %v92
  %151 = vmatprep.subr.mxu0 0.0
  %152 = vmatpush1.msra.mxu0 %v93
  %153 = vmatprep.subr.mxu0 0.0
  %154 = vmatpush1.msra.mxu0 %v94
  %155 = vmatprep.subr.mxu0 0.0
  %156 = vmatpush1.msra.mxu0 %v95
  %157 = vmatprep.subr.mxu0 0.0
  %158 = vmatpush1.msra.mxu0 %v96
  %159 = vmatprep.subr.mxu0 0.0
  %160 = vmatpush1.msra.mxu0 %v97
  %161 = vmatprep.subr.mxu0 0.0
  %162 = vmatpush1.msra.mxu0 %v98
  %163 = vmatprep.subr.mxu0 0.0
  %164 = vmatpush1.msra.mxu0 %v99
  %165 = vmatprep.subr.mxu0 0.0
  %166 = vmatpush1.msra.mxu0 %v100
  %167 = vmatprep.subr.mxu0 0.0
  %168 = vmatpush1.msra.mxu0 %v101
  %169 = vmatprep.subr.mxu0 0.0
  %170 = vmatpush1.msra.mxu0 %v102
  %171 = vmatprep.subr.mxu0 0.0
  %172 = vmatpush1.msra.mxu0 %v103
  %173 = vmatprep.subr.mxu0 0.0
  %174 = vmatpush1.msra.mxu0 %v104
  %175 = vmatprep.subr.mxu0 0.0
  %176 = vmatpush1.msra.mxu0 %v105
  %177 = vmatprep.mubr.f32.mxu0 %v69
  %178 = vmatmul.mubr.f32.gmra.mrb[0].mxu0 %v68
  %v179 = vpop.f32.mrb[0].mxu0
  %v180 = vadd.f32 %v111, %v179
  %v181 = vpop.f32.mrb[0].mxu0
  %182 = vmatprep.mubr.f32.mxu0 %v71
  %183 = vmatmul.mubr.f32.gmra.mrb[0].mxu0 %v70
  %v184 = vpop.f32.mrb[0].mxu0
  %v185 = vadd.f32 %v111, %v184
  %v186 = vpop.f32.mrb[0].mxu0
  %187 = vmatprep.mubr.f32.mxu0 %v73
  %188 = vmatmul.mubr.f32.gmra.mrb[0].mxu0 %v72
  %v189 = vpop.f32.mrb[0].mxu0
  %v190 = vadd.f32 %v111, %v189
  %v191 = vpop.f32.mrb[0].mxu0
  %192 = vdwg.mxu0
  %v193 = vld [vmem:[%s1] sm:$0xff]
  %v194 = vld [vmem:[%s1 + $0x8] sm:$0xff]
  %v195 = vld [vmem:[%s1 + $0x10] sm:$0x3]
  %v196 = vsub.f32 1.0, %v193
  %v197 = vsub.f32 1.0, %v194
  %v198 = vsub.f32 1.0, %v195
  %200 = vset.pattern.permute.xlu0 0
  %201 = vperm.xlu0 %200, %v196
  %v202 = vpop.permute.xlu0 %201
  %205 = vset.pattern.permute.xlu0 0
  %206 = vperm.xlu0 %205, %v197
  %v207 = vpop.permute.xlu0 %206
  %210 = vset.pattern.permute.xlu0 0
  %211 = vperm.xlu0 %210, %v198
  %v212 = vpop.permute.xlu0 %211
  %v214 = vmul.f32 %v180, %v202
  %v215 = vmul.f32 %v185, %v207
  %v216 = vmul.f32 %v190, %v212
  %v217 = vld [vmem:[%s6] sm:$0x1]
  %v219 = vlaneseq
  %v220 = vshrl.u32 %v219, 7
  %v221 = vsub.s32 0, %v220
  %v222 = vrot.slane %v217, %v221
  %225 = vset.pattern.permute.xlu0 0
  %226 = vperm.xlu0 %225, %v193
  %v227 = vpop.permute.xlu0 %226
  %230 = vset.pattern.permute.xlu0 0
  %231 = vperm.xlu0 %230, %v194
  %v232 = vpop.permute.xlu0 %231
  %235 = vset.pattern.permute.xlu0 0
  %236 = vperm.xlu0 %235, %v195
  %v237 = vpop.permute.xlu0 %236
  %v239 = vmul.f32 %v222, %v227
  %v240 = vmul.f32 %v222, %v232
  %v241 = vmul.f32 %v222, %v237
  %v242 = vadd.f32 %v214, %v239
  %v243 = vadd.f32 %v215, %v240
  %v244 = vadd.f32 %v216, %v241
  %v245 = vld [vmem:[%s2] sm:$0xff]
  %v246 = vld [vmem:[%s2 + $0x8] sm:$0xff]
  %v247 = vld [vmem:[%s2 + $0x10] sm:$0x3]
  %v248 = vadd.f32 %v242, %v245
  %v249 = vadd.f32 %v243, %v246
  %v250 = vadd.f32 %v244, %v247
  %v251 = vld [vmem:[%s7] sm:$0x1]
  %v252 = vld [vmem:[%s8] sm:$0x1]
  %vm253 = vcmask 261120
  %v254 = vsel %vm253, %v248, 0.0
  %255 = vadd.xlane.f32.xlu0 %v254
  %v256 = vpop.xlane.xlu0 %255
  %v257 = vsel %vm253, %v249, 0.0
  %258 = vadd.xlane.f32.xlu0 %v257
  %v259 = vpop.xlane.xlu0 %258
  %vm260 = vcmask 254976
  %v261 = vsel %vm260, %v250, 0.0
  %262 = vadd.xlane.f32.xlu0 %v261
  %v263 = vpop.xlane.xlu0 %262
  %v264 = vrcp.pop 32.0
  %v265 = vmul.f32 %v256, %v264
  %v266 = vmul.f32 %v259, %v264
  %v267 = vmul.f32 %v263, %v264
  %v268 = vsub.f32 %v248, %v265
  %v269 = vsub.f32 %v249, %v266
  %v270 = vsub.f32 %v250, %v267
  %v271 = vmul.f32 %v268, %v268
  %v272 = vmul.f32 %v269, %v269
  %v273 = vmul.f32 %v270, %v270
  %v274 = vsel %vm253, %v271, 0.0
  %275 = vadd.xlane.f32.xlu0 %v274
  %v276 = vpop.xlane.xlu0 %275
  %v277 = vsel %vm253, %v272, 0.0
  %278 = vadd.xlane.f32.xlu0 %v277
  %v279 = vpop.xlane.xlu0 %278
  %v280 = vsel %vm260, %v273, 0.0
  %281 = vadd.xlane.f32.xlu0 %v280
  %v282 = vpop.xlane.xlu0 %281
  %v283 = vmul.f32 %v276, %v264
  %v284 = vmul.f32 %v279, %v264
  %v285 = vmul.f32 %v282, %v264
  %v286 = vadd.f32 %v283, 1e-12
  %v287 = vadd.f32 %v284, 1e-12
  %v288 = vadd.f32 %v285, 1e-12
  %v289 = vrsqrt.pop %v286
  %v290 = vrsqrt.pop %v287
  %v291 = vrsqrt.pop %v288
  %v292 = vmul.f32 %v268, %v289
  %v293 = vmul.f32 %v269, %v290
  %v294 = vmul.f32 %v270, %v291
  %v296 = vlaneseq
  %v297 = vshrl.u32 %v296, 7
  %v298 = vsub.s32 0, %v297
  %v299 = vrot.slane %v251, %v298
  %v301 = vmul.f32 %v292, %v299
  %v302 = vmul.f32 %v293, %v299
  %v303 = vmul.f32 %v294, %v299
  %v305 = vlaneseq
  %v306 = vshrl.u32 %v305, 7
  %v307 = vsub.s32 0, %v306
  %v308 = vrot.slane %v252, %v307
  %v310 = vadd.f32 %v301, %v308
  %v311 = vadd.f32 %v302, %v308
  %v312 = vadd.f32 %v303, %v308
  %v313 = vld [vmem:[%s9] sm:$0xff]
  %v314 = vld [vmem:[%s9 + $0x8] sm:$0xff]
  %v315 = vld [vmem:[%s9 + $0x10] sm:$0xff]
  %v316 = vld [vmem:[%s9 + $0x18] sm:$0xff]
  %v317 = vld [vmem:[%s10] sm:$0x1]
  %v319 = vlaneseq
  %v320 = vshrl.u32 %v319, 7
  %v321 = vsub.s32 0, %v320
  %v322 = vrot.slane %v317, %v321
  %v325 = vsel %vm253, %v310, 0
  %v328 = vsel %vm253, %v311, 0
  %v331 = vsel %vm253, %v312, 0
  %333 = vmatprep.subr.mxu0 0.0
  %334 = vmatpush1.msra.mxu0 %v313
  %335 = vmatprep.subr.mxu0 0.0
  %336 = vmatpush1.msra.mxu0 %v314
  %337 = vmatprep.subr.mxu0 0.0
  %338 = vmatpush1.msra.mxu0 %v315
  %339 = vmatprep.subr.mxu0 0.0
  %340 = vmatpush1.msra.mxu0 %v316
  %341 = vmatprep.subr.mxu0 0.0
  %342 = vmatpush1.msra.mxu0 0.0
  %343 = vmatprep.subr.mxu0 0.0
  %344 = vmatpush1.msra.mxu0 0.0
  %345 = vmatprep.subr.mxu0 0.0
  %346 = vmatpush1.msra.mxu0 0.0
  %347 = vmatprep.subr.mxu0 0.0
  %348 = vmatpush1.msra.mxu0 0.0
  %349 = vmatprep.subr.mxu0 0.0
  %350 = vmatpush1.msra.mxu0 0.0
  %351 = vmatprep.subr.mxu0 0.0
  %352 = vmatpush1.msra.mxu0 0.0
  %353 = vmatprep.subr.mxu0 0.0
  %354 = vmatpush1.msra.mxu0 0.0
  %355 = vmatprep.subr.mxu0 0.0
  %356 = vmatpush1.msra.mxu0 0.0
  %357 = vmatprep.subr.mxu0 0.0
  %358 = vmatpush1.msra.mxu0 0.0
  %359 = vmatprep.subr.mxu0 0.0
  %360 = vmatpush1.msra.mxu0 0.0
  %361 = vmatprep.subr.mxu0 0.0
  %362 = vmatpush1.msra.mxu0 0.0
  %363 = vmatprep.subr.mxu0 0.0
  %364 = vmatpush1.msra.mxu0 0.0
  %365 = vmatprep.subr.mxu0 0.0
  %366 = vmatpush1.msra.mxu0 0.0
  %367 = vmatprep.subr.mxu0 0.0
  %368 = vmatpush1.msra.mxu0 0.0
  %369 = vmatprep.subr.mxu0 0.0
  %370 = vmatpush1.msra.mxu0 0.0
  %371 = vmatprep.subr.mxu0 0.0
  %372 = vmatpush1.msra.mxu0 0.0
  %373 = vmatprep.subr.mxu0 0.0
  %374 = vmatpush1.msra.mxu0 0.0
  %375 = vmatprep.subr.mxu0 0.0
  %376 = vmatpush1.msra.mxu0 0.0
  %377 = vmatprep.subr.mxu0 0.0
  %378 = vmatpush1.msra.mxu0 0.0
  %379 = vmatprep.subr.mxu0 0.0
  %380 = vmatpush1.msra.mxu0 0.0
  %381 = vmatprep.subr.mxu0 0.0
  %382 = vmatpush1.msra.mxu0 0.0
  %383 = vmatprep.subr.mxu0 0.0
  %384 = vmatpush1.msra.mxu0 0.0
  %385 = vmatprep.subr.mxu0 0.0
  %386 = vmatpush1.msra.mxu0 0.0
  %387 = vmatprep.subr.mxu0 0.0
  %388 = vmatpush1.msra.mxu0 0.0
  %389 = vmatprep.subr.mxu0 0.0
  %390 = vmatpush1.msra.mxu0 0.0
  %391 = vmatprep.subr.mxu0 0.0
  %392 = vmatpush1.msra.mxu0 0.0
  %393 = vmatprep.subr.mxu0 0.0
  %394 = vmatpush1.msra.mxu0 0.0
  %395 = vmatprep.subr.mxu0 0.0
  %396 = vmatpush1.msra.mxu0 0.0
  %397 = vmatprep.mubr.f32.mxu0 0.0
  %398 = vmatmul.mubr.f32.gmra.mrb[0].mxu0 %v325
  %v399 = vpop.f32.mrb[0].mxu0
  %v400 = vadd.f32 %v322, %v399
  %v401 = vpop.f32.mrb[0].mxu0
  %402 = vmatprep.mubr.f32.mxu0 0.0
  %403 = vmatmul.mubr.f32.gmra.mrb[0].mxu0 %v328
  %v404 = vpop.f32.mrb[0].mxu0
  %v405 = vadd.f32 %v322, %v404
  %v406 = vpop.f32.mrb[0].mxu0
  %407 = vmatprep.mubr.f32.mxu0 0.0
  %408 = vmatmul.mubr.f32.gmra.mrb[0].mxu0 %v331
  %v409 = vpop.f32.mrb[0].mxu0
  %v410 = vadd.f32 %v322, %v409
  %v411 = vpop.f32.mrb[0].mxu0
  %412 = vdwg.mxu0
  %vm413 = vcmask 785408
  %414 = vst.msk [vmem:[#allocation2] sm:$0xff] %vm413, %v400
  %415 = vst.msk [vmem:[#allocation2 + $0x8] sm:$0xff] %vm413, %v405
  %vm416 = vcmask 779264
  %417 = vst.msk [vmem:[#allocation2 + $0x10] sm:$0x3] %vm416, %v410
  %v418 = vld [vmem:[%s3] sm:$0x1]
  %v419 = vld [vmem:[#allocation2] sm:$0xff]
  %v420 = vld [vmem:[#allocation2 + $0x8] sm:$0x1]
  %423 = vrot.lane.b32.xlu0 %v419, 96
  %v424 = vpop.permute.xlu0 %423
  %425 = vrot.lane.b32.xlu0 %v420, 96
  %v426 = vpop.permute.xlu0 %425
  %vm427 = vcmask 64512
  %v428 = vsel %vm427, %v419, 0
  %v430 = vsel %vm427, %v420, 0
  %v432 = vsel %vm427, %v424, 0
  %v434 = vsel %vm427, %v426, 0
  %436 = vmatprep.subr.mxu0 0.0
  %437 = vmatpush1.xpose.msra.mxu0 %v432
  %438 = vmatprep.subr.mxu0 0.0
  %439 = vmatpush1.xpose.msra.mxu0 %v434
  %440 = vmatprep.subr.mxu0 0.0
  %441 = vmatpush1.xpose.msra.mxu0 0.0
  %442 = vmatprep.subr.mxu0 0.0
  %443 = vmatpush1.xpose.msra.mxu0 0.0
  %444 = vmatprep.subr.mxu0 0.0
  %445 = vmatpush1.xpose.msra.mxu0 0.0
  %446 = vmatprep.subr.mxu0 0.0
  %447 = vmatpush1.xpose.msra.mxu0 0.0
  %448 = vmatprep.subr.mxu0 0.0
  %449 = vmatpush1.xpose.msra.mxu0 0.0
  %450 = vmatprep.subr.mxu0 0.0
  %451 = vmatpush1.xpose.msra.mxu0 0.0
  %452 = vmatprep.subr.mxu0 0.0
  %453 = vmatpush1.xpose.msra.mxu0 0.0
  %454 = vmatprep.subr.mxu0 0.0
  %455 = vmatpush1.xpose.msra.mxu0 0.0
  %456 = vmatprep.subr.mxu0 0.0
  %457 = vmatpush1.xpose.msra.mxu0 0.0
  %458 = vmatprep.subr.mxu0 0.0
  %459 = vmatpush1.xpose.msra.mxu0 0.0
  %460 = vmatprep.subr.mxu0 0.0
  %461 = vmatpush1.xpose.msra.mxu0 0.0
  %462 = vmatprep.subr.mxu0 0.0
  %463 = vmatpush1.xpose.msra.mxu0 0.0
  %464 = vmatprep.subr.mxu0 0.0
  %465 = vmatpush1.xpose.msra.mxu0 0.0
  %466 = vmatprep.subr.mxu0 0.0
  %467 = vmatpush1.xpose.msra.mxu0 0.0
  %468 = vmatprep.subr.mxu0 0.0
  %469 = vmatpush1.xpose.msra.mxu0 0.0
  %470 = vmatprep.subr.mxu0 0.0
  %471 = vmatpush1.xpose.msra.mxu0 0.0
  %472 = vmatprep.subr.mxu0 0.0
  %473 = vmatpush1.xpose.msra.mxu0 0.0
  %474 = vmatprep.subr.mxu0 0.0
  %475 = vmatpush1.xpose.msra.mxu0 0.0
  %476 = vmatprep.subr.mxu0 0.0
  %477 = vmatpush1.xpose.msra.mxu0 0.0
  %478 = vmatprep.subr.mxu0 0.0
  %479 = vmatpush1.xpose.msra.mxu0 0.0
  %480 = vmatprep.subr.mxu0 0.0
  %481 = vmatpush1.xpose.msra.mxu0 0.0
  %482 = vmatprep.subr.mxu0 0.0
  %483 = vmatpush1.xpose.msra.mxu0 0.0
  %484 = vmatprep.subr.mxu0 0.0
  %485 = vmatpush1.xpose.msra.mxu0 0.0
  %486 = vmatprep.subr.mxu0 0.0
  %487 = vmatpush1.xpose.msra.mxu0 0.0
  %488 = vmatprep.subr.mxu0 0.0
  %489 = vmatpush1.xpose.msra.mxu0 0.0
  %490 = vmatprep.subr.mxu0 0.0
  %491 = vmatpush1.xpose.msra.mxu0 0.0
  %492 = vmatprep.subr.mxu0 0.0
  %493 = vmatpush1.xpose.msra.mxu0 0.0
  %494 = vmatprep.subr.mxu0 0.0
  %495 = vmatpush1.xpose.msra.mxu0 0.0
  %496 = vmatprep.subr.mxu0 0.0
  %497 = vmatpush1.xpose.msra.mxu0 0.0
  %498 = vmatprep.subr.mxu0 0.0
  %499 = vmatpush1.xpose.msra.mxu0 0.0
  %500 = vmatprep.mubr.f32.mxu0 0.0
  %501 = vmatmul.mubr.f32.gmra.mrb[0].mxu0 %v428
  %v502 = vpop.f32.mrb[0].mxu0
  %v503 = vadd.f32 0.0, %v502
  %v504 = vpop.f32.mrb[0].mxu0
  %505 = vmatprep.mubr.f32.mxu0 0.0
  %506 = vmatmul.mubr.f32.gmra.mrb[0].mxu0 %v430
  %v507 = vpop.f32.mrb[0].mxu0
  %v508 = vadd.f32 0.0, %v507
  %v509 = vpop.f32.mrb[0].mxu0
  %510 = vdwg.mxu0
  %v511 = vmul.f32 %v503, 0.35355338
  %v512 = vmul.f32 %v508, 0.35355338
  %v513 = vlaneseq
  %v514 = vshrl.u32 %v513, 7
  %v515 = vsub.s32 0, %v514
  %v516 = vrot.slane %v418, %v515
  %v517 = vadd.f32 %v511, %v516
  %v518 = vadd.f32 %v512, %v516
  %vm519 = vcmask 72704
  %v520 = vsel %vm519, %v517, -inf
  %521 = vmax.xlane.f32.xlu0 %v520
  %v522 = vpop.xlane.xlu0 %521
  %vm523 = vcmask 65536
  %v524 = vsel %vm523, %v518, -inf
  %525 = vmax.xlane.f32.xlu0 %v524
  %v526 = vpop.xlane.xlu0 %525
  %v527 = vsub.f32 %v517, %v522
  %v528 = vsub.f32 %v518, %v526
  %v529 = vmul.f32 %v527, 1.442695
  %v530 = vpow.pop %v529
  %v531 = vmul.f32 %v528, 1.442695
  %v532 = vpow.pop %v531
  %v533 = vsel %vm519, %v530, 0.0
  %534 = vadd.xlane.f32.xlu0 %v533
  %v535 = vpop.xlane.xlu0 %534
  %v536 = vsel %vm523, %v532, 0.0
  %537 = vadd.xlane.f32.xlu0 %v536
  %v538 = vpop.xlane.xlu0 %537
  %v539 = vrcp.pop %v535
  %v540 = vrcp.pop %v538
  %v541 = vmul.f32 %v530, %v539
  %v542 = vmul.f32 %v532, %v540
  %543 = vrot.lane.b32.xlu0 %v419, 64
  %v544 = vpop.permute.xlu0 %543
  %545 = vrot.lane.b32.xlu0 %v420, 64
  %v546 = vpop.permute.xlu0 %545
  %v549 = vsel %vm519, %v541, 0
  %v552 = vsel %vm519, %v542, 0
  %vm554 = vcmask 1040384
  %v555 = vsel %vm554, %v546, 0
  %557 = vmatprep.subr.mxu0 0.0
  %558 = vmatpush1.msra.mxu0 %v544
  %559 = vmatprep.subr.mxu0 0.0
  %560 = vmatpush1.msra.mxu0 %v555
  %561 = vmatprep.subr.mxu0 0.0
  %562 = vmatpush1.msra.mxu0 0.0
  %563 = vmatprep.subr.mxu0 0.0
  %564 = vmatpush1.msra.mxu0 0.0
  %565 = vmatprep.subr.mxu0 0.0
  %566 = vmatpush1.msra.mxu0 0.0
  %567 = vmatprep.subr.mxu0 0.0
  %568 = vmatpush1.msra.mxu0 0.0
  %569 = vmatprep.subr.mxu0 0.0
  %570 = vmatpush1.msra.mxu0 0.0
  %571 = vmatprep.subr.mxu0 0.0
  %572 = vmatpush1.msra.mxu0 0.0
  %573 = vmatprep.subr.mxu0 0.0
  %574 = vmatpush1.msra.mxu0 0.0
  %575 = vmatprep.subr.mxu0 0.0
  %576 = vmatpush1.msra.mxu0 0.0
  %577 = vmatprep.subr.mxu0 0.0
  %578 = vmatpush1.msra.mxu0 0.0
  %579 = vmatprep.subr.mxu0 0.0
  %580 = vmatpush1.msra.mxu0 0.0
  %581 = vmatprep.subr.mxu0 0.0
  %582 = vmatpush1.msra.mxu0 0.0
  %583 = vmatprep.subr.mxu0 0.0
  %584 = vmatpush1.msra.mxu0 0.0
  %585 = vmatprep.subr.mxu0 0.0
  %586 = vmatpush1.msra.mxu0 0.0
  %587 = vmatprep.subr.mxu0 0.0
  %588 = vmatpush1.msra.mxu0 0.0
  %589 = vmatprep.subr.mxu0 0.0
  %590 = vmatpush1.msra.mxu0 0.0
  %591 = vmatprep.subr.mxu0 0.0
  %592 = vmatpush1.msra.mxu0 0.0
  %593 = vmatprep.subr.mxu0 0.0
  %594 = vmatpush1.msra.mxu0 0.0
  %595 = vmatprep.subr.mxu0 0.0
  %596 = vmatpush1.msra.mxu0 0.0
  %597 = vmatprep.subr.mxu0 0.0
  %598 = vmatpush1.msra.mxu0 0.0
  %599 = vmatprep.subr.mxu0 0.0
  %600 = vmatpush1.msra.mxu0 0.0
  %601 = vmatprep.subr.mxu0 0.0
  %602 = vmatpush1.msra.mxu0 0.0
  %603 = vmatprep.subr.mxu0 0.0
  %604 = vmatpush1.msra.mxu0 0.0
  %605 = vmatprep.subr.mxu0 0.0
  %606 = vmatpush1.msra.mxu0 0.0
  %607 = vmatprep.subr.mxu0 0.0
  %608 = vmatpush1.msra.mxu0 0.0
  %609 = vmatprep.subr.mxu0 0.0
  %610 = vmatpush1.msra.mxu0 0.0
  %611 = vmatprep.subr.mxu0 0.0
  %612 = vmatpush1.msra.mxu0 0.0
  %613 = vmatprep.subr.mxu0 0.0
  %614 = vmatpush1.msra.mxu0 0.0
  %615 = vmatprep.subr.mxu0 0.0
  %616 = vmatpush1.msra.mxu0 0.0
  %617 = vmatprep.subr.mxu0 0.0
  %618 = vmatpush1.msra.mxu0 0.0
  %619 = vmatprep.subr.mxu0 0.0
  %620 = vmatpush1.msra.mxu0 0.0
  %621 = vmatprep.mubr.f32.mxu0 0.0
  %622 = vmatmul.mubr.f32.gmra.mrb[0].mxu0 %v549
  %v623 = vpop.f32.mrb[0].mxu0
  %v624 = vadd.f32 0.0, %v623
  %v625 = vpop.f32.mrb[0].mxu0
  %626 = vmatprep.mubr.f32.mxu0 0.0
  %627 = vmatmul.mubr.f32.gmra.mrb[0].mxu0 %v552
  %v628 = vpop.f32.mrb[0].mxu0
  %v629 = vadd.f32 0.0, %v628
  %v630 = vpop.f32.mrb[0].mxu0
  %631 = vdwg.mxu0
  %632 = vst.msk [vmem:[#allocation3] sm:$0xff] %vm427, %v624
  %vm633 = vcmask 57344
  %634 = vst.msk [vmem:[#allocation3 + $0x8] sm:$0x1] %vm633, %v629
  %v635 = vld [vmem:[#allocation2] sm:$0xff]
  %v636 = vld [vmem:[#allocation2 + $0x8] sm:$0x1]
  %639 = vrot.lane.b32.xlu0 %v635, 120
  %v640 = vpop.permute.xlu0 %639
  %641 = vrot.lane.b32.xlu0 %v636, 120
  %v642 = vpop.permute.xlu0 %641
  %643 = vrot.lane.b32.xlu0 %v635, 88
  %v644 = vpop.permute.xlu0 %643
  %645 = vrot.lane.b32.xlu0 %v636, 88
  %v646 = vpop.permute.xlu0 %645
  %v647 = vsel %vm427, %v640, 0
  %v649 = vsel %vm427, %v642, 0
  %v651 = vsel %vm427, %v644, 0
  %v653 = vsel %vm427, %v646, 0
  %655 = vmatprep.subr.mxu0 0.0
  %656 = vmatpush1.xpose.msra.mxu0 %v651
  %657 = vmatprep.subr.mxu0 0.0
  %658 = vmatpush1.xpose.msra.mxu0 %v653
  %659 = vmatprep.subr.mxu0 0.0
  %660 = vmatpush1.xpose.msra.mxu0 0.0
  %661 = vmatprep.subr.mxu0 0.0
  %662 = vmatpush1.xpose.msra.mxu0 0.0
  %663 = vmatprep.subr.mxu0 0.0
  %664 = vmatpush1.xpose.msra.mxu0 0.0
  %665 = vmatprep.subr.mxu0 0.0
  %666 = vmatpush1.xpose.msra.mxu0 0.0
  %667 = vmatprep.subr.mxu0 0.0
  %668 = vmatpush1.xpose.msra.mxu0 0.0
  %669 = vmatprep.subr.mxu0 0.0
  %670 = vmatpush1.xpose.msra.mxu0 0.0
  %671 = vmatprep.subr.mxu0 0.0
  %672 = vmatpush1.xpose.msra.mxu0 0.0
  %673 = vmatprep.subr.mxu0 0.0
  %674 = vmatpush1.xpose.msra.mxu0 0.0
  %675 = vmatprep.subr.mxu0 0.0
  %676 = vmatpush1.xpose.msra.mxu0 0.0
  %677 = vmatprep.subr.mxu0 0.0
  %678 = vmatpush1.xpose.msra.mxu0 0.0
  %679 = vmatprep.subr.mxu0 0.0
  %680 = vmatpush1.xpose.msra.mxu0 0.0
  %681 = vmatprep.subr.mxu0 0.0
  %682 = vmatpush1.xpose.msra.mxu0 0.0
  %683 = vmatprep.subr.mxu0 0.0
  %684 = vmatpush1.xpose.msra.mxu0 0.0
  %685 = vmatprep.subr.mxu0 0.0
  %686 = vmatpush1.xpose.msra.mxu0 0.0
  %687 = vmatprep.subr.mxu0 0.0
  %688 = vmatpush1.xpose.msra.mxu0 0.0
  %689 = vmatprep.subr.mxu0 0.0
  %690 = vmatpush1.xpose.msra.mxu0 0.0
  %691 = vmatprep.subr.mxu0 0.0
  %692 = vmatpush1.xpose.msra.mxu0 0.0
  %693 = vmatprep.subr.mxu0 0.0
  %694 = vmatpush1.xpose.msra.mxu0 0.0
  %695 = vmatprep.subr.mxu0 0.0
  %696 = vmatpush1.xpose.msra.mxu0 0.0
  %697 = vmatprep.subr.mxu0 0.0
  %698 = vmatpush1.xpose.msra.mxu0 0.0
  %699 = vmatprep.subr.mxu0 0.0
  %700 = vmatpush1.xpose.msra.mxu0 0.0
  %701 = vmatprep.subr.mxu0 0.0
  %702 = vmatpush1.xpose.msra.mxu0 0.0
  %703 = vmatprep.subr.mxu0 0.0
  %704 = vmatpush1.xpose.msra.mxu0 0.0
  %705 = vmatprep.subr.mxu0 0.0
  %706 = vmatpush1.xpose.msra.mxu0 0.0
  %707 = vmatprep.subr.mxu0 0.0
  %708 = vmatpush1.xpose.msra.mxu0 0.0
  %709 = vmatprep.subr.mxu0 0.0
  %710 = vmatpush1.xpose.msra.mxu0 0.0
  %711 = vmatprep.subr.mxu0 0.0
  %712 = vmatpush1.xpose.msra.mxu0 0.0
  %713 = vmatprep.subr.mxu0 0.0
  %714 = vmatpush1.xpose.msra.mxu0 0.0
  %715 = vmatprep.subr.mxu0 0.0
  %716 = vmatpush1.xpose.msra.mxu0 0.0
  %717 = vmatprep.subr.mxu0 0.0
  %718 = vmatpush1.xpose.msra.mxu0 0.0
  %719 = vmatprep.mubr.f32.mxu0 0.0
  %720 = vmatmul.mubr.f32.gmra.mrb[0].mxu0 %v647
  %v721 = vpop.f32.mrb[0].mxu0
  %v722 = vadd.f32 0.0, %v721
  %v723 = vpop.f32.mrb[0].mxu0
  %724 = vmatprep.mubr.f32.mxu0 0.0
  %725 = vmatmul.mubr.f32.gmra.mrb[0].mxu0 %v649
  %v726 = vpop.f32.mrb[0].mxu0
  %v727 = vadd.f32 0.0, %v726
  %v728 = vpop.f32.mrb[0].mxu0
  %729 = vdwg.mxu0
  %v730 = vmul.f32 %v722, 0.35355338
  %v731 = vmul.f32 %v727, 0.35355338
  %v732 = vadd.f32 %v730, %v516
  %v733 = vadd.f32 %v731, %v516
  %v734 = vsel %vm519, %v732, -inf
  %735 = vmax.xlane.f32.xlu0 %v734
  %v736 = vpop.xlane.xlu0 %735
  %v737 = vsel %vm523, %v733, -inf
  %738 = vmax.xlane.f32.xlu0 %v737
  %v739 = vpop.xlane.xlu0 %738
  %v740 = vsub.f32 %v732, %v736
  %v741 = vsub.f32 %v733, %v739
  %v742 = vmul.f32 %v740, 1.442695
  %v743 = vpow.pop %v742
  %v744 = vmul.f32 %v741, 1.442695
  %v745 = vpow.pop %v744
  %v746 = vsel %vm519, %v743, 0.0
  %747 = vadd.xlane.f32.xlu0 %v746
  %v748 = vpop.xlane.xlu0 %747
  %v749 = vsel %vm523, %v745, 0.0
  %750 = vadd.xlane.f32.xlu0 %v749
  %v751 = vpop.xlane.xlu0 %750
  %v752 = vrcp.pop %v748
  %v753 = vrcp.pop %v751
  %v754 = vmul.f32 %v743, %v752
  %v755 = vmul.f32 %v745, %v753
  %756 = vrot.lane.b32.xlu0 %v635, 56
  %v757 = vpop.permute.xlu0 %756
  %758 = vrot.lane.b32.xlu0 %v636, 56
  %v759 = vpop.permute.xlu0 %758
  %v762 = vsel %vm519, %v754, 0
  %v765 = vsel %vm519, %v755, 0
  %v767 = vsel %vm554, %v759, 0
  %769 = vmatprep.subr.mxu0 0.0
  %770 = vmatpush1.msra.mxu0 %v757
  %771 = vmatprep.subr.mxu0 0.0
  %772 = vmatpush1.msra.mxu0 %v767
  %773 = vmatprep.subr.mxu0 0.0
  %774 = vmatpush1.msra.mxu0 0.0
  %775 = vmatprep.subr.mxu0 0.0
  %776 = vmatpush1.msra.mxu0 0.0
  %777 = vmatprep.subr.mxu0 0.0
  %778 = vmatpush1.msra.mxu0 0.0
  %779 = vmatprep.subr.mxu0 0.0
  %780 = vmatpush1.msra.mxu0 0.0
  %781 = vmatprep.subr.mxu0 0.0
  %782 = vmatpush1.msra.mxu0 0.0
  %783 = vmatprep.subr.mxu0 0.0
  %784 = vmatpush1.msra.mxu0 0.0
  %785 = vmatprep.subr.mxu0 0.0
  %786 = vmatpush1.msra.mxu0 0.0
  %787 = vmatprep.subr.mxu0 0.0
  %788 = vmatpush1.msra.mxu0 0.0
  %789 = vmatprep.subr.mxu0 0.0
  %790 = vmatpush1.msra.mxu0 0.0
  %791 = vmatprep.subr.mxu0 0.0
  %792 = vmatpush1.msra.mxu0 0.0
  %793 = vmatprep.subr.mxu0 0.0
  %794 = vmatpush1.msra.mxu0 0.0
  %795 = vmatprep.subr.mxu0 0.0
  %796 = vmatpush1.msra.mxu0 0.0
  %797 = vmatprep.subr.mxu0 0.0
  %798 = vmatpush1.msra.mxu0 0.0
  %799 = vmatprep.subr.mxu0 0.0
  %800 = vmatpush1.msra.mxu0 0.0
  %801 = vmatprep.subr.mxu0 0.0
  %802 = vmatpush1.msra.mxu0 0.0
  %803 = vmatprep.subr.mxu0 0.0
  %804 = vmatpush1.msra.mxu0 0.0
  %805 = vmatprep.subr.mxu0 0.0
  %806 = vmatpush1.msra.mxu0 0.0
  %807 = vmatprep.subr.mxu0 0.0
  %808 = vmatpush1.msra.mxu0 0.0
  %809 = vmatprep.subr.mxu0 0.0
  %810 = vmatpush1.msra.mxu0 0.0
  %811 = vmatprep.subr.mxu0 0.0
  %812 = vmatpush1.msra.mxu0 0.0
  %813 = vmatprep.subr.mxu0 0.0
  %814 = vmatpush1.msra.mxu0 0.0
  %815 = vmatprep.subr.mxu0 0.0
  %816 = vmatpush1.msra.mxu0 0.0
  %817 = vmatprep.subr.mxu0 0.0
  %818 = vmatpush1.msra.mxu0 0.0
  %819 = vmatprep.subr.mxu0 0.0
  %820 = vmatpush1.msra.mxu0 0.0
  %821 = vmatprep.subr.mxu0 0.0
  %822 = vmatpush1.msra.mxu0 0.0
  %823 = vmatprep.subr.mxu0 0.0
  %824 = vmatpush1.msra.mxu0 0.0
  %825 = vmatprep.subr.mxu0 0.0
  %826 = vmatpush1.msra.mxu0 0.0
  %827 = vmatprep.subr.mxu0 0.0
  %828 = vmatpush1.msra.mxu0 0.0
  %829 = vmatprep.subr.mxu0 0.0
  %830 = vmatpush1.msra.mxu0 0.0
  %831 = vmatprep.subr.mxu0 0.0
  %832 = vmatpush1.msra.mxu0 0.0
  %833 = vmatprep.mubr.f32.mxu0 0.0
  %834 = vmatmul.mubr.f32.gmra.mrb[0].mxu0 %v762
  %v835 = vpop.f32.mrb[0].mxu0
  %v836 = vadd.f32 0.0, %v835
  %v837 = vpop.f32.mrb[0].mxu0
  %838 = vmatprep.mubr.f32.mxu0 0.0
  %839 = vmatmul.mubr.f32.gmra.mrb[0].mxu0 %v765
  %v840 = vpop.f32.mrb[0].mxu0
  %v841 = vadd.f32 0.0, %v840
  %v842 = vpop.f32.mrb[0].mxu0
  %843 = vdwg.mxu0
  %846 = vrot.lane.b32.xlu0 %v836, 8
  %v847 = vpop.permute.xlu0 %846
  %848 = vrot.lane.b32.xlu0 %v841, 8
  %v849 = vpop.permute.xlu0 %848
  %vm852 = vcmask 130112
  %853 = vst.msk [vmem:[#allocation3] sm:$0xff] %vm852, %v847
  %vm854 = vcmask 122944
  %855 = vst.msk [vmem:[#allocation3 + $0x8] sm:$0x1] %vm854, %v849
  %v856 = vld [vmem:[#allocation2] sm:$0xff]
  %v857 = vld [vmem:[#allocation2 + $0x8] sm:$0x1]
  %860 = vrot.lane.b32.xlu0 %v856, 112
  %v861 = vpop.permute.xlu0 %860
  %862 = vrot.lane.b32.xlu0 %v857, 112
  %v863 = vpop.permute.xlu0 %862
  %864 = vrot.lane.b32.xlu0 %v856, 80
  %v865 = vpop.permute.xlu0 %864
  %866 = vrot.lane.b32.xlu0 %v857, 80
  %v867 = vpop.permute.xlu0 %866
  %v868 = vsel %vm427, %v861, 0
  %v870 = vsel %vm427, %v863, 0
  %v872 = vsel %vm427, %v865, 0
  %v874 = vsel %vm427, %v867, 0
  %876 = vmatprep.subr.mxu0 0.0
  %877 = vmatpush1.xpose.msra.mxu0 %v872
  %878 = vmatprep.subr.mxu0 0.0
  %879 = vmatpush1.xpose.msra.mxu0 %v874
  %880 = vmatprep.subr.mxu0 0.0
  %881 = vmatpush1.xpose.msra.mxu0 0.0
  %882 = vmatprep.subr.mxu0 0.0
  %883 = vmatpush1.xpose.msra.mxu0 0.0
  %884 = vmatprep.subr.mxu0 0.0
  %885 = vmatpush1.xpose.msra.mxu0 0.0
  %886 = vmatprep.subr.mxu0 0.0
  %887 = vmatpush1.xpose.msra.mxu0 0.0
  %888 = vmatprep.subr.mxu0 0.0
  %889 = vmatpush1.xpose.msra.mxu0 0.0
  %890 = vmatprep.subr.mxu0 0.0
  %891 = vmatpush1.xpose.msra.mxu0 0.0
  %892 = vmatprep.subr.mxu0 0.0
  %893 = vmatpush1.xpose.msra.mxu0 0.0
  %894 = vmatprep.subr.mxu0 0.0
  %895 = vmatpush1.xpose.msra.mxu0 0.0
  %896 = vmatprep.subr.mxu0 0.0
  %897 = vmatpush1.xpose.msra.mxu0 0.0
  %898 = vmatprep.subr.mxu0 0.0
  %899 = vmatpush1.xpose.msra.mxu0 0.0
  %900 = vmatprep.subr.mxu0 0.0
  %901 = vmatpush1.xpose.msra.mxu0 0.0
  %902 = vmatprep.subr.mxu0 0.0
  %903 = vmatpush1.xpose.msra.mxu0 0.0
  %904 = vmatprep.subr.mxu0 0.0
  %905 = vmatpush1.xpose.msra.mxu0 0.0
  %906 = vmatprep.subr.mxu0 0.0
  %907 = vmatpush1.xpose.msra.mxu0 0.0
  %908 = vmatprep.subr.mxu0 0.0
  %909 = vmatpush1.xpose.msra.mxu0 0.0
  %910 = vmatprep.subr.mxu0 0.0
  %911 = vmatpush1.xpose.msra.mxu0 0.0
  %912 = vmatprep.subr.mxu0 0.0
  %913 = vmatpush1.xpose.msra.mxu0 0.0
  %914 = vmatprep.subr.mxu0 0.0
  %915 = vmatpush1.xpose.msra.mxu0 0.0
  %916 = vmatprep.subr.mxu0 0.0
  %917 = vmatpush1.xpose.msra.mxu0 0.0
  %918 = vmatprep.subr.mxu0 0.0
  %919 = vmatpush1.xpose.msra.mxu0 0.0
  %920 = vmatprep.subr.mxu0 0.0
  %921 = vmatpush1.xpose.msra.mxu0 0.0
  %922 = vmatprep.subr.mxu0 0.0
  %923 = vmatpush1.xpose.msra.mxu0 0.0
  %924 = vmatprep.subr.mxu0 0.0
  %925 = vmatpush1.xpose.msra.mxu0 0.0
  %926 = vmatprep.subr.mxu0 0.0
  %927 = vmatpush1.xpose.msra.mxu0 0.0
  %928 = vmatprep.subr.mxu0 0.0
  %929 = vmatpush1.xpose.msra.mxu0 0.0
  %930 = vmatprep.subr.mxu0 0.0
  %931 = vmatpush1.xpose.msra.mxu0 0.0
  %932 = vmatprep.subr.mxu0 0.0
  %933 = vmatpush1.xpose.msra.mxu0 0.0
  %934 = vmatprep.subr.mxu0 0.0
  %935 = vmatpush1.xpose.msra.mxu0 0.0
  %936 = vmatprep.subr.mxu0 0.0
  %937 = vmatpush1.xpose.msra.mxu0 0.0
  %938 = vmatprep.subr.mxu0 0.0
  %939 = vmatpush1.xpose.msra.mxu0 0.0
  %940 = vmatprep.mubr.f32.mxu0 0.0
  %941 = vmatmul.mubr.f32.gmra.mrb[0].mxu0 %v868
  %v942 = vpop.f32.mrb[0].mxu0
  %v943 = vadd.f32 0.0, %v942
  %v944 = vpop.f32.mrb[0].mxu0
  %945 = vmatprep.mubr.f32.mxu0 0.0
  %946 = vmatmul.mubr.f32.gmra.mrb[0].mxu0 %v870
  %v947 = vpop.f32.mrb[0].mxu0
  %v948 = vadd.f32 0.0, %v947
  %v949 = vpop.f32.mrb[0].mxu0
  %950 = vdwg.mxu0
  %v951 = vmul.f32 %v943, 0.35355338
  %v952 = vmul.f32 %v948, 0.35355338
  %v953 = vadd.f32 %v951, %v516
  %v954 = vadd.f32 %v952, %v516
  %v955 = vsel %vm519, %v953, -inf
  %956 = vmax.xlane.f32.xlu0 %v955
  %v957 = vpop.xlane.xlu0 %956
  %v958 = vsel %vm523, %v954, -inf
  %959 = vmax.xlane.f32.xlu0 %v958
  %v960 = vpop.xlane.xlu0 %959
  %v961 = vsub.f32 %v953, %v957
  %v962 = vsub.f32 %v954, %v960
  %v963 = vmul.f32 %v961, 1.442695
  %v964 = vpow.pop %v963
  %v965 = vmul.f32 %v962, 1.442695
  %v966 = vpow.pop %v965
  %v967 = vsel %vm519, %v964, 0.0
  %968 = vadd.xlane.f32.xlu0 %v967
  %v969 = vpop.xlane.xlu0 %968
  %v970 = vsel %vm523, %v966, 0.0
  %971 = vadd.xlane.f32.xlu0 %v970
  %v972 = vpop.xlane.xlu0 %971
  %v973 = vrcp.pop %v969
  %v974 = vrcp.pop %v972
  %v975 = vmul.f32 %v964, %v973
  %v976 = vmul.f32 %v966, %v974
  %977 = vrot.lane.b32.xlu0 %v856, 48
  %v978 = vpop.permute.xlu0 %977
  %979 = vrot.lane.b32.xlu0 %v857, 48
  %v980 = vpop.permute.xlu0 %979
  %v983 = vsel %vm519, %v975, 0
  %v986 = vsel %vm519, %v976, 0
  %v988 = vsel %vm554, %v980, 0
  %990 = vmatprep.subr.mxu0 0.0
  %991 = vmatpush1.msra.mxu0 %v978
  %992 = vmatprep.subr.mxu0 0.0
  %993 = vmatpush1.msra.mxu0 %v988
  %994 = vmatprep.subr.mxu0 0.0
  %995 = vmatpush1.msra.mxu0 0.0
  %996 = vmatprep.subr.mxu0 0.0
  %997 = vmatpush1.msra.mxu0 0.0
  %998 = vmatprep.subr.mxu0 0.0
  %999 = vmatpush1.msra.mxu0 0.0
  %1000 = vmatprep.subr.mxu0 0.0
  %1001 = vmatpush1.msra.mxu0 0.0
  %1002 = vmatprep.subr.mxu0 0.0
  %1003 = vmatpush1.msra.mxu0 0.0
  %1004 = vmatprep.subr.mxu0 0.0
  %1005 = vmatpush1.msra.mxu0 0.0
  %1006 = vmatprep.subr.mxu0 0.0
  %1007 = vmatpush1.msra.mxu0 0.0
  %1008 = vmatprep.subr.mxu0 0.0
  %1009 = vmatpush1.msra.mxu0 0.0
  %1010 = vmatprep.subr.mxu0 0.0
  %1011 = vmatpush1.msra.mxu0 0.0
  %1012 = vmatprep.subr.mxu0 0.0
  %1013 = vmatpush1.msra.mxu0 0.0
  %1014 = vmatprep.subr.mxu0 0.0
  %1015 = vmatpush1.msra.mxu0 0.0
  %1016 = vmatprep.subr.mxu0 0.0
  %1017 = vmatpush1.msra.mxu0 0.0
  %1018 = vmatprep.subr.mxu0 0.0
  %1019 = vmatpush1.msra.mxu0 0.0
  %1020 = vmatprep.subr.mxu0 0.0
  %1021 = vmatpush1.msra.mxu0 0.0
  %1022 = vmatprep.subr.mxu0 0.0
  %1023 = vmatpush1.msra.mxu0 0.0
  %1024 = vmatprep.subr.mxu0 0.0
  %1025 = vmatpush1.msra.mxu0 0.0
  %1026 = vmatprep.subr.mxu0 0.0
  %1027 = vmatpush1.msra.mxu0 0.0
  %1028 = vmatprep.subr.mxu0 0.0
  %1029 = vmatpush1.msra.mxu0 0.0
  %1030 = vmatprep.subr.mxu0 0.0
  %1031 = vmatpush1.msra.mxu0 0.0
  %1032 = vmatprep.subr.mxu0 0.0
  %1033 = vmatpush1.msra.mxu0 0.0
  %1034 = vmatprep.subr.mxu0 0.0
  %1035 = vmatpush1.msra.mxu0 0.0
  %1036 = vmatprep.subr.mxu0 0.0
  %1037 = vmatpush1.msra.mxu0 0.0
  %1038 = vmatprep.subr.mxu0 0.0
  %1039 = vmatpush1.msra.mxu0 0.0
  %1040 = vmatprep.subr.mxu0 0.0
  %1041 = vmatpush1.msra.mxu0 0.0
  %1042 = vmatprep.subr.mxu0 0.0
  %1043 = vmatpush1.msra.mxu0 0.0
  %1044 = vmatprep.subr.mxu0 0.0
  %1045 = vmatpush1.msra.mxu0 0.0
  %1046 = vmatprep.subr.mxu0 0.0
  %1047 = vmatpush1.msra.mxu0 0.0
  %1048 = vmatprep.subr.mxu0 0.0
  %1049 = vmatpush1.msra.mxu0 0.0
  %1050 = vmatprep.subr.mxu0 0.0
  %1051 = vmatpush1.msra.mxu0 0.0
  %1052 = vmatprep.subr.mxu0 0.0
  %1053 = vmatpush1.msra.mxu0 0.0
  %1054 = vmatprep.mubr.f32.mxu0 0.0
  %1055 = vmatmul.mubr.f32.gmra.mrb[0].mxu0 %v983
  %v1056 = vpop.f32.mrb[0].mxu0
  %v1057 = vadd.f32 0.0, %v1056
  %v1058 = vpop.f32.mrb[0].mxu0
  %1059 = vmatprep.mubr.f32.mxu0 0.0
  %1060 = vmatmul.mubr.f32.gmra.mrb[0].mxu0 %v986
  %v1061 = vpop.f32.mrb[0].mxu0
  %v1062 = vadd.f32 0.0, %v1061
  %v1063 = vpop.f32.mrb[0].mxu0
  %1064 = vdwg.mxu0
  %1067 = vrot.lane.b32.xlu0 %v1057, 16
  %v1068 = vpop.permute.xlu0 %1067
  %1069 = vrot.lane.b32.xlu0 %v1062, 16
  %v1070 = vpop.permute.xlu0 %1069
  %vm1073 = vcmask 195712
  %1074 = vst.msk [vmem:[#allocation3] sm:$0xff] %vm1073, %v1068
  %vm1075 = vcmask 188544
  %1076 = vst.msk [vmem:[#allocation3 + $0x8] sm:$0x1] %vm1075, %v1070
  %v1077 = vld [vmem:[#allocation2] sm:$0xff]
  %v1078 = vld [vmem:[#allocation2 + $0x8] sm:$0x1]
  %1081 = vrot.lane.b32.xlu0 %v1077, 104
  %v1082 = vpop.permute.xlu0 %1081
  %1083 = vrot.lane.b32.xlu0 %v1078, 104
  %v1084 = vpop.permute.xlu0 %1083
  %1085 = vrot.lane.b32.xlu0 %v1077, 72
  %v1086 = vpop.permute.xlu0 %1085
  %1087 = vrot.lane.b32.xlu0 %v1078, 72
  %v1088 = vpop.permute.xlu0 %1087
  %v1089 = vsel %vm427, %v1082, 0
  %v1091 = vsel %vm427, %v1084, 0
  %v1093 = vsel %vm427, %v1086, 0
  %v1095 = vsel %vm427, %v1088, 0
  %1097 = vmatprep.subr.mxu0 0.0
  %1098 = vmatpush1.xpose.msra.mxu0 %v1093
  %1099 = vmatprep.subr.mxu0 0.0
  %1100 = vmatpush1.xpose.msra.mxu0 %v1095
  %1101 = vmatprep.subr.mxu0 0.0
  %1102 = vmatpush1.xpose.msra.mxu0 0.0
  %1103 = vmatprep.subr.mxu0 0.0
  %1104 = vmatpush1.xpose.msra.mxu0 0.0
  %1105 = vmatprep.subr.mxu0 0.0
  %1106 = vmatpush1.xpose.msra.mxu0 0.0
  %1107 = vmatprep.subr.mxu0 0.0
  %1108 = vmatpush1.xpose.msra.mxu0 0.0
  %1109 = vmatprep.subr.mxu0 0.0
  %1110 = vmatpush1.xpose.msra.mxu0 0.0
  %1111 = vmatprep.subr.mxu0 0.0
  %1112 = vmatpush1.xpose.msra.mxu0 0.0
  %1113 = vmatprep.subr.mxu0 0.0
  %1114 = vmatpush1.xpose.msra.mxu0 0.0
  %1115 = vmatprep.subr.mxu0 0.0
  %1116 = vmatpush1.xpose.msra.mxu0 0.0
  %1117 = vmatprep.subr.mxu0 0.0
  %1118 = vmatpush1.xpose.msra.mxu0 0.0
  %1119 = vmatprep.subr.mxu0 0.0
  %1120 = vmatpush1.xpose.msra.mxu0 0.0
  %1121 = vmatprep.subr.mxu0 0.0
  %1122 = vmatpush1.xpose.msra.mxu0 0.0
  %1123 = vmatprep.subr.mxu0 0.0
  %1124 = vmatpush1.xpose.msra.mxu0 0.0
  %1125 = vmatprep.subr.mxu0 0.0
  %1126 = vmatpush1.xpose.msra.mxu0 0.0
  %1127 = vmatprep.subr.mxu0 0.0
  %1128 = vmatpush1.xpose.msra.mxu0 0.0
  %1129 = vmatprep.subr.mxu0 0.0
  %1130 = vmatpush1.xpose.msra.mxu0 0.0
  %1131 = vmatprep.subr.mxu0 0.0
  %1132 = vmatpush1.xpose.msra.mxu0 0.0
  %1133 = vmatprep.subr.mxu0 0.0
  %1134 = vmatpush1.xpose.msra.mxu0 0.0
  %1135 = vmatprep.subr.mxu0 0.0
  %1136 = vmatpush1.xpose.msra.mxu0 0.0
  %1137 = vmatprep.subr.mxu0 0.0
  %1138 = vmatpush1.xpose.msra.mxu0 0.0
  %1139 = vmatprep.subr.mxu0 0.0
  %1140 = vmatpush1.xpose.msra.mxu0 0.0
  %1141 = vmatprep.subr.mxu0 0.0
  %1142 = vmatpush1.xpose.msra.mxu0 0.0
  %1143 = vmatprep.subr.mxu0 0.0
  %1144 = vmatpush1.xpose.msra.mxu0 0.0
  %1145 = vmatprep.subr.mxu0 0.0
  %1146 = vmatpush1.xpose.msra.mxu0 0.0
  %1147 = vmatprep.subr.mxu0 0.0
  %1148 = vmatpush1.xpose.msra.mxu0 0.0
  %1149 = vmatprep.subr.mxu0 0.0
  %1150 = vmatpush1.xpose.msra.mxu0 0.0
  %1151 = vmatprep.subr.mxu0 0.0
  %1152 = vmatpush1.xpose.msra.mxu0 0.0
  %1153 = vmatprep.subr.mxu0 0.0
  %1154 = vmatpush1.xpose.msra.mxu0 0.0
  %1155 = vmatprep.subr.mxu0 0.0
  %1156 = vmatpush1.xpose.msra.mxu0 0.0
  %1157 = vmatprep.subr.mxu0 0.0
  %1158 = vmatpush1.xpose.msra.mxu0 0.0
  %1159 = vmatprep.subr.mxu0 0.0
  %1160 = vmatpush1.xpose.msra.mxu0 0.0
  %1161 = vmatprep.mubr.f32.mxu0 0.0
  %1162 = vmatmul.mubr.f32.gmra.mrb[0].mxu0 %v1089
  %v1163 = vpop.f32.mrb[0].mxu0
  %v1164 = vadd.f32 0.0, %v1163
  %v1165 = vpop.f32.mrb[0].mxu0
  %1166 = vmatprep.mubr.f32.mxu0 0.0
  %1167 = vmatmul.mubr.f32.gmra.mrb[0].mxu0 %v1091
  %v1168 = vpop.f32.mrb[0].mxu0
  %v1169 = vadd.f32 0.0, %v1168
  %v1170 = vpop.f32.mrb[0].mxu0
  %1171 = vdwg.mxu0
  %v1172 = vmul.f32 %v1164, 0.35355338
  %v1173 = vmul.f32 %v1169, 0.35355338
  %v1174 = vadd.f32 %v1172, %v516
  %v1175 = vadd.f32 %v1173, %v516
  %v1176 = vsel %vm519, %v1174, -inf
  %1177 = vmax.xlane.f32.xlu0 %v1176
  %v1178 = vpop.xlane.xlu0 %1177
  %v1179 = vsel %vm523, %v1175, -inf
  %1180 = vmax.xlane.f32.xlu0 %v1179
  %v1181 = vpop.xlane.xlu0 %1180
  %v1182 = vsub.f32 %v1174, %v1178
  %v1183 = vsub.f32 %v1175, %v1181
  %v1184 = vmul.f32 %v1182, 1.442695
  %v1185 = vpow.pop %v1184
  %v1186 = vmul.f32 %v1183, 1.442695
  %v1187 = vpow.pop %v1186
  %v1188 = vsel %vm519, %v1185, 0.0
  %1189 = vadd.xlane.f32.xlu0 %v1188
  %v1190 = vpop.xlane.xlu0 %1189
  %v1191 = vsel %vm523, %v1187, 0.0
  %1192 = vadd.xlane.f32.xlu0 %v1191
  %v1193 = vpop.xlane.xlu0 %1192
  %v1194 = vrcp.pop %v1190
  %v1195 = vrcp.pop %v1193
  %v1196 = vmul.f32 %v1185, %v1194
  %v1197 = vmul.f32 %v1187, %v1195
  %1198 = vrot.lane.b32.xlu0 %v1077, 40
  %v1199 = vpop.permute.xlu0 %1198
  %1200 = vrot.lane.b32.xlu0 %v1078, 40
  %v1201 = vpop.permute.xlu0 %1200
  %v1204 = vsel %vm519, %v1196, 0
  %v1207 = vsel %vm519, %v1197, 0
  %v1209 = vsel %vm554, %v1201, 0
  %1211 = vmatprep.subr.mxu0 0.0
  %1212 = vmatpush1.msra.mxu0 %v1199
  %1213 = vmatprep.subr.mxu0 0.0
  %1214 = vmatpush1.msra.mxu0 %v1209
  %1215 = vmatprep.subr.mxu0 0.0
  %1216 = vmatpush1.msra.mxu0 0.0
  %1217 = vmatprep.subr.mxu0 0.0
  %1218 = vmatpush1.msra.mxu0 0.0
  %1219 = vmatprep.subr.mxu0 0.0
  %1220 = vmatpush1.msra.mxu0 0.0
  %1221 = vmatprep.subr.mxu0 0.0
  %1222 = vmatpush1.msra.mxu0 0.0
  %1223 = vmatprep.subr.mxu0 0.0
  %1224 = vmatpush1.msra.mxu0 0.0
  %1225 = vmatprep.subr.mxu0 0.0
  %1226 = vmatpush1.msra.mxu0 0.0
  %1227 = vmatprep.subr.mxu0 0.0
  %1228 = vmatpush1.msra.mxu0 0.0
  %1229 = vmatprep.subr.mxu0 0.0
  %1230 = vmatpush1.msra.mxu0 0.0
  %1231 = vmatprep.subr.mxu0 0.0
  %1232 = vmatpush1.msra.mxu0 0.0
  %1233 = vmatprep.subr.mxu0 0.0
  %1234 = vmatpush1.msra.mxu0 0.0
  %1235 = vmatprep.subr.mxu0 0.0
  %1236 = vmatpush1.msra.mxu0 0.0
  %1237 = vmatprep.subr.mxu0 0.0
  %1238 = vmatpush1.msra.mxu0 0.0
  %1239 = vmatprep.subr.mxu0 0.0
  %1240 = vmatpush1.msra.mxu0 0.0
  %1241 = vmatprep.subr.mxu0 0.0
  %1242 = vmatpush1.msra.mxu0 0.0
  %1243 = vmatprep.subr.mxu0 0.0
  %1244 = vmatpush1.msra.mxu0 0.0
  %1245 = vmatprep.subr.mxu0 0.0
  %1246 = vmatpush1.msra.mxu0 0.0
  %1247 = vmatprep.subr.mxu0 0.0
  %1248 = vmatpush1.msra.mxu0 0.0
  %1249 = vmatprep.subr.mxu0 0.0
  %1250 = vmatpush1.msra.mxu0 0.0
  %1251 = vmatprep.subr.mxu0 0.0
  %1252 = vmatpush1.msra.mxu0 0.0
  %1253 = vmatprep.subr.mxu0 0.0
  %1254 = vmatpush1.msra.mxu0 0.0
  %1255 = vmatprep.subr.mxu0 0.0
  %1256 = vmatpush1.msra.mxu0 0.0
  %1257 = vmatprep.subr.mxu0 0.0
  %1258 = vmatpush1.msra.mxu0 0.0
  %1259 = vmatprep.subr.mxu0 0.0
  %1260 = vmatpush1.msra.mxu0 0.0
  %1261 = vmatprep.subr.mxu0 0.0
  %1262 = vmatpush1.msra.mxu0 0.0
  %1263 = vmatprep.subr.mxu0 0.0
  %1264 = vmatpush1.msra.mxu0 0.0
  %1265 = vmatprep.subr.mxu0 0.0
  %1266 = vmatpush1.msra.mxu0 0.0
  %1267 = vmatprep.subr.mxu0 0.0
  %1268 = vmatpush1.msra.mxu0 0.0
  %1269 = vmatprep.subr.mxu0 0.0
  %1270 = vmatpush1.msra.mxu0 0.0
  %1271 = vmatprep.subr.mxu0 0.0
  %1272 = vmatpush1.msra.mxu0 0.0
  %1273 = vmatprep.subr.mxu0 0.0
  %1274 = vmatpush1.msra.mxu0 0.0
  %1275 = vmatprep.mubr.f32.mxu0 0.0
  %1276 = vmatmul.mubr.f32.gmra.mrb[0].mxu0 %v1204
  %v1277 = vpop.f32.mrb[0].mxu0
  %v1278 = vadd.f32 0.0, %v1277
  %v1279 = vpop.f32.mrb[0].mxu0
  %1280 = vmatprep.mubr.f32.mxu0 0.0
  %1281 = vmatmul.mubr.f32.gmra.mrb[0].mxu0 %v1207
  %v1282 = vpop.f32.mrb[0].mxu0
  %v1283 = vadd.f32 0.0, %v1282
  %v1284 = vpop.f32.mrb[0].mxu0
  %1285 = vdwg.mxu0
  %1288 = vrot.lane.b32.xlu0 %v1278, 24
  %v1289 = vpop.permute.xlu0 %1288
  %1290 = vrot.lane.b32.xlu0 %v1283, 24
  %v1291 = vpop.permute.xlu0 %1290
  %vm1294 = vcmask 261312
  %1295 = vst.msk [vmem:[#allocation3] sm:$0xff] %vm1294, %v1289
  %vm1296 = vcmask 254144
  %1297 = vst.msk [vmem:[#allocation3 + $0x8] sm:$0x1] %vm1296, %v1291
  %v1298 = vld [vmem:[%s3 + $0x1] sm:$0x1]
  %v1299 = vld [vmem:[#allocation2 + $0x9] sm:$0xff]
  %v1300 = vld [vmem:[#allocation2 + $0x11] sm:$0x1]
  %1303 = vrot.lane.b32.xlu0 %v1299, 96
  %v1304 = vpop.permute.xlu0 %1303
  %1305 = vrot.lane.b32.xlu0 %v1300, 96
  %v1306 = vpop.permute.xlu0 %1305
  %v1307 = vsel %vm427, %v1299, 0
  %v1309 = vsel %vm427, %v1300, 0
  %v1311 = vsel %vm427, %v1304, 0
  %v1313 = vsel %vm427, %v1306, 0
  %1315 = vmatprep.subr.mxu0 0.0
  %1316 = vmatpush1.xpose.msra.mxu0 %v1311
  %1317 = vmatprep.subr.mxu0 0.0
  %1318 = vmatpush1.xpose.msra.mxu0 %v1313
  %1319 = vmatprep.subr.mxu0 0.0
  %1320 = vmatpush1.xpose.msra.mxu0 0.0
  %1321 = vmatprep.subr.mxu0 0.0
  %1322 = vmatpush1.xpose.msra.mxu0 0.0
  %1323 = vmatprep.subr.mxu0 0.0
  %1324 = vmatpush1.xpose.msra.mxu0 0.0
  %1325 = vmatprep.subr.mxu0 0.0
  %1326 = vmatpush1.xpose.msra.mxu0 0.0
  %1327 = vmatprep.subr.mxu0 0.0
  %1328 = vmatpush1.xpose.msra.mxu0 0.0
  %1329 = vmatprep.subr.mxu0 0.0
  %1330 = vmatpush1.xpose.msra.mxu0 0.0
  %1331 = vmatprep.subr.mxu0 0.0
  %1332 = vmatpush1.xpose.msra.mxu0 0.0
  %1333 = vmatprep.subr.mxu0 0.0
  %1334 = vmatpush1.xpose.msra.mxu0 0.0
  %1335 = vmatprep.subr.mxu0 0.0
  %1336 = vmatpush1.xpose.msra.mxu0 0.0
  %1337 = vmatprep.subr.mxu0 0.0
  %1338 = vmatpush1.xpose.msra.mxu0 0.0
  %1339 = vmatprep.subr.mxu0 0.0
  %1340 = vmatpush1.xpose.msra.mxu0 0.0
  %1341 = vmatprep.subr.mxu0 0.0
  %1342 = vmatpush1.xpose.msra.mxu0 0.0
  %1343 = vmatprep.subr.mxu0 0.0
  %1344 = vmatpush1.xpose.msra.mxu0 0.0
  %1345 = vmatprep.subr.mxu0 0.0
  %1346 = vmatpush1.xpose.msra.mxu0 0.0
  %1347 = vmatprep.subr.mxu0 0.0
  %1348 = vmatpush1.xpose.msra.mxu0 0.0
  %1349 = vmatprep.subr.mxu0 0.0
  %1350 = vmatpush1.xpose.msra.mxu0 0.0
  %1351 = vmatprep.subr.mxu0 0.0
  %1352 = vmatpush1.xpose.msra.mxu0 0.0
  %1353 = vmatprep.subr.mxu0 0.0
  %1354 = vmatpush1.xpose.msra.mxu0 0.0
  %1355 = vmatprep.subr.mxu0 0.0
  %1356 = vmatpush1.xpose.msra.mxu0 0.0
  %1357 = vmatprep.subr.mxu0 0.0
  %1358 = vmatpush1.xpose.msra.mxu0 0.0
  %1359 = vmatprep.subr.mxu0 0.0
  %1360 = vmatpush1.xpose.msra.mxu0 0.0
  %1361 = vmatprep.subr.mxu0 0.0
  %1362 = vmatpush1.xpose.msra.mxu0 0.0
  %1363 = vmatprep.subr.mxu0 0.0
  %1364 = vmatpush1.xpose.msra.mxu0 0.0
  %1365 = vmatprep.subr.mxu0 0.0
  %1366 = vmatpush1.xpose.msra.mxu0 0.0
  %1367 = vmatprep.subr.mxu0 0.0
  %1368 = vmatpush1.xpose.msra.mxu0 0.0
  %1369 = vmatprep.subr.mxu0 0.0
  %1370 = vmatpush1.xpose.msra.mxu0 0.0
  %1371 = vmatprep.subr.mxu0 0.0
  %1372 = vmatpush1.xpose.msra.mxu0 0.0
  %1373 = vmatprep.subr.mxu0 0.0
  %1374 = vmatpush1.xpose.msra.mxu0 0.0
  %1375 = vmatprep.subr.mxu0 0.0
  %1376 = vmatpush1.xpose.msra.mxu0 0.0
  %1377 = vmatprep.subr.mxu0 0.0
  %1378 = vmatpush1.xpose.msra.mxu0 0.0
  %1379 = vmatprep.mubr.f32.mxu0 0.0
  %1380 = vmatmul.mubr.f32.gmra.mrb[0].mxu0 %v1307
  %v1381 = vpop.f32.mrb[0].mxu0
  %v1382 = vadd.f32 0.0, %v1381
  %v1383 = vpop.f32.mrb[0].mxu0
  %1384 = vmatprep.mubr.f32.mxu0 0.0
  %1385 = vmatmul.mubr.f32.gmra.mrb[0].mxu0 %v1309
  %v1386 = vpop.f32.mrb[0].mxu0
  %v1387 = vadd.f32 0.0, %v1386
  %v1388 = vpop.f32.mrb[0].mxu0
  %1389 = vdwg.mxu0
  %v1390 = vmul.f32 %v1382, 0.35355338
  %v1391 = vmul.f32 %v1387, 0.35355338
  %v1392 = vlaneseq
  %v1393 = vshrl.u32 %v1392, 7
  %v1394 = vsub.s32 0, %v1393
  %v1395 = vrot.slane %v1298, %v1394
  %v1396 = vadd.f32 %v1390, %v1395
  %v1397 = vadd.f32 %v1391, %v1395
  %v1398 = vsel %vm519, %v1396, -inf
  %1399 = vmax.xlane.f32.xlu0 %v1398
  %v1400 = vpop.xlane.xlu0 %1399
  %v1401 = vsel %vm523, %v1397, -inf
  %1402 = vmax.xlane.f32.xlu0 %v1401
  %v1403 = vpop.xlane.xlu0 %1402
  %v1404 = vsub.f32 %v1396, %v1400
  %v1405 = vsub.f32 %v1397, %v1403
  %v1406 = vmul.f32 %v1404, 1.442695
  %v1407 = vpow.pop %v1406
  %v1408 = vmul.f32 %v1405, 1.442695
  %v1409 = vpow.pop %v1408
  %v1410 = vsel %vm519, %v1407, 0.0
  %1411 = vadd.xlane.f32.xlu0 %v1410
  %v1412 = vpop.xlane.xlu0 %1411
  %v1413 = vsel %vm523, %v1409, 0.0
  %1414 = vadd.xlane.f32.xlu0 %v1413
  %v1415 = vpop.xlane.xlu0 %1414
  %v1416 = vrcp.pop %v1412
  %v1417 = vrcp.pop %v1415
  %v1418 = vmul.f32 %v1407, %v1416
  %v1419 = vmul.f32 %v1409, %v1417
  %1420 = vrot.lane.b32.xlu0 %v1299, 64
  %v1421 = vpop.permute.xlu0 %1420
  %1422 = vrot.lane.b32.xlu0 %v1300, 64
  %v1423 = vpop.permute.xlu0 %1422
  %v1426 = vsel %vm519, %v1418, 0
  %v1429 = vsel %vm519, %v1419, 0
  %v1431 = vsel %vm554, %v1423, 0
  %1433 = vmatprep.subr.mxu0 0.0
  %1434 = vmatpush1.msra.mxu0 %v1421
  %1435 = vmatprep.subr.mxu0 0.0
  %1436 = vmatpush1.msra.mxu0 %v1431
  %1437 = vmatprep.subr.mxu0 0.0
  %1438 = vmatpush1.msra.mxu0 0.0
  %1439 = vmatprep.subr.mxu0 0.0
  %1440 = vmatpush1.msra.mxu0 0.0
  %1441 = vmatprep.subr.mxu0 0.0
  %1442 = vmatpush1.msra.mxu0 0.0
  %1443 = vmatprep.subr.mxu0 0.0
  %1444 = vmatpush1.msra.mxu0 0.0
  %1445 = vmatprep.subr.mxu0 0.0
  %1446 = vmatpush1.msra.mxu0 0.0
  %1447 = vmatprep.subr.mxu0 0.0
  %1448 = vmatpush1.msra.mxu0 0.0
  %1449 = vmatprep.subr.mxu0 0.0
  %1450 = vmatpush1.msra.mxu0 0.0
  %1451 = vmatprep.subr.mxu0 0.0
  %1452 = vmatpush1.msra.mxu0 0.0
  %1453 = vmatprep.subr.mxu0 0.0
  %1454 = vmatpush1.msra.mxu0 0.0
  %1455 = vmatprep.subr.mxu0 0.0
  %1456 = vmatpush1.msra.mxu0 0.0
  %1457 = vmatprep.subr.mxu0 0.0
  %1458 = vmatpush1.msra.mxu0 0.0
  %1459 = vmatprep.subr.mxu0 0.0
  %1460 = vmatpush1.msra.mxu0 0.0
  %1461 = vmatprep.subr.mxu0 0.0
  %1462 = vmatpush1.msra.mxu0 0.0
  %1463 = vmatprep.subr.mxu0 0.0
  %1464 = vmatpush1.msra.mxu0 0.0
  %1465 = vmatprep.subr.mxu0 0.0
  %1466 = vmatpush1.msra.mxu0 0.0
  %1467 = vmatprep.subr.mxu0 0.0
  %1468 = vmatpush1.msra.mxu0 0.0
  %1469 = vmatprep.subr.mxu0 0.0
  %1470 = vmatpush1.msra.mxu0 0.0
  %1471 = vmatprep.subr.mxu0 0.0
  %1472 = vmatpush1.msra.mxu0 0.0
  %1473 = vmatprep.subr.mxu0 0.0
  %1474 = vmatpush1.msra.mxu0 0.0
  %1475 = vmatprep.subr.mxu0 0.0
  %1476 = vmatpush1.msra.mxu0 0.0
  %1477 = vmatprep.subr.mxu0 0.0
  %1478 = vmatpush1.msra.mxu0 0.0
  %1479 = vmatprep.subr.mxu0 0.0
  %1480 = vmatpush1.msra.mxu0 0.0
  %1481 = vmatprep.subr.mxu0 0.0
  %1482 = vmatpush1.msra.mxu0 0.0
  %1483 = vmatprep.subr.mxu0 0.0
  %1484 = vmatpush1.msra.mxu0 0.0
  %1485 = vmatprep.subr.mxu0 0.0
  %1486 = vmatpush1.msra.mxu0 0.0
  %1487 = vmatprep.subr.mxu0 0.0
  %1488 = vmatpush1.msra.mxu0 0.0
  %1489 = vmatprep.subr.mxu0 0.0
  %1490 = vmatpush1.msra.mxu0 0.0
  %1491 = vmatprep.subr.mxu0 0.0
  %1492 = vmatpush1.msra.mxu0 0.0
  %1493 = vmatprep.subr.mxu0 0.0
  %1494 = vmatpush1.msra.mxu0 0.0
  %1495 = vmatprep.subr.mxu0 0.0
  %1496 = vmatpush1.msra.mxu0 0.0
  %1497 = vmatprep.mubr.f32.mxu0 0.0
  %1498 = vmatmul.mubr.f32.gmra.mrb[0].mxu0 %v1426
  %v1499 = vpop.f32.mrb[0].mxu0
  %v1500 = vadd.f32 0.0, %v1499
  %v1501 = vpop.f32.mrb[0].mxu0
  %1502 = vmatprep.mubr.f32.mxu0 0.0
  %1503 = vmatmul.mubr.f32.gmra.mrb[0].mxu0 %v1429
  %v1504 = vpop.f32.mrb[0].mxu0
  %v1505 = vadd.f32 0.0, %v1504
  %v1506 = vpop.f32.mrb[0].mxu0
  %1507 = vdwg.mxu0
  %1508 = vst.msk [vmem:[#allocation3 + $0x9] sm:$0xff] %vm427, %v1500
  %1509 = vst.msk [vmem:[#allocation3 + $0x11] sm:$0x1] %vm633, %v1505
  %v1510 = vld [vmem:[#allocation2 + $0x9] sm:$0xff]
  %v1511 = vld [vmem:[#allocation2 + $0x11] sm:$0x1]
  %1514 = vrot.lane.b32.xlu0 %v1510, 120
  %v1515 = vpop.permute.xlu0 %1514
  %1516 = vrot.lane.b32.xlu0 %v1511, 120
  %v1517 = vpop.permute.xlu0 %1516
  %1518 = vrot.lane.b32.xlu0 %v1510, 88
  %v1519 = vpop.permute.xlu0 %1518
  %1520 = vrot.lane.b32.xlu0 %v1511, 88
  %v1521 = vpop.permute.xlu0 %1520
  %v1522 = vsel %vm427, %v1515, 0
  %v1524 = vsel %vm427, %v1517, 0
  %v1526 = vsel %vm427, %v1519, 0
  %v1528 = vsel %vm427, %v1521, 0
  %1530 = vmatprep.subr.mxu0 0.0
  %1531 = vmatpush1.xpose.msra.mxu0 %v1526
  %1532 = vmatprep.subr.mxu0 0.0
  %1533 = vmatpush1.xpose.msra.mxu0 %v1528
  %1534 = vmatprep.subr.mxu0 0.0
  %1535 = vmatpush1.xpose.msra.mxu0 0.0
  %1536 = vmatprep.subr.mxu0 0.0
  %1537 = vmatpush1.xpose.msra.mxu0 0.0
  %1538 = vmatprep.subr.mxu0 0.0
  %1539 = vmatpush1.xpose.msra.mxu0 0.0
  %1540 = vmatprep.subr.mxu0 0.0
  %1541 = vmatpush1.xpose.msra.mxu0 0.0
  %1542 = vmatprep.subr.mxu0 0.0
  %1543 = vmatpush1.xpose.msra.mxu0 0.0
  %1544 = vmatprep.subr.mxu0 0.0
  %1545 = vmatpush1.xpose.msra.mxu0 0.0
  %1546 = vmatprep.subr.mxu0 0.0
  %1547 = vmatpush1.xpose.msra.mxu0 0.0
  %1548 = vmatprep.subr.mxu0 0.0
  %1549 = vmatpush1.xpose.msra.mxu0 0.0
  %1550 = vmatprep.subr.mxu0 0.0
  %1551 = vmatpush1.xpose.msra.mxu0 0.0
  %1552 = vmatprep.subr.mxu0 0.0
  %1553 = vmatpush1.xpose.msra.mxu0 0.0
  %1554 = vmatprep.subr.mxu0 0.0
  %1555 = vmatpush1.xpose.msra.mxu0 0.0
  %1556 = vmatprep.subr.mxu0 0.0
  %1557 = vmatpush1.xpose.msra.mxu0 0.0
  %1558 = vmatprep.subr.mxu0 0.0
  %1559 = vmatpush1.xpose.msra.mxu0 0.0
  %1560 = vmatprep.subr.mxu0 0.0
  %1561 = vmatpush1.xpose.msra.mxu0 0.0
  %1562 = vmatprep.subr.mxu0 0.0
  %1563 = vmatpush1.xpose.msra.mxu0 0.0
  %1564 = vmatprep.subr.mxu0 0.0
  %1565 = vmatpush1.xpose.msra.mxu0 0.0
  %1566 = vmatprep.subr.mxu0 0.0
  %1567 = vmatpush1.xpose.msra.mxu0 0.0
  %1568 = vmatprep.subr.mxu0 0.0
  %1569 = vmatpush1.xpose.msra.mxu0 0.0
  %1570 = vmatprep.subr.mxu0 0.0
  %1571 = vmatpush1.xpose.msra.mxu0 0.0
  %1572 = vmatprep.subr.mxu0 0.0
  %1573 = vmatpush1.xpose.msra.mxu0 0.0
  %1574 = vmatprep.subr.mxu0 0.0
  %1575 = vmatpush1.xpose.msra.mxu0 0.0
  %1576 = vmatprep.subr.mxu0 0.0
  %1577 = vmatpush1.xpose.msra.mxu0 0.0
  %1578 = vmatprep.subr.mxu0 0.0
  %1579 = vmatpush1.xpose.msra.mxu0 0.0
  %1580 = vmatprep.subr.mxu0 0.0
  %1581 = vmatpush1.xpose.msra.mxu0 0.0
  %1582 = vmatprep.subr.mxu0 0.0
  %1583 = vmatpush1.xpose.msra.mxu0 0.0
  %1584 = vmatprep.subr.mxu0 0.0
  %1585 = vmatpush1.xpose.msra.mxu0 0.0
  %1586 = vmatprep.subr.mxu0 0.0
  %1587 = vmatpush1.xpose.msra.mxu0 0.0
  %1588 = vmatprep.subr.mxu0 0.0
  %1589 = vmatpush1.xpose.msra.mxu0 0.0
  %1590 = vmatprep.subr.mxu0 0.0
  %1591 = vmatpush1.xpose.msra.mxu0 0.0
  %1592 = vmatprep.subr.mxu0 0.0
  %1593 = vmatpush1.xpose.msra.mxu0 0.0
  %1594 = vmatprep.mubr.f32.mxu0 0.0
  %1595 = vmatmul.mubr.f32.gmra.mrb[0].mxu0 %v1522
  %v1596 = vpop.f32.mrb[0].mxu0
  %v1597 = vadd.f32 0.0, %v1596
  %v1598 = vpop.f32.mrb[0].mxu0
  %1599 = vmatprep.mubr.f32.mxu0 0.0
  %1600 = vmatmul.mubr.f32.gmra.mrb[0].mxu0 %v1524
  %v1601 = vpop.f32.mrb[0].mxu0
  %v1602 = vadd.f32 0.0, %v1601
  %v1603 = vpop.f32.mrb[0].mxu0
  %1604 = vdwg.mxu0
  %v1605 = vmul.f32 %v1597, 0.35355338
  %v1606 = vmul.f32 %v1602, 0.35355338
  %v1607 = vadd.f32 %v1605, %v1395
  %v1608 = vadd.f32 %v1606, %v1395
  %v1609 = vsel %vm519, %v1607, -inf
  %1610 = vmax.xlane.f32.xlu0 %v1609
  %v1611 = vpop.xlane.xlu0 %1610
  %v1612 = vsel %vm523, %v1608, -inf
  %1613 = vmax.xlane.f32.xlu0 %v1612
  %v1614 = vpop.xlane.xlu0 %1613
  %v1615 = vsub.f32 %v1607, %v1611
  %v1616 = vsub.f32 %v1608, %v1614
  %v1617 = vmul.f32 %v1615, 1.442695
  %v1618 = vpow.pop %v1617
  %v1619 = vmul.f32 %v1616, 1.442695
  %v1620 = vpow.pop %v1619
  %v1621 = vsel %vm519, %v1618, 0.0
  %1622 = vadd.xlane.f32.xlu0 %v1621
  %v1623 = vpop.xlane.xlu0 %1622
  %v1624 = vsel %vm523, %v1620, 0.0
  %1625 = vadd.xlane.f32.xlu0 %v1624
  %v1626 = vpop.xlane.xlu0 %1625
  %v1627 = vrcp.pop %v1623
  %v1628 = vrcp.pop %v1626
  %v1629 = vmul.f32 %v1618, %v1627
  %v1630 = vmul.f32 %v1620, %v1628
  %1631 = vrot.lane.b32.xlu0 %v1510, 56
  %v1632 = vpop.permute.xlu0 %1631
  %1633 = vrot.lane.b32.xlu0 %v1511, 56
  %v1634 = vpop.permute.xlu0 %1633
  %v1637 = vsel %vm519, %v1629, 0
  %v1640 = vsel %vm519, %v1630, 0
  %v1642 = vsel %vm554, %v1634, 0
  %1644 = vmatprep.subr.mxu0 0.0
  %1645 = vmatpush1.msra.mxu0 %v1632
  %1646 = vmatprep.subr.mxu0 0.0
  %1647 = vmatpush1.msra.mxu0 %v1642
  %1648 = vmatprep.subr.mxu0 0.0
  %1649 = vmatpush1.msra.mxu0 0.0
  %1650 = vmatprep.subr.mxu0 0.0
  %1651 = vmatpush1.msra.mxu0 0.0
  %1652 = vmatprep.subr.mxu0 0.0
  %1653 = vmatpush1.msra.mxu0 0.0
  %1654 = vmatprep.subr.mxu0 0.0
  %1655 = vmatpush1.msra.mxu0 0.0
  %1656 = vmatprep.subr.mxu0 0.0
  %1657 = vmatpush1.msra.mxu0 0.0
  %1658 = vmatprep.subr.mxu0 0.0
  %1659 = vmatpush1.msra.mxu0 0.0
  %1660 = vmatprep.subr.mxu0 0.0
  %1661 = vmatpush1.msra.mxu0 0.0
  %1662 = vmatprep.subr.mxu0 0.0
  %1663 = vmatpush1.msra.mxu0 0.0
  %1664 = vmatprep.subr.mxu0 0.0
  %1665 = vmatpush1.msra.mxu0 0.0
  %1666 = vmatprep.subr.mxu0 0.0
  %1667 = vmatpush1.msra.mxu0 0.0
  %1668 = vmatprep.subr.mxu0 0.0
  %1669 = vmatpush1.msra.mxu0 0.0
  %1670 = vmatprep.subr.mxu0 0.0
  %1671 = vmatpush1.msra.mxu0 0.0
  %1672 = vmatprep.subr.mxu0 0.0
  %1673 = vmatpush1.msra.mxu0 0.0
  %1674 = vmatprep.subr.mxu0 0.0
  %1675 = vmatpush1.msra.mxu0 0.0
  %1676 = vmatprep.subr.mxu0 0.0
  %1677 = vmatpush1.msra.mxu0 0.0
  %1678 = vmatprep.subr.mxu0 0.0
  %1679 = vmatpush1.msra.mxu0 0.0
  %1680 = vmatprep.subr.mxu0 0.0
  %1681 = vmatpush1.msra.mxu0 0.0
  %1682 = vmatprep.subr.mxu0 0.0
  %1683 = vmatpush1.msra.mxu0 0.0
  %1684 = vmatprep.subr.mxu0 0.0
  %1685 = vmatpush1.msra.mxu0 0.0
  %1686 = vmatprep.subr.mxu0 0.0
  %1687 = vmatpush1.msra.mxu0 0.0
  %1688 = vmatprep.subr.mxu0 0.0
  %1689 = vmatpush1.msra.mxu0 0.0
  %1690 = vmatprep.subr.mxu0 0.0
  %1691 = vmatpush1.msra.mxu0 0.0
  %1692 = vmatprep.subr.mxu0 0.0
  %1693 = vmatpush1.msra.mxu0 0.0
  %1694 = vmatprep.subr.mxu0 0.0
  %1695 = vmatpush1.msra.mxu0 0.0
  %1696 = vmatprep.subr.mxu0 0.0
  %1697 = vmatpush1.msra.mxu0 0.0
  %1698 = vmatprep.subr.mxu0 0.0
  %1699 = vmatpush1.msra.mxu0 0.0
  %1700 = vmatprep.subr.mxu0 0.0
  %1701 = vmatpush1.msra.mxu0 0.0
  %1702 = vmatprep.subr.mxu0 0.0
  %1703 = vmatpush1.msra.mxu0 0.0
  %1704 = vmatprep.subr.mxu0 0.0
  %1705 = vmatpush1.msra.mxu0 0.0
  %1706 = vmatprep.subr.mxu0 0.0
  %1707 = vmatpush1.msra.mxu0 0.0
  %1708 = vmatprep.mubr.f32.mxu0 0.0
  %1709 = vmatmul.mubr.f32.gmra.mrb[0].mxu0 %v1637
  %v1710 = vpop.f32.mrb[0].mxu0
  %v1711 = vadd.f32 0.0, %v1710
  %v1712 = vpop.f32.mrb[0].mxu0
  %1713 = vmatprep.mubr.f32.mxu0 0.0
  %1714 = vmatmul.mubr.f32.gmra.mrb[0].mxu0 %v1640
  %v1715 = vpop.f32.mrb[0].mxu0
  %v1716 = vadd.f32 0.0, %v1715
  %v1717 = vpop.f32.mrb[0].mxu0
  %1718 = vdwg.mxu0
  %1721 = vrot.lane.b32.xlu0 %v1711, 8
  %v1722 = vpop.permute.xlu0 %1721
  %1723 = vrot.lane.b32.xlu0 %v1716, 8
  %v1724 = vpop.permute.xlu0 %1723
  %1727 = vst.msk [vmem:[#allocation3 + $0x9] sm:$0xff] %vm852, %v1722
  %1728 = vst.msk [vmem:[#allocation3 + $0x11] sm:$0x1] %vm854, %v1724
  %v1729 = vld [vmem:[#allocation2 + $0x9] sm:$0xff]
  %v1730 = vld [vmem:[#allocation2 + $0x11] sm:$0x1]
  %1733 = vrot.lane.b32.xlu0 %v1729, 112
  %v1734 = vpop.permute.xlu0 %1733
  %1735 = vrot.lane.b32.xlu0 %v1730, 112
  %v1736 = vpop.permute.xlu0 %1735
  %1737 = vrot.lane.b32.xlu0 %v1729, 80
  %v1738 = vpop.permute.xlu0 %1737
  %1739 = vrot.lane.b32.xlu0 %v1730, 80
  %v1740 = vpop.permute.xlu0 %1739
  %v1741 = vsel %vm427, %v1734, 0
  %v1743 = vsel %vm427, %v1736, 0
  %v1745 = vsel %vm427, %v1738, 0
  %v1747 = vsel %vm427, %v1740, 0
  %1749 = vmatprep.subr.mxu0 0.0
  %1750 = vmatpush1.xpose.msra.mxu0 %v1745
  %1751 = vmatprep.subr.mxu0 0.0
  %1752 = vmatpush1.xpose.msra.mxu0 %v1747
  %1753 = vmatprep.subr.mxu0 0.0
  %1754 = vmatpush1.xpose.msra.mxu0 0.0
  %1755 = vmatprep.subr.mxu0 0.0
  %1756 = vmatpush1.xpose.msra.mxu0 0.0
  %1757 = vmatprep.subr.mxu0 0.0
  %1758 = vmatpush1.xpose.msra.mxu0 0.0
  %1759 = vmatprep.subr.mxu0 0.0
  %1760 = vmatpush1.xpose.msra.mxu0 0.0
  %1761 = vmatprep.subr.mxu0 0.0
  %1762 = vmatpush1.xpose.msra.mxu0 0.0
  %1763 = vmatprep.subr.mxu0 0.0
  %1764 = vmatpush1.xpose.msra.mxu0 0.0
  %1765 = vmatprep.subr.mxu0 0.0
  %1766 = vmatpush1.xpose.msra.mxu0 0.0
  %1767 = vmatprep.subr.mxu0 0.0
  %1768 = vmatpush1.xpose.msra.mxu0 0.0
  %1769 = vmatprep.subr.mxu0 0.0
  %1770 = vmatpush1.xpose.msra.mxu0 0.0
  %1771 = vmatprep.subr.mxu0 0.0
  %1772 = vmatpush1.xpose.msra.mxu0 0.0
  %1773 = vmatprep.subr.mxu0 0.0
  %1774 = vmatpush1.xpose.msra.mxu0 0.0
  %1775 = vmatprep.subr.mxu0 0.0
  %1776 = vmatpush1.xpose.msra.mxu0 0.0
  %1777 = vmatprep.subr.mxu0 0.0
  %1778 = vmatpush1.xpose.msra.mxu0 0.0
  %1779 = vmatprep.subr.mxu0 0.0
  %1780 = vmatpush1.xpose.msra.mxu0 0.0
  %1781 = vmatprep.subr.mxu0 0.0
  %1782 = vmatpush1.xpose.msra.mxu0 0.0
  %1783 = vmatprep.subr.mxu0 0.0
  %1784 = vmatpush1.xpose.msra.mxu0 0.0
  %1785 = vmatprep.subr.mxu0 0.0
  %1786 = vmatpush1.xpose.msra.mxu0 0.0
  %1787 = vmatprep.subr.mxu0 0.0
  %1788 = vmatpush1.xpose.msra.mxu0 0.0
  %1789 = vmatprep.subr.mxu0 0.0
  %1790 = vmatpush1.xpose.msra.mxu0 0.0
  %1791 = vmatprep.subr.mxu0 0.0
  %1792 = vmatpush1.xpose.msra.mxu0 0.0
  %1793 = vmatprep.subr.mxu0 0.0
  %1794 = vmatpush1.xpose.msra.mxu0 0.0
  %1795 = vmatprep.subr.mxu0 0.0
  %1796 = vmatpush1.xpose.msra.mxu0 0.0
  %1797 = vmatprep.subr.mxu0 0.0
  %1798 = vmatpush1.xpose.msra.mxu0 0.0
  %1799 = vmatprep.subr.mxu0 0.0
  %1800 = vmatpush1.xpose.msra.mxu0 0.0
  %1801 = vmatprep.subr.mxu0 0.0
  %1802 = vmatpush1.xpose.msra.mxu0 0.0
  %1803 = vmatprep.subr.mxu0 0.0
  %1804 = vmatpush1.xpose.msra.mxu0 0.0
  %1805 = vmatprep.subr.mxu0 0.0
  %1806 = vmatpush1.xpose.msra.mxu0 0.0
  %1807 = vmatprep.subr.mxu0 0.0
  %1808 = vmatpush1.xpose.msra.mxu0 0.0
  %1809 = vmatprep.subr.mxu0 0.0
  %1810 = vmatpush1.xpose.msra.mxu0 0.0
  %1811 = vmatprep.subr.mxu0 0.0
  %1812 = vmatpush1.xpose.msra.mxu0 0.0
  %1813 = vmatprep.mubr.f32.mxu0 0.0
  %1814 = vmatmul.mubr.f32.gmra.mrb[0].mxu0 %v1741
  %v1815 = vpop.f32.mrb[0].mxu0
  %v1816 = vadd.f32 0.0, %v1815
  %v1817 = vpop.f32.mrb[0].mxu0
  %1818 = vmatprep.mubr.f32.mxu0 0.0
  %1819 = vmatmul.mubr.f32.gmra.mrb[0].mxu0 %v1743
  %v1820 = vpop.f32.mrb[0].mxu0
  %v1821 = vadd.f32 0.0, %v1820
  %v1822 = vpop.f32.mrb[0].mxu0
  %1823 = vdwg.mxu0
  %v1824 = vmul.f32 %v1816, 0.35355338
  %v1825 = vmul.f32 %v1821, 0.35355338
  %v1826 = vadd.f32 %v1824, %v1395
  %v1827 = vadd.f32 %v1825, %v1395
  %v1828 = vsel %vm519, %v1826, -inf
  %1829 = vmax.xlane.f32.xlu0 %v1828
  %v1830 = vpop.xlane.xlu0 %1829
  %v1831 = vsel %vm523, %v1827, -inf
  %1832 = vmax.xlane.f32.xlu0 %v1831
  %v1833 = vpop.xlane.xlu0 %1832
  %v1834 = vsub.f32 %v1826, %v1830
  %v1835 = vsub.f32 %v1827, %v1833
  %v1836 = vmul.f32 %v1834, 1.442695
  %v1837 = vpow.pop %v1836
  %v1838 = vmul.f32 %v1835, 1.442695
  %v1839 = vpow.pop %v1838
  %v1840 = vsel %vm519, %v1837, 0.0
  %1841 = vadd.xlane.f32.xlu0 %v1840
  %v1842 = vpop.xlane.xlu0 %1841
  %v1843 = vsel %vm523, %v1839, 0.0
  %1844 = vadd.xlane.f32.xlu0 %v1843
  %v1845 = vpop.xlane.xlu0 %1844
  %v1846 = vrcp.pop %v1842
  %v1847 = vrcp.pop %v1845
  %v1848 = vmul.f32 %v1837, %v1846
  %v1849 = vmul.f32 %v1839, %v1847
  %1850 = vrot.lane.b32.xlu0 %v1729, 48
  %v1851 = vpop.permute.xlu0 %1850
  %1852 = vrot.lane.b32.xlu0 %v1730, 48
  %v1853 = vpop.permute.xlu0 %1852
  %v1856 = vsel %vm519, %v1848, 0
  %v1859 = vsel %vm519, %v1849, 0
  %v1861 = vsel %vm554, %v1853, 0
  %1863 = vmatprep.subr.mxu0 0.0
  %1864 = vmatpush1.msra.mxu0 %v1851
  %1865 = vmatprep.subr.mxu0 0.0
  %1866 = vmatpush1.msra.mxu0 %v1861
  %1867 = vmatprep.subr.mxu0 0.0
  %1868 = vmatpush1.msra.mxu0 0.0
  %1869 = vmatprep.subr.mxu0 0.0
  %1870 = vmatpush1.msra.mxu0 0.0
  %1871 = vmatprep.subr.mxu0 0.0
  %1872 = vmatpush1.msra.mxu0 0.0
  %1873 = vmatprep.subr.mxu0 0.0
  %1874 = vmatpush1.msra.mxu0 0.0
  %1875 = vmatprep.subr.mxu0 0.0
  %1876 = vmatpush1.msra.mxu0 0.0
  %1877 = vmatprep.subr.mxu0 0.0
  %1878 = vmatpush1.msra.mxu0 0.0
  %1879 = vmatprep.subr.mxu0 0.0
  %1880 = vmatpush1.msra.mxu0 0.0
  %1881 = vmatprep.subr.mxu0 0.0
  %1882 = vmatpush1.msra.mxu0 0.0
  %1883 = vmatprep.subr.mxu0 0.0
  %1884 = vmatpush1.msra.mxu0 0.0
  %1885 = vmatprep.subr.mxu0 0.0
  %1886 = vmatpush1.msra.mxu0 0.0
  %1887 = vmatprep.subr.mxu0 0.0
  %1888 = vmatpush1.msra.mxu0 0.0
  %1889 = vmatprep.subr.mxu0 0.0
  %1890 = vmatpush1.msra.mxu0 0.0
  %1891 = vmatprep.subr.mxu0 0.0
  %1892 = vmatpush1.msra.mxu0 0.0
  %1893 = vmatprep.subr.mxu0 0.0
  %1894 = vmatpush1.msra.mxu0 0.0
  %1895 = vmatprep.subr.mxu0 0.0
  %1896 = vmatpush1.msra.mxu0 0.0
  %1897 = vmatprep.subr.mxu0 0.0
  %1898 = vmatpush1.msra.mxu0 0.0
  %1899 = vmatprep.subr.mxu0 0.0
  %1900 = vmatpush1.msra.mxu0 0.0
  %1901 = vmatprep.subr.mxu0 0.0
  %1902 = vmatpush1.msra.mxu0 0.0
  %1903 = vmatprep.subr.mxu0 0.0
  %1904 = vmatpush1.msra.mxu0 0.0
  %1905 = vmatprep.subr.mxu0 0.0
  %1906 = vmatpush1.msra.mxu0 0.0
  %1907 = vmatprep.subr.mxu0 0.0
  %1908 = vmatpush1.msra.mxu0 0.0
  %1909 = vmatprep.subr.mxu0 0.0
  %1910 = vmatpush1.msra.mxu0 0.0
  %1911 = vmatprep.subr.mxu0 0.0
  %1912 = vmatpush1.msra.mxu0 0.0
  %1913 = vmatprep.subr.mxu0 0.0
  %1914 = vmatpush1.msra.mxu0 0.0
  %1915 = vmatprep.subr.mxu0 0.0
  %1916 = vmatpush1.msra.mxu0 0.0
  %1917 = vmatprep.subr.mxu0 0.0
  %1918 = vmatpush1.msra.mxu0 0.0
  %1919 = vmatprep.subr.mxu0 0.0
  %1920 = vmatpush1.msra.mxu0 0.0
  %1921 = vmatprep.subr.mxu0 0.0
  %1922 = vmatpush1.msra.mxu0 0.0
  %1923 = vmatprep.subr.mxu0 0.0
  %1924 = vmatpush1.msra.mxu0 0.0
  %1925 = vmatprep.subr.mxu0 0.0
  %1926 = vmatpush1.msra.mxu0 0.0
  %1927 = vmatprep.mubr.f32.mxu0 0.0
  %1928 = vmatmul.mubr.f32.gmra.mrb[0].mxu0 %v1856
  %v1929 = vpop.f32.mrb[0].mxu0
  %v1930 = vadd.f32 0.0, %v1929
  %v1931 = vpop.f32.mrb[0].mxu0
  %1932 = vmatprep.mubr.f32.mxu0 0.0
  %1933 = vmatmul.mubr.f32.gmra.mrb[0].mxu0 %v1859
  %v1934 = vpop.f32.mrb[0].mxu0
  %v1935 = vadd.f32 0.0, %v1934
  %v1936 = vpop.f32.mrb[0].mxu0
  %1937 = vdwg.mxu0
  %1940 = vrot.lane.b32.xlu0 %v1930, 16
  %v1941 = vpop.permute.xlu0 %1940
  %1942 = vrot.lane.b32.xlu0 %v1935, 16
  %v1943 = vpop.permute.xlu0 %1942
  %1946 = vst.msk [vmem:[#allocation3 + $0x9] sm:$0xff] %vm1073, %v1941
  %1947 = vst.msk [vmem:[#allocation3 + $0x11] sm:$0x1] %vm1075, %v1943
  %v1948 = vld [vmem:[#allocation2 + $0x9] sm:$0xff]
  %v1949 = vld [vmem:[#allocation2 + $0x11] sm:$0x1]
  %1952 = vrot.lane.b32.xlu0 %v1948, 104
  %v1953 = vpop.permute.xlu0 %1952
  %1954 = vrot.lane.b32.xlu0 %v1949, 104
  %v1955 = vpop.permute.xlu0 %1954
  %1956 = vrot.lane.b32.xlu0 %v1948, 72
  %v1957 = vpop.permute.xlu0 %1956
  %1958 = vrot.lane.b32.xlu0 %v1949, 72
  %v1959 = vpop.permute.xlu0 %1958
  %v1960 = vsel %vm427, %v1953, 0
  %v1962 = vsel %vm427, %v1955, 0
  %v1964 = vsel %vm427, %v1957, 0
  %v1966 = vsel %vm427, %v1959, 0
  %1968 = vmatprep.subr.mxu0 0.0
  %1969 = vmatpush1.xpose.msra.mxu0 %v1964
  %1970 = vmatprep.subr.mxu0 0.0
  %1971 = vmatpush1.xpose.msra.mxu0 %v1966
  %1972 = vmatprep.subr.mxu0 0.0
  %1973 = vmatpush1.xpose.msra.mxu0 0.0
  %1974 = vmatprep.subr.mxu0 0.0
  %1975 = vmatpush1.xpose.msra.mxu0 0.0
  %1976 = vmatprep.subr.mxu0 0.0
  %1977 = vmatpush1.xpose.msra.mxu0 0.0
  %1978 = vmatprep.subr.mxu0 0.0
  %1979 = vmatpush1.xpose.msra.mxu0 0.0
  %1980 = vmatprep.subr.mxu0 0.0
  %1981 = vmatpush1.xpose.msra.mxu0 0.0
  %1982 = vmatprep.subr.mxu0 0.0
  %1983 = vmatpush1.xpose.msra.mxu0 0.0
  %1984 = vmatprep.subr.mxu0 0.0
  %1985 = vmatpush1.xpose.msra.mxu0 0.0
  %1986 = vmatprep.subr.mxu0 0.0
  %1987 = vmatpush1.xpose.msra.mxu0 0.0
  %1988 = vmatprep.subr.mxu0 0.0
  %1989 = vmatpush1.xpose.msra.mxu0 0.0
  %1990 = vmatprep.subr.mxu0 0.0
  %1991 = vmatpush1.xpose.msra.mxu0 0.0
  %1992 = vmatprep.subr.mxu0 0.0
  %1993 = vmatpush1.xpose.msra.mxu0 0.0
  %1994 = vmatprep.subr.mxu0 0.0
  %1995 = vmatpush1.xpose.msra.mxu0 0.0
  %1996 = vmatprep.subr.mxu0 0.0
  %1997 = vmatpush1.xpose.msra.mxu0 0.0
  %1998 = vmatprep.subr.mxu0 0.0
  %1999 = vmatpush1.xpose.msra.mxu0 0.0
  %2000 = vmatprep.subr.mxu0 0.0
  %2001 = vmatpush1.xpose.msra.mxu0 0.0
  %2002 = vmatprep.subr.mxu0 0.0
  %2003 = vmatpush1.xpose.msra.mxu0 0.0
  %2004 = vmatprep.subr.mxu0 0.0
  %2005 = vmatpush1.xpose.msra.mxu0 0.0
  %2006 = vmatprep.subr.mxu0 0.0
  %2007 = vmatpush1.xpose.msra.mxu0 0.0
  %2008 = vmatprep.subr.mxu0 0.0
  %2009 = vmatpush1.xpose.msra.mxu0 0.0
  %2010 = vmatprep.subr.mxu0 0.0
  %2011 = vmatpush1.xpose.msra.mxu0 0.0
  %2012 = vmatprep.subr.mxu0 0.0
  %2013 = vmatpush1.xpose.msra.mxu0 0.0
  %2014 = vmatprep.subr.mxu0 0.0
  %2015 = vmatpush1.xpose.msra.mxu0 0.0
  %2016 = vmatprep.subr.mxu0 0.0
  %2017 = vmatpush1.xpose.msra.mxu0 0.0
  %2018 = vmatprep.subr.mxu0 0.0
  %2019 = vmatpush1.xpose.msra.mxu0 0.0
  %2020 = vmatprep.subr.mxu0 0.0
  %2021 = vmatpush1.xpose.msra.mxu0 0.0
  %2022 = vmatprep.subr.mxu0 0.0
  %2023 = vmatpush1.xpose.msra.mxu0 0.0
  %2024 = vmatprep.subr.mxu0 0.0
  %2025 = vmatpush1.xpose.msra.mxu0 0.0
  %2026 = vmatprep.subr.mxu0 0.0
  %2027 = vmatpush1.xpose.msra.mxu0 0.0
  %2028 = vmatprep.subr.mxu0 0.0
  %2029 = vmatpush1.xpose.msra.mxu0 0.0
  %2030 = vmatprep.subr.mxu0 0.0
  %2031 = vmatpush1.xpose.msra.mxu0 0.0
  %2032 = vmatprep.mubr.f32.mxu0 0.0
  %2033 = vmatmul.mubr.f32.gmra.mrb[0].mxu0 %v1960
  %v2034 = vpop.f32.mrb[0].mxu0
  %v2035 = vadd.f32 0.0, %v2034
  %v2036 = vpop.f32.mrb[0].mxu0
  %2037 = vmatprep.mubr.f32.mxu0 0.0
  %2038 = vmatmul.mubr.f32.gmra.mrb[0].mxu0 %v1962
  %v2039 = vpop.f32.mrb[0].mxu0
  %v2040 = vadd.f32 0.0, %v2039
  %v2041 = vpop.f32.mrb[0].mxu0
  %2042 = vdwg.mxu0
  %v2043 = vmul.f32 %v2035, 0.35355338
  %v2044 = vmul.f32 %v2040, 0.35355338
  %v2045 = vadd.f32 %v2043, %v1395
  %v2046 = vadd.f32 %v2044, %v1395
  %v2047 = vsel %vm519, %v2045, -inf
  %2048 = vmax.xlane.f32.xlu0 %v2047
  %v2049 = vpop.xlane.xlu0 %2048
  %v2050 = vsel %vm523, %v2046, -inf
  %2051 = vmax.xlane.f32.xlu0 %v2050
  %v2052 = vpop.xlane.xlu0 %2051
  %v2053 = vsub.f32 %v2045, %v2049
  %v2054 = vsub.f32 %v2046, %v2052
  %v2055 = vmul.f32 %v2053, 1.442695
  %v2056 = vpow.pop %v2055
  %v2057 = vmul.f32 %v2054, 1.442695
  %v2058 = vpow.pop %v2057
  %v2059 = vsel %vm519, %v2056, 0.0
  %2060 = vadd.xlane.f32.xlu0 %v2059
  %v2061 = vpop.xlane.xlu0 %2060
  %v2062 = vsel %vm523, %v2058, 0.0
  %2063 = vadd.xlane.f32.xlu0 %v2062
  %v2064 = vpop.xlane.xlu0 %2063
  %v2065 = vrcp.pop %v2061
  %v2066 = vrcp.pop %v2064
  %v2067 = vmul.f32 %v2056, %v2065
  %v2068 = vmul.f32 %v2058, %v2066
  %2069 = vrot.lane.b32.xlu0 %v1948, 40
  %v2070 = vpop.permute.xlu0 %2069
  %2071 = vrot.lane.b32.xlu0 %v1949, 40
  %v2072 = vpop.permute.xlu0 %2071
  %v2075 = vsel %vm519, %v2067, 0
  %v2078 = vsel %vm519, %v2068, 0
  %v2080 = vsel %vm554, %v2072, 0
  %2082 = vmatprep.subr.mxu0 0.0
  %2083 = vmatpush1.msra.mxu0 %v2070
  %2084 = vmatprep.subr.mxu0 0.0
  %2085 = vmatpush1.msra.mxu0 %v2080
  %2086 = vmatprep.subr.mxu0 0.0
  %2087 = vmatpush1.msra.mxu0 0.0
  %2088 = vmatprep.subr.mxu0 0.0
  %2089 = vmatpush1.msra.mxu0 0.0
  %2090 = vmatprep.subr.mxu0 0.0
  %2091 = vmatpush1.msra.mxu0 0.0
  %2092 = vmatprep.subr.mxu0 0.0
  %2093 = vmatpush1.msra.mxu0 0.0
  %2094 = vmatprep.subr.mxu0 0.0
  %2095 = vmatpush1.msra.mxu0 0.0
  %2096 = vmatprep.subr.mxu0 0.0
  %2097 = vmatpush1.msra.mxu0 0.0
  %2098 = vmatprep.subr.mxu0 0.0
  %2099 = vmatpush1.msra.mxu0 0.0
  %2100 = vmatprep.subr.mxu0 0.0
  %2101 = vmatpush1.msra.mxu0 0.0
  %2102 = vmatprep.subr.mxu0 0.0
  %2103 = vmatpush1.msra.mxu0 0.0
  %2104 = vmatprep.subr.mxu0 0.0
  %2105 = vmatpush1.msra.mxu0 0.0
  %2106 = vmatprep.subr.mxu0 0.0
  %2107 = vmatpush1.msra.mxu0 0.0
  %2108 = vmatprep.subr.mxu0 0.0
  %2109 = vmatpush1.msra.mxu0 0.0
  %2110 = vmatprep.subr.mxu0 0.0
  %2111 = vmatpush1.msra.mxu0 0.0
  %2112 = vmatprep.subr.mxu0 0.0
  %2113 = vmatpush1.msra.mxu0 0.0
  %2114 = vmatprep.subr.mxu0 0.0
  %2115 = vmatpush1.msra.mxu0 0.0
  %2116 = vmatprep.subr.mxu0 0.0
  %2117 = vmatpush1.msra.mxu0 0.0
  %2118 = vmatprep.subr.mxu0 0.0
  %2119 = vmatpush1.msra.mxu0 0.0
  %2120 = vmatprep.subr.mxu0 0.0
  %2121 = vmatpush1.msra.mxu0 0.0
  %2122 = vmatprep.subr.mxu0 0.0
  %2123 = vmatpush1.msra.mxu0 0.0
  %2124 = vmatprep.subr.mxu0 0.0
  %2125 = vmatpush1.msra.mxu0 0.0
  %2126 = vmatprep.subr.mxu0 0.0
  %2127 = vmatpush1.msra.mxu0 0.0
  %2128 = vmatprep.subr.mxu0 0.0
  %2129 = vmatpush1.msra.mxu0 0.0
  %2130 = vmatprep.subr.mxu0 0.0
  %2131 = vmatpush1.msra.mxu0 0.0
  %2132 = vmatprep.subr.mxu0 0.0
  %2133 = vmatpush1.msra.mxu0 0.0
  %2134 = vmatprep.subr.mxu0 0.0
  %2135 = vmatpush1.msra.mxu0 0.0
  %2136 = vmatprep.subr.mxu0 0.0
  %2137 = vmatpush1.msra.mxu0 0.0
  %2138 = vmatprep.subr.mxu0 0.0
  %2139 = vmatpush1.msra.mxu0 0.0
  %2140 = vmatprep.subr.mxu0 0.0
  %2141 = vmatpush1.msra.mxu0 0.0
  %2142 = vmatprep.subr.mxu0 0.0
  %2143 = vmatpush1.msra.mxu0 0.0
  %2144 = vmatprep.subr.mxu0 0.0
  %2145 = vmatpush1.msra.mxu0 0.0
  %2146 = vmatprep.mubr.f32.mxu0 0.0
  %2147 = vmatmul.mubr.f32.gmra.mrb[0].mxu0 %v2075
  %v2148 = vpop.f32.mrb[0].mxu0
  %v2149 = vadd.f32 0.0, %v2148
  %v2150 = vpop.f32.mrb[0].mxu0
  %2151 = vmatprep.mubr.f32.mxu0 0.0
  %2152 = vmatmul.mubr.f32.gmra.mrb[0].mxu0 %v2078
  %v2153 = vpop.f32.mrb[0].mxu0
  %v2154 = vadd.f32 0.0, %v2153
  %v2155 = vpop.f32.mrb[0].mxu0
  %2156 = vdwg.mxu0
  %2159 = vrot.lane.b32.xlu0 %v2149, 24
  %v2160 = vpop.permute.xlu0 %2159
  %2161 = vrot.lane.b32.xlu0 %v2154, 24
  %v2162 = vpop.permute.xlu0 %2161
  %2165 = vst.msk [vmem:[#allocation3 + $0x9] sm:$0xff] %vm1294, %v2160
  %2166 = vst.msk [vmem:[#allocation3 + $0x11] sm:$0x1] %vm1296, %v2162
  %v2167 = vld [vmem:[#allocation3] sm:$0xff]
  %v2168 = vld [vmem:[#allocation3 + $0x8] sm:$0xff]
  %v2169 = vld [vmem:[#allocation3 + $0x10] sm:$0x3]
  %v2170 = vld [vmem:[%s11] sm:$0xff]
  %v2171 = vld [vmem:[%s11 + $0x8] sm:$0xff]
  %v2172 = vld [vmem:[%s11 + $0x10] sm:$0xff]
  %v2173 = vld [vmem:[%s11 + $0x18] sm:$0xff]
  %v2174 = vld [vmem:[%s12] sm:$0x1]
  %v2176 = vlaneseq
  %v2177 = vshrl.u32 %v2176, 7
  %v2178 = vsub.s32 0, %v2177
  %v2179 = vrot.slane %v2174, %v2178
  %v2182 = vsel %vm253, %v2167, 0
  %v2185 = vsel %vm253, %v2168, 0
  %v2188 = vsel %vm253, %v2169, 0
  %2190 = vmatprep.subr.mxu0 0.0
  %2191 = vmatpush1.msra.mxu0 %v2170
  %2192 = vmatprep.subr.mxu0 0.0
  %2193 = vmatpush1.msra.mxu0 %v2171
  %2194 = vmatprep.subr.mxu0 0.0
  %2195 = vmatpush1.msra.mxu0 %v2172
  %2196 = vmatprep.subr.mxu0 0.0
  %2197 = vmatpush1.msra.mxu0 %v2173
  %2198 = vmatprep.subr.mxu0 0.0
  %2199 = vmatpush1.msra.mxu0 0.0
  %2200 = vmatprep.subr.mxu0 0.0
  %2201 = vmatpush1.msra.mxu0 0.0
  %2202 = vmatprep.subr.mxu0 0.0
  %2203 = vmatpush1.msra.mxu0 0.0
  %2204 = vmatprep.subr.mxu0 0.0
  %2205 = vmatpush1.msra.mxu0 0.0
  %2206 = vmatprep.subr.mxu0 0.0
  %2207 = vmatpush1.msra.mxu0 0.0
  %2208 = vmatprep.subr.mxu0 0.0
  %2209 = vmatpush1.msra.mxu0 0.0
  %2210 = vmatprep.subr.mxu0 0.0
  %2211 = vmatpush1.msra.mxu0 0.0
  %2212 = vmatprep.subr.mxu0 0.0
  %2213 = vmatpush1.msra.mxu0 0.0
  %2214 = vmatprep.subr.mxu0 0.0
  %2215 = vmatpush1.msra.mxu0 0.0
  %2216 = vmatprep.subr.mxu0 0.0
  %2217 = vmatpush1.msra.mxu0 0.0
  %2218 = vmatprep.subr.mxu0 0.0
  %2219 = vmatpush1.msra.mxu0 0.0
  %2220 = vmatprep.subr.mxu0 0.0
  %2221 = vmatpush1.msra.mxu0 0.0
  %2222 = vmatprep.subr.mxu0 0.0
  %2223 = vmatpush1.msra.mxu0 0.0
  %2224 = vmatprep.subr.mxu0 0.0
  %2225 = vmatpush1.msra.mxu0 0.0
  %2226 = vmatprep.subr.mxu0 0.0
  %2227 = vmatpush1.msra.mxu0 0.0
  %2228 = vmatprep.subr.mxu0 0.0
  %2229 = vmatpush1.msra.mxu0 0.0
  %2230 = vmatprep.subr.mxu0 0.0
  %2231 = vmatpush1.msra.mxu0 0.0
  %2232 = vmatprep.subr.mxu0 0.0
  %2233 = vmatpush1.msra.mxu0 0.0
  %2234 = vmatprep.subr.mxu0 0.0
  %2235 = vmatpush1.msra.mxu0 0.0
  %2236 = vmatprep.subr.mxu0 0.0
  %2237 = vmatpush1.msra.mxu0 0.0
  %2238 = vmatprep.subr.mxu0 0.0
  %2239 = vmatpush1.msra.mxu0 0.0
  %2240 = vmatprep.subr.mxu0 0.0
  %2241 = vmatpush1.msra.mxu0 0.0
  %2242 = vmatprep.subr.mxu0 0.0
  %2243 = vmatpush1.msra.mxu0 0.0
  %2244 = vmatprep.subr.mxu0 0.0
  %2245 = vmatpush1.msra.mxu0 0.0
  %2246 = vmatprep.subr.mxu0 0.0
  %2247 = vmatpush1.msra.mxu0 0.0
  %2248 = vmatprep.subr.mxu0 0.0
  %2249 = vmatpush1.msra.mxu0 0.0
  %2250 = vmatprep.subr.mxu0 0.0
  %2251 = vmatpush1.msra.mxu0 0.0
  %2252 = vmatprep.subr.mxu0 0.0
  %2253 = vmatpush1.msra.mxu0 0.0
  %2254 = vmatprep.mubr.f32.mxu0 0.0
  %2255 = vmatmul.mubr.f32.gmra.mrb[0].mxu0 %v2182
  %v2256 = vpop.f32.mrb[0].mxu0
  %v2257 = vadd.f32 %v2179, %v2256
  %v2258 = vpop.f32.mrb[0].mxu0
  %2259 = vmatprep.mubr.f32.mxu0 0.0
  %2260 = vmatmul.mubr.f32.gmra.mrb[0].mxu0 %v2185
  %v2261 = vpop.f32.mrb[0].mxu0
  %v2262 = vadd.f32 %v2179, %v2261
  %v2263 = vpop.f32.mrb[0].mxu0
  %2264 = vmatprep.mubr.f32.mxu0 0.0
  %2265 = vmatmul.mubr.f32.gmra.mrb[0].mxu0 %v2188
  %v2266 = vpop.f32.mrb[0].mxu0
  %v2267 = vadd.f32 %v2179, %v2266
  %v2268 = vpop.f32.mrb[0].mxu0
  %2269 = vdwg.mxu0
  %v2270 = vadd.f32 %v310, %v2257
  %v2271 = vadd.f32 %v311, %v2262
  %v2272 = vadd.f32 %v312, %v2267
  %v2273 = vld [vmem:[%s13] sm:$0x1]
  %v2274 = vld [vmem:[%s14] sm:$0x1]
  %v2275 = vsel %vm253, %v2270, 0.0
  %2276 = vadd.xlane.f32.xlu0 %v2275
  %v2277 = vpop.xlane.xlu0 %2276
  %v2278 = vsel %vm253, %v2271, 0.0
  %2279 = vadd.xlane.f32.xlu0 %v2278
  %v2280 = vpop.xlane.xlu0 %2279
  %v2281 = vsel %vm260, %v2272, 0.0
  %2282 = vadd.xlane.f32.xlu0 %v2281
  %v2283 = vpop.xlane.xlu0 %2282
  %v2284 = vmul.f32 %v2277, %v264
  %v2285 = vmul.f32 %v2280, %v264
  %v2286 = vmul.f32 %v2283, %v264
  %v2287 = vsub.f32 %v2270, %v2284
  %v2288 = vsub.f32 %v2271, %v2285
  %v2289 = vsub.f32 %v2272, %v2286
  %v2290 = vmul.f32 %v2287, %v2287
  %v2291 = vmul.f32 %v2288, %v2288
  %v2292 = vmul.f32 %v2289, %v2289
  %v2293 = vsel %vm253, %v2290, 0.0
  %2294 = vadd.xlane.f32.xlu0 %v2293
  %v2295 = vpop.xlane.xlu0 %2294
  %v2296 = vsel %vm253, %v2291, 0.0
  %2297 = vadd.xlane.f32.xlu0 %v2296
  %v2298 = vpop.xlane.xlu0 %2297
  %v2299 = vsel %vm260, %v2292, 0.0
  %2300 = vadd.xlane.f32.xlu0 %v2299
  %v2301 = vpop.xlane.xlu0 %2300
  %v2302 = vmul.f32 %v2295, %v264
  %v2303 = vmul.f32 %v2298, %v264
  %v2304 = vmul.f32 %v2301, %v264
  %v2305 = vadd.f32 %v2302, 1e-12
  %v2306 = vadd.f32 %v2303, 1e-12
  %v2307 = vadd.f32 %v2304, 1e-12
  %v2308 = vrsqrt.pop %v2305
  %v2309 = vrsqrt.pop %v2306
  %v2310 = vrsqrt.pop %v2307
  %v2311 = vmul.f32 %v2287, %v2308
  %v2312 = vmul.f32 %v2288, %v2309
  %v2313 = vmul.f32 %v2289, %v2310
  %v2315 = vlaneseq
  %v2316 = vshrl.u32 %v2315, 7
  %v2317 = vsub.s32 0, %v2316
  %v2318 = vrot.slane %v2273, %v2317
  %v2320 = vmul.f32 %v2311, %v2318
  %v2321 = vmul.f32 %v2312, %v2318
  %v2322 = vmul.f32 %v2313, %v2318
  %v2324 = vlaneseq
  %v2325 = vshrl.u32 %v2324, 7
  %v2326 = vsub.s32 0, %v2325
  %v2327 = vrot.slane %v2274, %v2326
  %v2329 = vadd.f32 %v2320, %v2327
  %v2330 = vadd.f32 %v2321, %v2327
  %v2331 = vadd.f32 %v2322, %v2327
  %v2332 = vld [vmem:[%s15] sm:$0xff]
  %v2333 = vld [vmem:[%s15 + $0x8] sm:$0xff]
  %v2334 = vld [vmem:[%s15 + $0x10] sm:$0xff]
  %v2335 = vld [vmem:[%s15 + $0x18] sm:$0xff]
  %v2336 = vld [vmem:[%s16] sm:$0x1]
  %v2338 = vlaneseq
  %v2339 = vshrl.u32 %v2338, 7
  %v2340 = vsub.s32 0, %v2339
  %v2341 = vrot.slane %v2336, %v2340
  %v2344 = vsel %vm253, %v2329, 0
  %v2347 = vsel %vm253, %v2330, 0
  %v2350 = vsel %vm253, %v2331, 0
  %2352 = vmatprep.subr.mxu0 0.0
  %2353 = vmatpush1.msra.mxu0 %v2332
  %2354 = vmatprep.subr.mxu0 0.0
  %2355 = vmatpush1.msra.mxu0 %v2333
  %2356 = vmatprep.subr.mxu0 0.0
  %2357 = vmatpush1.msra.mxu0 %v2334
  %2358 = vmatprep.subr.mxu0 0.0
  %2359 = vmatpush1.msra.mxu0 %v2335
  %2360 = vmatprep.subr.mxu0 0.0
  %2361 = vmatpush1.msra.mxu0 0.0
  %2362 = vmatprep.subr.mxu0 0.0
  %2363 = vmatpush1.msra.mxu0 0.0
  %2364 = vmatprep.subr.mxu0 0.0
  %2365 = vmatpush1.msra.mxu0 0.0
  %2366 = vmatprep.subr.mxu0 0.0
  %2367 = vmatpush1.msra.mxu0 0.0
  %2368 = vmatprep.subr.mxu0 0.0
  %2369 = vmatpush1.msra.mxu0 0.0
  %2370 = vmatprep.subr.mxu0 0.0
  %2371 = vmatpush1.msra.mxu0 0.0
  %2372 = vmatprep.subr.mxu0 0.0
  %2373 = vmatpush1.msra.mxu0 0.0
  %2374 = vmatprep.subr.mxu0 0.0
  %2375 = vmatpush1.msra.mxu0 0.0
  %2376 = vmatprep.subr.mxu0 0.0
  %2377 = vmatpush1.msra.mxu0 0.0
  %2378 = vmatprep.subr.mxu0 0.0
  %2379 = vmatpush1.msra.mxu0 0.0
  %2380 = vmatprep.subr.mxu0 0.0
  %2381 = vmatpush1.msra.mxu0 0.0
  %2382 = vmatprep.subr.mxu0 0.0
  %2383 = vmatpush1.msra.mxu0 0.0
  %2384 = vmatprep.subr.mxu0 0.0
  %2385 = vmatpush1.msra.mxu0 0.0
  %2386 = vmatprep.subr.mxu0 0.0
  %2387 = vmatpush1.msra.mxu0 0.0
  %2388 = vmatprep.subr.mxu0 0.0
  %2389 = vmatpush1.msra.mxu0 0.0
  %2390 = vmatprep.subr.mxu0 0.0
  %2391 = vmatpush1.msra.mxu0 0.0
  %2392 = vmatprep.subr.mxu0 0.0
  %2393 = vmatpush1.msra.mxu0 0.0
  %2394 = vmatprep.subr.mxu0 0.0
  %2395 = vmatpush1.msra.mxu0 0.0
  %2396 = vmatprep.subr.mxu0 0.0
  %2397 = vmatpush1.msra.mxu0 0.0
  %2398 = vmatprep.subr.mxu0 0.0
  %2399 = vmatpush1.msra.mxu0 0.0
  %2400 = vmatprep.subr.mxu0 0.0
  %2401 = vmatpush1.msra.mxu0 0.0
  %2402 = vmatprep.subr.mxu0 0.0
  %2403 = vmatpush1.msra.mxu0 0.0
  %2404 = vmatprep.subr.mxu0 0.0
  %2405 = vmatpush1.msra.mxu0 0.0
  %2406 = vmatprep.subr.mxu0 0.0
  %2407 = vmatpush1.msra.mxu0 0.0
  %2408 = vmatprep.subr.mxu0 0.0
  %2409 = vmatpush1.msra.mxu0 0.0
  %2410 = vmatprep.subr.mxu0 0.0
  %2411 = vmatpush1.msra.mxu0 0.0
  %2412 = vmatprep.subr.mxu0 0.0
  %2413 = vmatpush1.msra.mxu0 0.0
  %2414 = vmatprep.subr.mxu0 0.0
  %2415 = vmatpush1.msra.mxu0 0.0
  %2416 = vmatprep.mubr.f32.mxu0 0.0
  %2417 = vmatmul.mubr.f32.gmra.mrb[0].mxu0 %v2344
  %v2418 = vpop.f32.mrb[0].mxu0
  %v2419 = vadd.f32 %v2341, %v2418
  %v2420 = vpop.f32.mrb[0].mxu0
  %2421 = vmatprep.mubr.f32.mxu0 0.0
  %2422 = vmatmul.mubr.f32.gmra.mrb[0].mxu0 %v2347
  %v2423 = vpop.f32.mrb[0].mxu0
  %v2424 = vadd.f32 %v2341, %v2423
  %v2425 = vpop.f32.mrb[0].mxu0
  %2426 = vmatprep.mubr.f32.mxu0 0.0
  %2427 = vmatmul.mubr.f32.gmra.mrb[0].mxu0 %v2350
  %v2428 = vpop.f32.mrb[0].mxu0
  %v2429 = vadd.f32 %v2341, %v2428
  %v2430 = vpop.f32.mrb[0].mxu0
  %2431 = vdwg.mxu0
  %v2432 = vmul.f32 %v2419, %v2419
  %v2433 = vmul.f32 %v2424, %v2424
  %v2434 = vmul.f32 %v2429, %v2429
  %v2435 = vmul.f32 %v2419, %v2432
  %v2436 = vmul.f32 %v2424, %v2433
  %v2437 = vmul.f32 %v2429, %v2434
  %v2438 = vmul.f32 %v2435, 0.044715
  %v2439 = vmul.f32 %v2436, 0.044715
  %v2440 = vmul.f32 %v2437, 0.044715
  %v2441 = vadd.f32 %v2419, %v2438
  %v2442 = vadd.f32 %v2424, %v2439
  %v2443 = vadd.f32 %v2429, %v2440
  %v2444 = vmul.f32 %v2441, 0.7978846
  %v2445 = vmul.f32 %v2442, 0.7978846
  %v2446 = vmul.f32 %v2443, 0.7978846
  %v2447 = vtanh.pop %v2444
  %v2448 = vtanh.pop %v2445
  %v2449 = vtanh.pop %v2446
  %v2450 = vadd.f32 %v2447, 1.0
  %v2451 = vadd.f32 %v2448, 1.0
  %v2452 = vadd.f32 %v2449, 1.0
  %v2453 = vmul.f32 %v2450, 0.5
  %v2454 = vmul.f32 %v2451, 0.5
  %v2455 = vmul.f32 %v2452, 0.5
  %v2456 = vmul.f32 %v2419, %v2453
  %v2457 = vmul.f32 %v2424, %v2454
  %v2458 = vmul.f32 %v2429, %v2455
  %v2459 = vld [vmem:[%s17] sm:$0xff]
  %v2460 = vld [vmem:[%s17 + $0x8] sm:$0xff]
  %v2461 = vld [vmem:[%s17 + $0x10] sm:$0xff]
  %v2462 = vld [vmem:[%s17 + $0x18] sm:$0xff]
  %v2463 = vld [vmem:[%s17 + $0x20] sm:$0xff]
  %v2464 = vld [vmem:[%s17 + $0x28] sm:$0xff]
  %v2465 = vld [vmem:[%s17 + $0x30] sm:$0xff]
  %v2466 = vld [vmem:[%s17 + $0x38] sm:$0xff]
  %v2467 = vld [vmem:[%s18] sm:$0x1]
  %v2469 = vlaneseq
  %v2470 = vshrl.u32 %v2469, 7
  %v2471 = vsub.s32 0, %v2470
  %v2472 = vrot.slane %v2467, %v2471
  %vm2474 = vcmask 523264
  %v2476 = vsel %vm2474, %v2456, 0
  %v2479 = vsel %vm2474, %v2457, 0
  %v2482 = vsel %vm2474, %v2458, 0
  %2484 = vmatprep.subr.mxu0 0.0
  %2485 = vmatpush1.msra.mxu0 %v2459
  %2486 = vmatprep.subr.mxu0 0.0
  %2487 = vmatpush1.msra.mxu0 %v2460
  %2488 = vmatprep.subr.mxu0 0.0
  %2489 = vmatpush1.msra.mxu0 %v2461
  %2490 = vmatprep.subr.mxu0 0.0
  %2491 = vmatpush1.msra.mxu0 %v2462
  %2492 = vmatprep.subr.mxu0 0.0
  %2493 = vmatpush1.msra.mxu0 %v2463
  %2494 = vmatprep.subr.mxu0 0.0
  %2495 = vmatpush1.msra.mxu0 %v2464
  %2496 = vmatprep.subr.mxu0 0.0
  %2497 = vmatpush1.msra.mxu0 %v2465
  %2498 = vmatprep.subr.mxu0 0.0
  %2499 = vmatpush1.msra.mxu0 %v2466
  %2500 = vmatprep.subr.mxu0 0.0
  %2501 = vmatpush1.msra.mxu0 0.0
  %2502 = vmatprep.subr.mxu0 0.0
  %2503 = vmatpush1.msra.mxu0 0.0
  %2504 = vmatprep.subr.mxu0 0.0
  %2505 = vmatpush1.msra.mxu0 0.0
  %2506 = vmatprep.subr.mxu0 0.0
  %2507 = vmatpush1.msra.mxu0 0.0
  %2508 = vmatprep.subr.mxu0 0.0
  %2509 = vmatpush1.msra.mxu0 0.0
  %2510 = vmatprep.subr.mxu0 0.0
  %2511 = vmatpush1.msra.mxu0 0.0
  %2512 = vmatprep.subr.mxu0 0.0
  %2513 = vmatpush1.msra.mxu0 0.0
  %2514 = vmatprep.subr.mxu0 0.0
  %2515 = vmatpush1.msra.mxu0 0.0
  %2516 = vmatprep.subr.mxu0 0.0
  %2517 = vmatpush1.msra.mxu0 0.0
  %2518 = vmatprep.subr.mxu0 0.0
  %2519 = vmatpush1.msra.mxu0 0.0
  %2520 = vmatprep.subr.mxu0 0.0
  %2521 = vmatpush1.msra.mxu0 0.0
  %2522 = vmatprep.subr.mxu0 0.0
  %2523 = vmatpush1.msra.mxu0 0.0
  %2524 = vmatprep.subr.mxu0 0.0
  %2525 = vmatpush1.msra.mxu0 0.0
  %2526 = vmatprep.subr.mxu0 0.0
  %2527 = vmatpush1.msra.mxu0 0.0
  %2528 = vmatprep.subr.mxu0 0.0
  %2529 = vmatpush1.msra.mxu0 0.0
  %2530 = vmatprep.subr.mxu0 0.0
  %2531 = vmatpush1.msra.mxu0 0.0
  %2532 = vmatprep.subr.mxu0 0.0
  %2533 = vmatpush1.msra.mxu0 0.0
  %2534 = vmatprep.subr.mxu0 0.0
  %2535 = vmatpush1.msra.mxu0 0.0
  %2536 = vmatprep.subr.mxu0 0.0
  %2537 = vmatpush1.msra.mxu0 0.0
  %2538 = vmatprep.subr.mxu0 0.0
  %2539 = vmatpush1.msra.mxu0 0.0
  %2540 = vmatprep.subr.mxu0 0.0
  %2541 = vmatpush1.msra.mxu0 0.0
  %2542 = vmatprep.subr.mxu0 0.0
  %2543 = vmatpush1.msra.mxu0 0.0
  %2544 = vmatprep.subr.mxu0 0.0
  %2545 = vmatpush1.msra.mxu0 0.0
  %2546 = vmatprep.subr.mxu0 0.0
  %2547 = vmatpush1.msra.mxu0 0.0
  %2548 = vmatprep.mubr.f32.mxu0 0.0
  %2549 = vmatmul.mubr.f32.gmra.mrb[0].mxu0 %v2476
  %v2550 = vpop.f32.mrb[0].mxu0
  %v2551 = vadd.f32 %v2472, %v2550
  %v2552 = vpop.f32.mrb[0].mxu0
  %2553 = vmatprep.mubr.f32.mxu0 0.0
  %2554 = vmatmul.mubr.f32.gmra.mrb[0].mxu0 %v2479
  %v2555 = vpop.f32.mrb[0].mxu0
  %v2556 = vadd.f32 %v2472, %v2555
  %v2557 = vpop.f32.mrb[0].mxu0
  %2558 = vmatprep.mubr.f32.mxu0 0.0
  %2559 = vmatmul.mubr.f32.gmra.mrb[0].mxu0 %v2482
  %v2560 = vpop.f32.mrb[0].mxu0
  %v2561 = vadd.f32 %v2472, %v2560
  %v2562 = vpop.f32.mrb[0].mxu0
  %2563 = vdwg.mxu0
  %v2564 = vadd.f32 %v2329, %v2551
  %v2565 = vadd.f32 %v2330, %v2556
  %v2566 = vadd.f32 %v2331, %v2561
  %v2567 = vld [vmem:[%s19] sm:$0x1]
  %v2568 = vld [vmem:[%s20] sm:$0x1]
  %v2569 = vsel %vm253, %v2564, 0.0
  %2570 = vadd.xlane.f32.xlu0 %v2569
  %v2571 = vpop.xlane.xlu0 %2570
  %v2572 = vsel %vm253, %v2565, 0.0
  %2573 = vadd.xlane.f32.xlu0 %v2572
  %v2574 = vpop.xlane.xlu0 %2573
  %v2575 = vsel %vm260, %v2566, 0.0
  %2576 = vadd.xlane.f32.xlu0 %v2575
  %v2577 = vpop.xlane.xlu0 %2576
  %v2578 = vmul.f32 %v2571, %v264
  %v2579 = vmul.f32 %v2574, %v264
  %v2580 = vmul.f32 %v2577, %v264
  %v2581 = vsub.f32 %v2564, %v2578
  %v2582 = vsub.f32 %v2565, %v2579
  %v2583 = vsub.f32 %v2566, %v2580
  %v2584 = vmul.f32 %v2581, %v2581
  %v2585 = vmul.f32 %v2582, %v2582
  %v2586 = vmul.f32 %v2583, %v2583
  %v2587 = vsel %vm253, %v2584, 0.0
  %2588 = vadd.xlane.f32.xlu0 %v2587
  %v2589 = vpop.xlane.xlu0 %2588
  %v2590 = vsel %vm253, %v2585, 0.0
  %2591 = vadd.xlane.f32.xlu0 %v2590
  %v2592 = vpop.xlane.xlu0 %2591
  %v2593 = vsel %vm260, %v2586, 0.0
  %2594 = vadd.xlane.f32.xlu0 %v2593
  %v2595 = vpop.xlane.xlu0 %2594
  %v2596 = vmul.f32 %v2589, %v264
  %v2597 = vmul.f32 %v2592, %v264
  %v2598 = vmul.f32 %v2595, %v264
  %v2599 = vadd.f32 %v2596, 1e-12
  %v2600 = vadd.f32 %v2597, 1e-12
  %v2601 = vadd.f32 %v2598, 1e-12
  %v2602 = vrsqrt.pop %v2599
  %v2603 = vrsqrt.pop %v2600
  %v2604 = vrsqrt.pop %v2601
  %v2605 = vmul.f32 %v2581, %v2602
  %v2606 = vmul.f32 %v2582, %v2603
  %v2607 = vmul.f32 %v2583, %v2604
  %v2609 = vlaneseq
  %v2610 = vshrl.u32 %v2609, 7
  %v2611 = vsub.s32 0, %v2610
  %v2612 = vrot.slane %v2567, %v2611
  %v2614 = vmul.f32 %v2605, %v2612
  %v2615 = vmul.f32 %v2606, %v2612
  %v2616 = vmul.f32 %v2607, %v2612
  %v2618 = vlaneseq
  %v2619 = vshrl.u32 %v2618, 7
  %v2620 = vsub.s32 0, %v2619
  %v2621 = vrot.slane %v2568, %v2620
  %v2623 = vadd.f32 %v2614, %v2621
  %v2624 = vadd.f32 %v2615, %v2621
  %v2625 = vadd.f32 %v2616, %v2621
  %s2626 = scalar_lea.vmem %s9, 32
  %v2627 = vld [vmem:[%s2626] sm:$0xff]
  %v2628 = vld [vmem:[%s2626 + $0x8] sm:$0xff]
  %v2629 = vld [vmem:[%s2626 + $0x10] sm:$0xff]
  %v2630 = vld [vmem:[%s2626 + $0x18] sm:$0xff]
  %s2631 = scalar_lea.vmem %s10, 1
  %v2632 = vld [vmem:[%s2631] sm:$0x1]
  %v2634 = vlaneseq
  %v2635 = vshrl.u32 %v2634, 7
  %v2636 = vsub.s32 0, %v2635
  %v2637 = vrot.slane %v2632, %v2636
  %v2640 = vsel %vm253, %v2623, 0
  %v2643 = vsel %vm253, %v2624, 0
  %v2646 = vsel %vm253, %v2625, 0
  %2648 = vmatprep.subr.mxu0 0.0
  %2649 = vmatpush1.msra.mxu0 %v2627
  %2650 = vmatprep.subr.mxu0 0.0
  %2651 = vmatpush1.msra.mxu0 %v2628
  %2652 = vmatprep.subr.mxu0 0.0
  %2653 = vmatpush1.msra.mxu0 %v2629
  %2654 = vmatprep.subr.mxu0 0.0
  %2655 = vmatpush1.msra.mxu0 %v2630
  %2656 = vmatprep.subr.mxu0 0.0
  %2657 = vmatpush1.msra.mxu0 0.0
  %2658 = vmatprep.subr.mxu0 0.0
  %2659 = vmatpush1.msra.mxu0 0.0
  %2660 = vmatprep.subr.mxu0 0.0
  %2661 = vmatpush1.msra.mxu0 0.0
  %2662 = vmatprep.subr.mxu0 0.0
  %2663 = vmatpush1.msra.mxu0 0.0
  %2664 = vmatprep.subr.mxu0 0.0
  %2665 = vmatpush1.msra.mxu0 0.0
  %2666 = vmatprep.subr.mxu0 0.0
  %2667 = vmatpush1.msra.mxu0 0.0
  %2668 = vmatprep.subr.mxu0 0.0
  %2669 = vmatpush1.msra.mxu0 0.0
  %2670 = vmatprep.subr.mxu0 0.0
  %2671 = vmatpush1.msra.mxu0 0.0
  %2672 = vmatprep.subr.mxu0 0.0
  %2673 = vmatpush1.msra.mxu0 0.0
  %2674 = vmatprep.subr.mxu0 0.0
  %2675 = vmatpush1.msra.mxu0 0.0
  %2676 = vmatprep.subr.mxu0 0.0
  %2677 = vmatpush1.msra.mxu0 0.0
  %2678 = vmatprep.subr.mxu0 0.0
  %2679 = vmatpush1.msra.mxu0 0.0
  %2680 = vmatprep.subr.mxu0 0.0
  %2681 = vmatpush1.msra.mxu0 0.0
  %2682 = vmatprep.subr.mxu0 0.0
  %2683 = vmatpush1.msra.mxu0 0.0
  %2684 = vmatprep.subr.mxu0 0.0
  %2685 = vmatpush1.msra.mxu0 0.0
  %2686 = vmatprep.subr.mxu0 0.0
  %2687 = vmatpush1.msra.mxu0 0.0
  %2688 = vmatprep.subr.mxu0 0.0
  %2689 = vmatpush1.msra.mxu0 0.0
  %2690 = vmatprep.subr.mxu0 0.0
  %2691 = vmatpush1.msra.mxu0 0.0
  %2692 = vmatprep.subr.mxu0 0.0
  %2693 = vmatpush1.msra.mxu0 0.0
  %2694 = vmatprep.subr.mxu0 0.0
  %2695 = vmatpush1.msra.mxu0 0.0
  %2696 = vmatprep.subr.mxu0 0.0
  %2697 = vmatpush1.msra.mxu0 0.0
  %2698 = vmatprep.subr.mxu0 0.0
  %2699 = vmatpush1.msra.mxu0 0.0
  %2700 = vmatprep.subr.mxu0 0.0
  %2701 = vmatpush1.msra.mxu0 0.0
  %2702 = vmatprep.subr.mxu0 0.0
  %2703 = vmatpush1.msra.mxu0 0.0
  %2704 = vmatprep.subr.mxu0 0.0
  %2705 = vmatpush1.msra.mxu0 0.0
  %2706 = vmatprep.subr.mxu0 0.0
  %2707 = vmatpush1.msra.mxu0 0.0
  %2708 = vmatprep.subr.mxu0 0.0
  %2709 = vmatpush1.msra.mxu0 0.0
  %2710 = vmatprep.subr.mxu0 0.0
  %2711 = vmatpush1.msra.mxu0 0.0
  %2712 = vmatprep.mubr.f32.mxu0 0.0
  %2713 = vmatmul.mubr.f32.gmra.mrb[0].mxu0 %v2640
  %v2714 = vpop.f32.mrb[0].mxu0
  %v2715 = vadd.f32 %v2637, %v2714
  %v2716 = vpop.f32.mrb[0].mxu0
  %2717 = vmatprep.mubr.f32.mxu0 0.0
  %2718 = vmatmul.mubr.f32.gmra.mrb[0].mxu0 %v2643
  %v2719 = vpop.f32.mrb[0].mxu0
  %v2720 = vadd.f32 %v2637, %v2719
  %v2721 = vpop.f32.mrb[0].mxu0
  %2722 = vmatprep.mubr.f32.mxu0 0.0
  %2723 = vmatmul.mubr.f32.gmra.mrb[0].mxu0 %v2646
  %v2724 = vpop.f32.mrb[0].mxu0
  %v2725 = vadd.f32 %v2637, %v2724
  %v2726 = vpop.f32.mrb[0].mxu0
  %2727 = vdwg.mxu0
  %2728 = vst.msk [vmem:[#allocation2] sm:$0xff] %vm413, %v2715
  %2729 = vst.msk [vmem:[#allocation2 + $0x8] sm:$0xff] %vm413, %v2720
  %2730 = vst.msk [vmem:[#allocation2 + $0x10] sm:$0x3] %vm416, %v2725
  %v2731 = vld [vmem:[%s3] sm:$0x1]
  %v2732 = vld [vmem:[#allocation2] sm:$0xff]
  %v2733 = vld [vmem:[#allocation2 + $0x8] sm:$0x1]
  %2736 = vrot.lane.b32.xlu0 %v2732, 96
  %v2737 = vpop.permute.xlu0 %2736
  %2738 = vrot.lane.b32.xlu0 %v2733, 96
  %v2739 = vpop.permute.xlu0 %2738
  %v2740 = vsel %vm427, %v2732, 0
  %v2742 = vsel %vm427, %v2733, 0
  %v2744 = vsel %vm427, %v2737, 0
  %v2746 = vsel %vm427, %v2739, 0
  %2748 = vmatprep.subr.mxu0 0.0
  %2749 = vmatpush1.xpose.msra.mxu0 %v2744
  %2750 = vmatprep.subr.mxu0 0.0
  %2751 = vmatpush1.xpose.msra.mxu0 %v2746
  %2752 = vmatprep.subr.mxu0 0.0
  %2753 = vmatpush1.xpose.msra.mxu0 0.0
  %2754 = vmatprep.subr.mxu0 0.0
  %2755 = vmatpush1.xpose.msra.mxu0 0.0
  %2756 = vmatprep.subr.mxu0 0.0
  %2757 = vmatpush1.xpose.msra.mxu0 0.0
  %2758 = vmatprep.subr.mxu0 0.0
  %2759 = vmatpush1.xpose.msra.mxu0 0.0
  %2760 = vmatprep.subr.mxu0 0.0
  %2761 = vmatpush1.xpose.msra.mxu0 0.0
  %2762 = vmatprep.subr.mxu0 0.0
  %2763 = vmatpush1.xpose.msra.mxu0 0.0
  %2764 = vmatprep.subr.mxu0 0.0
  %2765 = vmatpush1.xpose.msra.mxu0 0.0
  %2766 = vmatprep.subr.mxu0 0.0
  %2767 = vmatpush1.xpose.msra.mxu0 0.0
  %2768 = vmatprep.subr.mxu0 0.0
  %2769 = vmatpush1.xpose.msra.mxu0 0.0
  %2770 = vmatprep.subr.mxu0 0.0
  %2771 = vmatpush1.xpose.msra.mxu0 0.0
  %2772 = vmatprep.subr.mxu0 0.0
  %2773 = vmatpush1.xpose.msra.mxu0 0.0
  %2774 = vmatprep.subr.mxu0 0.0
  %2775 = vmatpush1.xpose.msra.mxu0 0.0
  %2776 = vmatprep.subr.mxu0 0.0
  %2777 = vmatpush1.xpose.msra.mxu0 0.0
  %2778 = vmatprep.subr.mxu0 0.0
  %2779 = vmatpush1.xpose.msra.mxu0 0.0
  %2780 = vmatprep.subr.mxu0 0.0
  %2781 = vmatpush1.xpose.msra.mxu0 0.0
  %2782 = vmatprep.subr.mxu0 0.0
  %2783 = vmatpush1.xpose.msra.mxu0 0.0
  %2784 = vmatprep.subr.mxu0 0.0
  %2785 = vmatpush1.xpose.msra.mxu0 0.0
  %2786 = vmatprep.subr.mxu0 0.0
  %2787 = vmatpush1.xpose.msra.mxu0 0.0
  %2788 = vmatprep.subr.mxu0 0.0
  %2789 = vmatpush1.xpose.msra.mxu0 0.0
  %2790 = vmatprep.subr.mxu0 0.0
  %2791 = vmatpush1.xpose.msra.mxu0 0.0
  %2792 = vmatprep.subr.mxu0 0.0
  %2793 = vmatpush1.xpose.msra.mxu0 0.0
  %2794 = vmatprep.subr.mxu0 0.0
  %2795 = vmatpush1.xpose.msra.mxu0 0.0
  %2796 = vmatprep.subr.mxu0 0.0
  %2797 = vmatpush1.xpose.msra.mxu0 0.0
  %2798 = vmatprep.subr.mxu0 0.0
  %2799 = vmatpush1.xpose.msra.mxu0 0.0
  %2800 = vmatprep.subr.mxu0 0.0
  %2801 = vmatpush1.xpose.msra.mxu0 0.0
  %2802 = vmatprep.subr.mxu0 0.0
  %2803 = vmatpush1.xpose.msra.mxu0 0.0
  %2804 = vmatprep.subr.mxu0 0.0
  %2805 = vmatpush1.xpose.msra.mxu0 0.0
  %2806 = vmatprep.subr.mxu0 0.0
  %2807 = vmatpush1.xpose.msra.mxu0 0.0
  %2808 = vmatprep.subr.mxu0 0.0
  %2809 = vmatpush1.xpose.msra.mxu0 0.0
  %2810 = vmatprep.subr.mxu0 0.0
  %2811 = vmatpush1.xpose.msra.mxu0 0.0
  %2812 = vmatprep.mubr.f32.mxu0 0.0
  %2813 = vmatmul.mubr.f32.gmra.mrb[0].mxu0 %v2740
  %v2814 = vpop.f32.mrb[0].mxu0
  %v2815 = vadd.f32 0.0, %v2814
  %v2816 = vpop.f32.mrb[0].mxu0
  %2817 = vmatprep.mubr.f32.mxu0 0.0
  %2818 = vmatmul.mubr.f32.gmra.mrb[0].mxu0 %v2742
  %v2819 = vpop.f32.mrb[0].mxu0
  %v2820 = vadd.f32 0.0, %v2819
  %v2821 = vpop.f32.mrb[0].mxu0
  %2822 = vdwg.mxu0
  %v2823 = vmul.f32 %v2815, 0.35355338
  %v2824 = vmul.f32 %v2820, 0.35355338
  %v2825 = vlaneseq
  %v2826 = vshrl.u32 %v2825, 7
  %v2827 = vsub.s32 0, %v2826
  %v2828 = vrot.slane %v2731, %v2827
  %v2829 = vadd.f32 %v2823, %v2828
  %v2830 = vadd.f32 %v2824, %v2828
  %v2831 = vsel %vm519, %v2829, -inf
  %2832 = vmax.xlane.f32.xlu0 %v2831
  %v2833 = vpop.xlane.xlu0 %2832
  %v2834 = vsel %vm523, %v2830, -inf
  %2835 = vmax.xlane.f32.xlu0 %v2834
  %v2836 = vpop.xlane.xlu0 %2835
  %v2837 = vsub.f32 %v2829, %v2833
  %v2838 = vsub.f32 %v2830, %v2836
  %v2839 = vmul.f32 %v2837, 1.442695
  %v2840 = vpow.pop %v2839
  %v2841 = vmul.f32 %v2838, 1.442695
  %v2842 = vpow.pop %v2841
  %v2843 = vsel %vm519, %v2840, 0.0
  %2844 = vadd.xlane.f32.xlu0 %v2843
  %v2845 = vpop.xlane.xlu0 %2844
  %v2846 = vsel %vm523, %v2842, 0.0
  %2847 = vadd.xlane.f32.xlu0 %v2846
  %v2848 = vpop.xlane.xlu0 %2847
  %v2849 = vrcp.pop %v2845
  %v2850 = vrcp.pop %v2848
  %v2851 = vmul.f32 %v2840, %v2849
  %v2852 = vmul.f32 %v2842, %v2850
  %2853 = vrot.lane.b32.xlu0 %v2732, 64
  %v2854 = vpop.permute.xlu0 %2853
  %2855 = vrot.lane.b32.xlu0 %v2733, 64
  %v2856 = vpop.permute.xlu0 %2855
  %v2859 = vsel %vm519, %v2851, 0
  %v2862 = vsel %vm519, %v2852, 0
  %v2864 = vsel %vm554, %v2856, 0
  %2866 = vmatprep.subr.mxu0 0.0
  %2867 = vmatpush1.msra.mxu0 %v2854
  %2868 = vmatprep.subr.mxu0 0.0
  %2869 = vmatpush1.msra.mxu0 %v2864
  %2870 = vmatprep.subr.mxu0 0.0
  %2871 = vmatpush1.msra.mxu0 0.0
  %2872 = vmatprep.subr.mxu0 0.0
  %2873 = vmatpush1.msra.mxu0 0.0
  %2874 = vmatprep.subr.mxu0 0.0
  %2875 = vmatpush1.msra.mxu0 0.0
  %2876 = vmatprep.subr.mxu0 0.0
  %2877 = vmatpush1.msra.mxu0 0.0
  %2878 = vmatprep.subr.mxu0 0.0
  %2879 = vmatpush1.msra.mxu0 0.0
  %2880 = vmatprep.subr.mxu0 0.0
  %2881 = vmatpush1.msra.mxu0 0.0
  %2882 = vmatprep.subr.mxu0 0.0
  %2883 = vmatpush1.msra.mxu0 0.0
  %2884 = vmatprep.subr.mxu0 0.0
  %2885 = vmatpush1.msra.mxu0 0.0
  %2886 = vmatprep.subr.mxu0 0.0
  %2887 = vmatpush1.msra.mxu0 0.0
  %2888 = vmatprep.subr.mxu0 0.0
  %2889 = vmatpush1.msra.mxu0 0.0
  %2890 = vmatprep.subr.mxu0 0.0
  %2891 = vmatpush1.msra.mxu0 0.0
  %2892 = vmatprep.subr.mxu0 0.0
  %2893 = vmatpush1.msra.mxu0 0.0
  %2894 = vmatprep.subr.mxu0 0.0
  %2895 = vmatpush1.msra.mxu0 0.0
  %2896 = vmatprep.subr.mxu0 0.0
  %2897 = vmatpush1.msra.mxu0 0.0
  %2898 = vmatprep.subr.mxu0 0.0
  %2899 = vmatpush1.msra.mxu0 0.0
  %2900 = vmatprep.subr.mxu0 0.0
  %2901 = vmatpush1.msra.mxu0 0.0
  %2902 = vmatprep.subr.mxu0 0.0
  %2903 = vmatpush1.msra.mxu0 0.0
  %2904 = vmatprep.subr.mxu0 0.0
  %2905 = vmatpush1.msra.mxu0 0.0
  %2906 = vmatprep.subr.mxu0 0.0
  %2907 = vmatpush1.msra.mxu0 0.0
  %2908 = vmatprep.subr.mxu0 0.0
  %2909 = vmatpush1.msra.mxu0 0.0
  %2910 = vmatprep.subr.mxu0 0.0
  %2911 = vmatpush1.msra.mxu0 0.0
  %2912 = vmatprep.subr.mxu0 0.0
  %2913 = vmatpush1.msra.mxu0 0.0
  %2914 = vmatprep.subr.mxu0 0.0
  %2915 = vmatpush1.msra.mxu0 0.0
  %2916 = vmatprep.subr.mxu0 0.0
  %2917 = vmatpush1.msra.mxu0 0.0
  %2918 = vmatprep.subr.mxu0 0.0
  %2919 = vmatpush1.msra.mxu0 0.0
  %2920 = vmatprep.subr.mxu0 0.0
  %2921 = vmatpush1.msra.mxu0 0.0
  %2922 = vmatprep.subr.mxu0 0.0
  %2923 = vmatpush1.msra.mxu0 0.0
  %2924 = vmatprep.subr.mxu0 0.0
  %2925 = vmatpush1.msra.mxu0 0.0
  %2926 = vmatprep.subr.mxu0 0.0
  %2927 = vmatpush1.msra.mxu0 0.0
  %2928 = vmatprep.subr.mxu0 0.0
  %2929 = vmatpush1.msra.mxu0 0.0
  %2930 = vmatprep.mubr.f32.mxu0 0.0
  %2931 = vmatmul.mubr.f32.gmra.mrb[0].mxu0 %v2859
  %v2932 = vpop.f32.mrb[0].mxu0
  %v2933 = vadd.f32 0.0, %v2932
  %v2934 = vpop.f32.mrb[0].mxu0
  %2935 = vmatprep.mubr.f32.mxu0 0.0
  %2936 = vmatmul.mubr.f32.gmra.mrb[0].mxu0 %v2862
  %v2937 = vpop.f32.mrb[0].mxu0
  %v2938 = vadd.f32 0.0, %v2937
  %v2939 = vpop.f32.mrb[0].mxu0
  %2940 = vdwg.mxu0
  %2941 = vst.msk [vmem:[#allocation3] sm:$0xff] %vm427, %v2933
  %2942 = vst.msk [vmem:[#allocation3 + $0x8] sm:$0x1] %vm633, %v2938
  %v2943 = vld [vmem:[#allocation2] sm:$0xff]
  %v2944 = vld [vmem:[#allocation2 + $0x8] sm:$0x1]
  %2947 = vrot.lane.b32.xlu0 %v2943, 120
  %v2948 = vpop.permute.xlu0 %2947
  %2949 = vrot.lane.b32.xlu0 %v2944, 120
  %v2950 = vpop.permute.xlu0 %2949
  %2951 = vrot.lane.b32.xlu0 %v2943, 88
  %v2952 = vpop.permute.xlu0 %2951
  %2953 = vrot.lane.b32.xlu0 %v2944, 88
  %v2954 = vpop.permute.xlu0 %2953
  %v2955 = vsel %vm427, %v2948, 0
  %v2957 = vsel %vm427, %v2950, 0
  %v2959 = vsel %vm427, %v2952, 0
  %v2961 = vsel %vm427, %v2954, 0
  %2963 = vmatprep.subr.mxu0 0.0
  %2964 = vmatpush1.xpose.msra.mxu0 %v2959
  %2965 = vmatprep.subr.mxu0 0.0
  %2966 = vmatpush1.xpose.msra.mxu0 %v2961
  %2967 = vmatprep.subr.mxu0 0.0
  %2968 = vmatpush1.xpose.msra.mxu0 0.0
  %2969 = vmatprep.subr.mxu0 0.0
  %2970 = vmatpush1.xpose.msra.mxu0 0.0
  %2971 = vmatprep.subr.mxu0 0.0
  %2972 = vmatpush1.xpose.msra.mxu0 0.0
  %2973 = vmatprep.subr.mxu0 0.0
  %2974 = vmatpush1.xpose.msra.mxu0 0.0
  %2975 = vmatprep.subr.mxu0 0.0
  %2976 = vmatpush1.xpose.msra.mxu0 0.0
  %2977 = vmatprep.subr.mxu0 0.0
  %2978 = vmatpush1.xpose.msra.mxu0 0.0
  %2979 = vmatprep.subr.mxu0 0.0
  %2980 = vmatpush1.xpose.msra.mxu0 0.0
  %2981 = vmatprep.subr.mxu0 0.0
  %2982 = vmatpush1.xpose.msra.mxu0 0.0
  %2983 = vmatprep.subr.mxu0 0.0
  %2984 = vmatpush1.xpose.msra.mxu0 0.0
  %2985 = vmatprep.subr.mxu0 0.0
  %2986 = vmatpush1.xpose.msra.mxu0 0.0
  %2987 = vmatprep.subr.mxu0 0.0
  %2988 = vmatpush1.xpose.msra.mxu0 0.0
  %2989 = vmatprep.subr.mxu0 0.0
  %2990 = vmatpush1.xpose.msra.mxu0 0.0
  %2991 = vmatprep.subr.mxu0 0.0
  %2992 = vmatpush1.xpose.msra.mxu0 0.0
  %2993 = vmatprep.subr.mxu0 0.0
  %2994 = vmatpush1.xpose.msra.mxu0 0.0
  %2995 = vmatprep.subr.mxu0 0.0
  %2996 = vmatpush1.xpose.msra.mxu0 0.0
  %2997 = vmatprep.subr.mxu0 0.0
  %2998 = vmatpush1.xpose.msra.mxu0 0.0
  %2999 = vmatprep.subr.mxu0 0.0
  %3000 = vmatpush1.xpose.msra.mxu0 0.0
  %3001 = vmatprep.subr.mxu0 0.0
  %3002 = vmatpush1.xpose.msra.mxu0 0.0
  %3003 = vmatprep.subr.mxu0 0.0
  %3004 = vmatpush1.xpose.msra.mxu0 0.0
  %3005 = vmatprep.subr.mxu0 0.0
  %3006 = vmatpush1.xpose.msra.mxu0 0.0
  %3007 = vmatprep.subr.mxu0 0.0
  %3008 = vmatpush1.xpose.msra.mxu0 0.0
  %3009 = vmatprep.subr.mxu0 0.0
  %3010 = vmatpush1.xpose.msra.mxu0 0.0
  %3011 = vmatprep.subr.mxu0 0.0
  %3012 = vmatpush1.xpose.msra.mxu0 0.0
  %3013 = vmatprep.subr.mxu0 0.0
  %3014 = vmatpush1.xpose.msra.mxu0 0.0
  %3015 = vmatprep.subr.mxu0 0.0
  %3016 = vmatpush1.xpose.msra.mxu0 0.0
  %3017 = vmatprep.subr.mxu0 0.0
  %3018 = vmatpush1.xpose.msra.mxu0 0.0
  %3019 = vmatprep.subr.mxu0 0.0
  %3020 = vmatpush1.xpose.msra.mxu0 0.0
  %3021 = vmatprep.subr.mxu0 0.0
  %3022 = vmatpush1.xpose.msra.mxu0 0.0
  %3023 = vmatprep.subr.mxu0 0.0
  %3024 = vmatpush1.xpose.msra.mxu0 0.0
  %3025 = vmatprep.subr.mxu0 0.0
  %3026 = vmatpush1.xpose.msra.mxu0 0.0
  %3027 = vmatprep.mubr.f32.mxu0 0.0
  %3028 = vmatmul.mubr.f32.gmra.mrb[0].mxu0 %v2955
  %v3029 = vpop.f32.mrb[0].mxu0
  %v3030 = vadd.f32 0.0, %v3029
  %v3031 = vpop.f32.mrb[0].mxu0
  %3032 = vmatprep.mubr.f32.mxu0 0.0
  %3033 = vmatmul.mubr.f32.gmra.mrb[0].mxu0 %v2957
  %v3034 = vpop.f32.mrb[0].mxu0
  %v3035 = vadd.f32 0.0, %v3034
  %v3036 = vpop.f32.mrb[0].mxu0
  %3037 = vdwg.mxu0
  %v3038 = vmul.f32 %v3030, 0.35355338
  %v3039 = vmul.f32 %v3035, 0.35355338
  %v3040 = vadd.f32 %v3038, %v2828
  %v3041 = vadd.f32 %v3039, %v2828
  %v3042 = vsel %vm519, %v3040, -inf
  %3043 = vmax.xlane.f32.xlu0 %v3042
  %v3044 = vpop.xlane.xlu0 %3043
  %v3045 = vsel %vm523, %v3041, -inf
  %3046 = vmax.xlane.f32.xlu0 %v3045
  %v3047 = vpop.xlane.xlu0 %3046
  %v3048 = vsub.f32 %v3040, %v3044
  %v3049 = vsub.f32 %v3041, %v3047
  %v3050 = vmul.f32 %v3048, 1.442695
  %v3051 = vpow.pop %v3050
  %v3052 = vmul.f32 %v3049, 1.442695
  %v3053 = vpow.pop %v3052
  %v3054 = vsel %vm519, %v3051, 0.0
  %3055 = vadd.xlane.f32.xlu0 %v3054
  %v3056 = vpop.xlane.xlu0 %3055
  %v3057 = vsel %vm523, %v3053, 0.0
  %3058 = vadd.xlane.f32.xlu0 %v3057
  %v3059 = vpop.xlane.xlu0 %3058
  %v3060 = vrcp.pop %v3056
  %v3061 = vrcp.pop %v3059
  %v3062 = vmul.f32 %v3051, %v3060
  %v3063 = vmul.f32 %v3053, %v3061
  %3064 = vrot.lane.b32.xlu0 %v2943, 56
  %v3065 = vpop.permute.xlu0 %3064
  %3066 = vrot.lane.b32.xlu0 %v2944, 56
  %v3067 = vpop.permute.xlu0 %3066
  %v3070 = vsel %vm519, %v3062, 0
  %v3073 = vsel %vm519, %v3063, 0
  %v3075 = vsel %vm554, %v3067, 0
  %3077 = vmatprep.subr.mxu0 0.0
  %3078 = vmatpush1.msra.mxu0 %v3065
  %3079 = vmatprep.subr.mxu0 0.0
  %3080 = vmatpush1.msra.mxu0 %v3075
  %3081 = vmatprep.subr.mxu0 0.0
  %3082 = vmatpush1.msra.mxu0 0.0
  %3083 = vmatprep.subr.mxu0 0.0
  %3084 = vmatpush1.msra.mxu0 0.0
  %3085 = vmatprep.subr.mxu0 0.0
  %3086 = vmatpush1.msra.mxu0 0.0
  %3087 = vmatprep.subr.mxu0 0.0
  %3088 = vmatpush1.msra.mxu0 0.0
  %3089 = vmatprep.subr.mxu0 0.0
  %3090 = vmatpush1.msra.mxu0 0.0
  %3091 = vmatprep.subr.mxu0 0.0
  %3092 = vmatpush1.msra.mxu0 0.0
  %3093 = vmatprep.subr.mxu0 0.0
  %3094 = vmatpush1.msra.mxu0 0.0
  %3095 = vmatprep.subr.mxu0 0.0
  %3096 = vmatpush1.msra.mxu0 0.0
  %3097 = vmatprep.subr.mxu0 0.0
  %3098 = vmatpush1.msra.mxu0 0.0
  %3099 = vmatprep.subr.mxu0 0.0
  %3100 = vmatpush1.msra.mxu0 0.0
  %3101 = vmatprep.subr.mxu0 0.0
  %3102 = vmatpush1.msra.mxu0 0.0
  %3103 = vmatprep.subr.mxu0 0.0
  %3104 = vmatpush1.msra.mxu0 0.0
  %3105 = vmatprep.subr.mxu0 0.0
  %3106 = vmatpush1.msra.mxu0 0.0
  %3107 = vmatprep.subr.mxu0 0.0
  %3108 = vmatpush1.msra.mxu0 0.0
  %3109 = vmatprep.subr.mxu0 0.0
  %3110 = vmatpush1.msra.mxu0 0.0
  %3111 = vmatprep.subr.mxu0 0.0
  %3112 = vmatpush1.msra.mxu0 0.0
  %3113 = vmatprep.subr.mxu0 0.0
  %3114 = vmatpush1.msra.mxu0 0.0
  %3115 = vmatprep.subr.mxu0 0.0
  %3116 = vmatpush1.msra.mxu0 0.0
  %3117 = vmatprep.subr.mxu0 0.0
  %3118 = vmatpush1.msra.mxu0 0.0
  %3119 = vmatprep.subr.mxu0 0.0
  %3120 = vmatpush1.msra.mxu0 0.0
  %3121 = vmatprep.subr.mxu0 0.0
  %3122 = vmatpush1.msra.mxu0 0.0
  %3123 = vmatprep.subr.mxu0 0.0
  %3124 = vmatpush1.msra.mxu0 0.0
  %3125 = vmatprep.subr.mxu0 0.0
  %3126 = vmatpush1.msra.mxu0 0.0
  %3127 = vmatprep.subr.mxu0 0.0
  %3128 = vmatpush1.msra.mxu0 0.0
  %3129 = vmatprep.subr.mxu0 0.0
  %3130 = vmatpush1.msra.mxu0 0.0
  %3131 = vmatprep.subr.mxu0 0.0
  %3132 = vmatpush1.msra.mxu0 0.0
  %3133 = vmatprep.subr.mxu0 0.0
  %3134 = vmatpush1.msra.mxu0 0.0
  %3135 = vmatprep.subr.mxu0 0.0
  %3136 = vmatpush1.msra.mxu0 0.0
  %3137 = vmatprep.subr.mxu0 0.0
  %3138 = vmatpush1.msra.mxu0 0.0
  %3139 = vmatprep.subr.mxu0 0.0
  %3140 = vmatpush1.msra.mxu0 0.0
  %3141 = vmatprep.mubr.f32.mxu0 0.0
  %3142 = vmatmul.mubr.f32.gmra.mrb[0].mxu0 %v3070
  %v3143 = vpop.f32.mrb[0].mxu0
  %v3144 = vadd.f32 0.0, %v3143
  %v3145 = vpop.f32.mrb[0].mxu0
  %3146 = vmatprep.mubr.f32.mxu0 0.0
  %3147 = vmatmul.mubr.f32.gmra.mrb[0].mxu0 %v3073
  %v3148 = vpop.f32.mrb[0].mxu0
  %v3149 = vadd.f32 0.0, %v3148
  %v3150 = vpop.f32.mrb[0].mxu0
  %3151 = vdwg.mxu0
  %3154 = vrot.lane.b32.xlu0 %v3144, 8
  %v3155 = vpop.permute.xlu0 %3154
  %3156 = vrot.lane.b32.xlu0 %v3149, 8
  %v3157 = vpop.permute.xlu0 %3156
  %3160 = vst.msk [vmem:[#allocation3] sm:$0xff] %vm852, %v3155
  %3161 = vst.msk [vmem:[#allocation3 + $0x8] sm:$0x1] %vm854, %v3157
  %v3162 = vld [vmem:[#allocation2] sm:$0xff]
  %v3163 = vld [vmem:[#allocation2 + $0x8] sm:$0x1]
  %3166 = vrot.lane.b32.xlu0 %v3162, 112
  %v3167 = vpop.permute.xlu0 %3166
  %3168 = vrot.lane.b32.xlu0 %v3163, 112
  %v3169 = vpop.permute.xlu0 %3168
  %3170 = vrot.lane.b32.xlu0 %v3162, 80
  %v3171 = vpop.permute.xlu0 %3170
  %3172 = vrot.lane.b32.xlu0 %v3163, 80
  %v3173 = vpop.permute.xlu0 %3172
  %v3174 = vsel %vm427, %v3167, 0
  %v3176 = vsel %vm427, %v3169, 0
  %v3178 = vsel %vm427, %v3171, 0
  %v3180 = vsel %vm427, %v3173, 0
  %3182 = vmatprep.subr.mxu0 0.0
  %3183 = vmatpush1.xpose.msra.mxu0 %v3178
  %3184 = vmatprep.subr.mxu0 0.0
  %3185 = vmatpush1.xpose.msra.mxu0 %v3180
  %3186 = vmatprep.subr.mxu0 0.0
  %3187 = vmatpush1.xpose.msra.mxu0 0.0
  %3188 = vmatprep.subr.mxu0 0.0
  %3189 = vmatpush1.xpose.msra.mxu0 0.0
  %3190 = vmatprep.subr.mxu0 0.0
  %3191 = vmatpush1.xpose.msra.mxu0 0.0
  %3192 = vmatprep.subr.mxu0 0.0
  %3193 = vmatpush1.xpose.msra.mxu0 0.0
  %3194 = vmatprep.subr.mxu0 0.0
  %3195 = vmatpush1.xpose.msra.mxu0 0.0
  %3196 = vmatprep.subr.mxu0 0.0
  %3197 = vmatpush1.xpose.msra.mxu0 0.0
  %3198 = vmatprep.subr.mxu0 0.0
  %3199 = vmatpush1.xpose.msra.mxu0 0.0
  %3200 = vmatprep.subr.mxu0 0.0
  %3201 = vmatpush1.xpose.msra.mxu0 0.0
  %3202 = vmatprep.subr.mxu0 0.0
  %3203 = vmatpush1.xpose.msra.mxu0 0.0
  %3204 = vmatprep.subr.mxu0 0.0
  %3205 = vmatpush1.xpose.msra.mxu0 0.0
  %3206 = vmatprep.subr.mxu0 0.0
  %3207 = vmatpush1.xpose.msra.mxu0 0.0
  %3208 = vmatprep.subr.mxu0 0.0
  %3209 = vmatpush1.xpose.msra.mxu0 0.0
  %3210 = vmatprep.subr.mxu0 0.0
  %3211 = vmatpush1.xpose.msra.mxu0 0.0
  %3212 = vmatprep.subr.mxu0 0.0
  %3213 = vmatpush1.xpose.msra.mxu0 0.0
  %3214 = vmatprep.subr.mxu0 0.0
  %3215 = vmatpush1.xpose.msra.mxu0 0.0
  %3216 = vmatprep.subr.mxu0 0.0
  %3217 = vmatpush1.xpose.msra.mxu0 0.0
  %3218 = vmatprep.subr.mxu0 0.0
  %3219 = vmatpush1.xpose.msra.mxu0 0.0
  %3220 = vmatprep.subr.mxu0 0.0
  %3221 = vmatpush1.xpose.msra.mxu0 0.0
  %3222 = vmatprep.subr.mxu0 0.0
  %3223 = vmatpush1.xpose.msra.mxu0 0.0
  %3224 = vmatprep.subr.mxu0 0.0
  %3225 = vmatpush1.xpose.msra.mxu0 0.0
  %3226 = vmatprep.subr.mxu0 0.0
  %3227 = vmatpush1.xpose.msra.mxu0 0.0
  %3228 = vmatprep.subr.mxu0 0.0
  %3229 = vmatpush1.xpose.msra.mxu0 0.0
  %3230 = vmatprep.subr.mxu0 0.0
  %3231 = vmatpush1.xpose.msra.mxu0 0.0
  %3232 = vmatprep.subr.mxu0 0.0
  %3233 = vmatpush1.xpose.msra.mxu0 0.0
  %3234 = vmatprep.subr.mxu0 0.0
  %3235 = vmatpush1.xpose.msra.mxu0 0.0
  %3236 = vmatprep.subr.mxu0 0.0
  %3237 = vmatpush1.xpose.msra.mxu0 0.0
  %3238 = vmatprep.subr.mxu0 0.0
  %3239 = vmatpush1.xpose.msra.mxu0 0.0
  %3240 = vmatprep.subr.mxu0 0.0
  %3241 = vmatpush1.xpose.msra.mxu0 0.0
  %3242 = vmatprep.subr.mxu0 0.0
  %3243 = vmatpush1.xpose.msra.mxu0 0.0
  %3244 = vmatprep.subr.mxu0 0.0
  %3245 = vmatpush1.xpose.msra.mxu0 0.0
  %3246 = vmatprep.mubr.f32.mxu0 0.0
  %3247 = vmatmul.mubr.f32.gmra.mrb[0].mxu0 %v3174
  %v3248 = vpop.f32.mrb[0].mxu0
  %v3249 = vadd.f32 0.0, %v3248
  %v3250 = vpop.f32.mrb[0].mxu0
  %3251 = vmatprep.mubr.f32.mxu0 0.0
  %3252 = vmatmul.mubr.f32.gmra.mrb[0].mxu0 %v3176
  %v3253 = vpop.f32.mrb[0].mxu0
  %v3254 = vadd.f32 0.0, %v3253
  %v3255 = vpop.f32.mrb[0].mxu0
  %3256 = vdwg.mxu0
  %v3257 = vmul.f32 %v3249, 0.35355338
  %v3258 = vmul.f32 %v3254, 0.35355338
  %v3259 = vadd.f32 %v3257, %v2828
  %v3260 = vadd.f32 %v3258, %v2828
  %v3261 = vsel %vm519, %v3259, -inf
  %3262 = vmax.xlane.f32.xlu0 %v3261
  %v3263 = vpop.xlane.xlu0 %3262
  %v3264 = vsel %vm523, %v3260, -inf
  %3265 = vmax.xlane.f32.xlu0 %v3264
  %v3266 = vpop.xlane.xlu0 %3265
  %v3267 = vsub.f32 %v3259, %v3263
  %v3268 = vsub.f32 %v3260, %v3266
  %v3269 = vmul.f32 %v3267, 1.442695
  %v3270 = vpow.pop %v3269
  %v3271 = vmul.f32 %v3268, 1.442695
  %v3272 = vpow.pop %v3271
  %v3273 = vsel %vm519, %v3270, 0.0
  %3274 = vadd.xlane.f32.xlu0 %v3273
  %v3275 = vpop.xlane.xlu0 %3274
  %v3276 = vsel %vm523, %v3272, 0.0
  %3277 = vadd.xlane.f32.xlu0 %v3276
  %v3278 = vpop.xlane.xlu0 %3277
  %v3279 = vrcp.pop %v3275
  %v3280 = vrcp.pop %v3278
  %v3281 = vmul.f32 %v3270, %v3279
  %v3282 = vmul.f32 %v3272, %v3280
  %3283 = vrot.lane.b32.xlu0 %v3162, 48
  %v3284 = vpop.permute.xlu0 %3283
  %3285 = vrot.lane.b32.xlu0 %v3163, 48
  %v3286 = vpop.permute.xlu0 %3285
  %v3289 = vsel %vm519, %v3281, 0
  %v3292 = vsel %vm519, %v3282, 0
  %v3294 = vsel %vm554, %v3286, 0
  %3296 = vmatprep.subr.mxu0 0.0
  %3297 = vmatpush1.msra.mxu0 %v3284
  %3298 = vmatprep.subr.mxu0 0.0
  %3299 = vmatpush1.msra.mxu0 %v3294
  %3300 = vmatprep.subr.mxu0 0.0
  %3301 = vmatpush1.msra.mxu0 0.0
  %3302 = vmatprep.subr.mxu0 0.0
  %3303 = vmatpush1.msra.mxu0 0.0
  %3304 = vmatprep.subr.mxu0 0.0
  %3305 = vmatpush1.msra.mxu0 0.0
  %3306 = vmatprep.subr.mxu0 0.0
  %3307 = vmatpush1.msra.mxu0 0.0
  %3308 = vmatprep.subr.mxu0 0.0
  %3309 = vmatpush1.msra.mxu0 0.0
  %3310 = vmatprep.subr.mxu0 0.0
  %3311 = vmatpush1.msra.mxu0 0.0
  %3312 = vmatprep.subr.mxu0 0.0
  %3313 = vmatpush1.msra.mxu0 0.0
  %3314 = vmatprep.subr.mxu0 0.0
  %3315 = vmatpush1.msra.mxu0 0.0
  %3316 = vmatprep.subr.mxu0 0.0
  %3317 = vmatpush1.msra.mxu0 0.0
  %3318 = vmatprep.subr.mxu0 0.0
  %3319 = vmatpush1.msra.mxu0 0.0
  %3320 = vmatprep.subr.mxu0 0.0
  %3321 = vmatpush1.msra.mxu0 0.0
  %3322 = vmatprep.subr.mxu0 0.0
  %3323 = vmatpush1.msra.mxu0 0.0
  %3324 = vmatprep.subr.mxu0 0.0
  %3325 = vmatpush1.msra.mxu0 0.0
  %3326 = vmatprep.subr.mxu0 0.0
  %3327 = vmatpush1.msra.mxu0 0.0
  %3328 = vmatprep.subr.mxu0 0.0
  %3329 = vmatpush1.msra.mxu0 0.0
  %3330 = vmatprep.subr.mxu0 0.0
  %3331 = vmatpush1.msra.mxu0 0.0
  %3332 = vmatprep.subr.mxu0 0.0
  %3333 = vmatpush1.msra.mxu0 0.0
  %3334 = vmatprep.subr.mxu0 0.0
  %3335 = vmatpush1.msra.mxu0 0.0
  %3336 = vmatprep.subr.mxu0 0.0
  %3337 = vmatpush1.msra.mxu0 0.0
  %3338 = vmatprep.subr.mxu0 0.0
  %3339 = vmatpush1.msra.mxu0 0.0
  %3340 = vmatprep.subr.mxu0 0.0
  %3341 = vmatpush1.msra.mxu0 0.0
  %3342 = vmatprep.subr.mxu0 0.0
  %3343 = vmatpush1.msra.mxu0 0.0
  %3344 = vmatprep.subr.mxu0 0.0
  %3345 = vmatpush1.msra.mxu0 0.0
  %3346 = vmatprep.subr.mxu0 0.0
  %3347 = vmatpush1.msra.mxu0 0.0
  %3348 = vmatprep.subr.mxu0 0.0
  %3349 = vmatpush1.msra.mxu0 0.0
  %3350 = vmatprep.subr.mxu0 0.0
  %3351 = vmatpush1.msra.mxu0 0.0
  %3352 = vmatprep.subr.mxu0 0.0
  %3353 = vmatpush1.msra.mxu0 0.0
  %3354 = vmatprep.subr.mxu0 0.0
  %3355 = vmatpush1.msra.mxu0 0.0
  %3356 = vmatprep.subr.mxu0 0.0
  %3357 = vmatpush1.msra.mxu0 0.0
  %3358 = vmatprep.subr.mxu0 0.0
  %3359 = vmatpush1.msra.mxu0 0.0
  %3360 = vmatprep.mubr.f32.mxu0 0.0
  %3361 = vmatmul.mubr.f32.gmra.mrb[0].mxu0 %v3289
  %v3362 = vpop.f32.mrb[0].mxu0
  %v3363 = vadd.f32 0.0, %v3362
  %v3364 = vpop.f32.mrb[0].mxu0
  %3365 = vmatprep.mubr.f32.mxu0 0.0
  %3366 = vmatmul.mubr.f32.gmra.mrb[0].mxu0 %v3292
  %v3367 = vpop.f32.mrb[0].mxu0
  %v3368 = vadd.f32 0.0, %v3367
  %v3369 = vpop.f32.mrb[0].mxu0
  %3370 = vdwg.mxu0
  %3373 = vrot.lane.b32.xlu0 %v3363, 16
  %v3374 = vpop.permute.xlu0 %3373
  %3375 = vrot.lane.b32.xlu0 %v3368, 16
  %v3376 = vpop.permute.xlu0 %3375
  %3379 = vst.msk [vmem:[#allocation3] sm:$0xff] %vm1073, %v3374
  %3380 = vst.msk [vmem:[#allocation3 + $0x8] sm:$0x1] %vm1075, %v3376
  %v3381 = vld [vmem:[#allocation2] sm:$0xff]
  %v3382 = vld [vmem:[#allocation2 + $0x8] sm:$0x1]
  %3385 = vrot.lane.b32.xlu0 %v3381, 104
  %v3386 = vpop.permute.xlu0 %3385
  %3387 = vrot.lane.b32.xlu0 %v3382, 104
  %v3388 = vpop.permute.xlu0 %3387
  %3389 = vrot.lane.b32.xlu0 %v3381, 72
  %v3390 = vpop.permute.xlu0 %3389
  %3391 = vrot.lane.b32.xlu0 %v3382, 72
  %v3392 = vpop.permute.xlu0 %3391
  %v3393 = vsel %vm427, %v3386, 0
  %v3395 = vsel %vm427, %v3388, 0
  %v3397 = vsel %vm427, %v3390, 0
  %v3399 = vsel %vm427, %v3392, 0
  %3401 = vmatprep.subr.mxu0 0.0
  %3402 = vmatpush1.xpose.msra.mxu0 %v3397
  %3403 = vmatprep.subr.mxu0 0.0
  %3404 = vmatpush1.xpose.msra.mxu0 %v3399
  %3405 = vmatprep.subr.mxu0 0.0
  %3406 = vmatpush1.xpose.msra.mxu0 0.0
  %3407 = vmatprep.subr.mxu0 0.0
  %3408 = vmatpush1.xpose.msra.mxu0 0.0
  %3409 = vmatprep.subr.mxu0 0.0
  %3410 = vmatpush1.xpose.msra.mxu0 0.0
  %3411 = vmatprep.subr.mxu0 0.0
  %3412 = vmatpush1.xpose.msra.mxu0 0.0
  %3413 = vmatprep.subr.mxu0 0.0
  %3414 = vmatpush1.xpose.msra.mxu0 0.0
  %3415 = vmatprep.subr.mxu0 0.0
  %3416 = vmatpush1.xpose.msra.mxu0 0.0
  %3417 = vmatprep.subr.mxu0 0.0
  %3418 = vmatpush1.xpose.msra.mxu0 0.0
  %3419 = vmatprep.subr.mxu0 0.0
  %3420 = vmatpush1.xpose.msra.mxu0 0.0
  %3421 = vmatprep.subr.mxu0 0.0
  %3422 = vmatpush1.xpose.msra.mxu0 0.0
  %3423 = vmatprep.subr.mxu0 0.0
  %3424 = vmatpush1.xpose.msra.mxu0 0.0
  %3425 = vmatprep.subr.mxu0 0.0
  %3426 = vmatpush1.xpose.msra.mxu0 0.0
  %3427 = vmatprep.subr.mxu0 0.0
  %3428 = vmatpush1.xpose.msra.mxu0 0.0
  %3429 = vmatprep.subr.mxu0 0.0
  %3430 = vmatpush1.xpose.msra.mxu0 0.0
  %3431 = vmatprep.subr.mxu0 0.0
  %3432 = vmatpush1.xpose.msra.mxu0 0.0
  %3433 = vmatprep.subr.mxu0 0.0
  %3434 = vmatpush1.xpose.msra.mxu0 0.0
  %3435 = vmatprep.subr.mxu0 0.0
  %3436 = vmatpush1.xpose.msra.mxu0 0.0
  %3437 = vmatprep.subr.mxu0 0.0
  %3438 = vmatpush1.xpose.msra.mxu0 0.0
  %3439 = vmatprep.subr.mxu0 0.0
  %3440 = vmatpush1.xpose.msra.mxu0 0.0
  %3441 = vmatprep.subr.mxu0 0.0
  %3442 = vmatpush1.xpose.msra.mxu0 0.0
  %3443 = vmatprep.subr.mxu0 0.0
  %3444 = vmatpush1.xpose.msra.mxu0 0.0
  %3445 = vmatprep.subr.mxu0 0.0
  %3446 = vmatpush1.xpose.msra.mxu0 0.0
  %3447 = vmatprep.subr.mxu0 0.0
  %3448 = vmatpush1.xpose.msra.mxu0 0.0
  %3449 = vmatprep.subr.mxu0 0.0
  %3450 = vmatpush1.xpose.msra.mxu0 0.0
  %3451 = vmatprep.subr.mxu0 0.0
  %3452 = vmatpush1.xpose.msra.mxu0 0.0
  %3453 = vmatprep.subr.mxu0 0.0
  %3454 = vmatpush1.xpose.msra.mxu0 0.0
  %3455 = vmatprep.subr.mxu0 0.0
  %3456 = vmatpush1.xpose.msra.mxu0 0.0
  %3457 = vmatprep.subr.mxu0 0.0
  %3458 = vmatpush1.xpose.msra.mxu0 0.0
  %3459 = vmatprep.subr.mxu0 0.0
  %3460 = vmatpush1.xpose.msra.mxu0 0.0
  %3461 = vmatprep.subr.mxu0 0.0
  %3462 = vmatpush1.xpose.msra.mxu0 0.0
  %3463 = vmatprep.subr.mxu0 0.0
  %3464 = vmatpush1.xpose.msra.mxu0 0.0
  %3465 = vmatprep.mubr.f32.mxu0 0.0
  %3466 = vmatmul.mubr.f32.gmra.mrb[0].mxu0 %v3393
  %v3467 = vpop.f32.mrb[0].mxu0
  %v3468 = vadd.f32 0.0, %v3467
  %v3469 = vpop.f32.mrb[0].mxu0
  %3470 = vmatprep.mubr.f32.mxu0 0.0
  %3471 = vmatmul.mubr.f32.gmra.mrb[0].mxu0 %v3395
  %v3472 = vpop.f32.mrb[0].mxu0
  %v3473 = vadd.f32 0.0, %v3472
  %v3474 = vpop.f32.mrb[0].mxu0
  %3475 = vdwg.mxu0
  %v3476 = vmul.f32 %v3468, 0.35355338
  %v3477 = vmul.f32 %v3473, 0.35355338
  %v3478 = vadd.f32 %v3476, %v2828
  %v3479 = vadd.f32 %v3477, %v2828
  %v3480 = vsel %vm519, %v3478, -inf
  %3481 = vmax.xlane.f32.xlu0 %v3480
  %v3482 = vpop.xlane.xlu0 %3481
  %v3483 = vsel %vm523, %v3479, -inf
  %3484 = vmax.xlane.f32.xlu0 %v3483
  %v3485 = vpop.xlane.xlu0 %3484
  %v3486 = vsub.f32 %v3478, %v3482
  %v3487 = vsub.f32 %v3479, %v3485
  %v3488 = vmul.f32 %v3486, 1.442695
  %v3489 = vpow.pop %v3488
  %v3490 = vmul.f32 %v3487, 1.442695
  %v3491 = vpow.pop %v3490
  %v3492 = vsel %vm519, %v3489, 0.0
  %3493 = vadd.xlane.f32.xlu0 %v3492
  %v3494 = vpop.xlane.xlu0 %3493
  %v3495 = vsel %vm523, %v3491, 0.0
  %3496 = vadd.xlane.f32.xlu0 %v3495
  %v3497 = vpop.xlane.xlu0 %3496
  %v3498 = vrcp.pop %v3494
  %v3499 = vrcp.pop %v3497
  %v3500 = vmul.f32 %v3489, %v3498
  %v3501 = vmul.f32 %v3491, %v3499
  %3502 = vrot.lane.b32.xlu0 %v3381, 40
  %v3503 = vpop.permute.xlu0 %3502
  %3504 = vrot.lane.b32.xlu0 %v3382, 40
  %v3505 = vpop.permute.xlu0 %3504
  %v3508 = vsel %vm519, %v3500, 0
  %v3511 = vsel %vm519, %v3501, 0
  %v3513 = vsel %vm554, %v3505, 0
  %3515 = vmatprep.subr.mxu0 0.0
  %3516 = vmatpush1.msra.mxu0 %v3503
  %3517 = vmatprep.subr.mxu0 0.0
  %3518 = vmatpush1.msra.mxu0 %v3513
  %3519 = vmatprep.subr.mxu0 0.0
  %3520 = vmatpush1.msra.mxu0 0.0
  %3521 = vmatprep.subr.mxu0 0.0
  %3522 = vmatpush1.msra.mxu0 0.0
  %3523 = vmatprep.subr.mxu0 0.0
  %3524 = vmatpush1.msra.mxu0 0.0
  %3525 = vmatprep.subr.mxu0 0.0
  %3526 = vmatpush1.msra.mxu0 0.0
  %3527 = vmatprep.subr.mxu0 0.0
  %3528 = vmatpush1.msra.mxu0 0.0
  %3529 = vmatprep.subr.mxu0 0.0
  %3530 = vmatpush1.msra.mxu0 0.0
  %3531 = vmatprep.subr.mxu0 0.0
  %3532 = vmatpush1.msra.mxu0 0.0
  %3533 = vmatprep.subr.mxu0 0.0
  %3534 = vmatpush1.msra.mxu0 0.0
  %3535 = vmatprep.subr.mxu0 0.0
  %3536 = vmatpush1.msra.mxu0 0.0
  %3537 = vmatprep.subr.mxu0 0.0
  %3538 = vmatpush1.msra.mxu0 0.0
  %3539 = vmatprep.subr.mxu0 0.0
  %3540 = vmatpush1.msra.mxu0 0.0
  %3541 = vmatprep.subr.mxu0 0.0
  %3542 = vmatpush1.msra.mxu0 0.0
  %3543 = vmatprep.subr.mxu0 0.0
  %3544 = vmatpush1.msra.mxu0 0.0
  %3545 = vmatprep.subr.mxu0 0.0
  %3546 = vmatpush1.msra.mxu0 0.0
  %3547 = vmatprep.subr.mxu0 0.0
  %3548 = vmatpush1.msra.mxu0 0.0
  %3549 = vmatprep.subr.mxu0 0.0
  %3550 = vmatpush1.msra.mxu0 0.0
  %3551 = vmatprep.subr.mxu0 0.0
  %3552 = vmatpush1.msra.mxu0 0.0
  %3553 = vmatprep.subr.mxu0 0.0
  %3554 = vmatpush1.msra.mxu0 0.0
  %3555 = vmatprep.subr.mxu0 0.0
  %3556 = vmatpush1.msra.mxu0 0.0
  %3557 = vmatprep.subr.mxu0 0.0
  %3558 = vmatpush1.msra.mxu0 0.0
  %3559 = vmatprep.subr.mxu0 0.0
  %3560 = vmatpush1.msra.mxu0 0.0
  %3561 = vmatprep.subr.mxu0 0.0
  %3562 = vmatpush1.msra.mxu0 0.0
  %3563 = vmatprep.subr.mxu0 0.0
  %3564 = vmatpush1.msra.mxu0 0.0
  %3565 = vmatprep.subr.mxu0 0.0
  %3566 = vmatpush1.msra.mxu0 0.0
  %3567 = vmatprep.subr.mxu0 0.0
  %3568 = vmatpush1.msra.mxu0 0.0
  %3569 = vmatprep.subr.mxu0 0.0
  %3570 = vmatpush1.msra.mxu0 0.0
  %3571 = vmatprep.subr.mxu0 0.0
  %3572 = vmatpush1.msra.mxu0 0.0
  %3573 = vmatprep.subr.mxu0 0.0
  %3574 = vmatpush1.msra.mxu0 0.0
  %3575 = vmatprep.subr.mxu0 0.0
  %3576 = vmatpush1.msra.mxu0 0.0
  %3577 = vmatprep.subr.mxu0 0.0
  %3578 = vmatpush1.msra.mxu0 0.0
  %3579 = vmatprep.mubr.f32.mxu0 0.0
  %3580 = vmatmul.mubr.f32.gmra.mrb[0].mxu0 %v3508
  %v3581 = vpop.f32.mrb[0].mxu0
  %v3582 = vadd.f32 0.0, %v3581
  %v3583 = vpop.f32.mrb[0].mxu0
  %3584 = vmatprep.mubr.f32.mxu0 0.0
  %3585 = vmatmul.mubr.f32.gmra.mrb[0].mxu0 %v3511
  %v3586 = vpop.f32.mrb[0].mxu0
  %v3587 = vadd.f32 0.0, %v3586
  %v3588 = vpop.f32.mrb[0].mxu0
  %3589 = vdwg.mxu0
  %3592 = vrot.lane.b32.xlu0 %v3582, 24
  %v3593 = vpop.permute.xlu0 %3592
  %3594 = vrot.lane.b32.xlu0 %v3587, 24
  %v3595 = vpop.permute.xlu0 %3594
  %3598 = vst.msk [vmem:[#allocation3] sm:$0xff] %vm1294, %v3593
  %3599 = vst.msk [vmem:[#allocation3 + $0x8] sm:$0x1] %vm1296, %v3595
  %v3600 = vld [vmem:[%s3 + $0x1] sm:$0x1]
  %v3601 = vld [vmem:[#allocation2 + $0x9] sm:$0xff]
  %v3602 = vld [vmem:[#allocation2 + $0x11] sm:$0x1]
  %3605 = vrot.lane.b32.xlu0 %v3601, 96
  %v3606 = vpop.permute.xlu0 %3605
  %3607 = vrot.lane.b32.xlu0 %v3602, 96
  %v3608 = vpop.permute.xlu0 %3607
  %v3609 = vsel %vm427, %v3601, 0
  %v3611 = vsel %vm427, %v3602, 0
  %v3613 = vsel %vm427, %v3606, 0
  %v3615 = vsel %vm427, %v3608, 0
  %3617 = vmatprep.subr.mxu0 0.0
  %3618 = vmatpush1.xpose.msra.mxu0 %v3613
  %3619 = vmatprep.subr.mxu0 0.0
  %3620 = vmatpush1.xpose.msra.mxu0 %v3615
  %3621 = vmatprep.subr.mxu0 0.0
  %3622 = vmatpush1.xpose.msra.mxu0 0.0
  %3623 = vmatprep.subr.mxu0 0.0
  %3624 = vmatpush1.xpose.msra.mxu0 0.0
  %3625 = vmatprep.subr.mxu0 0.0
  %3626 = vmatpush1.xpose.msra.mxu0 0.0
  %3627 = vmatprep.subr.mxu0 0.0
  %3628 = vmatpush1.xpose.msra.mxu0 0.0
  %3629 = vmatprep.subr.mxu0 0.0
  %3630 = vmatpush1.xpose.msra.mxu0 0.0
  %3631 = vmatprep.subr.mxu0 0.0
  %3632 = vmatpush1.xpose.msra.mxu0 0.0
  %3633 = vmatprep.subr.mxu0 0.0
  %3634 = vmatpush1.xpose.msra.mxu0 0.0
  %3635 = vmatprep.subr.mxu0 0.0
  %3636 = vmatpush1.xpose.msra.mxu0 0.0
  %3637 = vmatprep.subr.mxu0 0.0
  %3638 = vmatpush1.xpose.msra.mxu0 0.0
  %3639 = vmatprep.subr.mxu0 0.0
  %3640 = vmatpush1.xpose.msra.mxu0 0.0
  %3641 = vmatprep.subr.mxu0 0.0
  %3642 = vmatpush1.xpose.msra.mxu0 0.0
  %3643 = vmatprep.subr.mxu0 0.0
  %3644 = vmatpush1.xpose.msra.mxu0 0.0
  %3645 = vmatprep.subr.mxu0 0.0
  %3646 = vmatpush1.xpose.msra.mxu0 0.0
  %3647 = vmatprep.subr.mxu0 0.0
  %3648 = vmatpush1.xpose.msra.mxu0 0.0
  %3649 = vmatprep.subr.mxu0 0.0
  %3650 = vmatpush1.xpose.msra.mxu0 0.0
  %3651 = vmatprep.subr.mxu0 0.0
  %3652 = vmatpush1.xpose.msra.mxu0 0.0
  %3653 = vmatprep.subr.mxu0 0.0
  %3654 = vmatpush1.xpose.msra.mxu0 0.0
  %3655 = vmatprep.subr.mxu0 0.0
  %3656 = vmatpush1.xpose.msra.mxu0 0.0
  %3657 = vmatprep.subr.mxu0 0.0
  %3658 = vmatpush1.xpose.msra.mxu0 0.0
  %3659 = vmatprep.subr.mxu0 0.0
  %3660 = vmatpush1.xpose.msra.mxu0 0.0
  %3661 = vmatprep.subr.mxu0 0.0
  %3662 = vmatpush1.xpose.msra.mxu0 0.0
  %3663 = vmatprep.subr.mxu0 0.0
  %3664 = vmatpush1.xpose.msra.mxu0 0.0
  %3665 = vmatprep.subr.mxu0 0.0
  %3666 = vmatpush1.xpose.msra.mxu0 0.0
  %3667 = vmatprep.subr.mxu0 0.0
  %3668 = vmatpush1.xpose.msra.mxu0 0.0
  %3669 = vmatprep.subr.mxu0 0.0
  %3670 = vmatpush1.xpose.msra.mxu0 0.0
  %3671 = vmatprep.subr.mxu0 0.0
  %3672 = vmatpush1.xpose.msra.mxu0 0.0
  %3673 = vmatprep.subr.mxu0 0.0
  %3674 = vmatpush1.xpose.msra.mxu0 0.0
  %3675 = vmatprep.subr.mxu0 0.0
  %3676 = vmatpush1.xpose.msra.mxu0 0.0
  %3677 = vmatprep.subr.mxu0 0.0
  %3678 = vmatpush1.xpose.msra.mxu0 0.0
  %3679 = vmatprep.subr.mxu0 0.0
  %3680 = vmatpush1.xpose.msra.mxu0 0.0
  %3681 = vmatprep.mubr.f32.mxu0 0.0
  %3682 = vmatmul.mubr.f32.gmra.mrb[0].mxu0 %v3609
  %v3683 = vpop.f32.mrb[0].mxu0
  %v3684 = vadd.f32 0.0, %v3683
  %v3685 = vpop.f32.mrb[0].mxu0
  %3686 = vmatprep.mubr.f32.mxu0 0.0
  %3687 = vmatmul.mubr.f32.gmra.mrb[0].mxu0 %v3611
  %v3688 = vpop.f32.mrb[0].mxu0
  %v3689 = vadd.f32 0.0, %v3688
  %v3690 = vpop.f32.mrb[0].mxu0
  %3691 = vdwg.mxu0
  %v3692 = vmul.f32 %v3684, 0.35355338
  %v3693 = vmul.f32 %v3689, 0.35355338
  %v3694 = vlaneseq
  %v3695 = vshrl.u32 %v3694, 7
  %v3696 = vsub.s32 0, %v3695
  %v3697 = vrot.slane %v3600, %v3696
  %v3698 = vadd.f32 %v3692, %v3697
  %v3699 = vadd.f32 %v3693, %v3697
  %v3700 = vsel %vm519, %v3698, -inf
  %3701 = vmax.xlane.f32.xlu0 %v3700
  %v3702 = vpop.xlane.xlu0 %3701
  %v3703 = vsel %vm523, %v3699, -inf
  %3704 = vmax.xlane.f32.xlu0 %v3703
  %v3705 = vpop.xlane.xlu0 %3704
  %v3706 = vsub.f32 %v3698, %v3702
  %v3707 = vsub.f32 %v3699, %v3705
  %v3708 = vmul.f32 %v3706, 1.442695
  %v3709 = vpow.pop %v3708
  %v3710 = vmul.f32 %v3707, 1.442695
  %v3711 = vpow.pop %v3710
  %v3712 = vsel %vm519, %v3709, 0.0
  %3713 = vadd.xlane.f32.xlu0 %v3712
  %v3714 = vpop.xlane.xlu0 %3713
  %v3715 = vsel %vm523, %v3711, 0.0
  %3716 = vadd.xlane.f32.xlu0 %v3715
  %v3717 = vpop.xlane.xlu0 %3716
  %v3718 = vrcp.pop %v3714
  %v3719 = vrcp.pop %v3717
  %v3720 = vmul.f32 %v3709, %v3718
  %v3721 = vmul.f32 %v3711, %v3719
  %3722 = vrot.lane.b32.xlu0 %v3601, 64
  %v3723 = vpop.permute.xlu0 %3722
  %3724 = vrot.lane.b32.xlu0 %v3602, 64
  %v3725 = vpop.permute.xlu0 %3724
  %v3728 = vsel %vm519, %v3720, 0
  %v3731 = vsel %vm519, %v3721, 0
  %v3733 = vsel %vm554, %v3725, 0
  %3735 = vmatprep.subr.mxu0 0.0
  %3736 = vmatpush1.msra.mxu0 %v3723
  %3737 = vmatprep.subr.mxu0 0.0
  %3738 = vmatpush1.msra.mxu0 %v3733
  %3739 = vmatprep.subr.mxu0 0.0
  %3740 = vmatpush1.msra.mxu0 0.0
  %3741 = vmatprep.subr.mxu0 0.0
  %3742 = vmatpush1.msra.mxu0 0.0
  %3743 = vmatprep.subr.mxu0 0.0
  %3744 = vmatpush1.msra.mxu0 0.0
  %3745 = vmatprep.subr.mxu0 0.0
  %3746 = vmatpush1.msra.mxu0 0.0
  %3747 = vmatprep.subr.mxu0 0.0
  %3748 = vmatpush1.msra.mxu0 0.0
  %3749 = vmatprep.subr.mxu0 0.0
  %3750 = vmatpush1.msra.mxu0 0.0
  %3751 = vmatprep.subr.mxu0 0.0
  %3752 = vmatpush1.msra.mxu0 0.0
  %3753 = vmatprep.subr.mxu0 0.0
  %3754 = vmatpush1.msra.mxu0 0.0
  %3755 = vmatprep.subr.mxu0 0.0
  %3756 = vmatpush1.msra.mxu0 0.0
  %3757 = vmatprep.subr.mxu0 0.0
  %3758 = vmatpush1.msra.mxu0 0.0
  %3759 = vmatprep.subr.mxu0 0.0
  %3760 = vmatpush1.msra.mxu0 0.0
  %3761 = vmatprep.subr.mxu0 0.0
  %3762 = vmatpush1.msra.mxu0 0.0
  %3763 = vmatprep.subr.mxu0 0.0
  %3764 = vmatpush1.msra.mxu0 0.0
  %3765 = vmatprep.subr.mxu0 0.0
  %3766 = vmatpush1.msra.mxu0 0.0
  %3767 = vmatprep.subr.mxu0 0.0
  %3768 = vmatpush1.msra.mxu0 0.0
  %3769 = vmatprep.subr.mxu0 0.0
  %3770 = vmatpush1.msra.mxu0 0.0
  %3771 = vmatprep.subr.mxu0 0.0
  %3772 = vmatpush1.msra.mxu0 0.0
  %3773 = vmatprep.subr.mxu0 0.0
  %3774 = vmatpush1.msra.mxu0 0.0
  %3775 = vmatprep.subr.mxu0 0.0
  %3776 = vmatpush1.msra.mxu0 0.0
  %3777 = vmatprep.subr.mxu0 0.0
  %3778 = vmatpush1.msra.mxu0 0.0
  %3779 = vmatprep.subr.mxu0 0.0
  %3780 = vmatpush1.msra.mxu0 0.0
  %3781 = vmatprep.subr.mxu0 0.0
  %3782 = vmatpush1.msra.mxu0 0.0
  %3783 = vmatprep.subr.mxu0 0.0
  %3784 = vmatpush1.msra.mxu0 0.0
  %3785 = vmatprep.subr.mxu0 0.0
  %3786 = vmatpush1.msra.mxu0 0.0
  %3787 = vmatprep.subr.mxu0 0.0
  %3788 = vmatpush1.msra.mxu0 0.0
  %3789 = vmatprep.subr.mxu0 0.0
  %3790 = vmatpush1.msra.mxu0 0.0
  %3791 = vmatprep.subr.mxu0 0.0
  %3792 = vmatpush1.msra.mxu0 0.0
  %3793 = vmatprep.subr.mxu0 0.0
  %3794 = vmatpush1.msra.mxu0 0.0
  %3795 = vmatprep.subr.mxu0 0.0
  %3796 = vmatpush1.msra.mxu0 0.0
  %3797 = vmatprep.subr.mxu0 0.0
  %3798 = vmatpush1.msra.mxu0 0.0
  %3799 = vmatprep.mubr.f32.mxu0 0.0
  %3800 = vmatmul.mubr.f32.gmra.mrb[0].mxu0 %v3728
  %v3801 = vpop.f32.mrb[0].mxu0
  %v3802 = vadd.f32 0.0, %v3801
  %v3803 = vpop.f32.mrb[0].mxu0
  %3804 = vmatprep.mubr.f32.mxu0 0.0
  %3805 = vmatmul.mubr.f32.gmra.mrb[0].mxu0 %v3731
  %v3806 = vpop.f32.mrb[0].mxu0
  %v3807 = vadd.f32 0.0, %v3806
  %v3808 = vpop.f32.mrb[0].mxu0
  %3809 = vdwg.mxu0
  %3810 = vst.msk [vmem:[#allocation3 + $0x9] sm:$0xff] %vm427, %v3802
  %3811 = vst.msk [vmem:[#allocation3 + $0x11] sm:$0x1] %vm633, %v3807
  %v3812 = vld [vmem:[#allocation2 + $0x9] sm:$0xff]
  %v3813 = vld [vmem:[#allocation2 + $0x11] sm:$0x1]
  %3816 = vrot.lane.b32.xlu0 %v3812, 120
  %v3817 = vpop.permute.xlu0 %3816
  %3818 = vrot.lane.b32.xlu0 %v3813, 120
  %v3819 = vpop.permute.xlu0 %3818
  %3820 = vrot.lane.b32.xlu0 %v3812, 88
  %v3821 = vpop.permute.xlu0 %3820
  %3822 = vrot.lane.b32.xlu0 %v3813, 88
  %v3823 = vpop.permute.xlu0 %3822
  %v3824 = vsel %vm427, %v3817, 0
  %v3826 = vsel %vm427, %v3819, 0
  %v3828 = vsel %vm427, %v3821, 0
  %v3830 = vsel %vm427, %v3823, 0
  %3832 = vmatprep.subr.mxu0 0.0
  %3833 = vmatpush1.xpose.msra.mxu0 %v3828
  %3834 = vmatprep.subr.mxu0 0.0
  %3835 = vmatpush1.xpose.msra.mxu0 %v3830
  %3836 = vmatprep.subr.mxu0 0.0
  %3837 = vmatpush1.xpose.msra.mxu0 0.0
  %3838 = vmatprep.subr.mxu0 0.0
  %3839 = vmatpush1.xpose.msra.mxu0 0.0
  %3840 = vmatprep.subr.mxu0 0.0
  %3841 = vmatpush1.xpose.msra.mxu0 0.0
  %3842 = vmatprep.subr.mxu0 0.0
  %3843 = vmatpush1.xpose.msra.mxu0 0.0
  %3844 = vmatprep.subr.mxu0 0.0
  %3845 = vmatpush1.xpose.msra.mxu0 0.0
  %3846 = vmatprep.subr.mxu0 0.0
  %3847 = vmatpush1.xpose.msra.mxu0 0.0
  %3848 = vmatprep.subr.mxu0 0.0
  %3849 = vmatpush1.xpose.msra.mxu0 0.0
  %3850 = vmatprep.subr.mxu0 0.0
  %3851 = vmatpush1.xpose.msra.mxu0 0.0
  %3852 = vmatprep.subr.mxu0 0.0
  %3853 = vmatpush1.xpose.msra.mxu0 0.0
  %3854 = vmatprep.subr.mxu0 0.0
  %3855 = vmatpush1.xpose.msra.mxu0 0.0
  %3856 = vmatprep.subr.mxu0 0.0
  %3857 = vmatpush1.xpose.msra.mxu0 0.0
  %3858 = vmatprep.subr.mxu0 0.0
  %3859 = vmatpush1.xpose.msra.mxu0 0.0
  %3860 = vmatprep.subr.mxu0 0.0
  %3861 = vmatpush1.xpose.msra.mxu0 0.0
  %3862 = vmatprep.subr.mxu0 0.0
  %3863 = vmatpush1.xpose.msra.mxu0 0.0
  %3864 = vmatprep.subr.mxu0 0.0
  %3865 = vmatpush1.xpose.msra.mxu0 0.0
  %3866 = vmatprep.subr.mxu0 0.0
  %3867 = vmatpush1.xpose.msra.mxu0 0.0
  %3868 = vmatprep.subr.mxu0 0.0
  %3869 = vmatpush1.xpose.msra.mxu0 0.0
  %3870 = vmatprep.subr.mxu0 0.0
  %3871 = vmatpush1.xpose.msra.mxu0 0.0
  %3872 = vmatprep.subr.mxu0 0.0
  %3873 = vmatpush1.xpose.msra.mxu0 0.0
  %3874 = vmatprep.subr.mxu0 0.0
  %3875 = vmatpush1.xpose.msra.mxu0 0.0
  %3876 = vmatprep.subr.mxu0 0.0
  %3877 = vmatpush1.xpose.msra.mxu0 0.0
  %3878 = vmatprep.subr.mxu0 0.0
  %3879 = vmatpush1.xpose.msra.mxu0 0.0
  %3880 = vmatprep.subr.mxu0 0.0
  %3881 = vmatpush1.xpose.msra.mxu0 0.0
  %3882 = vmatprep.subr.mxu0 0.0
  %3883 = vmatpush1.xpose.msra.mxu0 0.0
  %3884 = vmatprep.subr.mxu0 0.0
  %3885 = vmatpush1.xpose.msra.mxu0 0.0
  %3886 = vmatprep.subr.mxu0 0.0
  %3887 = vmatpush1.xpose.msra.mxu0 0.0
  %3888 = vmatprep.subr.mxu0 0.0
  %3889 = vmatpush1.xpose.msra.mxu0 0.0
  %3890 = vmatprep.subr.mxu0 0.0
  %3891 = vmatpush1.xpose.msra.mxu0 0.0
  %3892 = vmatprep.subr.mxu0 0.0
  %3893 = vmatpush1.xpose.msra.mxu0 0.0
  %3894 = vmatprep.subr.mxu0 0.0
  %3895 = vmatpush1.xpose.msra.mxu0 0.0
  %3896 = vmatprep.mubr.f32.mxu0 0.0
  %3897 = vmatmul.mubr.f32.gmra.mrb[0].mxu0 %v3824
  %v3898 = vpop.f32.mrb[0].mxu0
  %v3899 = vadd.f32 0.0, %v3898
  %v3900 = vpop.f32.mrb[0].mxu0
  %3901 = vmatprep.mubr.f32.mxu0 0.0
  %3902 = vmatmul.mubr.f32.gmra.mrb[0].mxu0 %v3826
  %v3903 = vpop.f32.mrb[0].mxu0
  %v3904 = vadd.f32 0.0, %v3903
  %v3905 = vpop.f32.mrb[0].mxu0
  %3906 = vdwg.mxu0
  %v3907 = vmul.f32 %v3899, 0.35355338
  %v3908 = vmul.f32 %v3904, 0.35355338
  %v3909 = vadd.f32 %v3907, %v3697
  %v3910 = vadd.f32 %v3908, %v3697
  %v3911 = vsel %vm519, %v3909, -inf
  %3912 = vmax.xlane.f32.xlu0 %v3911
  %v3913 = vpop.xlane.xlu0 %3912
  %v3914 = vsel %vm523, %v3910, -inf
  %3915 = vmax.xlane.f32.xlu0 %v3914
  %v3916 = vpop.xlane.xlu0 %3915
  %v3917 = vsub.f32 %v3909, %v3913
  %v3918 = vsub.f32 %v3910, %v3916
  %v3919 = vmul.f32 %v3917, 1.442695
  %v3920 = vpow.pop %v3919
  %v3921 = vmul.f32 %v3918, 1.442695
  %v3922 = vpow.pop %v3921
  %v3923 = vsel %vm519, %v3920, 0.0
  %3924 = vadd.xlane.f32.xlu0 %v3923
  %v3925 = vpop.xlane.xlu0 %3924
  %v3926 = vsel %vm523, %v3922, 0.0
  %3927 = vadd.xlane.f32.xlu0 %v3926
  %v3928 = vpop.xlane.xlu0 %3927
  %v3929 = vrcp.pop %v3925
  %v3930 = vrcp.pop %v3928
  %v3931 = vmul.f32 %v3920, %v3929
  %v3932 = vmul.f32 %v3922, %v3930
  %3933 = vrot.lane.b32.xlu0 %v3812, 56
  %v3934 = vpop.permute.xlu0 %3933
  %3935 = vrot.lane.b32.xlu0 %v3813, 56
  %v3936 = vpop.permute.xlu0 %3935
  %v3939 = vsel %vm519, %v3931, 0
  %v3942 = vsel %vm519, %v3932, 0
  %v3944 = vsel %vm554, %v3936, 0
  %3946 = vmatprep.subr.mxu0 0.0
  %3947 = vmatpush1.msra.mxu0 %v3934
  %3948 = vmatprep.subr.mxu0 0.0
  %3949 = vmatpush1.msra.mxu0 %v3944
  %3950 = vmatprep.subr.mxu0 0.0
  %3951 = vmatpush1.msra.mxu0 0.0
  %3952 = vmatprep.subr.mxu0 0.0
  %3953 = vmatpush1.msra.mxu0 0.0
  %3954 = vmatprep.subr.mxu0 0.0
  %3955 = vmatpush1.msra.mxu0 0.0
  %3956 = vmatprep.subr.mxu0 0.0
  %3957 = vmatpush1.msra.mxu0 0.0
  %3958 = vmatprep.subr.mxu0 0.0
  %3959 = vmatpush1.msra.mxu0 0.0
  %3960 = vmatprep.subr.mxu0 0.0
  %3961 = vmatpush1.msra.mxu0 0.0
  %3962 = vmatprep.subr.mxu0 0.0
  %3963 = vmatpush1.msra.mxu0 0.0
  %3964 = vmatprep.subr.mxu0 0.0
  %3965 = vmatpush1.msra.mxu0 0.0
  %3966 = vmatprep.subr.mxu0 0.0
  %3967 = vmatpush1.msra.mxu0 0.0
  %3968 = vmatprep.subr.mxu0 0.0
  %3969 = vmatpush1.msra.mxu0 0.0
  %3970 = vmatprep.subr.mxu0 0.0
  %3971 = vmatpush1.msra.mxu0 0.0
  %3972 = vmatprep.subr.mxu0 0.0
  %3973 = vmatpush1.msra.mxu0 0.0
  %3974 = vmatprep.subr.mxu0 0.0
  %3975 = vmatpush1.msra.mxu0 0.0
  %3976 = vmatprep.subr.mxu0 0.0
  %3977 = vmatpush1.msra.mxu0 0.0
  %3978 = vmatprep.subr.mxu0 0.0
  %3979 = vmatpush1.msra.mxu0 0.0
  %3980 = vmatprep.subr.mxu0 0.0
  %3981 = vmatpush1.msra.mxu0 0.0
  %3982 = vmatprep.subr.mxu0 0.0
  %3983 = vmatpush1.msra.mxu0 0.0
  %3984 = vmatprep.subr.mxu0 0.0
  %3985 = vmatpush1.msra.mxu0 0.0
  %3986 = vmatprep.subr.mxu0 0.0
  %3987 = vmatpush1.msra.mxu0 0.0
  %3988 = vmatprep.subr.mxu0 0.0
  %3989 = vmatpush1.msra.mxu0 0.0
  %3990 = vmatprep.subr.mxu0 0.0
  %3991 = vmatpush1.msra.mxu0 0.0
  %3992 = vmatprep.subr.mxu0 0.0
  %3993 = vmatpush1.msra.mxu0 0.0
  %3994 = vmatprep.subr.mxu0 0.0
  %3995 = vmatpush1.msra.mxu0 0.0
  %3996 = vmatprep.subr.mxu0 0.0
  %3997 = vmatpush1.msra.mxu0 0.0
  %3998 = vmatprep.subr.mxu0 0.0
  %3999 = vmatpush1.msra.mxu0 0.0
  %4000 = vmatprep.subr.mxu0 0.0
  %4001 = vmatpush1.msra.mxu0 0.0
  %4002 = vmatprep.subr.mxu0 0.0
  %4003 = vmatpush1.msra.mxu0 0.0
  %4004 = vmatprep.subr.mxu0 0.0
  %4005 = vmatpush1.msra.mxu0 0.0
  %4006 = vmatprep.subr.mxu0 0.0
  %4007 = vmatpush1.msra.mxu0 0.0
  %4008 = vmatprep.subr.mxu0 0.0
  %4009 = vmatpush1.msra.mxu0 0.0
  %4010 = vmatprep.mubr.f32.mxu0 0.0
  %4011 = vmatmul.mubr.f32.gmra.mrb[0].mxu0 %v3939
  %v4012 = vpop.f32.mrb[0].mxu0
  %v4013 = vadd.f32 0.0, %v4012
  %v4014 = vpop.f32.mrb[0].mxu0
  %4015 = vmatprep.mubr.f32.mxu0 0.0
  %4016 = vmatmul.mubr.f32.gmra.mrb[0].mxu0 %v3942
  %v4017 = vpop.f32.mrb[0].mxu0
  %v4018 = vadd.f32 0.0, %v4017
  %v4019 = vpop.f32.mrb[0].mxu0
  %4020 = vdwg.mxu0
  %4023 = vrot.lane.b32.xlu0 %v4013, 8
  %v4024 = vpop.permute.xlu0 %4023
  %4025 = vrot.lane.b32.xlu0 %v4018, 8
  %v4026 = vpop.permute.xlu0 %4025
  %4029 = vst.msk [vmem:[#allocation3 + $0x9] sm:$0xff] %vm852, %v4024
  %4030 = vst.msk [vmem:[#allocation3 + $0x11] sm:$0x1] %vm854, %v4026
  %v4031 = vld [vmem:[#allocation2 + $0x9] sm:$0xff]
  %v4032 = vld [vmem:[#allocation2 + $0x11] sm:$0x1]
  %4035 = vrot.lane.b32.xlu0 %v4031, 112
  %v4036 = vpop.permute.xlu0 %4035
  %4037 = vrot.lane.b32.xlu0 %v4032, 112
  %v4038 = vpop.permute.xlu0 %4037
  %4039 = vrot.lane.b32.xlu0 %v4031, 80
  %v4040 = vpop.permute.xlu0 %4039
  %4041 = vrot.lane.b32.xlu0 %v4032, 80
  %v4042 = vpop.permute.xlu0 %4041
  %v4043 = vsel %vm427, %v4036, 0
  %v4045 = vsel %vm427, %v4038, 0
  %v4047 = vsel %vm427, %v4040, 0
  %v4049 = vsel %vm427, %v4042, 0
  %4051 = vmatprep.subr.mxu0 0.0
  %4052 = vmatpush1.xpose.msra.mxu0 %v4047
  %4053 = vmatprep.subr.mxu0 0.0
  %4054 = vmatpush1.xpose.msra.mxu0 %v4049
  %4055 = vmatprep.subr.mxu0 0.0
  %4056 = vmatpush1.xpose.msra.mxu0 0.0
  %4057 = vmatprep.subr.mxu0 0.0
  %4058 = vmatpush1.xpose.msra.mxu0 0.0
  %4059 = vmatprep.subr.mxu0 0.0
  %4060 = vmatpush1.xpose.msra.mxu0 0.0
  %4061 = vmatprep.subr.mxu0 0.0
  %4062 = vmatpush1.xpose.msra.mxu0 0.0
  %4063 = vmatprep.subr.mxu0 0.0
  %4064 = vmatpush1.xpose.msra.mxu0 0.0
  %4065 = vmatprep.subr.mxu0 0.0
  %4066 = vmatpush1.xpose.msra.mxu0 0.0
  %4067 = vmatprep.subr.mxu0 0.0
  %4068 = vmatpush1.xpose.msra.mxu0 0.0
  %4069 = vmatprep.subr.mxu0 0.0
  %4070 = vmatpush1.xpose.msra.mxu0 0.0
  %4071 = vmatprep.subr.mxu0 0.0
  %4072 = vmatpush1.xpose.msra.mxu0 0.0
  %4073 = vmatprep.subr.mxu0 0.0
  %4074 = vmatpush1.xpose.msra.mxu0 0.0
  %4075 = vmatprep.subr.mxu0 0.0
  %4076 = vmatpush1.xpose.msra.mxu0 0.0
  %4077 = vmatprep.subr.mxu0 0.0
  %4078 = vmatpush1.xpose.msra.mxu0 0.0
  %4079 = vmatprep.subr.mxu0 0.0
  %4080 = vmatpush1.xpose.msra.mxu0 0.0
  %4081 = vmatprep.subr.mxu0 0.0
  %4082 = vmatpush1.xpose.msra.mxu0 0.0
  %4083 = vmatprep.subr.mxu0 0.0
  %4084 = vmatpush1.xpose.msra.mxu0 0.0
  %4085 = vmatprep.subr.mxu0 0.0
  %4086 = vmatpush1.xpose.msra.mxu0 0.0
  %4087 = vmatprep.subr.mxu0 0.0
  %4088 = vmatpush1.xpose.msra.mxu0 0.0
  %4089 = vmatprep.subr.mxu0 0.0
  %4090 = vmatpush1.xpose.msra.mxu0 0.0
  %4091 = vmatprep.subr.mxu0 0.0
  %4092 = vmatpush1.xpose.msra.mxu0 0.0
  %4093 = vmatprep.subr.mxu0 0.0
  %4094 = vmatpush1.xpose.msra.mxu0 0.0
  %4095 = vmatprep.subr.mxu0 0.0
  %4096 = vmatpush1.xpose.msra.mxu0 0.0
  %4097 = vmatprep.subr.mxu0 0.0
  %4098 = vmatpush1.xpose.msra.mxu0 0.0
  %4099 = vmatprep.subr.mxu0 0.0
  %4100 = vmatpush1.xpose.msra.mxu0 0.0
  %4101 = vmatprep.subr.mxu0 0.0
  %4102 = vmatpush1.xpose.msra.mxu0 0.0
  %4103 = vmatprep.subr.mxu0 0.0
  %4104 = vmatpush1.xpose.msra.mxu0 0.0
  %4105 = vmatprep.subr.mxu0 0.0
  %4106 = vmatpush1.xpose.msra.mxu0 0.0
  %4107 = vmatprep.subr.mxu0 0.0
  %4108 = vmatpush1.xpose.msra.mxu0 0.0
  %4109 = vmatprep.subr.mxu0 0.0
  %4110 = vmatpush1.xpose.msra.mxu0 0.0
  %4111 = vmatprep.subr.mxu0 0.0
  %4112 = vmatpush1.xpose.msra.mxu0 0.0
  %4113 = vmatprep.subr.mxu0 0.0
  %4114 = vmatpush1.xpose.msra.mxu0 0.0
  %4115 = vmatprep.mubr.f32.mxu0 0.0
  %4116 = vmatmul.mubr.f32.gmra.mrb[0].mxu0 %v4043
  %v4117 = vpop.f32.mrb[0].mxu0
  %v4118 = vadd.f32 0.0, %v4117
  %v4119 = vpop.f32.mrb[0].mxu0
  %4120 = vmatprep.mubr.f32.mxu0 0.0
  %4121 = vmatmul.mubr.f32.gmra.mrb[0].mxu0 %v4045
  %v4122 = vpop.f32.mrb[0].mxu0
  %v4123 = vadd.f32 0.0, %v4122
  %v4124 = vpop.f32.mrb[0].mxu0
  %4125 = vdwg.mxu0
  %v4126 = vmul.f32 %v4118, 0.35355338
  %v4127 = vmul.f32 %v4123, 0.35355338
  %v4128 = vadd.f32 %v4126, %v3697
  %v4129 = vadd.f32 %v4127, %v3697
  %v4130 = vsel %vm519, %v4128, -inf
  %4131 = vmax.xlane.f32.xlu0 %v4130
  %v4132 = vpop.xlane.xlu0 %4131
  %v4133 = vsel %vm523, %v4129, -inf
  %4134 = vmax.xlane.f32.xlu0 %v4133
  %v4135 = vpop.xlane.xlu0 %4134
  %v4136 = vsub.f32 %v4128, %v4132
  %v4137 = vsub.f32 %v4129, %v4135
  %v4138 = vmul.f32 %v4136, 1.442695
  %v4139 = vpow.pop %v4138
  %v4140 = vmul.f32 %v4137, 1.442695
  %v4141 = vpow.pop %v4140
  %v4142 = vsel %vm519, %v4139, 0.0
  %4143 = vadd.xlane.f32.xlu0 %v4142
  %v4144 = vpop.xlane.xlu0 %4143
  %v4145 = vsel %vm523, %v4141, 0.0
  %4146 = vadd.xlane.f32.xlu0 %v4145
  %v4147 = vpop.xlane.xlu0 %4146
  %v4148 = vrcp.pop %v4144
  %v4149 = vrcp.pop %v4147
  %v4150 = vmul.f32 %v4139, %v4148
  %v4151 = vmul.f32 %v4141, %v4149
  %4152 = vrot.lane.b32.xlu0 %v4031, 48
  %v4153 = vpop.permute.xlu0 %4152
  %4154 = vrot.lane.b32.xlu0 %v4032, 48
  %v4155 = vpop.permute.xlu0 %4154
  %v4158 = vsel %vm519, %v4150, 0
  %v4161 = vsel %vm519, %v4151, 0
  %v4163 = vsel %vm554, %v4155, 0
  %4165 = vmatprep.subr.mxu0 0.0
  %4166 = vmatpush1.msra.mxu0 %v4153
  %4167 = vmatprep.subr.mxu0 0.0
  %4168 = vmatpush1.msra.mxu0 %v4163
  %4169 = vmatprep.subr.mxu0 0.0
  %4170 = vmatpush1.msra.mxu0 0.0
  %4171 = vmatprep.subr.mxu0 0.0
  %4172 = vmatpush1.msra.mxu0 0.0
  %4173 = vmatprep.subr.mxu0 0.0
  %4174 = vmatpush1.msra.mxu0 0.0
  %4175 = vmatprep.subr.mxu0 0.0
  %4176 = vmatpush1.msra.mxu0 0.0
  %4177 = vmatprep.subr.mxu0 0.0
  %4178 = vmatpush1.msra.mxu0 0.0
  %4179 = vmatprep.subr.mxu0 0.0
  %4180 = vmatpush1.msra.mxu0 0.0
  %4181 = vmatprep.subr.mxu0 0.0
  %4182 = vmatpush1.msra.mxu0 0.0
  %4183 = vmatprep.subr.mxu0 0.0
  %4184 = vmatpush1.msra.mxu0 0.0
  %4185 = vmatprep.subr.mxu0 0.0
  %4186 = vmatpush1.msra.mxu0 0.0
  %4187 = vmatprep.subr.mxu0 0.0
  %4188 = vmatpush1.msra.mxu0 0.0
  %4189 = vmatprep.subr.mxu0 0.0
  %4190 = vmatpush1.msra.mxu0 0.0
  %4191 = vmatprep.subr.mxu0 0.0
  %4192 = vmatpush1.msra.mxu0 0.0
  %4193 = vmatprep.subr.mxu0 0.0
  %4194 = vmatpush1.msra.mxu0 0.0
  %4195 = vmatprep.subr.mxu0 0.0
  %4196 = vmatpush1.msra.mxu0 0.0
  %4197 = vmatprep.subr.mxu0 0.0
  %4198 = vmatpush1.msra.mxu0 0.0
  %4199 = vmatprep.subr.mxu0 0.0
  %4200 = vmatpush1.msra.mxu0 0.0
  %4201 = vmatprep.subr.mxu0 0.0
  %4202 = vmatpush1.msra.mxu0 0.0
  %4203 = vmatprep.subr.mxu0 0.0
  %4204 = vmatpush1.msra.mxu0 0.0
  %4205 = vmatprep.subr.mxu0 0.0
  %4206 = vmatpush1.msra.mxu0 0.0
  %4207 = vmatprep.subr.mxu0 0.0
  %4208 = vmatpush1.msra.mxu0 0.0
  %4209 = vmatprep.subr.mxu0 0.0
  %4210 = vmatpush1.msra.mxu0 0.0
  %4211 = vmatprep.subr.mxu0 0.0
  %4212 = vmatpush1.msra.mxu0 0.0
  %4213 = vmatprep.subr.mxu0 0.0
  %4214 = vmatpush1.msra.mxu0 0.0
  %4215 = vmatprep.subr.mxu0 0.0
  %4216 = vmatpush1.msra.mxu0 0.0
  %4217 = vmatprep.subr.mxu0 0.0
  %4218 = vmatpush1.msra.mxu0 0.0
  %4219 = vmatprep.subr.mxu0 0.0
  %4220 = vmatpush1.msra.mxu0 0.0
  %4221 = vmatprep.subr.mxu0 0.0
  %4222 = vmatpush1.msra.mxu0 0.0
  %4223 = vmatprep.subr.mxu0 0.0
  %4224 = vmatpush1.msra.mxu0 0.0
  %4225 = vmatprep.subr.mxu0 0.0
  %4226 = vmatpush1.msra.mxu0 0.0
  %4227 = vmatprep.subr.mxu0 0.0
  %4228 = vmatpush1.msra.mxu0 0.0
  %4229 = vmatprep.mubr.f32.mxu0 0.0
  %4230 = vmatmul.mubr.f32.gmra.mrb[0].mxu0 %v4158
  %v4231 = vpop.f32.mrb[0].mxu0
  %v4232 = vadd.f32 0.0, %v4231
  %v4233 = vpop.f32.mrb[0].mxu0
  %4234 = vmatprep.mubr.f32.mxu0 0.0
  %4235 = vmatmul.mubr.f32.gmra.mrb[0].mxu0 %v4161
  %v4236 = vpop.f32.mrb[0].mxu0
  %v4237 = vadd.f32 0.0, %v4236
  %v4238 = vpop.f32.mrb[0].mxu0
  %4239 = vdwg.mxu0
  %4242 = vrot.lane.b32.xlu0 %v4232, 16
  %v4243 = vpop.permute.xlu0 %4242
  %4244 = vrot.lane.b32.xlu0 %v4237, 16
  %v4245 = vpop.permute.xlu0 %4244
  %4248 = vst.msk [vmem:[#allocation3 + $0x9] sm:$0xff] %vm1073, %v4243
  %4249 = vst.msk [vmem:[#allocation3 + $0x11] sm:$0x1] %vm1075, %v4245
  %v4250 = vld [vmem:[#allocation2 + $0x9] sm:$0xff]
  %v4251 = vld [vmem:[#allocation2 + $0x11] sm:$0x1]
  %4254 = vrot.lane.b32.xlu0 %v4250, 104
  %v4255 = vpop.permute.xlu0 %4254
  %4256 = vrot.lane.b32.xlu0 %v4251, 104
  %v4257 = vpop.permute.xlu0 %4256
  %4258 = vrot.lane.b32.xlu0 %v4250, 72
  %v4259 = vpop.permute.xlu0 %4258
  %4260 = vrot.lane.b32.xlu0 %v4251, 72
  %v4261 = vpop.permute.xlu0 %4260
  %v4262 = vsel %vm427, %v4255, 0
  %v4264 = vsel %vm427, %v4257, 0
  %v4266 = vsel %vm427, %v4259, 0
  %v4268 = vsel %vm427, %v4261, 0
  %4270 = vmatprep.subr.mxu0 0.0
  %4271 = vmatpush1.xpose.msra.mxu0 %v4266
  %4272 = vmatprep.subr.mxu0 0.0
  %4273 = vmatpush1.xpose.msra.mxu0 %v4268
  %4274 = vmatprep.subr.mxu0 0.0
  %4275 = vmatpush1.xpose.msra.mxu0 0.0
  %4276 = vmatprep.subr.mxu0 0.0
  %4277 = vmatpush1.xpose.msra.mxu0 0.0
  %4278 = vmatprep.subr.mxu0 0.0
  %4279 = vmatpush1.xpose.msra.mxu0 0.0
  %4280 = vmatprep.subr.mxu0 0.0
  %4281 = vmatpush1.xpose.msra.mxu0 0.0
  %4282 = vmatprep.subr.mxu0 0.0
  %4283 = vmatpush1.xpose.msra.mxu0 0.0
  %4284 = vmatprep.subr.mxu0 0.0
  %4285 = vmatpush1.xpose.msra.mxu0 0.0
  %4286 = vmatprep.subr.mxu0 0.0
  %4287 = vmatpush1.xpose.msra.mxu0 0.0
  %4288 = vmatprep.subr.mxu0 0.0
  %4289 = vmatpush1.xpose.msra.mxu0 0.0
  %4290 = vmatprep.subr.mxu0 0.0
  %4291 = vmatpush1.xpose.msra.mxu0 0.0
  %4292 = vmatprep.subr.mxu0 0.0
  %4293 = vmatpush1.xpose.msra.mxu0 0.0
  %4294 = vmatprep.subr.mxu0 0.0
  %4295 = vmatpush1.xpose.msra.mxu0 0.0
  %4296 = vmatprep.subr.mxu0 0.0
  %4297 = vmatpush1.xpose.msra.mxu0 0.0
  %4298 = vmatprep.subr.mxu0 0.0
  %4299 = vmatpush1.xpose.msra.mxu0 0.0
  %4300 = vmatprep.subr.mxu0 0.0
  %4301 = vmatpush1.xpose.msra.mxu0 0.0
  %4302 = vmatprep.subr.mxu0 0.0
  %4303 = vmatpush1.xpose.msra.mxu0 0.0
  %4304 = vmatprep.subr.mxu0 0.0
  %4305 = vmatpush1.xpose.msra.mxu0 0.0
  %4306 = vmatprep.subr.mxu0 0.0
  %4307 = vmatpush1.xpose.msra.mxu0 0.0
  %4308 = vmatprep.subr.mxu0 0.0
  %4309 = vmatpush1.xpose.msra.mxu0 0.0
  %4310 = vmatprep.subr.mxu0 0.0
  %4311 = vmatpush1.xpose.msra.mxu0 0.0
  %4312 = vmatprep.subr.mxu0 0.0
  %4313 = vmatpush1.xpose.msra.mxu0 0.0
  %4314 = vmatprep.subr.mxu0 0.0
  %4315 = vmatpush1.xpose.msra.mxu0 0.0
  %4316 = vmatprep.subr.mxu0 0.0
  %4317 = vmatpush1.xpose.msra.mxu0 0.0
  %4318 = vmatprep.subr.mxu0 0.0
  %4319 = vmatpush1.xpose.msra.mxu0 0.0
  %4320 = vmatprep.subr.mxu0 0.0
  %4321 = vmatpush1.xpose.msra.mxu0 0.0
  %4322 = vmatprep.subr.mxu0 0.0
  %4323 = vmatpush1.xpose.msra.mxu0 0.0
  %4324 = vmatprep.subr.mxu0 0.0
  %4325 = vmatpush1.xpose.msra.mxu0 0.0
  %4326 = vmatprep.subr.mxu0 0.0
  %4327 = vmatpush1.xpose.msra.mxu0 0.0
  %4328 = vmatprep.subr.mxu0 0.0
  %4329 = vmatpush1.xpose.msra.mxu0 0.0
  %4330 = vmatprep.subr.mxu0 0.0
  %4331 = vmatpush1.xpose.msra.mxu0 0.0
  %4332 = vmatprep.subr.mxu0 0.0
  %4333 = vmatpush1.xpose.msra.mxu0 0.0
  %4334 = vmatprep.mubr.f32.mxu0 0.0
  %4335 = vmatmul.mubr.f32.gmra.mrb[0].mxu0 %v4262
  %v4336 = vpop.f32.mrb[0].mxu0
  %v4337 = vadd.f32 0.0, %v4336
  %v4338 = vpop.f32.mrb[0].mxu0
  %4339 = vmatprep.mubr.f32.mxu0 0.0
  %4340 = vmatmul.mubr.f32.gmra.mrb[0].mxu0 %v4264
  %v4341 = vpop.f32.mrb[0].mxu0
  %v4342 = vadd.f32 0.0, %v4341
  %v4343 = vpop.f32.mrb[0].mxu0
  %4344 = vdwg.mxu0
  %v4345 = vmul.f32 %v4337, 0.35355338
  %v4346 = vmul.f32 %v4342, 0.35355338
  %v4347 = vadd.f32 %v4345, %v3697
  %v4348 = vadd.f32 %v4346, %v3697
  %v4349 = vsel %vm519, %v4347, -inf
  %4350 = vmax.xlane.f32.xlu0 %v4349
  %v4351 = vpop.xlane.xlu0 %4350
  %v4352 = vsel %vm523, %v4348, -inf
  %4353 = vmax.xlane.f32.xlu0 %v4352
  %v4354 = vpop.xlane.xlu0 %4353
  %v4355 = vsub.f32 %v4347, %v4351
  %v4356 = vsub.f32 %v4348, %v4354
  %v4357 = vmul.f32 %v4355, 1.442695
  %v4358 = vpow.pop %v4357
  %v4359 = vmul.f32 %v4356, 1.442695
  %v4360 = vpow.pop %v4359
  %v4361 = vsel %vm519, %v4358, 0.0
  %4362 = vadd.xlane.f32.xlu0 %v4361
  %v4363 = vpop.xlane.xlu0 %4362
  %v4364 = vsel %vm523, %v4360, 0.0
  %4365 = vadd.xlane.f32.xlu0 %v4364
  %v4366 = vpop.xlane.xlu0 %4365
  %v4367 = vrcp.pop %v4363
  %v4368 = vrcp.pop %v4366
  %v4369 = vmul.f32 %v4358, %v4367
  %v4370 = vmul.f32 %v4360, %v4368
  %4371 = vrot.lane.b32.xlu0 %v4250, 40
  %v4372 = vpop.permute.xlu0 %4371
  %4373 = vrot.lane.b32.xlu0 %v4251, 40
  %v4374 = vpop.permute.xlu0 %4373
  %v4377 = vsel %vm519, %v4369, 0
  %v4380 = vsel %vm519, %v4370, 0
  %v4382 = vsel %vm554, %v4374, 0
  %4384 = vmatprep.subr.mxu0 0.0
  %4385 = vmatpush1.msra.mxu0 %v4372
  %4386 = vmatprep.subr.mxu0 0.0
  %4387 = vmatpush1.msra.mxu0 %v4382
  %4388 = vmatprep.subr.mxu0 0.0
  %4389 = vmatpush1.msra.mxu0 0.0
  %4390 = vmatprep.subr.mxu0 0.0
  %4391 = vmatpush1.msra.mxu0 0.0
  %4392 = vmatprep.subr.mxu0 0.0
  %4393 = vmatpush1.msra.mxu0 0.0
  %4394 = vmatprep.subr.mxu0 0.0
  %4395 = vmatpush1.msra.mxu0 0.0
  %4396 = vmatprep.subr.mxu0 0.0
  %4397 = vmatpush1.msra.mxu0 0.0
  %4398 = vmatprep.subr.mxu0 0.0
  %4399 = vmatpush1.msra.mxu0 0.0
  %4400 = vmatprep.subr.mxu0 0.0
  %4401 = vmatpush1.msra.mxu0 0.0
  %4402 = vmatprep.subr.mxu0 0.0
  %4403 = vmatpush1.msra.mxu0 0.0
  %4404 = vmatprep.subr.mxu0 0.0
  %4405 = vmatpush1.msra.mxu0 0.0
  %4406 = vmatprep.subr.mxu0 0.0
  %4407 = vmatpush1.msra.mxu0 0.0
  %4408 = vmatprep.subr.mxu0 0.0
  %4409 = vmatpush1.msra.mxu0 0.0
  %4410 = vmatprep.subr.mxu0 0.0
  %4411 = vmatpush1.msra.mxu0 0.0
  %4412 = vmatprep.subr.mxu0 0.0
  %4413 = vmatpush1.msra.mxu0 0.0
  %4414 = vmatprep.subr.mxu0 0.0
  %4415 = vmatpush1.msra.mxu0 0.0
  %4416 = vmatprep.subr.mxu0 0.0
  %4417 = vmatpush1.msra.mxu0 0.0
  %4418 = vmatprep.subr.mxu0 0.0
  %4419 = vmatpush1.msra.mxu0 0.0
  %4420 = vmatprep.subr.mxu0 0.0
  %4421 = vmatpush1.msra.mxu0 0.0
  %4422 = vmatprep.subr.mxu0 0.0
  %4423 = vmatpush1.msra.mxu0 0.0
  %4424 = vmatprep.subr.mxu0 0.0
  %4425 = vmatpush1.msra.mxu0 0.0
  %4426 = vmatprep.subr.mxu0 0.0
  %4427 = vmatpush1.msra.mxu0 0.0
  %4428 = vmatprep.subr.mxu0 0.0
  %4429 = vmatpush1.msra.mxu0 0.0
  %4430 = vmatprep.subr.mxu0 0.0
  %4431 = vmatpush1.msra.mxu0 0.0
  %4432 = vmatprep.subr.mxu0 0.0
  %4433 = vmatpush1.msra.mxu0 0.0
  %4434 = vmatprep.subr.mxu0 0.0
  %4435 = vmatpush1.msra.mxu0 0.0
  %4436 = vmatprep.subr.mxu0 0.0
  %4437 = vmatpush1.msra.mxu0 0.0
  %4438 = vmatprep.subr.mxu0 0.0
  %4439 = vmatpush1.msra.mxu0 0.0
  %4440 = vmatprep.subr.mxu0 0.0
  %4441 = vmatpush1.msra.mxu0 0.0
  %4442 = vmatprep.subr.mxu0 0.0
  %4443 = vmatpush1.msra.mxu0 0.0
  %4444 = vmatprep.subr.mxu0 0.0
  %4445 = vmatpush1.msra.mxu0 0.0
  %4446 = vmatprep.subr.mxu0 0.0
  %4447 = vmatpush1.msra.mxu0 0.0
  %4448 = vmatprep.mubr.f32.mxu0 0.0
  %4449 = vmatmul.mubr.f32.gmra.mrb[0].mxu0 %v4377
  %v4450 = vpop.f32.mrb[0].mxu0
  %v4451 = vadd.f32 0.0, %v4450
  %v4452 = vpop.f32.mrb[0].mxu0
  %4453 = vmatprep.mubr.f32.mxu0 0.0
  %4454 = vmatmul.mubr.f32.gmra.mrb[0].mxu0 %v4380
  %v4455 = vpop.f32.mrb[0].mxu0
  %v4456 = vadd.f32 0.0, %v4455
  %v4457 = vpop.f32.mrb[0].mxu0
  %4458 = vdwg.mxu0
  %4461 = vrot.lane.b32.xlu0 %v4451, 24
  %v4462 = vpop.permute.xlu0 %4461
  %4463 = vrot.lane.b32.xlu0 %v4456, 24
  %v4464 = vpop.permute.xlu0 %4463
  %4467 = vst.msk [vmem:[#allocation3 + $0x9] sm:$0xff] %vm1294, %v4462
  %4468 = vst.msk [vmem:[#allocation3 + $0x11] sm:$0x1] %vm1296, %v4464
  %v4469 = vld [vmem:[#allocation3] sm:$0xff]
  %v4470 = vld [vmem:[#allocation3 + $0x8] sm:$0xff]
  %v4471 = vld [vmem:[#allocation3 + $0x10] sm:$0x3]
  %s4472 = scalar_lea.vmem %s11, 32
  %v4473 = vld [vmem:[%s4472] sm:$0xff]
  %v4474 = vld [vmem:[%s4472 + $0x8] sm:$0xff]
  %v4475 = vld [vmem:[%s4472 + $0x10] sm:$0xff]
  %v4476 = vld [vmem:[%s4472 + $0x18] sm:$0xff]
  %s4477 = scalar_lea.vmem %s12, 1
  %v4478 = vld [vmem:[%s4477] sm:$0x1]
  %v4480 = vlaneseq
  %v4481 = vshrl.u32 %v4480, 7
  %v4482 = vsub.s32 0, %v4481
  %v4483 = vrot.slane %v4478, %v4482
  %v4486 = vsel %vm253, %v4469, 0
  %v4489 = vsel %vm253, %v4470, 0
  %v4492 = vsel %vm253, %v4471, 0
  %4494 = vmatprep.subr.mxu0 0.0
  %4495 = vmatpush1.msra.mxu0 %v4473
  %4496 = vmatprep.subr.mxu0 0.0
  %4497 = vmatpush1.msra.mxu0 %v4474
  %4498 = vmatprep.subr.mxu0 0.0
  %4499 = vmatpush1.msra.mxu0 %v4475
  %4500 = vmatprep.subr.mxu0 0.0
  %4501 = vmatpush1.msra.mxu0 %v4476
  %4502 = vmatprep.subr.mxu0 0.0
  %4503 = vmatpush1.msra.mxu0 0.0
  %4504 = vmatprep.subr.mxu0 0.0
  %4505 = vmatpush1.msra.mxu0 0.0
  %4506 = vmatprep.subr.mxu0 0.0
  %4507 = vmatpush1.msra.mxu0 0.0
  %4508 = vmatprep.subr.mxu0 0.0
  %4509 = vmatpush1.msra.mxu0 0.0
  %4510 = vmatprep.subr.mxu0 0.0
  %4511 = vmatpush1.msra.mxu0 0.0
  %4512 = vmatprep.subr.mxu0 0.0
  %4513 = vmatpush1.msra.mxu0 0.0
  %4514 = vmatprep.subr.mxu0 0.0
  %4515 = vmatpush1.msra.mxu0 0.0
  %4516 = vmatprep.subr.mxu0 0.0
  %4517 = vmatpush1.msra.mxu0 0.0
  %4518 = vmatprep.subr.mxu0 0.0
  %4519 = vmatpush1.msra.mxu0 0.0
  %4520 = vmatprep.subr.mxu0 0.0
  %4521 = vmatpush1.msra.mxu0 0.0
  %4522 = vmatprep.subr.mxu0 0.0
  %4523 = vmatpush1.msra.mxu0 0.0
  %4524 = vmatprep.subr.mxu0 0.0
  %4525 = vmatpush1.msra.mxu0 0.0
  %4526 = vmatprep.subr.mxu0 0.0
  %4527 = vmatpush1.msra.mxu0 0.0
  %4528 = vmatprep.subr.mxu0 0.0
  %4529 = vmatpush1.msra.mxu0 0.0
  %4530 = vmatprep.subr.mxu0 0.0
  %4531 = vmatpush1.msra.mxu0 0.0
  %4532 = vmatprep.subr.mxu0 0.0
  %4533 = vmatpush1.msra.mxu0 0.0
  %4534 = vmatprep.subr.mxu0 0.0
  %4535 = vmatpush1.msra.mxu0 0.0
  %4536 = vmatprep.subr.mxu0 0.0
  %4537 = vmatpush1.msra.mxu0 0.0
  %4538 = vmatprep.subr.mxu0 0.0
  %4539 = vmatpush1.msra.mxu0 0.0
  %4540 = vmatprep.subr.mxu0 0.0
  %4541 = vmatpush1.msra.mxu0 0.0
  %4542 = vmatprep.subr.mxu0 0.0
  %4543 = vmatpush1.msra.mxu0 0.0
  %4544 = vmatprep.subr.mxu0 0.0
  %4545 = vmatpush1.msra.mxu0 0.0
  %4546 = vmatprep.subr.mxu0 0.0
  %4547 = vmatpush1.msra.mxu0 0.0
  %4548 = vmatprep.subr.mxu0 0.0
  %4549 = vmatpush1.msra.mxu0 0.0
  %4550 = vmatprep.subr.mxu0 0.0
  %4551 = vmatpush1.msra.mxu0 0.0
  %4552 = vmatprep.subr.mxu0 0.0
  %4553 = vmatpush1.msra.mxu0 0.0
  %4554 = vmatprep.subr.mxu0 0.0
  %4555 = vmatpush1.msra.mxu0 0.0
  %4556 = vmatprep.subr.mxu0 0.0
  %4557 = vmatpush1.msra.mxu0 0.0
  %4558 = vmatprep.mubr.f32.mxu0 0.0
  %4559 = vmatmul.mubr.f32.gmra.mrb[0].mxu0 %v4486
  %v4560 = vpop.f32.mrb[0].mxu0
  %v4561 = vadd.f32 %v4483, %v4560
  %v4562 = vpop.f32.mrb[0].mxu0
  %4563 = vmatprep.mubr.f32.mxu0 0.0
  %4564 = vmatmul.mubr.f32.gmra.mrb[0].mxu0 %v4489
  %v4565 = vpop.f32.mrb[0].mxu0
  %v4566 = vadd.f32 %v4483, %v4565
  %v4567 = vpop.f32.mrb[0].mxu0
  %4568 = vmatprep.mubr.f32.mxu0 0.0
  %4569 = vmatmul.mubr.f32.gmra.mrb[0].mxu0 %v4492
  %v4570 = vpop.f32.mrb[0].mxu0
  %v4571 = vadd.f32 %v4483, %v4570
  %v4572 = vpop.f32.mrb[0].mxu0
  %4573 = vdwg.mxu0
  %v4574 = vadd.f32 %v2623, %v4561
  %v4575 = vadd.f32 %v2624, %v4566
  %v4576 = vadd.f32 %v2625, %v4571
  %s4577 = scalar_lea.vmem %s13, 1
  %v4578 = vld [vmem:[%s4577] sm:$0x1]
  %s4579 = scalar_lea.vmem %s14, 1
  %v4580 = vld [vmem:[%s4579] sm:$0x1]
  %v4581 = vsel %vm253, %v4574, 0.0
  %4582 = vadd.xlane.f32.xlu0 %v4581
  %v4583 = vpop.xlane.xlu0 %4582
  %v4584 = vsel %vm253, %v4575, 0.0
  %4585 = vadd.xlane.f32.xlu0 %v4584
  %v4586 = vpop.xlane.xlu0 %4585
  %v4587 = vsel %vm260, %v4576, 0.0
  %4588 = vadd.xlane.f32.xlu0 %v4587
  %v4589 = vpop.xlane.xlu0 %4588
  %v4590 = vmul.f32 %v4583, %v264
  %v4591 = vmul.f32 %v4586, %v264
  %v4592 = vmul.f32 %v4589, %v264
  %v4593 = vsub.f32 %v4574, %v4590
  %v4594 = vsub.f32 %v4575, %v4591
  %v4595 = vsub.f32 %v4576, %v4592
  %v4596 = vmul.f32 %v4593, %v4593
  %v4597 = vmul.f32 %v4594, %v4594
  %v4598 = vmul.f32 %v4595, %v4595
  %v4599 = vsel %vm253, %v4596, 0.0
  %4600 = vadd.xlane.f32.xlu0 %v4599
  %v4601 = vpop.xlane.xlu0 %4600
  %v4602 = vsel %vm253, %v4597, 0.0
  %4603 = vadd.xlane.f32.xlu0 %v4602
  %v4604 = vpop.xlane.xlu0 %4603
  %v4605 = vsel %vm260, %v4598, 0.0
  %4606 = vadd.xlane.f32.xlu0 %v4605
  %v4607 = vpop.xlane.xlu0 %4606
  %v4608 = vmul.f32 %v4601, %v264
  %v4609 = vmul.f32 %v4604, %v264
  %v4610 = vmul.f32 %v4607, %v264
  %v4611 = vadd.f32 %v4608, 1e-12
  %v4612 = vadd.f32 %v4609, 1e-12
  %v4613 = vadd.f32 %v4610, 1e-12
  %v4614 = vrsqrt.pop %v4611
  %v4615 = vrsqrt.pop %v4612
  %v4616 = vrsqrt.pop %v4613
  %v4617 = vmul.f32 %v4593, %v4614
  %v4618 = vmul.f32 %v4594, %v4615
  %v4619 = vmul.f32 %v4595, %v4616
  %v4621 = vlaneseq
  %v4622 = vshrl.u32 %v4621, 7
  %v4623 = vsub.s32 0, %v4622
  %v4624 = vrot.slane %v4578, %v4623
  %v4626 = vmul.f32 %v4617, %v4624
  %v4627 = vmul.f32 %v4618, %v4624
  %v4628 = vmul.f32 %v4619, %v4624
  %v4630 = vlaneseq
  %v4631 = vshrl.u32 %v4630, 7
  %v4632 = vsub.s32 0, %v4631
  %v4633 = vrot.slane %v4580, %v4632
  %v4635 = vadd.f32 %v4626, %v4633
  %v4636 = vadd.f32 %v4627, %v4633
  %v4637 = vadd.f32 %v4628, %v4633
  %s4638 = scalar_lea.vmem %s15, 32
  %v4639 = vld [vmem:[%s4638] sm:$0xff]
  %v4640 = vld [vmem:[%s4638 + $0x8] sm:$0xff]
  %v4641 = vld [vmem:[%s4638 + $0x10] sm:$0xff]
  %v4642 = vld [vmem:[%s4638 + $0x18] sm:$0xff]
  %s4643 = scalar_lea.vmem %s16, 1
  %v4644 = vld [vmem:[%s4643] sm:$0x1]
  %v4646 = vlaneseq
  %v4647 = vshrl.u32 %v4646, 7
  %v4648 = vsub.s32 0, %v4647
  %v4649 = vrot.slane %v4644, %v4648
  %v4652 = vsel %vm253, %v4635, 0
  %v4655 = vsel %vm253, %v4636, 0
  %v4658 = vsel %vm253, %v4637, 0
  %4660 = vmatprep.subr.mxu0 0.0
  %4661 = vmatpush1.msra.mxu0 %v4639
  %4662 = vmatprep.subr.mxu0 0.0
  %4663 = vmatpush1.msra.mxu0 %v4640
  %4664 = vmatprep.subr.mxu0 0.0
  %4665 = vmatpush1.msra.mxu0 %v4641
  %4666 = vmatprep.subr.mxu0 0.0
  %4667 = vmatpush1.msra.mxu0 %v4642
  %4668 = vmatprep.subr.mxu0 0.0
  %4669 = vmatpush1.msra.mxu0 0.0
  %4670 = vmatprep.subr.mxu0 0.0
  %4671 = vmatpush1.msra.mxu0 0.0
  %4672 = vmatprep.subr.mxu0 0.0
  %4673 = vmatpush1.msra.mxu0 0.0
  %4674 = vmatprep.subr.mxu0 0.0
  %4675 = vmatpush1.msra.mxu0 0.0
  %4676 = vmatprep.subr.mxu0 0.0
  %4677 = vmatpush1.msra.mxu0 0.0
  %4678 = vmatprep.subr.mxu0 0.0
  %4679 = vmatpush1.msra.mxu0 0.0
  %4680 = vmatprep.subr.mxu0 0.0
  %4681 = vmatpush1.msra.mxu0 0.0
  %4682 = vmatprep.subr.mxu0 0.0
  %4683 = vmatpush1.msra.mxu0 0.0
  %4684 = vmatprep.subr.mxu0 0.0
  %4685 = vmatpush1.msra.mxu0 0.0
  %4686 = vmatprep.subr.mxu0 0.0
  %4687 = vmatpush1.msra.mxu0 0.0
  %4688 = vmatprep.subr.mxu0 0.0
  %4689 = vmatpush1.msra.mxu0 0.0
  %4690 = vmatprep.subr.mxu0 0.0
  %4691 = vmatpush1.msra.mxu0 0.0
  %4692 = vmatprep.subr.mxu0 0.0
  %4693 = vmatpush1.msra.mxu0 0.0
  %4694 = vmatprep.subr.mxu0 0.0
  %4695 = vmatpush1.msra.mxu0 0.0
  %4696 = vmatprep.subr.mxu0 0.0
  %4697 = vmatpush1.msra.mxu0 0.0
  %4698 = vmatprep.subr.mxu0 0.0
  %4699 = vmatpush1.msra.mxu0 0.0
  %4700 = vmatprep.subr.mxu0 0.0
  %4701 = vmatpush1.msra.mxu0 0.0
  %4702 = vmatprep.subr.mxu0 0.0
  %4703 = vmatpush1.msra.mxu0 0.0
  %4704 = vmatprep.subr.mxu0 0.0
  %4705 = vmatpush1.msra.mxu0 0.0
  %4706 = vmatprep.subr.mxu0 0.0
  %4707 = vmatpush1.msra.mxu0 0.0
  %4708 = vmatprep.subr.mxu0 0.0
  %4709 = vmatpush1.msra.mxu0 0.0
  %4710 = vmatprep.subr.mxu0 0.0
  %4711 = vmatpush1.msra.mxu0 0.0
  %4712 = vmatprep.subr.mxu0 0.0
  %4713 = vmatpush1.msra.mxu0 0.0
  %4714 = vmatprep.subr.mxu0 0.0
  %4715 = vmatpush1.msra.mxu0 0.0
  %4716 = vmatprep.subr.mxu0 0.0
  %4717 = vmatpush1.msra.mxu0 0.0
  %4718 = vmatprep.subr.mxu0 0.0
  %4719 = vmatpush1.msra.mxu0 0.0
  %4720 = vmatprep.subr.mxu0 0.0
  %4721 = vmatpush1.msra.mxu0 0.0
  %4722 = vmatprep.subr.mxu0 0.0
  %4723 = vmatpush1.msra.mxu0 0.0
  %4724 = vmatprep.mubr.f32.mxu0 0.0
  %4725 = vmatmul.mubr.f32.gmra.mrb[0].mxu0 %v4652
  %v4726 = vpop.f32.mrb[0].mxu0
  %v4727 = vadd.f32 %v4649, %v4726
  %v4728 = vpop.f32.mrb[0].mxu0
  %4729 = vmatprep.mubr.f32.mxu0 0.0
  %4730 = vmatmul.mubr.f32.gmra.mrb[0].mxu0 %v4655
  %v4731 = vpop.f32.mrb[0].mxu0
  %v4732 = vadd.f32 %v4649, %v4731
  %v4733 = vpop.f32.mrb[0].mxu0
  %4734 = vmatprep.mubr.f32.mxu0 0.0
  %4735 = vmatmul.mubr.f32.gmra.mrb[0].mxu0 %v4658
  %v4736 = vpop.f32.mrb[0].mxu0
  %v4737 = vadd.f32 %v4649, %v4736
  %v4738 = vpop.f32.mrb[0].mxu0
  %4739 = vdwg.mxu0
  %v4740 = vmul.f32 %v4727, %v4727
  %v4741 = vmul.f32 %v4732, %v4732
  %v4742 = vmul.f32 %v4737, %v4737
  %v4743 = vmul.f32 %v4727, %v4740
  %v4744 = vmul.f32 %v4732, %v4741
  %v4745 = vmul.f32 %v4737, %v4742
  %v4746 = vmul.f32 %v4743, 0.044715
  %v4747 = vmul.f32 %v4744, 0.044715
  %v4748 = vmul.f32 %v4745, 0.044715
  %v4749 = vadd.f32 %v4727, %v4746
  %v4750 = vadd.f32 %v4732, %v4747
  %v4751 = vadd.f32 %v4737, %v4748
  %v4752 = vmul.f32 %v4749, 0.7978846
  %v4753 = vmul.f32 %v4750, 0.7978846
  %v4754 = vmul.f32 %v4751, 0.7978846
  %v4755 = vtanh.pop %v4752
  %v4756 = vtanh.pop %v4753
  %v4757 = vtanh.pop %v4754
  %v4758 = vadd.f32 %v4755, 1.0
  %v4759 = vadd.f32 %v4756, 1.0
  %v4760 = vadd.f32 %v4757, 1.0
  %v4761 = vmul.f32 %v4758, 0.5
  %v4762 = vmul.f32 %v4759, 0.5
  %v4763 = vmul.f32 %v4760, 0.5
  %v4764 = vmul.f32 %v4727, %v4761
  %v4765 = vmul.f32 %v4732, %v4762
  %v4766 = vmul.f32 %v4737, %v4763
  %s4767 = scalar_lea.vmem %s17, 64
  %v4768 = vld [vmem:[%s4767] sm:$0xff]
  %v4769 = vld [vmem:[%s4767 + $0x8] sm:$0xff]
  %v4770 = vld [vmem:[%s4767 + $0x10] sm:$0xff]
  %v4771 = vld [vmem:[%s4767 + $0x18] sm:$0xff]
  %v4772 = vld [vmem:[%s4767 + $0x20] sm:$0xff]
  %v4773 = vld [vmem:[%s4767 + $0x28] sm:$0xff]
  %v4774 = vld [vmem:[%s4767 + $0x30] sm:$0xff]
  %v4775 = vld [vmem:[%s4767 + $0x38] sm:$0xff]
  %s4776 = scalar_lea.vmem %s18, 1
  %v4777 = vld [vmem:[%s4776] sm:$0x1]
  %v4779 = vlaneseq
  %v4780 = vshrl.u32 %v4779, 7
  %v4781 = vsub.s32 0, %v4780
  %v4782 = vrot.slane %v4777, %v4781
  %v4785 = vsel %vm2474, %v4764, 0
  %v4788 = vsel %vm2474, %v4765, 0
  %v4791 = vsel %vm2474, %v4766, 0
  %4793 = vmatprep.subr.mxu0 0.0
  %4794 = vmatpush1.msra.mxu0 %v4768
  %4795 = vmatprep.subr.mxu0 0.0
  %4796 = vmatpush1.msra.mxu0 %v4769
  %4797 = vmatprep.subr.mxu0 0.0
  %4798 = vmatpush1.msra.mxu0 %v4770
  %4799 = vmatprep.subr.mxu0 0.0
  %4800 = vmatpush1.msra.mxu0 %v4771
  %4801 = vmatprep.subr.mxu0 0.0
  %4802 = vmatpush1.msra.mxu0 %v4772
  %4803 = vmatprep.subr.mxu0 0.0
  %4804 = vmatpush1.msra.mxu0 %v4773
  %4805 = vmatprep.subr.mxu0 0.0
  %4806 = vmatpush1.msra.mxu0 %v4774
  %4807 = vmatprep.subr.mxu0 0.0
  %4808 = vmatpush1.msra.mxu0 %v4775
  %4809 = vmatprep.subr.mxu0 0.0
  %4810 = vmatpush1.msra.mxu0 0.0
  %4811 = vmatprep.subr.mxu0 0.0
  %4812 = vmatpush1.msra.mxu0 0.0
  %4813 = vmatprep.subr.mxu0 0.0
  %4814 = vmatpush1.msra.mxu0 0.0
  %4815 = vmatprep.subr.mxu0 0.0
  %4816 = vmatpush1.msra.mxu0 0.0
  %4817 = vmatprep.subr.mxu0 0.0
  %4818 = vmatpush1.msra.mxu0 0.0
  %4819 = vmatprep.subr.mxu0 0.0
  %4820 = vmatpush1.msra.mxu0 0.0
  %4821 = vmatprep.subr.mxu0 0.0
  %4822 = vmatpush1.msra.mxu0 0.0
  %4823 = vmatprep.subr.mxu0 0.0
  %4824 = vmatpush1.msra.mxu0 0.0
  %4825 = vmatprep.subr.mxu0 0.0
  %4826 = vmatpush1.msra.mxu0 0.0
  %4827 = vmatprep.subr.mxu0 0.0
  %4828 = vmatpush1.msra.mxu0 0.0
  %4829 = vmatprep.subr.mxu0 0.0
  %4830 = vmatpush1.msra.mxu0 0.0
  %4831 = vmatprep.subr.mxu0 0.0
  %4832 = vmatpush1.msra.mxu0 0.0
  %4833 = vmatprep.subr.mxu0 0.0
  %4834 = vmatpush1.msra.mxu0 0.0
  %4835 = vmatprep.subr.mxu0 0.0
  %4836 = vmatpush1.msra.mxu0 0.0
  %4837 = vmatprep.subr.mxu0 0.0
  %4838 = vmatpush1.msra.mxu0 0.0
  %4839 = vmatprep.subr.mxu0 0.0
  %4840 = vmatpush1.msra.mxu0 0.0
  %4841 = vmatprep.subr.mxu0 0.0
  %4842 = vmatpush1.msra.mxu0 0.0
  %4843 = vmatprep.subr.mxu0 0.0
  %4844 = vmatpush1.msra.mxu0 0.0
  %4845 = vmatprep.subr.mxu0 0.0
  %4846 = vmatpush1.msra.mxu0 0.0
  %4847 = vmatprep.subr.mxu0 0.0
  %4848 = vmatpush1.msra.mxu0 0.0
  %4849 = vmatprep.subr.mxu0 0.0
  %4850 = vmatpush1.msra.mxu0 0.0
  %4851 = vmatprep.subr.mxu0 0.0
  %4852 = vmatpush1.msra.mxu0 0.0
  %4853 = vmatprep.subr.mxu0 0.0
  %4854 = vmatpush1.msra.mxu0 0.0
  %4855 = vmatprep.subr.mxu0 0.0
  %4856 = vmatpush1.msra.mxu0 0.0
  %4857 = vmatprep.mubr.f32.mxu0 0.0
  %4858 = vmatmul.mubr.f32.gmra.mrb[0].mxu0 %v4785
  %v4859 = vpop.f32.mrb[0].mxu0
  %v4860 = vadd.f32 %v4782, %v4859
  %v4861 = vpop.f32.mrb[0].mxu0
  %4862 = vmatprep.mubr.f32.mxu0 0.0
  %4863 = vmatmul.mubr.f32.gmra.mrb[0].mxu0 %v4788
  %v4864 = vpop.f32.mrb[0].mxu0
  %v4865 = vadd.f32 %v4782, %v4864
  %v4866 = vpop.f32.mrb[0].mxu0
  %4867 = vmatprep.mubr.f32.mxu0 0.0
  %4868 = vmatmul.mubr.f32.gmra.mrb[0].mxu0 %v4791
  %v4869 = vpop.f32.mrb[0].mxu0
  %v4870 = vadd.f32 %v4782, %v4869
  %v4871 = vpop.f32.mrb[0].mxu0
  %4872 = vdwg.mxu0
  %v4873 = vadd.f32 %v4635, %v4860
  %v4874 = vadd.f32 %v4636, %v4865
  %v4875 = vadd.f32 %v4637, %v4870
  %s4876 = scalar_lea.vmem %s19, 1
  %v4877 = vld [vmem:[%s4876] sm:$0x1]
  %s4878 = scalar_lea.vmem %s20, 1
  %v4879 = vld [vmem:[%s4878] sm:$0x1]
  %v4880 = vsel %vm253, %v4873, 0.0
  %4881 = vadd.xlane.f32.xlu0 %v4880
  %v4882 = vpop.xlane.xlu0 %4881
  %v4883 = vsel %vm253, %v4874, 0.0
  %4884 = vadd.xlane.f32.xlu0 %v4883
  %v4885 = vpop.xlane.xlu0 %4884
  %v4886 = vsel %vm260, %v4875, 0.0
  %4887 = vadd.xlane.f32.xlu0 %v4886
  %v4888 = vpop.xlane.xlu0 %4887
  %v4889 = vmul.f32 %v4882, %v264
  %v4890 = vmul.f32 %v4885, %v264
  %v4891 = vmul.f32 %v4888, %v264
  %v4892 = vsub.f32 %v4873, %v4889
  %v4893 = vsub.f32 %v4874, %v4890
  %v4894 = vsub.f32 %v4875, %v4891
  %v4895 = vmul.f32 %v4892, %v4892
  %v4896 = vmul.f32 %v4893, %v4893
  %v4897 = vmul.f32 %v4894, %v4894
  %v4898 = vsel %vm253, %v4895, 0.0
  %4899 = vadd.xlane.f32.xlu0 %v4898
  %v4900 = vpop.xlane.xlu0 %4899
  %v4901 = vsel %vm253, %v4896, 0.0
  %4902 = vadd.xlane.f32.xlu0 %v4901
  %v4903 = vpop.xlane.xlu0 %4902
  %v4904 = vsel %vm260, %v4897, 0.0
  %4905 = vadd.xlane.f32.xlu0 %v4904
  %v4906 = vpop.xlane.xlu0 %4905
  %v4907 = vmul.f32 %v4900, %v264
  %v4908 = vmul.f32 %v4903, %v264
  %v4909 = vmul.f32 %v4906, %v264
  %v4910 = vadd.f32 %v4907, 1e-12
  %v4911 = vadd.f32 %v4908, 1e-12
  %v4912 = vadd.f32 %v4909, 1e-12
  %v4913 = vrsqrt.pop %v4910
  %v4914 = vrsqrt.pop %v4911
  %v4915 = vrsqrt.pop %v4912
  %v4916 = vmul.f32 %v4892, %v4913
  %v4917 = vmul.f32 %v4893, %v4914
  %v4918 = vmul.f32 %v4894, %v4915
  %v4920 = vlaneseq
  %v4921 = vshrl.u32 %v4920, 7
  %v4922 = vsub.s32 0, %v4921
  %v4923 = vrot.slane %v4877, %v4922
  %v4925 = vmul.f32 %v4916, %v4923
  %v4926 = vmul.f32 %v4917, %v4923
  %v4927 = vmul.f32 %v4918, %v4923
  %v4929 = vlaneseq
  %v4930 = vshrl.u32 %v4929, 7
  %v4931 = vsub.s32 0, %v4930
  %v4932 = vrot.slane %v4879, %v4931
  %v4934 = vadd.f32 %v4925, %v4932
  %v4935 = vadd.f32 %v4926, %v4932
  %v4936 = vadd.f32 %v4927, %v4932
  %4937 = vst.msk [vmem:[%s21] sm:$0xff] %vm253, %v4934
  %4938 = vst.msk [vmem:[%s21 + $0x8] sm:$0xff] %vm253, %v4935
  %4939 = vst.msk [vmem:[%s21 + $0x10] sm:$0x3] %vm260, %v4936
  // Predicated region
  $region86: #{midi_former_forward.2} parent=0 // pred_check
    _
  $region87: #{midi_former_forward.2} parent=0 // pred_check_branch
    %4941 = sbr.rel (0) target = $region89
  $region88: #{midi_former_forward.2} parent=0 // pred_region
    _
  $region89: #{midi_former_forward.2} parent=0 // pred_fallthru
    _
  // Predicated region
  $region90: #{midi_former_forward.2} parent=0 // pred_check
    _
  $region91: #{midi_former_forward.2} parent=0 // pred_check_branch
    %4943 = sbr.rel (0) target = $region93
  $region92: #{midi_former_forward.2} parent=0 // pred_region
    _
  $region93: #{midi_former_forward.2} parent=0 // pred_fallthru
    _

</llo_original>
